<compile_context>
chip_gen: v7x
topology: tpu7x:2x2x1
jax: 0.10.0
libtpu: 0.0.40
codegen_flags: <defaults>
</compile_context>

<pallas_src>
import functools

import jax
import jax.numpy as jnp
from jax import lax
from jax.experimental import pallas as pl
from jax.experimental.pallas import tpu as pltpu


# Set to jnp.float32 to recover exact f32 matmuls (bf16 is MXU-native on all gens).
_MXU_DTYPE = jnp.bfloat16
_LN_EPS = 1e-5


# ---------------------------------------------------------------------------
# The fused Pallas kernel (one grid step == one batch sample)
# ---------------------------------------------------------------------------
def _fused_stpgcn_kernel(*refs, kt, n, t3, eps):
    (xt1_ref, xt3_ref,
     ak_a_ref, ak_m_ref, ak_c_ref,            # (I_T kron A_hat) for T = t1, t1-2(kt-1), t3
     kel_ref, kol_ref, ker_ref, kor_ref,      # pair-conv node selection operators
     grp_a_ref, grp_c_ref,                    # LayerNorm group-mean operators (f32)
     *wrefs, o_ref) = refs

    N = n
    wit = iter(wrefs)

    def nxt():
        return next(wit)

    def mx(a):
        return a.astype(_MXU_DTYPE)

    def mxdot(a, b):
        return jnp.dot(mx(a), mx(b), preferred_element_type=jnp.float32)

    # assumed TemporalConvLayer_Residual:
    #   y = relu(Conv2d(cin,cout,(k,1))(x) + Conv2d(cin,cout,1x1)(x)[:,:,k-1:,:])
    # residual 1x1 weight is pre-folded into tap k-1, biases pre-summed (pack_inputs).
    def temporal(h2d, w_ref, b_ref, k):
        rows_out = h2d.shape[0] - (k - 1) * N
        h16 = mx(h2d)                                   # cast once, slice k times
        acc = mxdot(h16[0:rows_out, :], w_ref[0])
        for d in range(1, k):
            acc = acc + mxdot(h16[d * N:d * N + rows_out, :], w_ref[d])
        return jnp.maximum(acc + b_ref[...], 0.0)

    # assumed SpatialConvLayer (GraphConv norm='both' + ReLU): relu(A_hat X W + b).
    def spatial(h2d, ak_ref, w_ref, b_ref):
        agg = mxdot(ak_ref[...], h2d)
        return jnp.maximum(mxdot(agg, w_ref[...]) + b_ref[...], 0.0)

    # nn.LayerNorm([n, c]) applied per (batch, t) over the (n, c) plane.  Group
    # statistics come from a precomputed (I_T kron 1_{NxN})/(N*C) operator so no
    # in-kernel reshapes are needed; all LN math is kept in f32.
    def layernorm(h2d, grp_ref, g_ref, b_ref):
        grp = grp_ref[...]
        mu = jnp.dot(grp, jnp.sum(h2d, axis=-1, keepdims=True),
                     preferred_element_type=jnp.float32)
        xc = h2d - mu
        var = jnp.dot(grp, jnp.sum(xc * xc, axis=-1, keepdims=True),
                      preferred_element_type=jnp.float32)
        return xc * lax.rsqrt(var + eps) * g_ref[...] + b_ref[...]

    # Conv2d(32,32,(1,2),stride=(1,2)) applied to cat([left, right], node axis).
    # Even/odd node pairing is done with 0/1 selection matrices (MXU matmuls)
    # instead of strided sublane gathers / lane-axis concats.
    def pair_conv(l2d, r2d, w0_ref, w1_ref, b_ref):
        l16, r16 = mx(l2d), mx(r2d)
        lw0, lw1 = mxdot(l16, w0_ref[...]), mxdot(l16, w1_ref[...])
        rw0, rw1 = mxdot(r16, w0_ref[...]), mxdot(r16, w1_ref[...])
        return (mxdot(kel_ref[...], lw0) + mxdot(kol_ref[...], lw1)
                + mxdot(ker_ref[...], rw0) + mxdot(kor_ref[...], rw1)
                + b_ref[...])

    # ---- weight refs, in pack_inputs order --------------------------------
    t0_w, t0_b = nxt(), nxt()
    s1_w, s1_b = nxt(), nxt()
    t2_w, t2_b = nxt(), nxt()
    ln3_g, ln3_b = nxt(), nxt()
    t4_w, t4_b = nxt(), nxt()
    s5_w, s5_b = nxt(), nxt()
    t6_w, t6_b = nxt(), nxt()
    ln7_g, ln7_b = nxt(), nxt()
    t30_w, t30_b = nxt(), nxt()
    s31_w, s31_b = nxt(), nxt()
    ln32_g, ln32_b = nxt(), nxt()
    cat_w0, cat_w1, cat_b = nxt(), nxt(), nxt()
    fin_w0, fin_w1, fin_b = nxt(), nxt(), nxt()
    o_w1, o_b1 = nxt(), nxt()
    o_g, o_bt = nxt(), nxt()
    o_w2, o_b2 = nxt(), nxt()
    o_wf, o_bf = nxt(), nxt()
    o_wlt, o_bl = nxt(), nxt()

    # ---- stems (c_in = 1; taps im2col'd onto the lane axis by the wrapper) --
    x11 = jnp.maximum(mxdot(xt1_ref[0], t0_w[...]) + t0_b[...], 0.0)    # [t1*N, 32]
    x31 = jnp.maximum(mxdot(xt3_ref[0], t30_w[...]) + t30_b[...], 0.0)  # [t3*N, 32]

    # ---- first branch: control_str = 'TSTNTSTN' ----------------------------
    x12 = spatial(x11, ak_a_ref, s1_w, s1_b)            # T = t1
    x13 = temporal(x12, t2_w, t2_b, kt)                 # T = t1 - (kt-1)
    x14 = layernorm(x13, grp_a_ref, ln3_g, ln3_b)
    x15 = temporal(x14, t4_w, t4_b, kt)                 # T = t1 - 2(kt-1)
    x16 = spatial(x15, ak_m_ref, s5_w, s5_b)
    x17 = temporal(x16, t6_w, t6_b, kt)                 # T = t3
    x18 = layernorm(x17, grp_c_ref, ln7_g, ln7_b)

    # ---- pyramid fusion with the coarse third branch -----------------------
    x32 = pair_conv(x18, x31, cat_w0, cat_w1, cat_b)    # catconv
    x33 = spatial(x32, ak_c_ref, s31_w, s31_b)
    x34 = layernorm(x33, grp_c_ref, ln32_g, ln32_b)
    x_fin = pair_conv(x34, x18, fin_w0, fin_w1, fin_b)  # finalconv   [t3*N, 32]

    # ---- assumed OutputLayer:
    #   Conv2d(c,c,(T,1)) -> LayerNorm([n,c]) -> Conv2d(c,c,1) -> Conv2d(c,1,1)
    #   -> squeeze -> Linear(n, num_class)
    xf16 = mx(x_fin)
    acc = mxdot(xf16[0:N, :], o_w1[0])
    for t in range(1, t3):
        acc = acc + mxdot(xf16[t * N:(t + 1) * N, :], o_w1[t])
    h1 = acc + o_b1[...]                                # [N, C]
    mu = jnp.mean(h1, keepdims=True)
    xc = h1 - mu
    var = jnp.mean(xc * xc, keepdims=True)
    h1 = xc * lax.rsqrt(var + eps) * o_g[...] + o_bt[...]
    h2 = mxdot(h1, o_w2[...]) + o_b2[...]               # [N, C]
    hf = mxdot(h2, o_wf[...]) + o_bf[...]               # [N, 1]
    y = jnp.sum(hf * o_wlt[...], axis=0, keepdims=True) + o_bl[...]    # [1, nclass]
    o_ref[0] = y


# ---------------------------------------------------------------------------
# Weight / operator packing (runs once, outside the hot path)
# ---------------------------------------------------------------------------
def _pack_temporal(p):
    W, Wr = p["w"], p["w_res"]                          # torch conv layouts
    k = W.shape[2]
    wt = jnp.transpose(W[:, :, :, 0], (2, 1, 0))        # [k, cin, cout]
    wt = wt.at[k - 1].add(jnp.transpose(Wr[:, :, 0, 0], (1, 0)))  # fold residual 1x1
    bias = (p["b"] + p["b_res"]).reshape(1, -1)
    return wt, bias


def _pack_pair(p):
    W = p["w"]                                          # [cout, cin, 1, 2]
    return (jnp.transpose(W[:, :, 0, 0]), jnp.transpose(W[:, :, 0, 1]),
            p["b"].reshape(1, -1))


def pack_inputs(params, a_norm, T, kt, n):
    f32 = jnp.float32
    bf = lambda a: a.astype(_MXU_DTYPE)                 # MXU-side constants
    kt3 = (kt - 1) * 4 + 1
    t1, t3 = T - kt + 1, T - kt3 + 1
    t_a = t1 - (kt - 1)            # T at the first LayerNorm
    t_m = t1 - 2 * (kt - 1)        # T at the second spatial layer
    fl, tl, out = params["first"], params["third"], params["output"]

    def kron_eye(t, m):
        return jnp.kron(jnp.eye(t, dtype=f32), m.astype(f32))

    # block-diagonal graph aggregation operators (I_T kron A_hat), pre-cast to bf16
    ak_a, ak_m, ak_c = (bf(kron_eye(t, a_norm)) for t in (t1, t_m, t3))

    # 0/1 node-pair selection operators for the (1,2)-stride pair convs (bf16)
    half = n // 2
    j = jnp.arange(half)

    def sel(rows, cols):
        return jnp.zeros((n, n), f32).at[rows, cols].set(1.0)

    kel = bf(kron_eye(t3, sel(j, 2 * j)))
    kol = bf(kron_eye(t3, sel(j, 2 * j + 1)))
    ker = bf(kron_eye(t3, sel(j + half, 2 * j)))
    kor = bf(kron_eye(t3, sel(j + half, 2 * j + 1)))

    # per-time group-mean operators for LayerNorm([n, c]) (kept f32 for LN math)
    c_a = fl[3]["gamma"].shape[1]
    c_c = fl[7]["gamma"].shape[1]
    grp_a = kron_eye(t_a, jnp.ones((n, n), f32)) / float(n * c_a)
    grp_c = kron_eye(t3, jnp.ones((n, n), f32)) / float(n * c_c)

    def tile_ln(p, t):
        return (jnp.tile(p["gamma"].astype(f32), (t, 1)),
                jnp.tile(p["beta"].astype(f32), (t, 1)))

    ln3_g, ln3_b = tile_ln(fl[3], t_a)
    ln7_g, ln7_b = tile_ln(fl[7], t3)
    ln32_g, ln32_b = tile_ln(tl[2], t3)

    t0_w, t0_b = _pack_temporal(fl[0]); t0_w = t0_w[:, 0, :]      # c_in = 1 stem
    t2_w, t2_b = _pack_temporal(fl[2])
    t4_w, t4_b = _pack_temporal(fl[4])
    t6_w, t6_b = _pack_temporal(fl[6])
    t30_w, t30_b = _pack_temporal(tl[0]); t30_w = t30_w[:, 0, :]  # c_in = 1 stem
    cat_w0, cat_w1, cat_b = _pack_pair(params["catconv"])
    fin_w0, fin_w1, fin_b = _pack_pair(params["finalconv"])

    weights = [
        bf(t0_w), t0_b,
        bf(fl[1]["w"]), fl[1]["b"].reshape(1, -1),
        bf(t2_w), t2_b,
        ln3_g, ln3_b,
        bf(t4_w), t4_b,
        bf(fl[5]["w"]), fl[5]["b"].reshape(1, -1),
        bf(t6_w), t6_b,
        ln7_g, ln7_b,
        bf(t30_w), t30_b,
        bf(tl[1]["w"]), tl[1]["b"].reshape(1, -1),
        ln32_g, ln32_b,
        bf(cat_w0), bf(cat_w1), cat_b,
        bf(fin_w0), bf(fin_w1), fin_b,
        bf(jnp.transpose(out["w1"][:, :, :, 0], (2, 1, 0))), out["b1"].reshape(1, -1),
        out["gamma"], out["beta"],
        bf(jnp.transpose(out["w2"][:, :, 0, 0])), out["b2"].reshape(1, -1),
        bf(out["wf"][0, :, 0, 0].reshape(-1, 1)), out["bf"].reshape(1, 1),
        jnp.transpose(out["wl"]), out["bl"].reshape(1, -1),
    ]
    return [ak_a, ak_m, ak_c, kel, kol, ker, kor, grp_a, grp_c] + weights


# ---------------------------------------------------------------------------
# Forward builder: wrapper does only a tiny im2col of the 1-channel input.
# ---------------------------------------------------------------------------
def build_forward(T, kt, n, nclass):
    kt3 = (kt - 1) * 4 + 1
    t1, t3 = T - kt + 1, T - kt3 + 1
    kernel = functools.partial(_fused_stpgcn_kernel, kt=kt, n=n, t3=t3, eps=_LN_EPS)

    def _const_map(rank):
        zeros = (0,) * rank
        return lambda b: zeros

    def forward(x_nchw, kernel_inputs):
        B = x_nchw.shape[0]
        x = x_nchw[:, 0].astype(jnp.float32)                       # [B, T, n]
        # lane-axis im2col for the two c_in=1 stems (input is only a few KiB);
        # bf16 halves the per-sample HBM->VMEM DMA.
        xt1 = jnp.stack([x[:, d:d + t1, :] for d in range(kt)],
                        axis=-1).reshape(B, t1 * n, kt).astype(_MXU_DTYPE)
        xt3 = jnp.stack([x[:, d:d + t3, :] for d in range(kt3)],
                        axis=-1).reshape(B, t3 * n, kt3).astype(_MXU_DTYPE)
        inputs = [xt1, xt3] + list(kernel_inputs)

        in_specs = []
        for i, arr in enumerate(inputs):
            if i < 2:    # per-sample activations, tiled over the batch grid
                in_specs.append(pl.BlockSpec((1,) + arr.shape[1:],
                                             lambda b: (b, 0, 0)))
            else:        # weights / constant operators, fetched once (const index)
                in_specs.append(pl.BlockSpec(arr.shape, _const_map(arr.ndim)))

        out = pl.pallas_call(
            kernel,
            out_shape=jax.ShapeDtypeStruct((B, 1, nclass), jnp.float32),
            grid=(B,),
            in_specs=in_specs,
            out_specs=pl.BlockSpec((1, 1, nclass), lambda b: (b, 0, 0)),
            compiler_params=pltpu.CompilerParams(
                dimension_semantics=("parallel",)),   # 2 samples -> 2 TCs on v7x
        )(*inputs)
        return out.reshape(B, nclass)

    return jax.jit(forward)


# ---------------------------------------------------------------------------
# Deterministic parameter init (shapes follow the PyTorch __init__)
# ---------------------------------------------------------------------------
def init_params(key, c, T, kt, n, nclass):
    keys = iter(jax.random.split(key, 128))

    def w(shape, scale=0.1):
        return scale * jax.random.normal(next(keys), shape, jnp.float32)

    def temporal(cin, cout, k):
        return {"w": w((cout, cin, k, 1)), "b": w((cout,)),
                "w_res": w((cout, cin, 1, 1)), "b_res": w((cout,))}

    def spatial(cin, cout):
        return {"w": w((cin, cout)), "b": w((cout,))}

    def lnorm(nn_, cc):
        return {"gamma": jnp.ones((nn_, cc), jnp.float32),
                "beta": jnp.zeros((nn_, cc), jnp.float32)}

    # control_str = 'TSTNTSTN'
    first = [temporal(c[0], c[1], kt), spatial(c[1], c[2]),
             temporal(c[2], c[3], kt), lnorm(n, c[3]),
             temporal(c[3], c[4], kt), spatial(c[4], c[5]),
             temporal(c[5], c[6], kt), lnorm(n, c[6])]
    third = [temporal(c[0], c[1], (kt - 1) * 4 + 1),
             spatial(c[1], c[1]), lnorm(n, c[6])]
    catconv = {"w": w((32, 32, 1, 2)), "b": w((32,))}
    finalconv = {"w": w((32, 32, 1, 2)), "b": w((32,))}
    T_out, Cf = T - (kt - 1) * 4, c[6]
    output = {"w1": w((Cf, Cf, T_out, 1)), "b1": w((Cf,)),
              "gamma": jnp.ones((n, Cf), jnp.float32),
              "beta": jnp.zeros((n, Cf), jnp.float32),
              "w2": w((Cf, Cf, 1, 1)), "b2": w((Cf,)),
              "wf": w((1, Cf, 1, 1)), "bf": w((1,)),
              "wl": w((nclass, n)), "bl": w((nclass,))}
    return {"first": first, "third": third, "catconv": catconv,
            "finalconv": finalconv, "output": output}


def ring_graph_norm_adj(n):
    """Fixed DGLGraph stand-in: ring graph + self-loops, symmetric normalization."""
    idx = jnp.arange(n)
    a = jnp.zeros((n, n), jnp.float32)
    a = a.at[idx, (idx + 1) % n].set(1.0)
    a = a.at[idx, (idx - 1) % n].set(1.0)
    a = a + jnp.eye(n, dtype=jnp.float32)
    dinv = 1.0 / jnp.sqrt(jnp.sum(a, axis=1))
    return a * dinv[:, None] * dinv[None, :]


if __name__ == "__main__":
    B, T, n, kt, nclass = 2, 16, 16, 3, 7
    c = [1, 32, 32, 32, 32, 32, 32]            # channel schedule for 'TSTNTSTN'
    key = jax.random.PRNGKey(0)
    k_in, k_par = jax.random.split(key)
    x = jax.random.normal(k_in, (B, 1, T, n), jnp.float32)   # [batch, 1, T, n] (NCHW)
    params = init_params(k_par, c, T, kt, n, nclass)
    a_norm = ring_graph_norm_adj(n)

    kernel_inputs = pack_inputs(params, a_norm, T, kt, n)
    fwd = build_forward(T, kt, n, nclass)
    y = jax.block_until_ready(fwd(x, kernel_inputs))

    assert y.shape == (B, nclass), y.shape
    assert bool(jnp.all(jnp.isfinite(y)))
    print("KERNEL_OK")
</pallas_src>

<mosaic_0001>
module attributes {stable_mosaic.version = 11 : i64} {
  func.func @_fused_stpgcn_kernel(%arg0: i32, %arg1: memref<1x224x3xbf16, #tpu.memory_space<vmem>>, %arg2: memref<1x128x9xbf16, #tpu.memory_space<vmem>>, %arg3: memref<224x224xbf16, #tpu.memory_space<vmem>>, %arg4: memref<160x160xbf16, #tpu.memory_space<vmem>>, %arg5: memref<128x128xbf16, #tpu.memory_space<vmem>>, %arg6: memref<128x128xbf16, #tpu.memory_space<vmem>>, %arg7: memref<128x128xbf16, #tpu.memory_space<vmem>>, %arg8: memref<128x128xbf16, #tpu.memory_space<vmem>>, %arg9: memref<128x128xbf16, #tpu.memory_space<vmem>>, %arg10: memref<192x192xf32, #tpu.memory_space<vmem>>, %arg11: memref<128x128xf32, #tpu.memory_space<vmem>>, %arg12: memref<3x32xbf16, #tpu.memory_space<vmem>>, %arg13: memref<1x32xf32, #tpu.memory_space<vmem>>, %arg14: memref<32x32xbf16, #tpu.memory_space<vmem>>, %arg15: memref<1x32xf32, #tpu.memory_space<vmem>>, %arg16: memref<3x32x32xbf16, #tpu.memory_space<vmem>>, %arg17: memref<1x32xf32, #tpu.memory_space<vmem>>, %arg18: memref<192x32xf32, #tpu.memory_space<vmem>>, %arg19: memref<192x32xf32, #tpu.memory_space<vmem>>, %arg20: memref<3x32x32xbf16, #tpu.memory_space<vmem>>, %arg21: memref<1x32xf32, #tpu.memory_space<vmem>>, %arg22: memref<32x32xbf16, #tpu.memory_space<vmem>>, %arg23: memref<1x32xf32, #tpu.memory_space<vmem>>, %arg24: memref<3x32x32xbf16, #tpu.memory_space<vmem>>, %arg25: memref<1x32xf32, #tpu.memory_space<vmem>>, %arg26: memref<128x32xf32, #tpu.memory_space<vmem>>, %arg27: memref<128x32xf32, #tpu.memory_space<vmem>>, %arg28: memref<9x32xbf16, #tpu.memory_space<vmem>>, %arg29: memref<1x32xf32, #tpu.memory_space<vmem>>, %arg30: memref<32x32xbf16, #tpu.memory_space<vmem>>, %arg31: memref<1x32xf32, #tpu.memory_space<vmem>>, %arg32: memref<128x32xf32, #tpu.memory_space<vmem>>, %arg33: memref<128x32xf32, #tpu.memory_space<vmem>>, %arg34: memref<32x32xbf16, #tpu.memory_space<vmem>>, %arg35: memref<32x32xbf16, #tpu.memory_space<vmem>>, %arg36: memref<1x32xf32, #tpu.memory_space<vmem>>, %arg37: memref<32x32xbf16, #tpu.memory_space<vmem>>, %arg38: memref<32x32xbf16, #tpu.memory_space<vmem>>, %arg39: memref<1x32xf32, #tpu.memory_space<vmem>>, %arg40: memref<8x32x32xbf16, #tpu.memory_space<vmem>>, %arg41: memref<1x32xf32, #tpu.memory_space<vmem>>, %arg42: memref<16x32xf32, #tpu.memory_space<vmem>>, %arg43: memref<16x32xf32, #tpu.memory_space<vmem>>, %arg44: memref<32x32xbf16, #tpu.memory_space<vmem>>, %arg45: memref<1x32xf32, #tpu.memory_space<vmem>>, %arg46: memref<32x1xbf16, #tpu.memory_space<vmem>>, %arg47: memref<1x1xf32, #tpu.memory_space<vmem>>, %arg48: memref<16x7xf32, #tpu.memory_space<vmem>>, %arg49: memref<1x7xf32, #tpu.memory_space<vmem>>, %arg50: memref<1x1x7xf32, #tpu.memory_space<vmem>>) attributes {dimension_semantics = [#tpu.dimension_semantics<parallel>], iteration_bounds = array<i64: 2>, scalar_prefetch = 0 : i64, scratch_operands = 0 : i64, tpu.core_type = #tpu.core_type<tc>, window_params = [{transform_indices = @transform_0, window_bounds = array<i64: 1, 224, 3>}, {transform_indices = @transform_1, window_bounds = array<i64: 1, 128, 9>}, {pipeline_mode = #tpu.pipeline_mode<synchronous>, transform_indices = @transform_2, window_bounds = array<i64: 224, 224>}, {pipeline_mode = #tpu.pipeline_mode<synchronous>, transform_indices = @transform_3, window_bounds = array<i64: 160, 160>}, {pipeline_mode = #tpu.pipeline_mode<synchronous>, transform_indices = @transform_4, window_bounds = array<i64: 128, 128>}, {pipeline_mode = #tpu.pipeline_mode<synchronous>, transform_indices = @transform_5, window_bounds = array<i64: 128, 128>}, {pipeline_mode = #tpu.pipeline_mode<synchronous>, transform_indices = @transform_6, window_bounds = array<i64: 128, 128>}, {pipeline_mode = #tpu.pipeline_mode<synchronous>, transform_indices = @transform_7, window_bounds = array<i64: 128, 128>}, {pipeline_mode = #tpu.pipeline_mode<synchronous>, transform_indices = @transform_8, window_bounds = array<i64: 128, 128>}, {pipeline_mode = #tpu.pipeline_mode<synchronous>, transform_indices = @transform_9, window_bounds = array<i64: 192, 192>}, {pipeline_mode = #tpu.pipeline_mode<synchronous>, transform_indices = @transform_10, window_bounds = array<i64: 128, 128>}, {pipeline_mode = #tpu.pipeline_mode<synchronous>, transform_indices = @transform_11, window_bounds = array<i64: 3, 32>}, {pipeline_mode = #tpu.pipeline_mode<synchronous>, transform_indices = @transform_12, window_bounds = array<i64: 1, 32>}, {pipeline_mode = #tpu.pipeline_mode<synchronous>, transform_indices = @transform_13, window_bounds = array<i64: 32, 32>}, {pipeline_mode = #tpu.pipeline_mode<synchronous>, transform_indices = @transform_14, window_bounds = array<i64: 1, 32>}, {pipeline_mode = #tpu.pipeline_mode<synchronous>, transform_indices = @transform_15, window_bounds = array<i64: 3, 32, 32>}, {pipeline_mode = #tpu.pipeline_mode<synchronous>, transform_indices = @transform_16, window_bounds = array<i64: 1, 32>}, {pipeline_mode = #tpu.pipeline_mode<synchronous>, transform_indices = @transform_17, window_bounds = array<i64: 192, 32>}, {pipeline_mode = #tpu.pipeline_mode<synchronous>, transform_indices = @transform_18, window_bounds = array<i64: 192, 32>}, {pipeline_mode = #tpu.pipeline_mode<synchronous>, transform_indices = @transform_19, window_bounds = array<i64: 3, 32, 32>}, {pipeline_mode = #tpu.pipeline_mode<synchronous>, transform_indices = @transform_20, window_bounds = array<i64: 1, 32>}, {pipeline_mode = #tpu.pipeline_mode<synchronous>, transform_indices = @transform_21, window_bounds = array<i64: 32, 32>}, {pipeline_mode = #tpu.pipeline_mode<synchronous>, transform_indices = @transform_22, window_bounds = array<i64: 1, 32>}, {pipeline_mode = #tpu.pipeline_mode<synchronous>, transform_indices = @transform_23, window_bounds = array<i64: 3, 32, 32>}, {pipeline_mode = #tpu.pipeline_mode<synchronous>, transform_indices = @transform_24, window_bounds = array<i64: 1, 32>}, {pipeline_mode = #tpu.pipeline_mode<synchronous>, transform_indices = @transform_25, window_bounds = array<i64: 128, 32>}, {pipeline_mode = #tpu.pipeline_mode<synchronous>, transform_indices = @transform_26, window_bounds = array<i64: 128, 32>}, {pipeline_mode = #tpu.pipeline_mode<synchronous>, transform_indices = @transform_27, window_bounds = array<i64: 9, 32>}, {pipeline_mode = #tpu.pipeline_mode<synchronous>, transform_indices = @transform_28, window_bounds = array<i64: 1, 32>}, {pipeline_mode = #tpu.pipeline_mode<synchronous>, transform_indices = @transform_29, window_bounds = array<i64: 32, 32>}, {pipeline_mode = #tpu.pipeline_mode<synchronous>, transform_indices = @transform_30, window_bounds = array<i64: 1, 32>}, {pipeline_mode = #tpu.pipeline_mode<synchronous>, transform_indices = @transform_31, window_bounds = array<i64: 128, 32>}, {pipeline_mode = #tpu.pipeline_mode<synchronous>, transform_indices = @transform_32, window_bounds = array<i64: 128, 32>}, {pipeline_mode = #tpu.pipeline_mode<synchronous>, transform_indices = @transform_33, window_bounds = array<i64: 32, 32>}, {pipeline_mode = #tpu.pipeline_mode<synchronous>, transform_indices = @transform_34, window_bounds = array<i64: 32, 32>}, {pipeline_mode = #tpu.pipeline_mode<synchronous>, transform_indices = @transform_35, window_bounds = array<i64: 1, 32>}, {pipeline_mode = #tpu.pipeline_mode<synchronous>, transform_indices = @transform_36, window_bounds = array<i64: 32, 32>}, {pipeline_mode = #tpu.pipeline_mode<synchronous>, transform_indices = @transform_37, window_bounds = array<i64: 32, 32>}, {pipeline_mode = #tpu.pipeline_mode<synchronous>, transform_indices = @transform_38, window_bounds = array<i64: 1, 32>}, {pipeline_mode = #tpu.pipeline_mode<synchronous>, transform_indices = @transform_39, window_bounds = array<i64: 8, 32, 32>}, {pipeline_mode = #tpu.pipeline_mode<synchronous>, transform_indices = @transform_40, window_bounds = array<i64: 1, 32>}, {pipeline_mode = #tpu.pipeline_mode<synchronous>, transform_indices = @transform_41, window_bounds = array<i64: 16, 32>}, {pipeline_mode = #tpu.pipeline_mode<synchronous>, transform_indices = @transform_42, window_bounds = array<i64: 16, 32>}, {pipeline_mode = #tpu.pipeline_mode<synchronous>, transform_indices = @transform_43, window_bounds = array<i64: 32, 32>}, {pipeline_mode = #tpu.pipeline_mode<synchronous>, transform_indices = @transform_44, window_bounds = array<i64: 1, 32>}, {pipeline_mode = #tpu.pipeline_mode<synchronous>, transform_indices = @transform_45, window_bounds = array<i64: 32, 1>}, {pipeline_mode = #tpu.pipeline_mode<synchronous>, transform_indices = @transform_46, window_bounds = array<i64: 1, 1>}, {pipeline_mode = #tpu.pipeline_mode<synchronous>, transform_indices = @transform_47, window_bounds = array<i64: 16, 7>}, {pipeline_mode = #tpu.pipeline_mode<synchronous>, transform_indices = @transform_48, window_bounds = array<i64: 1, 7>}, {transform_indices = @transform_49, window_bounds = array<i64: 1, 1, 7>}]} {
    %c0 = arith.constant 0 : index
    %c0_0 = arith.constant 0 : index
    %c0_1 = arith.constant 0 : index
    %0 = vector.load %arg1[%c0, %c0_0, %c0_1] : memref<1x224x3xbf16, #tpu.memory_space<vmem>>, vector<1x224x3xbf16>
    %1 = vector.shape_cast %0 : vector<1x224x3xbf16> to vector<224x3xbf16>
    %c0_2 = arith.constant 0 : index
    %c0_3 = arith.constant 0 : index
    %2 = vector.load %arg12[%c0_2, %c0_3] : memref<3x32xbf16, #tpu.memory_space<vmem>>, vector<3x32xbf16>
    %cst = arith.constant dense<0.000000e+00> : vector<224x32xf32>
    %3 = tpu.matmul %1, %2, %cst {dimension_numbers = #tpu.dot_dimension_numbers<[1], [0], [0], [1], [0, 0, 1, 1], [], []>} : vector<224x3xbf16>, vector<3x32xbf16>, vector<224x32xf32> -> vector<224x32xf32>
    %c0_4 = arith.constant 0 : index
    %c0_5 = arith.constant 0 : index
    %4 = vector.load %arg13[%c0_4, %c0_5] : memref<1x32xf32, #tpu.memory_space<vmem>>, vector<1x32xf32>
    %5 = vector.broadcast %4 : vector<1x32xf32> to vector<224x32xf32>
    %6 = arith.addf %3, %5 : vector<224x32xf32>
    %cst_6 = arith.constant 0.000000e+00 : f32
    %7 = vector.broadcast %cst_6 : f32 to vector<224x32xf32>
    %8 = arith.maximumf %6, %7 : vector<224x32xf32>
    %c0_7 = arith.constant 0 : index
    %c0_8 = arith.constant 0 : index
    %c0_9 = arith.constant 0 : index
    %9 = vector.load %arg2[%c0_7, %c0_8, %c0_9] : memref<1x128x9xbf16, #tpu.memory_space<vmem>>, vector<1x128x9xbf16>
    %10 = vector.shape_cast %9 : vector<1x128x9xbf16> to vector<128x9xbf16>
    %c0_10 = arith.constant 0 : index
    %c0_11 = arith.constant 0 : index
    %11 = vector.load %arg28[%c0_10, %c0_11] : memref<9x32xbf16, #tpu.memory_space<vmem>>, vector<9x32xbf16>
    %cst_12 = arith.constant dense<0.000000e+00> : vector<128x32xf32>
    %12 = tpu.matmul %10, %11, %cst_12 {dimension_numbers = #tpu.dot_dimension_numbers<[1], [0], [0], [1], [0, 0, 1, 1], [], []>} : vector<128x9xbf16>, vector<9x32xbf16>, vector<128x32xf32> -> vector<128x32xf32>
    %c0_13 = arith.constant 0 : index
    %c0_14 = arith.constant 0 : index
    %13 = vector.load %arg29[%c0_13, %c0_14] : memref<1x32xf32, #tpu.memory_space<vmem>>, vector<1x32xf32>
    %14 = vector.broadcast %13 : vector<1x32xf32> to vector<128x32xf32>
    %15 = arith.addf %12, %14 : vector<128x32xf32>
    %cst_15 = arith.constant 0.000000e+00 : f32
    %16 = vector.broadcast %cst_15 : f32 to vector<128x32xf32>
    %17 = arith.maximumf %15, %16 : vector<128x32xf32>
    %c0_16 = arith.constant 0 : index
    %c0_17 = arith.constant 0 : index
    %18 = vector.load %arg3[%c0_16, %c0_17] : memref<224x224xbf16, #tpu.memory_space<vmem>>, vector<224x224xbf16>
    %19 = arith.truncf %8 : vector<224x32xf32> to vector<224x32xbf16>
    %cst_18 = arith.constant dense<0.000000e+00> : vector<224x32xf32>
    %20 = tpu.matmul %18, %19, %cst_18 {dimension_numbers = #tpu.dot_dimension_numbers<[1], [0], [0], [1], [0, 0, 1, 1], [], []>} : vector<224x224xbf16>, vector<224x32xbf16>, vector<224x32xf32> -> vector<224x32xf32>
    %c0_19 = arith.constant 0 : index
    %c0_20 = arith.constant 0 : index
    %21 = vector.load %arg14[%c0_19, %c0_20] : memref<32x32xbf16, #tpu.memory_space<vmem>>, vector<32x32xbf16>
    %22 = arith.truncf %20 : vector<224x32xf32> to vector<224x32xbf16>
    %cst_21 = arith.constant dense<0.000000e+00> : vector<224x32xf32>
    %23 = tpu.matmul %22, %21, %cst_21 {dimension_numbers = #tpu.dot_dimension_numbers<[1], [0], [0], [1], [0, 0, 1, 1], [], []>} : vector<224x32xbf16>, vector<32x32xbf16>, vector<224x32xf32> -> vector<224x32xf32>
    %c0_22 = arith.constant 0 : index
    %c0_23 = arith.constant 0 : index
    %24 = vector.load %arg15[%c0_22, %c0_23] : memref<1x32xf32, #tpu.memory_space<vmem>>, vector<1x32xf32>
    %25 = vector.broadcast %24 : vector<1x32xf32> to vector<224x32xf32>
    %26 = arith.addf %23, %25 : vector<224x32xf32>
    %cst_24 = arith.constant 0.000000e+00 : f32
    %27 = vector.broadcast %cst_24 : f32 to vector<224x32xf32>
    %28 = arith.maximumf %26, %27 : vector<224x32xf32>
    %29 = arith.truncf %28 : vector<224x32xf32> to vector<224x32xbf16>
    %30 = vector.extract_strided_slice %29 {offsets = [0, 0], sizes = [192, 32], strides = [1, 1]} : vector<224x32xbf16> to vector<192x32xbf16>
    %c0_25 = arith.constant 0 : index
    %c0_26 = arith.constant 0 : index
    %c0_27 = arith.constant 0 : index
    %31 = vector.load %arg16[%c0_25, %c0_26, %c0_27] : memref<3x32x32xbf16, #tpu.memory_space<vmem>>, vector<1x32x32xbf16>
    %32 = vector.shape_cast %31 : vector<1x32x32xbf16> to vector<32x32xbf16>
    %cst_28 = arith.constant dense<0.000000e+00> : vector<192x32xf32>
    %33 = tpu.matmul %30, %32, %cst_28 {dimension_numbers = #tpu.dot_dimension_numbers<[1], [0], [0], [1], [0, 0, 1, 1], [], []>} : vector<192x32xbf16>, vector<32x32xbf16>, vector<192x32xf32> -> vector<192x32xf32>
    %34 = vector.extract_strided_slice %29 {offsets = [16, 0], sizes = [192, 32], strides = [1, 1]} : vector<224x32xbf16> to vector<192x32xbf16>
    %c1 = arith.constant 1 : index
    %c0_29 = arith.constant 0 : index
    %c0_30 = arith.constant 0 : index
    %35 = vector.load %arg16[%c1, %c0_29, %c0_30] : memref<3x32x32xbf16, #tpu.memory_space<vmem>>, vector<1x32x32xbf16>
    %36 = vector.shape_cast %35 : vector<1x32x32xbf16> to vector<32x32xbf16>
    %cst_31 = arith.constant dense<0.000000e+00> : vector<192x32xf32>
    %37 = tpu.matmul %34, %36, %cst_31 {dimension_numbers = #tpu.dot_dimension_numbers<[1], [0], [0], [1], [0, 0, 1, 1], [], []>} : vector<192x32xbf16>, vector<32x32xbf16>, vector<192x32xf32> -> vector<192x32xf32>
    %38 = arith.addf %33, %37 : vector<192x32xf32>
    %39 = vector.extract_strided_slice %29 {offsets = [32, 0], sizes = [192, 32], strides = [1, 1]} : vector<224x32xbf16> to vector<192x32xbf16>
    %c2 = arith.constant 2 : index
    %c0_32 = arith.constant 0 : index
    %c0_33 = arith.constant 0 : index
    %40 = vector.load %arg16[%c2, %c0_32, %c0_33] : memref<3x32x32xbf16, #tpu.memory_space<vmem>>, vector<1x32x32xbf16>
    %41 = vector.shape_cast %40 : vector<1x32x32xbf16> to vector<32x32xbf16>
    %cst_34 = arith.constant dense<0.000000e+00> : vector<192x32xf32>
    %42 = tpu.matmul %39, %41, %cst_34 {dimension_numbers = #tpu.dot_dimension_numbers<[1], [0], [0], [1], [0, 0, 1, 1], [], []>} : vector<192x32xbf16>, vector<32x32xbf16>, vector<192x32xf32> -> vector<192x32xf32>
    %43 = arith.addf %38, %42 : vector<192x32xf32>
    %c0_35 = arith.constant 0 : index
    %c0_36 = arith.constant 0 : index
    %44 = vector.load %arg17[%c0_35, %c0_36] : memref<1x32xf32, #tpu.memory_space<vmem>>, vector<1x32xf32>
    %45 = vector.broadcast %44 : vector<1x32xf32> to vector<192x32xf32>
    %46 = arith.addf %43, %45 : vector<192x32xf32>
    %cst_37 = arith.constant 0.000000e+00 : f32
    %47 = vector.broadcast %cst_37 : f32 to vector<192x32xf32>
    %48 = arith.maximumf %46, %47 : vector<192x32xf32>
    %c0_38 = arith.constant 0 : index
    %c0_39 = arith.constant 0 : index
    %49 = vector.load %arg10[%c0_38, %c0_39] : memref<192x192xf32, #tpu.memory_space<vmem>>, vector<192x192xf32>
    %cst_40 = arith.constant dense<0.000000e+00> : vector<192xf32>
    %50 = vector.multi_reduction <add>, %48, %cst_40 [1] : vector<192x32xf32> to vector<192xf32>
    %51 = vector.shape_cast %50 : vector<192xf32> to vector<192x1xf32>
    %cst_41 = arith.constant dense<0.000000e+00> : vector<192x1xf32>
    %52 = tpu.matmul %49, %51, %cst_41 {dimension_numbers = #tpu.dot_dimension_numbers<[1], [0], [0], [1], [0, 0, 1, 1], [], []>} : vector<192x192xf32>, vector<192x1xf32>, vector<192x1xf32> -> vector<192x1xf32>
    %53 = vector.broadcast %52 : vector<192x1xf32> to vector<192x32xf32>
    %54 = arith.subf %48, %53 : vector<192x32xf32>
    %55 = arith.mulf %54, %54 : vector<192x32xf32>
    %cst_42 = arith.constant dense<0.000000e+00> : vector<192xf32>
    %56 = vector.multi_reduction <add>, %55, %cst_42 [1] : vector<192x32xf32> to vector<192xf32>
    %57 = vector.shape_cast %56 : vector<192xf32> to vector<192x1xf32>
    %cst_43 = arith.constant dense<0.000000e+00> : vector<192x1xf32>
    %58 = tpu.matmul %49, %57, %cst_43 {dimension_numbers = #tpu.dot_dimension_numbers<[1], [0], [0], [1], [0, 0, 1, 1], [], []>} : vector<192x192xf32>, vector<192x1xf32>, vector<192x1xf32> -> vector<192x1xf32>
    %cst_44 = arith.constant 9.99999974E-6 : f32
    %59 = vector.broadcast %cst_44 : f32 to vector<192x1xf32>
    %60 = arith.addf %58, %59 : vector<192x1xf32>
    %61 = math.rsqrt %60 : vector<192x1xf32>
    %62 = vector.broadcast %61 : vector<192x1xf32> to vector<192x32xf32>
    %63 = arith.mulf %54, %62 : vector<192x32xf32>
    %c0_45 = arith.constant 0 : index
    %c0_46 = arith.constant 0 : index
    %64 = vector.load %arg18[%c0_45, %c0_46] : memref<192x32xf32, #tpu.memory_space<vmem>>, vector<192x32xf32>
    %65 = arith.mulf %63, %64 : vector<192x32xf32>
    %c0_47 = arith.constant 0 : index
    %c0_48 = arith.constant 0 : index
    %66 = vector.load %arg19[%c0_47, %c0_48] : memref<192x32xf32, #tpu.memory_space<vmem>>, vector<192x32xf32>
    %67 = arith.addf %65, %66 : vector<192x32xf32>
    %68 = arith.truncf %67 : vector<192x32xf32> to vector<192x32xbf16>
    %69 = vector.extract_strided_slice %68 {offsets = [0, 0], sizes = [160, 32], strides = [1, 1]} : vector<192x32xbf16> to vector<160x32xbf16>
    %c0_49 = arith.constant 0 : index
    %c0_50 = arith.constant 0 : index
    %c0_51 = arith.constant 0 : index
    %70 = vector.load %arg20[%c0_49, %c0_50, %c0_51] : memref<3x32x32xbf16, #tpu.memory_space<vmem>>, vector<1x32x32xbf16>
    %71 = vector.shape_cast %70 : vector<1x32x32xbf16> to vector<32x32xbf16>
    %cst_52 = arith.constant dense<0.000000e+00> : vector<160x32xf32>
    %72 = tpu.matmul %69, %71, %cst_52 {dimension_numbers = #tpu.dot_dimension_numbers<[1], [0], [0], [1], [0, 0, 1, 1], [], []>} : vector<160x32xbf16>, vector<32x32xbf16>, vector<160x32xf32> -> vector<160x32xf32>
    %73 = vector.extract_strided_slice %68 {offsets = [16, 0], sizes = [160, 32], strides = [1, 1]} : vector<192x32xbf16> to vector<160x32xbf16>
    %c1_53 = arith.constant 1 : index
    %c0_54 = arith.constant 0 : index
    %c0_55 = arith.constant 0 : index
    %74 = vector.load %arg20[%c1_53, %c0_54, %c0_55] : memref<3x32x32xbf16, #tpu.memory_space<vmem>>, vector<1x32x32xbf16>
    %75 = vector.shape_cast %74 : vector<1x32x32xbf16> to vector<32x32xbf16>
    %cst_56 = arith.constant dense<0.000000e+00> : vector<160x32xf32>
    %76 = tpu.matmul %73, %75, %cst_56 {dimension_numbers = #tpu.dot_dimension_numbers<[1], [0], [0], [1], [0, 0, 1, 1], [], []>} : vector<160x32xbf16>, vector<32x32xbf16>, vector<160x32xf32> -> vector<160x32xf32>
    %77 = arith.addf %72, %76 : vector<160x32xf32>
    %78 = vector.extract_strided_slice %68 {offsets = [32, 0], sizes = [160, 32], strides = [1, 1]} : vector<192x32xbf16> to vector<160x32xbf16>
    %c2_57 = arith.constant 2 : index
    %c0_58 = arith.constant 0 : index
    %c0_59 = arith.constant 0 : index
    %79 = vector.load %arg20[%c2_57, %c0_58, %c0_59] : memref<3x32x32xbf16, #tpu.memory_space<vmem>>, vector<1x32x32xbf16>
    %80 = vector.shape_cast %79 : vector<1x32x32xbf16> to vector<32x32xbf16>
    %cst_60 = arith.constant dense<0.000000e+00> : vector<160x32xf32>
    %81 = tpu.matmul %78, %80, %cst_60 {dimension_numbers = #tpu.dot_dimension_numbers<[1], [0], [0], [1], [0, 0, 1, 1], [], []>} : vector<160x32xbf16>, vector<32x32xbf16>, vector<160x32xf32> -> vector<160x32xf32>
    %82 = arith.addf %77, %81 : vector<160x32xf32>
    %c0_61 = arith.constant 0 : index
    %c0_62 = arith.constant 0 : index
    %83 = vector.load %arg21[%c0_61, %c0_62] : memref<1x32xf32, #tpu.memory_space<vmem>>, vector<1x32xf32>
    %84 = vector.broadcast %83 : vector<1x32xf32> to vector<160x32xf32>
    %85 = arith.addf %82, %84 : vector<160x32xf32>
    %cst_63 = arith.constant 0.000000e+00 : f32
    %86 = vector.broadcast %cst_63 : f32 to vector<160x32xf32>
    %87 = arith.maximumf %85, %86 : vector<160x32xf32>
    %c0_64 = arith.constant 0 : index
    %c0_65 = arith.constant 0 : index
    %88 = vector.load %arg4[%c0_64, %c0_65] : memref<160x160xbf16, #tpu.memory_space<vmem>>, vector<160x160xbf16>
    %89 = arith.truncf %87 : vector<160x32xf32> to vector<160x32xbf16>
    %cst_66 = arith.constant dense<0.000000e+00> : vector<160x32xf32>
    %90 = tpu.matmul %88, %89, %cst_66 {dimension_numbers = #tpu.dot_dimension_numbers<[1], [0], [0], [1], [0, 0, 1, 1], [], []>} : vector<160x160xbf16>, vector<160x32xbf16>, vector<160x32xf32> -> vector<160x32xf32>
    %c0_67 = arith.constant 0 : index
    %c0_68 = arith.constant 0 : index
    %91 = vector.load %arg22[%c0_67, %c0_68] : memref<32x32xbf16, #tpu.memory_space<vmem>>, vector<32x32xbf16>
    %92 = arith.truncf %90 : vector<160x32xf32> to vector<160x32xbf16>
    %cst_69 = arith.constant dense<0.000000e+00> : vector<160x32xf32>
    %93 = tpu.matmul %92, %91, %cst_69 {dimension_numbers = #tpu.dot_dimension_numbers<[1], [0], [0], [1], [0, 0, 1, 1], [], []>} : vector<160x32xbf16>, vector<32x32xbf16>, vector<160x32xf32> -> vector<160x32xf32>
    %c0_70 = arith.constant 0 : index
    %c0_71 = arith.constant 0 : index
    %94 = vector.load %arg23[%c0_70, %c0_71] : memref<1x32xf32, #tpu.memory_space<vmem>>, vector<1x32xf32>
    %95 = vector.broadcast %94 : vector<1x32xf32> to vector<160x32xf32>
    %96 = arith.addf %93, %95 : vector<160x32xf32>
    %cst_72 = arith.constant 0.000000e+00 : f32
    %97 = vector.broadcast %cst_72 : f32 to vector<160x32xf32>
    %98 = arith.maximumf %96, %97 : vector<160x32xf32>
    %99 = arith.truncf %98 : vector<160x32xf32> to vector<160x32xbf16>
    %100 = vector.extract_strided_slice %99 {offsets = [0, 0], sizes = [128, 32], strides = [1, 1]} : vector<160x32xbf16> to vector<128x32xbf16>
    %c0_73 = arith.constant 0 : index
    %c0_74 = arith.constant 0 : index
    %c0_75 = arith.constant 0 : index
    %101 = vector.load %arg24[%c0_73, %c0_74, %c0_75] : memref<3x32x32xbf16, #tpu.memory_space<vmem>>, vector<1x32x32xbf16>
    %102 = vector.shape_cast %101 : vector<1x32x32xbf16> to vector<32x32xbf16>
    %cst_76 = arith.constant dense<0.000000e+00> : vector<128x32xf32>
    %103 = tpu.matmul %100, %102, %cst_76 {dimension_numbers = #tpu.dot_dimension_numbers<[1], [0], [0], [1], [0, 0, 1, 1], [], []>} : vector<128x32xbf16>, vector<32x32xbf16>, vector<128x32xf32> -> vector<128x32xf32>
    %104 = vector.extract_strided_slice %99 {offsets = [16, 0], sizes = [128, 32], strides = [1, 1]} : vector<160x32xbf16> to vector<128x32xbf16>
    %c1_77 = arith.constant 1 : index
    %c0_78 = arith.constant 0 : index
    %c0_79 = arith.constant 0 : index
    %105 = vector.load %arg24[%c1_77, %c0_78, %c0_79] : memref<3x32x32xbf16, #tpu.memory_space<vmem>>, vector<1x32x32xbf16>
    %106 = vector.shape_cast %105 : vector<1x32x32xbf16> to vector<32x32xbf16>
    %cst_80 = arith.constant dense<0.000000e+00> : vector<128x32xf32>
    %107 = tpu.matmul %104, %106, %cst_80 {dimension_numbers = #tpu.dot_dimension_numbers<[1], [0], [0], [1], [0, 0, 1, 1], [], []>} : vector<128x32xbf16>, vector<32x32xbf16>, vector<128x32xf32> -> vector<128x32xf32>
    %108 = arith.addf %103, %107 : vector<128x32xf32>
    %109 = vector.extract_strided_slice %99 {offsets = [32, 0], sizes = [128, 32], strides = [1, 1]} : vector<160x32xbf16> to vector<128x32xbf16>
    %c2_81 = arith.constant 2 : index
    %c0_82 = arith.constant 0 : index
    %c0_83 = arith.constant 0 : index
    %110 = vector.load %arg24[%c2_81, %c0_82, %c0_83] : memref<3x32x32xbf16, #tpu.memory_space<vmem>>, vector<1x32x32xbf16>
    %111 = vector.shape_cast %110 : vector<1x32x32xbf16> to vector<32x32xbf16>
    %cst_84 = arith.constant dense<0.000000e+00> : vector<128x32xf32>
    %112 = tpu.matmul %109, %111, %cst_84 {dimension_numbers = #tpu.dot_dimension_numbers<[1], [0], [0], [1], [0, 0, 1, 1], [], []>} : vector<128x32xbf16>, vector<32x32xbf16>, vector<128x32xf32> -> vector<128x32xf32>
    %113 = arith.addf %108, %112 : vector<128x32xf32>
    %c0_85 = arith.constant 0 : index
    %c0_86 = arith.constant 0 : index
    %114 = vector.load %arg25[%c0_85, %c0_86] : memref<1x32xf32, #tpu.memory_space<vmem>>, vector<1x32xf32>
    %115 = vector.broadcast %114 : vector<1x32xf32> to vector<128x32xf32>
    %116 = arith.addf %113, %115 : vector<128x32xf32>
    %cst_87 = arith.constant 0.000000e+00 : f32
    %117 = vector.broadcast %cst_87 : f32 to vector<128x32xf32>
    %118 = arith.maximumf %116, %117 : vector<128x32xf32>
    %c0_88 = arith.constant 0 : index
    %c0_89 = arith.constant 0 : index
    %119 = vector.load %arg11[%c0_88, %c0_89] : memref<128x128xf32, #tpu.memory_space<vmem>>, vector<128x128xf32>
    %cst_90 = arith.constant dense<0.000000e+00> : vector<128xf32>
    %120 = vector.multi_reduction <add>, %118, %cst_90 [1] : vector<128x32xf32> to vector<128xf32>
    %121 = vector.shape_cast %120 : vector<128xf32> to vector<128x1xf32>
    %cst_91 = arith.constant dense<0.000000e+00> : vector<128x1xf32>
    %122 = tpu.matmul %119, %121, %cst_91 {dimension_numbers = #tpu.dot_dimension_numbers<[1], [0], [0], [1], [0, 0, 1, 1], [], []>} : vector<128x128xf32>, vector<128x1xf32>, vector<128x1xf32> -> vector<128x1xf32>
    %123 = vector.broadcast %122 : vector<128x1xf32> to vector<128x32xf32>
    %124 = arith.subf %118, %123 : vector<128x32xf32>
    %125 = arith.mulf %124, %124 : vector<128x32xf32>
    %cst_92 = arith.constant dense<0.000000e+00> : vector<128xf32>
    %126 = vector.multi_reduction <add>, %125, %cst_92 [1] : vector<128x32xf32> to vector<128xf32>
    %127 = vector.shape_cast %126 : vector<128xf32> to vector<128x1xf32>
    %cst_93 = arith.constant dense<0.000000e+00> : vector<128x1xf32>
    %128 = tpu.matmul %119, %127, %cst_93 {dimension_numbers = #tpu.dot_dimension_numbers<[1], [0], [0], [1], [0, 0, 1, 1], [], []>} : vector<128x128xf32>, vector<128x1xf32>, vector<128x1xf32> -> vector<128x1xf32>
    %cst_94 = arith.constant 9.99999974E-6 : f32
    %129 = vector.broadcast %cst_94 : f32 to vector<128x1xf32>
    %130 = arith.addf %128, %129 : vector<128x1xf32>
    %131 = math.rsqrt %130 : vector<128x1xf32>
    %132 = vector.broadcast %131 : vector<128x1xf32> to vector<128x32xf32>
    %133 = arith.mulf %124, %132 : vector<128x32xf32>
    %c0_95 = arith.constant 0 : index
    %c0_96 = arith.constant 0 : index
    %134 = vector.load %arg26[%c0_95, %c0_96] : memref<128x32xf32, #tpu.memory_space<vmem>>, vector<128x32xf32>
    %135 = arith.mulf %133, %134 : vector<128x32xf32>
    %c0_97 = arith.constant 0 : index
    %c0_98 = arith.constant 0 : index
    %136 = vector.load %arg27[%c0_97, %c0_98] : memref<128x32xf32, #tpu.memory_space<vmem>>, vector<128x32xf32>
    %137 = arith.addf %135, %136 : vector<128x32xf32>
    %138 = arith.truncf %137 : vector<128x32xf32> to vector<128x32xbf16>
    %139 = arith.truncf %17 : vector<128x32xf32> to vector<128x32xbf16>
    %c0_99 = arith.constant 0 : index
    %c0_100 = arith.constant 0 : index
    %140 = vector.load %arg34[%c0_99, %c0_100] : memref<32x32xbf16, #tpu.memory_space<vmem>>, vector<32x32xbf16>
    %cst_101 = arith.constant dense<0.000000e+00> : vector<128x32xf32>
    %141 = tpu.matmul %138, %140, %cst_101 {dimension_numbers = #tpu.dot_dimension_numbers<[1], [0], [0], [1], [0, 0, 1, 1], [], []>} : vector<128x32xbf16>, vector<32x32xbf16>, vector<128x32xf32> -> vector<128x32xf32>
    %c0_102 = arith.constant 0 : index
    %c0_103 = arith.constant 0 : index
    %142 = vector.load %arg35[%c0_102, %c0_103] : memref<32x32xbf16, #tpu.memory_space<vmem>>, vector<32x32xbf16>
    %cst_104 = arith.constant dense<0.000000e+00> : vector<128x32xf32>
    %143 = tpu.matmul %138, %142, %cst_104 {dimension_numbers = #tpu.dot_dimension_numbers<[1], [0], [0], [1], [0, 0, 1, 1], [], []>} : vector<128x32xbf16>, vector<32x32xbf16>, vector<128x32xf32> -> vector<128x32xf32>
    %c0_105 = arith.constant 0 : index
    %c0_106 = arith.constant 0 : index
    %144 = vector.load %arg34[%c0_105, %c0_106] : memref<32x32xbf16, #tpu.memory_space<vmem>>, vector<32x32xbf16>
    %cst_107 = arith.constant dense<0.000000e+00> : vector<128x32xf32>
    %145 = tpu.matmul %139, %144, %cst_107 {dimension_numbers = #tpu.dot_dimension_numbers<[1], [0], [0], [1], [0, 0, 1, 1], [], []>} : vector<128x32xbf16>, vector<32x32xbf16>, vector<128x32xf32> -> vector<128x32xf32>
    %c0_108 = arith.constant 0 : index
    %c0_109 = arith.constant 0 : index
    %146 = vector.load %arg35[%c0_108, %c0_109] : memref<32x32xbf16, #tpu.memory_space<vmem>>, vector<32x32xbf16>
    %cst_110 = arith.constant dense<0.000000e+00> : vector<128x32xf32>
    %147 = tpu.matmul %139, %146, %cst_110 {dimension_numbers = #tpu.dot_dimension_numbers<[1], [0], [0], [1], [0, 0, 1, 1], [], []>} : vector<128x32xbf16>, vector<32x32xbf16>, vector<128x32xf32> -> vector<128x32xf32>
    %c0_111 = arith.constant 0 : index
    %c0_112 = arith.constant 0 : index
    %148 = vector.load %arg6[%c0_111, %c0_112] : memref<128x128xbf16, #tpu.memory_space<vmem>>, vector<128x128xbf16>
    %149 = arith.truncf %141 : vector<128x32xf32> to vector<128x32xbf16>
    %cst_113 = arith.constant dense<0.000000e+00> : vector<128x32xf32>
    %150 = tpu.matmul %148, %149, %cst_113 {dimension_numbers = #tpu.dot_dimension_numbers<[1], [0], [0], [1], [0, 0, 1, 1], [], []>} : vector<128x128xbf16>, vector<128x32xbf16>, vector<128x32xf32> -> vector<128x32xf32>
    %c0_114 = arith.constant 0 : index
    %c0_115 = arith.constant 0 : index
    %151 = vector.load %arg7[%c0_114, %c0_115] : memref<128x128xbf16, #tpu.memory_space<vmem>>, vector<128x128xbf16>
    %152 = arith.truncf %143 : vector<128x32xf32> to vector<128x32xbf16>
    %cst_116 = arith.constant dense<0.000000e+00> : vector<128x32xf32>
    %153 = tpu.matmul %151, %152, %cst_116 {dimension_numbers = #tpu.dot_dimension_numbers<[1], [0], [0], [1], [0, 0, 1, 1], [], []>} : vector<128x128xbf16>, vector<128x32xbf16>, vector<128x32xf32> -> vector<128x32xf32>
    %154 = arith.addf %150, %153 : vector<128x32xf32>
    %c0_117 = arith.constant 0 : index
    %c0_118 = arith.constant 0 : index
    %155 = vector.load %arg8[%c0_117, %c0_118] : memref<128x128xbf16, #tpu.memory_space<vmem>>, vector<128x128xbf16>
    %156 = arith.truncf %145 : vector<128x32xf32> to vector<128x32xbf16>
    %cst_119 = arith.constant dense<0.000000e+00> : vector<128x32xf32>
    %157 = tpu.matmul %155, %156, %cst_119 {dimension_numbers = #tpu.dot_dimension_numbers<[1], [0], [0], [1], [0, 0, 1, 1], [], []>} : vector<128x128xbf16>, vector<128x32xbf16>, vector<128x32xf32> -> vector<128x32xf32>
    %158 = arith.addf %154, %157 : vector<128x32xf32>
    %c0_120 = arith.constant 0 : index
    %c0_121 = arith.constant 0 : index
    %159 = vector.load %arg9[%c0_120, %c0_121] : memref<128x128xbf16, #tpu.memory_space<vmem>>, vector<128x128xbf16>
    %160 = arith.truncf %147 : vector<128x32xf32> to vector<128x32xbf16>
    %cst_122 = arith.constant dense<0.000000e+00> : vector<128x32xf32>
    %161 = tpu.matmul %159, %160, %cst_122 {dimension_numbers = #tpu.dot_dimension_numbers<[1], [0], [0], [1], [0, 0, 1, 1], [], []>} : vector<128x128xbf16>, vector<128x32xbf16>, vector<128x32xf32> -> vector<128x32xf32>
    %162 = arith.addf %158, %161 : vector<128x32xf32>
    %c0_123 = arith.constant 0 : index
    %c0_124 = arith.constant 0 : index
    %163 = vector.load %arg36[%c0_123, %c0_124] : memref<1x32xf32, #tpu.memory_space<vmem>>, vector<1x32xf32>
    %164 = vector.broadcast %163 : vector<1x32xf32> to vector<128x32xf32>
    %165 = arith.addf %162, %164 : vector<128x32xf32>
    %c0_125 = arith.constant 0 : index
    %c0_126 = arith.constant 0 : index
    %166 = vector.load %arg5[%c0_125, %c0_126] : memref<128x128xbf16, #tpu.memory_space<vmem>>, vector<128x128xbf16>
    %167 = arith.truncf %165 : vector<128x32xf32> to vector<128x32xbf16>
    %cst_127 = arith.constant dense<0.000000e+00> : vector<128x32xf32>
    %168 = tpu.matmul %166, %167, %cst_127 {dimension_numbers = #tpu.dot_dimension_numbers<[1], [0], [0], [1], [0, 0, 1, 1], [], []>} : vector<128x128xbf16>, vector<128x32xbf16>, vector<128x32xf32> -> vector<128x32xf32>
    %c0_128 = arith.constant 0 : index
    %c0_129 = arith.constant 0 : index
    %169 = vector.load %arg30[%c0_128, %c0_129] : memref<32x32xbf16, #tpu.memory_space<vmem>>, vector<32x32xbf16>
    %170 = arith.truncf %168 : vector<128x32xf32> to vector<128x32xbf16>
    %cst_130 = arith.constant dense<0.000000e+00> : vector<128x32xf32>
    %171 = tpu.matmul %170, %169, %cst_130 {dimension_numbers = #tpu.dot_dimension_numbers<[1], [0], [0], [1], [0, 0, 1, 1], [], []>} : vector<128x32xbf16>, vector<32x32xbf16>, vector<128x32xf32> -> vector<128x32xf32>
    %c0_131 = arith.constant 0 : index
    %c0_132 = arith.constant 0 : index
    %172 = vector.load %arg31[%c0_131, %c0_132] : memref<1x32xf32, #tpu.memory_space<vmem>>, vector<1x32xf32>
    %173 = vector.broadcast %172 : vector<1x32xf32> to vector<128x32xf32>
    %174 = arith.addf %171, %173 : vector<128x32xf32>
    %cst_133 = arith.constant 0.000000e+00 : f32
    %175 = vector.broadcast %cst_133 : f32 to vector<128x32xf32>
    %176 = arith.maximumf %174, %175 : vector<128x32xf32>
    %c0_134 = arith.constant 0 : index
    %c0_135 = arith.constant 0 : index
    %177 = vector.load %arg11[%c0_134, %c0_135] : memref<128x128xf32, #tpu.memory_space<vmem>>, vector<128x128xf32>
    %cst_136 = arith.constant dense<0.000000e+00> : vector<128xf32>
    %178 = vector.multi_reduction <add>, %176, %cst_136 [1] : vector<128x32xf32> to vector<128xf32>
    %179 = vector.shape_cast %178 : vector<128xf32> to vector<128x1xf32>
    %cst_137 = arith.constant dense<0.000000e+00> : vector<128x1xf32>
    %180 = tpu.matmul %177, %179, %cst_137 {dimension_numbers = #tpu.dot_dimension_numbers<[1], [0], [0], [1], [0, 0, 1, 1], [], []>} : vector<128x128xf32>, vector<128x1xf32>, vector<128x1xf32> -> vector<128x1xf32>
    %181 = vector.broadcast %180 : vector<128x1xf32> to vector<128x32xf32>
    %182 = arith.subf %176, %181 : vector<128x32xf32>
    %183 = arith.mulf %182, %182 : vector<128x32xf32>
    %cst_138 = arith.constant dense<0.000000e+00> : vector<128xf32>
    %184 = vector.multi_reduction <add>, %183, %cst_138 [1] : vector<128x32xf32> to vector<128xf32>
    %185 = vector.shape_cast %184 : vector<128xf32> to vector<128x1xf32>
    %cst_139 = arith.constant dense<0.000000e+00> : vector<128x1xf32>
    %186 = tpu.matmul %177, %185, %cst_139 {dimension_numbers = #tpu.dot_dimension_numbers<[1], [0], [0], [1], [0, 0, 1, 1], [], []>} : vector<128x128xf32>, vector<128x1xf32>, vector<128x1xf32> -> vector<128x1xf32>
    %cst_140 = arith.constant 9.99999974E-6 : f32
    %187 = vector.broadcast %cst_140 : f32 to vector<128x1xf32>
    %188 = arith.addf %186, %187 : vector<128x1xf32>
    %189 = math.rsqrt %188 : vector<128x1xf32>
    %190 = vector.broadcast %189 : vector<128x1xf32> to vector<128x32xf32>
    %191 = arith.mulf %182, %190 : vector<128x32xf32>
    %c0_141 = arith.constant 0 : index
    %c0_142 = arith.constant 0 : index
    %192 = vector.load %arg32[%c0_141, %c0_142] : memref<128x32xf32, #tpu.memory_space<vmem>>, vector<128x32xf32>
    %193 = arith.mulf %191, %192 : vector<128x32xf32>
    %c0_143 = arith.constant 0 : index
    %c0_144 = arith.constant 0 : index
    %194 = vector.load %arg33[%c0_143, %c0_144] : memref<128x32xf32, #tpu.memory_space<vmem>>, vector<128x32xf32>
    %195 = arith.addf %193, %194 : vector<128x32xf32>
    %196 = arith.truncf %195 : vector<128x32xf32> to vector<128x32xbf16>
    %197 = arith.truncf %137 : vector<128x32xf32> to vector<128x32xbf16>
    %c0_145 = arith.constant 0 : index
    %c0_146 = arith.constant 0 : index
    %198 = vector.load %arg37[%c0_145, %c0_146] : memref<32x32xbf16, #tpu.memory_space<vmem>>, vector<32x32xbf16>
    %cst_147 = arith.constant dense<0.000000e+00> : vector<128x32xf32>
    %199 = tpu.matmul %196, %198, %cst_147 {dimension_numbers = #tpu.dot_dimension_numbers<[1], [0], [0], [1], [0, 0, 1, 1], [], []>} : vector<128x32xbf16>, vector<32x32xbf16>, vector<128x32xf32> -> vector<128x32xf32>
    %c0_148 = arith.constant 0 : index
    %c0_149 = arith.constant 0 : index
    %200 = vector.load %arg38[%c0_148, %c0_149] : memref<32x32xbf16, #tpu.memory_space<vmem>>, vector<32x32xbf16>
    %cst_150 = arith.constant dense<0.000000e+00> : vector<128x32xf32>
    %201 = tpu.matmul %196, %200, %cst_150 {dimension_numbers = #tpu.dot_dimension_numbers<[1], [0], [0], [1], [0, 0, 1, 1], [], []>} : vector<128x32xbf16>, vector<32x32xbf16>, vector<128x32xf32> -> vector<128x32xf32>
    %c0_151 = arith.constant 0 : index
    %c0_152 = arith.constant 0 : index
    %202 = vector.load %arg37[%c0_151, %c0_152] : memref<32x32xbf16, #tpu.memory_space<vmem>>, vector<32x32xbf16>
    %cst_153 = arith.constant dense<0.000000e+00> : vector<128x32xf32>
    %203 = tpu.matmul %197, %202, %cst_153 {dimension_numbers = #tpu.dot_dimension_numbers<[1], [0], [0], [1], [0, 0, 1, 1], [], []>} : vector<128x32xbf16>, vector<32x32xbf16>, vector<128x32xf32> -> vector<128x32xf32>
    %c0_154 = arith.constant 0 : index
    %c0_155 = arith.constant 0 : index
    %204 = vector.load %arg38[%c0_154, %c0_155] : memref<32x32xbf16, #tpu.memory_space<vmem>>, vector<32x32xbf16>
    %cst_156 = arith.constant dense<0.000000e+00> : vector<128x32xf32>
    %205 = tpu.matmul %197, %204, %cst_156 {dimension_numbers = #tpu.dot_dimension_numbers<[1], [0], [0], [1], [0, 0, 1, 1], [], []>} : vector<128x32xbf16>, vector<32x32xbf16>, vector<128x32xf32> -> vector<128x32xf32>
    %c0_157 = arith.constant 0 : index
    %c0_158 = arith.constant 0 : index
    %206 = vector.load %arg6[%c0_157, %c0_158] : memref<128x128xbf16, #tpu.memory_space<vmem>>, vector<128x128xbf16>
    %207 = arith.truncf %199 : vector<128x32xf32> to vector<128x32xbf16>
    %cst_159 = arith.constant dense<0.000000e+00> : vector<128x32xf32>
    %208 = tpu.matmul %206, %207, %cst_159 {dimension_numbers = #tpu.dot_dimension_numbers<[1], [0], [0], [1], [0, 0, 1, 1], [], []>} : vector<128x128xbf16>, vector<128x32xbf16>, vector<128x32xf32> -> vector<128x32xf32>
    %c0_160 = arith.constant 0 : index
    %c0_161 = arith.constant 0 : index
    %209 = vector.load %arg7[%c0_160, %c0_161] : memref<128x128xbf16, #tpu.memory_space<vmem>>, vector<128x128xbf16>
    %210 = arith.truncf %201 : vector<128x32xf32> to vector<128x32xbf16>
    %cst_162 = arith.constant dense<0.000000e+00> : vector<128x32xf32>
    %211 = tpu.matmul %209, %210, %cst_162 {dimension_numbers = #tpu.dot_dimension_numbers<[1], [0], [0], [1], [0, 0, 1, 1], [], []>} : vector<128x128xbf16>, vector<128x32xbf16>, vector<128x32xf32> -> vector<128x32xf32>
    %212 = arith.addf %208, %211 : vector<128x32xf32>
    %c0_163 = arith.constant 0 : index
    %c0_164 = arith.constant 0 : index
    %213 = vector.load %arg8[%c0_163, %c0_164] : memref<128x128xbf16, #tpu.memory_space<vmem>>, vector<128x128xbf16>
    %214 = arith.truncf %203 : vector<128x32xf32> to vector<128x32xbf16>
    %cst_165 = arith.constant dense<0.000000e+00> : vector<128x32xf32>
    %215 = tpu.matmul %213, %214, %cst_165 {dimension_numbers = #tpu.dot_dimension_numbers<[1], [0], [0], [1], [0, 0, 1, 1], [], []>} : vector<128x128xbf16>, vector<128x32xbf16>, vector<128x32xf32> -> vector<128x32xf32>
    %216 = arith.addf %212, %215 : vector<128x32xf32>
    %c0_166 = arith.constant 0 : index
    %c0_167 = arith.constant 0 : index
    %217 = vector.load %arg9[%c0_166, %c0_167] : memref<128x128xbf16, #tpu.memory_space<vmem>>, vector<128x128xbf16>
    %218 = arith.truncf %205 : vector<128x32xf32> to vector<128x32xbf16>
    %cst_168 = arith.constant dense<0.000000e+00> : vector<128x32xf32>
    %219 = tpu.matmul %217, %218, %cst_168 {dimension_numbers = #tpu.dot_dimension_numbers<[1], [0], [0], [1], [0, 0, 1, 1], [], []>} : vector<128x128xbf16>, vector<128x32xbf16>, vector<128x32xf32> -> vector<128x32xf32>
    %220 = arith.addf %216, %219 : vector<128x32xf32>
    %c0_169 = arith.constant 0 : index
    %c0_170 = arith.constant 0 : index
    %221 = vector.load %arg39[%c0_169, %c0_170] : memref<1x32xf32, #tpu.memory_space<vmem>>, vector<1x32xf32>
    %222 = vector.broadcast %221 : vector<1x32xf32> to vector<128x32xf32>
    %223 = arith.addf %220, %222 : vector<128x32xf32>
    %224 = arith.truncf %223 : vector<128x32xf32> to vector<128x32xbf16>
    %225 = vector.extract_strided_slice %224 {offsets = [0, 0], sizes = [16, 32], strides = [1, 1]} : vector<128x32xbf16> to vector<16x32xbf16>
    %c0_171 = arith.constant 0 : index
    %c0_172 = arith.constant 0 : index
    %c0_173 = arith.constant 0 : index
    %226 = vector.load %arg40[%c0_171, %c0_172, %c0_173] : memref<8x32x32xbf16, #tpu.memory_space<vmem>>, vector<1x32x32xbf16>
    %227 = vector.shape_cast %226 : vector<1x32x32xbf16> to vector<32x32xbf16>
    %cst_174 = arith.constant dense<0.000000e+00> : vector<16x32xf32>
    %228 = tpu.matmul %225, %227, %cst_174 {dimension_numbers = #tpu.dot_dimension_numbers<[1], [0], [0], [1], [0, 0, 1, 1], [], []>} : vector<16x32xbf16>, vector<32x32xbf16>, vector<16x32xf32> -> vector<16x32xf32>
    %229 = vector.extract_strided_slice %224 {offsets = [16, 0], sizes = [16, 32], strides = [1, 1]} : vector<128x32xbf16> to vector<16x32xbf16>
    %c1_175 = arith.constant 1 : index
    %c0_176 = arith.constant 0 : index
    %c0_177 = arith.constant 0 : index
    %230 = vector.load %arg40[%c1_175, %c0_176, %c0_177] : memref<8x32x32xbf16, #tpu.memory_space<vmem>>, vector<1x32x32xbf16>
    %231 = vector.shape_cast %230 : vector<1x32x32xbf16> to vector<32x32xbf16>
    %cst_178 = arith.constant dense<0.000000e+00> : vector<16x32xf32>
    %232 = tpu.matmul %229, %231, %cst_178 {dimension_numbers = #tpu.dot_dimension_numbers<[1], [0], [0], [1], [0, 0, 1, 1], [], []>} : vector<16x32xbf16>, vector<32x32xbf16>, vector<16x32xf32> -> vector<16x32xf32>
    %233 = arith.addf %228, %232 : vector<16x32xf32>
    %234 = vector.extract_strided_slice %224 {offsets = [32, 0], sizes = [16, 32], strides = [1, 1]} : vector<128x32xbf16> to vector<16x32xbf16>
    %c2_179 = arith.constant 2 : index
    %c0_180 = arith.constant 0 : index
    %c0_181 = arith.constant 0 : index
    %235 = vector.load %arg40[%c2_179, %c0_180, %c0_181] : memref<8x32x32xbf16, #tpu.memory_space<vmem>>, vector<1x32x32xbf16>
    %236 = vector.shape_cast %235 : vector<1x32x32xbf16> to vector<32x32xbf16>
    %cst_182 = arith.constant dense<0.000000e+00> : vector<16x32xf32>
    %237 = tpu.matmul %234, %236, %cst_182 {dimension_numbers = #tpu.dot_dimension_numbers<[1], [0], [0], [1], [0, 0, 1, 1], [], []>} : vector<16x32xbf16>, vector<32x32xbf16>, vector<16x32xf32> -> vector<16x32xf32>
    %238 = arith.addf %233, %237 : vector<16x32xf32>
    %239 = vector.extract_strided_slice %224 {offsets = [48, 0], sizes = [16, 32], strides = [1, 1]} : vector<128x32xbf16> to vector<16x32xbf16>
    %c3 = arith.constant 3 : index
    %c0_183 = arith.constant 0 : index
    %c0_184 = arith.constant 0 : index
    %240 = vector.load %arg40[%c3, %c0_183, %c0_184] : memref<8x32x32xbf16, #tpu.memory_space<vmem>>, vector<1x32x32xbf16>
    %241 = vector.shape_cast %240 : vector<1x32x32xbf16> to vector<32x32xbf16>
    %cst_185 = arith.constant dense<0.000000e+00> : vector<16x32xf32>
    %242 = tpu.matmul %239, %241, %cst_185 {dimension_numbers = #tpu.dot_dimension_numbers<[1], [0], [0], [1], [0, 0, 1, 1], [], []>} : vector<16x32xbf16>, vector<32x32xbf16>, vector<16x32xf32> -> vector<16x32xf32>
    %243 = arith.addf %238, %242 : vector<16x32xf32>
    %244 = vector.extract_strided_slice %224 {offsets = [64, 0], sizes = [16, 32], strides = [1, 1]} : vector<128x32xbf16> to vector<16x32xbf16>
    %c4 = arith.constant 4 : index
    %c0_186 = arith.constant 0 : index
    %c0_187 = arith.constant 0 : index
    %245 = vector.load %arg40[%c4, %c0_186, %c0_187] : memref<8x32x32xbf16, #tpu.memory_space<vmem>>, vector<1x32x32xbf16>
    %246 = vector.shape_cast %245 : vector<1x32x32xbf16> to vector<32x32xbf16>
    %cst_188 = arith.constant dense<0.000000e+00> : vector<16x32xf32>
    %247 = tpu.matmul %244, %246, %cst_188 {dimension_numbers = #tpu.dot_dimension_numbers<[1], [0], [0], [1], [0, 0, 1, 1], [], []>} : vector<16x32xbf16>, vector<32x32xbf16>, vector<16x32xf32> -> vector<16x32xf32>
    %248 = arith.addf %243, %247 : vector<16x32xf32>
    %249 = vector.extract_strided_slice %224 {offsets = [80, 0], sizes = [16, 32], strides = [1, 1]} : vector<128x32xbf16> to vector<16x32xbf16>
    %c5 = arith.constant 5 : index
    %c0_189 = arith.constant 0 : index
    %c0_190 = arith.constant 0 : index
    %250 = vector.load %arg40[%c5, %c0_189, %c0_190] : memref<8x32x32xbf16, #tpu.memory_space<vmem>>, vector<1x32x32xbf16>
    %251 = vector.shape_cast %250 : vector<1x32x32xbf16> to vector<32x32xbf16>
    %cst_191 = arith.constant dense<0.000000e+00> : vector<16x32xf32>
    %252 = tpu.matmul %249, %251, %cst_191 {dimension_numbers = #tpu.dot_dimension_numbers<[1], [0], [0], [1], [0, 0, 1, 1], [], []>} : vector<16x32xbf16>, vector<32x32xbf16>, vector<16x32xf32> -> vector<16x32xf32>
    %253 = arith.addf %248, %252 : vector<16x32xf32>
    %254 = vector.extract_strided_slice %224 {offsets = [96, 0], sizes = [16, 32], strides = [1, 1]} : vector<128x32xbf16> to vector<16x32xbf16>
    %c6 = arith.constant 6 : index
    %c0_192 = arith.constant 0 : index
    %c0_193 = arith.constant 0 : index
    %255 = vector.load %arg40[%c6, %c0_192, %c0_193] : memref<8x32x32xbf16, #tpu.memory_space<vmem>>, vector<1x32x32xbf16>
    %256 = vector.shape_cast %255 : vector<1x32x32xbf16> to vector<32x32xbf16>
    %cst_194 = arith.constant dense<0.000000e+00> : vector<16x32xf32>
    %257 = tpu.matmul %254, %256, %cst_194 {dimension_numbers = #tpu.dot_dimension_numbers<[1], [0], [0], [1], [0, 0, 1, 1], [], []>} : vector<16x32xbf16>, vector<32x32xbf16>, vector<16x32xf32> -> vector<16x32xf32>
    %258 = arith.addf %253, %257 : vector<16x32xf32>
    %259 = vector.extract_strided_slice %224 {offsets = [112, 0], sizes = [16, 32], strides = [1, 1]} : vector<128x32xbf16> to vector<16x32xbf16>
    %c7 = arith.constant 7 : index
    %c0_195 = arith.constant 0 : index
    %c0_196 = arith.constant 0 : index
    %260 = vector.load %arg40[%c7, %c0_195, %c0_196] : memref<8x32x32xbf16, #tpu.memory_space<vmem>>, vector<1x32x32xbf16>
    %261 = vector.shape_cast %260 : vector<1x32x32xbf16> to vector<32x32xbf16>
    %cst_197 = arith.constant dense<0.000000e+00> : vector<16x32xf32>
    %262 = tpu.matmul %259, %261, %cst_197 {dimension_numbers = #tpu.dot_dimension_numbers<[1], [0], [0], [1], [0, 0, 1, 1], [], []>} : vector<16x32xbf16>, vector<32x32xbf16>, vector<16x32xf32> -> vector<16x32xf32>
    %263 = arith.addf %258, %262 : vector<16x32xf32>
    %c0_198 = arith.constant 0 : index
    %c0_199 = arith.constant 0 : index
    %264 = vector.load %arg41[%c0_198, %c0_199] : memref<1x32xf32, #tpu.memory_space<vmem>>, vector<1x32xf32>
    %265 = vector.broadcast %264 : vector<1x32xf32> to vector<16x32xf32>
    %266 = arith.addf %263, %265 : vector<16x32xf32>
    %267 = vector.shape_cast %266 : vector<16x32xf32> to vector<1x16x32xf32>
    %cst_200 = arith.constant dense<0.000000e+00> : vector<1xf32>
    %268 = vector.multi_reduction <add>, %267, %cst_200 [1, 2] : vector<1x16x32xf32> to vector<1xf32>
    %269 = vector.shape_cast %268 : vector<1xf32> to vector<1x1x1xf32>
    %270 = vector.extract %269[0, 0, 0] : f32 from vector<1x1x1xf32>
    %271 = vector.broadcast %270 : f32 to vector<1x1xf32>
    %cst_201 = arith.constant 5.120000e+02 : f32
    %272 = vector.broadcast %cst_201 : f32 to vector<1x1xf32>
    %273 = arith.divf %271, %272 : vector<1x1xf32>
    %274 = vector.broadcast %273 : vector<1x1xf32> to vector<16x32xf32>
    %275 = arith.subf %266, %274 : vector<16x32xf32>
    %276 = arith.mulf %275, %275 : vector<16x32xf32>
    %277 = vector.shape_cast %276 : vector<16x32xf32> to vector<1x16x32xf32>
    %cst_202 = arith.constant dense<0.000000e+00> : vector<1xf32>
    %278 = vector.multi_reduction <add>, %277, %cst_202 [1, 2] : vector<1x16x32xf32> to vector<1xf32>
    %279 = vector.shape_cast %278 : vector<1xf32> to vector<1x1x1xf32>
    %280 = vector.extract %279[0, 0, 0] : f32 from vector<1x1x1xf32>
    %281 = vector.broadcast %280 : f32 to vector<1x1xf32>
    %cst_203 = arith.constant 5.120000e+02 : f32
    %282 = vector.broadcast %cst_203 : f32 to vector<1x1xf32>
    %283 = arith.divf %281, %282 : vector<1x1xf32>
    %cst_204 = arith.constant 9.99999974E-6 : f32
    %284 = vector.broadcast %cst_204 : f32 to vector<1x1xf32>
    %285 = arith.addf %283, %284 : vector<1x1xf32>
    %286 = math.rsqrt %285 : vector<1x1xf32>
    %287 = vector.broadcast %286 : vector<1x1xf32> to vector<16x32xf32>
    %288 = arith.mulf %275, %287 : vector<16x32xf32>
    %c0_205 = arith.constant 0 : index
    %c0_206 = arith.constant 0 : index
    %289 = vector.load %arg42[%c0_205, %c0_206] : memref<16x32xf32, #tpu.memory_space<vmem>>, vector<16x32xf32>
    %290 = arith.mulf %288, %289 : vector<16x32xf32>
    %c0_207 = arith.constant 0 : index
    %c0_208 = arith.constant 0 : index
    %291 = vector.load %arg43[%c0_207, %c0_208] : memref<16x32xf32, #tpu.memory_space<vmem>>, vector<16x32xf32>
    %292 = arith.addf %290, %291 : vector<16x32xf32>
    %c0_209 = arith.constant 0 : index
    %c0_210 = arith.constant 0 : index
    %293 = vector.load %arg44[%c0_209, %c0_210] : memref<32x32xbf16, #tpu.memory_space<vmem>>, vector<32x32xbf16>
    %294 = arith.truncf %292 : vector<16x32xf32> to vector<16x32xbf16>
    %cst_211 = arith.constant dense<0.000000e+00> : vector<16x32xf32>
    %295 = tpu.matmul %294, %293, %cst_211 {dimension_numbers = #tpu.dot_dimension_numbers<[1], [0], [0], [1], [0, 0, 1, 1], [], []>} : vector<16x32xbf16>, vector<32x32xbf16>, vector<16x32xf32> -> vector<16x32xf32>
    %c0_212 = arith.constant 0 : index
    %c0_213 = arith.constant 0 : index
    %296 = vector.load %arg45[%c0_212, %c0_213] : memref<1x32xf32, #tpu.memory_space<vmem>>, vector<1x32xf32>
    %297 = vector.broadcast %296 : vector<1x32xf32> to vector<16x32xf32>
    %298 = arith.addf %295, %297 : vector<16x32xf32>
    %c0_214 = arith.constant 0 : index
    %c0_215 = arith.constant 0 : index
    %299 = vector.load %arg46[%c0_214, %c0_215] : memref<32x1xbf16, #tpu.memory_space<vmem>>, vector<32x1xbf16>
    %300 = arith.truncf %298 : vector<16x32xf32> to vector<16x32xbf16>
    %cst_216 = arith.constant dense<0.000000e+00> : vector<16x1xf32>
    %301 = tpu.matmul %300, %299, %cst_216 {dimension_numbers = #tpu.dot_dimension_numbers<[1], [0], [0], [1], [0, 0, 1, 1], [], []>} : vector<16x32xbf16>, vector<32x1xbf16>, vector<16x1xf32> -> vector<16x1xf32>
    %c0_217 = arith.constant 0 : index
    %c0_218 = arith.constant 0 : index
    %302 = vector.load %arg47[%c0_217, %c0_218] : memref<1x1xf32, #tpu.memory_space<vmem>>, vector<1x1xf32>
    %303 = vector.broadcast %302 : vector<1x1xf32> to vector<16x1xf32>
    %304 = arith.addf %301, %303 : vector<16x1xf32>
    %c0_219 = arith.constant 0 : index
    %c0_220 = arith.constant 0 : index
    %305 = vector.load %arg48[%c0_219, %c0_220] : memref<16x7xf32, #tpu.memory_space<vmem>>, vector<16x7xf32>
    %306 = vector.broadcast %304 : vector<16x1xf32> to vector<16x7xf32>
    %307 = arith.mulf %306, %305 : vector<16x7xf32>
    %cst_221 = arith.constant dense<0.000000e+00> : vector<7xf32>
    %308 = vector.multi_reduction <add>, %307, %cst_221 [0] : vector<16x7xf32> to vector<7xf32>
    %309 = vector.shape_cast %308 : vector<7xf32> to vector<1x7xf32>
    %c0_222 = arith.constant 0 : index
    %c0_223 = arith.constant 0 : index
    %310 = vector.load %arg49[%c0_222, %c0_223] : memref<1x7xf32, #tpu.memory_space<vmem>>, vector<1x7xf32>
    %311 = arith.addf %309, %310 : vector<1x7xf32>
    %c0_224 = arith.constant 0 : index
    %c0_225 = arith.constant 0 : index
    %c0_226 = arith.constant 0 : index
    %312 = vector.load %arg50[%c0_224, %c0_225, %c0_226] : memref<1x1x7xf32, #tpu.memory_space<vmem>>, vector<1x1x7xf32>
    %313 = vector.shape_cast %312 : vector<1x1x7xf32> to vector<1x7xf32>
    %314 = vector.shape_cast %311 : vector<1x7xf32> to vector<1x1x7xf32>
    tpu.vector_store %arg50[%c0_224, %c0_225, %c0_226], %314 {strides = array<i32>} : memref<1x1x7xf32, #tpu.memory_space<vmem>>, vector<1x1x7xf32>,
    return
  }
  func.func @transform_0(%arg0: i32) -> (i32, i32, i32) {
    %c0_i32 = arith.constant 0 : i32
    %c0_i32_0 = arith.constant 0 : i32
    %c0_i32_1 = arith.constant 0 : i32
    return %arg0, %c0_i32, %c0_i32_0 : i32, i32, i32
  }
  func.func @transform_1(%arg0: i32) -> (i32, i32, i32) {
    %c0_i32 = arith.constant 0 : i32
    %c0_i32_0 = arith.constant 0 : i32
    %c0_i32_1 = arith.constant 0 : i32
    return %arg0, %c0_i32, %c0_i32_0 : i32, i32, i32
  }
  func.func @transform_2(%arg0: i32) -> (i32, i32) {
    %c0_i32 = arith.constant 0 : i32
    %c0_i32_0 = arith.constant 0 : i32
    %c0_i32_1 = arith.constant 0 : i32
    return %c0_i32, %c0_i32_0 : i32, i32
  }
  func.func @transform_3(%arg0: i32) -> (i32, i32) {
    %c0_i32 = arith.constant 0 : i32
    %c0_i32_0 = arith.constant 0 : i32
    %c0_i32_1 = arith.constant 0 : i32
    return %c0_i32, %c0_i32_0 : i32, i32
  }
  func.func @transform_4(%arg0: i32) -> (i32, i32) {
    %c0_i32 = arith.constant 0 : i32
    %c0_i32_0 = arith.constant 0 : i32
    %c0_i32_1 = arith.constant 0 : i32
    return %c0_i32, %c0_i32_0 : i32, i32
  }
  func.func @transform_5(%arg0: i32) -> (i32, i32) {
    %c0_i32 = arith.constant 0 : i32
    %c0_i32_0 = arith.constant 0 : i32
    %c0_i32_1 = arith.constant 0 : i32
    return %c0_i32, %c0_i32_0 : i32, i32
  }
  func.func @transform_6(%arg0: i32) -> (i32, i32) {
    %c0_i32 = arith.constant 0 : i32
    %c0_i32_0 = arith.constant 0 : i32
    %c0_i32_1 = arith.constant 0 : i32
    return %c0_i32, %c0_i32_0 : i32, i32
  }
  func.func @transform_7(%arg0: i32) -> (i32, i32) {
    %c0_i32 = arith.constant 0 : i32
    %c0_i32_0 = arith.constant 0 : i32
    %c0_i32_1 = arith.constant 0 : i32
    return %c0_i32, %c0_i32_0 : i32, i32
  }
  func.func @transform_8(%arg0: i32) -> (i32, i32) {
    %c0_i32 = arith.constant 0 : i32
    %c0_i32_0 = arith.constant 0 : i32
    %c0_i32_1 = arith.constant 0 : i32
    return %c0_i32, %c0_i32_0 : i32, i32
  }
  func.func @transform_9(%arg0: i32) -> (i32, i32) {
    %c0_i32 = arith.constant 0 : i32
    %c0_i32_0 = arith.constant 0 : i32
    %c0_i32_1 = arith.constant 0 : i32
    return %c0_i32, %c0_i32_0 : i32, i32
  }
  func.func @transform_10(%arg0: i32) -> (i32, i32) {
    %c0_i32 = arith.constant 0 : i32
    %c0_i32_0 = arith.constant 0 : i32
    %c0_i32_1 = arith.constant 0 : i32
    return %c0_i32, %c0_i32_0 : i32, i32
  }
  func.func @transform_11(%arg0: i32) -> (i32, i32) {
    %c0_i32 = arith.constant 0 : i32
    %c0_i32_0 = arith.constant 0 : i32
    %c0_i32_1 = arith.constant 0 : i32
    return %c0_i32, %c0_i32_0 : i32, i32
  }
  func.func @transform_12(%arg0: i32) -> (i32, i32) {
    %c0_i32 = arith.constant 0 : i32
    %c0_i32_0 = arith.constant 0 : i32
    %c0_i32_1 = arith.constant 0 : i32
    return %c0_i32, %c0_i32_0 : i32, i32
  }
  func.func @transform_13(%arg0: i32) -> (i32, i32) {
    %c0_i32 = arith.constant 0 : i32
    %c0_i32_0 = arith.constant 0 : i32
    %c0_i32_1 = arith.constant 0 : i32
    return %c0_i32, %c0_i32_0 : i32, i32
  }
  func.func @transform_14(%arg0: i32) -> (i32, i32) {
    %c0_i32 = arith.constant 0 : i32
    %c0_i32_0 = arith.constant 0 : i32
    %c0_i32_1 = arith.constant 0 : i32
    return %c0_i32, %c0_i32_0 : i32, i32
  }
  func.func @transform_15(%arg0: i32) -> (i32, i32, i32) {
    %c0_i32 = arith.constant 0 : i32
    %c0_i32_0 = arith.constant 0 : i32
    %c0_i32_1 = arith.constant 0 : i32
    %c0_i32_2 = arith.constant 0 : i32
    return %c0_i32, %c0_i32_0, %c0_i32_1 : i32, i32, i32
  }
  func.func @transform_16(%arg0: i32) -> (i32, i32) {
    %c0_i32 = arith.constant 0 : i32
    %c0_i32_0 = arith.constant 0 : i32
    %c0_i32_1 = arith.constant 0 : i32
    return %c0_i32, %c0_i32_0 : i32, i32
  }
  func.func @transform_17(%arg0: i32) -> (i32, i32) {
    %c0_i32 = arith.constant 0 : i32
    %c0_i32_0 = arith.constant 0 : i32
    %c0_i32_1 = arith.constant 0 : i32
    return %c0_i32, %c0_i32_0 : i32, i32
  }
  func.func @transform_18(%arg0: i32) -> (i32, i32) {
    %c0_i32 = arith.constant 0 : i32
    %c0_i32_0 = arith.constant 0 : i32
    %c0_i32_1 = arith.constant 0 : i32
    return %c0_i32, %c0_i32_0 : i32, i32
  }
  func.func @transform_19(%arg0: i32) -> (i32, i32, i32) {
    %c0_i32 = arith.constant 0 : i32
    %c0_i32_0 = arith.constant 0 : i32
    %c0_i32_1 = arith.constant 0 : i32
    %c0_i32_2 = arith.constant 0 : i32
    return %c0_i32, %c0_i32_0, %c0_i32_1 : i32, i32, i32
  }
  func.func @transform_20(%arg0: i32) -> (i32, i32) {
    %c0_i32 = arith.constant 0 : i32
    %c0_i32_0 = arith.constant 0 : i32
    %c0_i32_1 = arith.constant 0 : i32
    return %c0_i32, %c0_i32_0 : i32, i32
  }
  func.func @transform_21(%arg0: i32) -> (i32, i32) {
    %c0_i32 = arith.constant 0 : i32
    %c0_i32_0 = arith.constant 0 : i32
    %c0_i32_1 = arith.constant 0 : i32
    return %c0_i32, %c0_i32_0 : i32, i32
  }
  func.func @transform_22(%arg0: i32) -> (i32, i32) {
    %c0_i32 = arith.constant 0 : i32
    %c0_i32_0 = arith.constant 0 : i32
    %c0_i32_1 = arith.constant 0 : i32
    return %c0_i32, %c0_i32_0 : i32, i32
  }
  func.func @transform_23(%arg0: i32) -> (i32, i32, i32) {
    %c0_i32 = arith.constant 0 : i32
    %c0_i32_0 = arith.constant 0 : i32
    %c0_i32_1 = arith.constant 0 : i32
    %c0_i32_2 = arith.constant 0 : i32
    return %c0_i32, %c0_i32_0, %c0_i32_1 : i32, i32, i32
  }
  func.func @transform_24(%arg0: i32) -> (i32, i32) {
    %c0_i32 = arith.constant 0 : i32
    %c0_i32_0 = arith.constant 0 : i32
    %c0_i32_1 = arith.constant 0 : i32
    return %c0_i32, %c0_i32_0 : i32, i32
  }
  func.func @transform_25(%arg0: i32) -> (i32, i32) {
    %c0_i32 = arith.constant 0 : i32
    %c0_i32_0 = arith.constant 0 : i32
    %c0_i32_1 = arith.constant 0 : i32
    return %c0_i32, %c0_i32_0 : i32, i32
  }
  func.func @transform_26(%arg0: i32) -> (i32, i32) {
    %c0_i32 = arith.constant 0 : i32
    %c0_i32_0 = arith.constant 0 : i32
    %c0_i32_1 = arith.constant 0 : i32
    return %c0_i32, %c0_i32_0 : i32, i32
  }
  func.func @transform_27(%arg0: i32) -> (i32, i32) {
    %c0_i32 = arith.constant 0 : i32
    %c0_i32_0 = arith.constant 0 : i32
    %c0_i32_1 = arith.constant 0 : i32
    return %c0_i32, %c0_i32_0 : i32, i32
  }
  func.func @transform_28(%arg0: i32) -> (i32, i32) {
    %c0_i32 = arith.constant 0 : i32
    %c0_i32_0 = arith.constant 0 : i32
    %c0_i32_1 = arith.constant 0 : i32
    return %c0_i32, %c0_i32_0 : i32, i32
  }
  func.func @transform_29(%arg0: i32) -> (i32, i32) {
    %c0_i32 = arith.constant 0 : i32
    %c0_i32_0 = arith.constant 0 : i32
    %c0_i32_1 = arith.constant 0 : i32
    return %c0_i32, %c0_i32_0 : i32, i32
  }
  func.func @transform_30(%arg0: i32) -> (i32, i32) {
    %c0_i32 = arith.constant 0 : i32
    %c0_i32_0 = arith.constant 0 : i32
    %c0_i32_1 = arith.constant 0 : i32
    return %c0_i32, %c0_i32_0 : i32, i32
  }
  func.func @transform_31(%arg0: i32) -> (i32, i32) {
    %c0_i32 = arith.constant 0 : i32
    %c0_i32_0 = arith.constant 0 : i32
    %c0_i32_1 = arith.constant 0 : i32
    return %c0_i32, %c0_i32_0 : i32, i32
  }
  func.func @transform_32(%arg0: i32) -> (i32, i32) {
    %c0_i32 = arith.constant 0 : i32
    %c0_i32_0 = arith.constant 0 : i32
    %c0_i32_1 = arith.constant 0 : i32
    return %c0_i32, %c0_i32_0 : i32, i32
  }
  func.func @transform_33(%arg0: i32) -> (i32, i32) {
    %c0_i32 = arith.constant 0 : i32
    %c0_i32_0 = arith.constant 0 : i32
    %c0_i32_1 = arith.constant 0 : i32
    return %c0_i32, %c0_i32_0 : i32, i32
  }
  func.func @transform_34(%arg0: i32) -> (i32, i32) {
    %c0_i32 = arith.constant 0 : i32
    %c0_i32_0 = arith.constant 0 : i32
    %c0_i32_1 = arith.constant 0 : i32
    return %c0_i32, %c0_i32_0 : i32, i32
  }
  func.func @transform_35(%arg0: i32) -> (i32, i32) {
    %c0_i32 = arith.constant 0 : i32
    %c0_i32_0 = arith.constant 0 : i32
    %c0_i32_1 = arith.constant 0 : i32
    return %c0_i32, %c0_i32_0 : i32, i32
  }
  func.func @transform_36(%arg0: i32) -> (i32, i32) {
    %c0_i32 = arith.constant 0 : i32
    %c0_i32_0 = arith.constant 0 : i32
    %c0_i32_1 = arith.constant 0 : i32
    return %c0_i32, %c0_i32_0 : i32, i32
  }
  func.func @transform_37(%arg0: i32) -> (i32, i32) {
    %c0_i32 = arith.constant 0 : i32
    %c0_i32_0 = arith.constant 0 : i32
    %c0_i32_1 = arith.constant 0 : i32
    return %c0_i32, %c0_i32_0 : i32, i32
  }
  func.func @transform_38(%arg0: i32) -> (i32, i32) {
    %c0_i32 = arith.constant 0 : i32
    %c0_i32_0 = arith.constant 0 : i32
    %c0_i32_1 = arith.constant 0 : i32
    return %c0_i32, %c0_i32_0 : i32, i32
  }
  func.func @transform_39(%arg0: i32) -> (i32, i32, i32) {
    %c0_i32 = arith.constant 0 : i32
    %c0_i32_0 = arith.constant 0 : i32
    %c0_i32_1 = arith.constant 0 : i32
    %c0_i32_2 = arith.constant 0 : i32
    return %c0_i32, %c0_i32_0, %c0_i32_1 : i32, i32, i32
  }
  func.func @transform_40(%arg0: i32) -> (i32, i32) {
    %c0_i32 = arith.constant 0 : i32
    %c0_i32_0 = arith.constant 0 : i32
    %c0_i32_1 = arith.constant 0 : i32
    return %c0_i32, %c0_i32_0 : i32, i32
  }
  func.func @transform_41(%arg0: i32) -> (i32, i32) {
    %c0_i32 = arith.constant 0 : i32
    %c0_i32_0 = arith.constant 0 : i32
    %c0_i32_1 = arith.constant 0 : i32
    return %c0_i32, %c0_i32_0 : i32, i32
  }
  func.func @transform_42(%arg0: i32) -> (i32, i32) {
    %c0_i32 = arith.constant 0 : i32
    %c0_i32_0 = arith.constant 0 : i32
    %c0_i32_1 = arith.constant 0 : i32
    return %c0_i32, %c0_i32_0 : i32, i32
  }
  func.func @transform_43(%arg0: i32) -> (i32, i32) {
    %c0_i32 = arith.constant 0 : i32
    %c0_i32_0 = arith.constant 0 : i32
    %c0_i32_1 = arith.constant 0 : i32
    return %c0_i32, %c0_i32_0 : i32, i32
  }
  func.func @transform_44(%arg0: i32) -> (i32, i32) {
    %c0_i32 = arith.constant 0 : i32
    %c0_i32_0 = arith.constant 0 : i32
    %c0_i32_1 = arith.constant 0 : i32
    return %c0_i32, %c0_i32_0 : i32, i32
  }
  func.func @transform_45(%arg0: i32) -> (i32, i32) {
    %c0_i32 = arith.constant 0 : i32
    %c0_i32_0 = arith.constant 0 : i32
    %c0_i32_1 = arith.constant 0 : i32
    return %c0_i32, %c0_i32_0 : i32, i32
  }
  func.func @transform_46(%arg0: i32) -> (i32, i32) {
    %c0_i32 = arith.constant 0 : i32
    %c0_i32_0 = arith.constant 0 : i32
    %c0_i32_1 = arith.constant 0 : i32
    return %c0_i32, %c0_i32_0 : i32, i32
  }
  func.func @transform_47(%arg0: i32) -> (i32, i32) {
    %c0_i32 = arith.constant 0 : i32
    %c0_i32_0 = arith.constant 0 : i32
    %c0_i32_1 = arith.constant 0 : i32
    return %c0_i32, %c0_i32_0 : i32, i32
  }
  func.func @transform_48(%arg0: i32) -> (i32, i32) {
    %c0_i32 = arith.constant 0 : i32
    %c0_i32_0 = arith.constant 0 : i32
    %c0_i32_1 = arith.constant 0 : i32
    return %c0_i32, %c0_i32_0 : i32, i32
  }
  func.func @transform_49(%arg0: i32) -> (i32, i32, i32) {
    %c0_i32 = arith.constant 0 : i32
    %c0_i32_0 = arith.constant 0 : i32
    %c0_i32_1 = arith.constant 0 : i32
    return %arg0, %c0_i32, %c0_i32_0 : i32, i32, i32
  }
}

</mosaic_0001>

<llo_original>
// kernel: forward.1
$region0: #{forward.1}
  #allocation0 [shape = 'u32[]', space=smem, size = 0x4, offset = 0x4, fixed_abs, tag = 'smem constant byte address 0x4 - core index']
  #allocation1 [shape = 'u32[144,128]{1,0:T(1,128)}', space=vmem, size = 0x12000, scoped, tag = 'internal scratch']
  #allocation2 [shape = 'f32[1,1]{1,0:T(1,128)S(1)}', space=vmem, size = 0x200, scoped, tag = 'scoped memory for forward.1']
  %s0 = inlined_call_operand.smem [shape: u32[50], index: -1, kind: input, shape index: {}]
  %s1 = sld [smem:[%s0]]
  %s2 = scalar_lea.smem %s0, 1
  %s3 = sld [smem:[%s2]]
  %s4 = scalar_lea.smem %s0, 2
  %s5 = sld [smem:[%s4]]
  %s6 = scalar_lea.smem %s0, 3
  %s7 = sld [smem:[%s6]]
  %s8 = scalar_lea.smem %s0, 4
  %s9 = sld [smem:[%s8]]
  %s10 = scalar_lea.smem %s0, 5
  %s11 = sld [smem:[%s10]]
  %s12 = scalar_lea.smem %s0, 6
  %s13 = sld [smem:[%s12]]
  %s14 = scalar_lea.smem %s0, 7
  %s15 = sld [smem:[%s14]]
  %s16 = scalar_lea.smem %s0, 8
  %s17 = sld [smem:[%s16]]
  %s18 = scalar_lea.smem %s0, 9
  %s19 = sld [smem:[%s18]]
  %s20 = scalar_lea.smem %s0, 10
  %s21 = sld [smem:[%s20]]
  %s22 = scalar_lea.smem %s0, 11
  %s23 = sld [smem:[%s22]]
  %s24 = scalar_lea.smem %s0, 12
  %s25 = sld [smem:[%s24]]
  %s26 = scalar_lea.smem %s0, 13
  %s27 = sld [smem:[%s26]]
  %s28 = scalar_lea.smem %s0, 14
  %s29 = sld [smem:[%s28]]
  %s30 = scalar_lea.smem %s0, 15
  %s31 = sld [smem:[%s30]]
  %s32 = scalar_lea.smem %s0, 16
  %s33 = sld [smem:[%s32]]
  %s34 = scalar_lea.smem %s0, 17
  %s35 = sld [smem:[%s34]]
  %s36 = scalar_lea.smem %s0, 18
  %s37 = sld [smem:[%s36]]
  %s38 = scalar_lea.smem %s0, 19
  %s39 = sld [smem:[%s38]]
  %s40 = scalar_lea.smem %s0, 20
  %s41 = sld [smem:[%s40]]
  %s42 = scalar_lea.smem %s0, 21
  %s43 = sld [smem:[%s42]]
  %s44 = scalar_lea.smem %s0, 22
  %s45 = sld [smem:[%s44]]
  %s46 = scalar_lea.smem %s0, 23
  %s47 = sld [smem:[%s46]]
  %s48 = scalar_lea.smem %s0, 24
  %s49 = sld [smem:[%s48]]
  %s50 = scalar_lea.smem %s0, 25
  %s51 = sld [smem:[%s50]]
  %s52 = scalar_lea.smem %s0, 26
  %s53 = sld [smem:[%s52]]
  %s54 = scalar_lea.smem %s0, 27
  %s55 = sld [smem:[%s54]]
  %s56 = scalar_lea.smem %s0, 28
  %s57 = sld [smem:[%s56]]
  %s58 = scalar_lea.smem %s0, 29
  %s59 = sld [smem:[%s58]]
  %s60 = scalar_lea.smem %s0, 30
  %s61 = sld [smem:[%s60]]
  %s62 = scalar_lea.smem %s0, 31
  %s63 = sld [smem:[%s62]]
  %s64 = scalar_lea.smem %s0, 32
  %s65 = sld [smem:[%s64]]
  %s66 = scalar_lea.smem %s0, 33
  %s67 = sld [smem:[%s66]]
  %s68 = scalar_lea.smem %s0, 34
  %s69 = sld [smem:[%s68]]
  %s70 = scalar_lea.smem %s0, 35
  %s71 = sld [smem:[%s70]]
  %s72 = scalar_lea.smem %s0, 36
  %s73 = sld [smem:[%s72]]
  %s74 = scalar_lea.smem %s0, 37
  %s75 = sld [smem:[%s74]]
  %s76 = scalar_lea.smem %s0, 38
  %s77 = sld [smem:[%s76]]
  %s78 = scalar_lea.smem %s0, 39
  %s79 = sld [smem:[%s78]]
  %s80 = scalar_lea.smem %s0, 40
  %s81 = sld [smem:[%s80]]
  %s82 = scalar_lea.smem %s0, 41
  %s83 = sld [smem:[%s82]]
  %s84 = scalar_lea.smem %s0, 42
  %s85 = sld [smem:[%s84]]
  %s86 = scalar_lea.smem %s0, 43
  %s87 = sld [smem:[%s86]]
  %s88 = scalar_lea.smem %s0, 44
  %s89 = sld [smem:[%s88]]
  %s90 = scalar_lea.smem %s0, 45
  %s91 = sld [smem:[%s90]]
  %s92 = scalar_lea.smem %s0, 46
  %s93 = sld [smem:[%s92]]
  %s94 = scalar_lea.smem %s0, 47
  %s95 = sld [smem:[%s94]]
  %s96 = scalar_lea.smem %s0, 48
  %s97 = sld [smem:[%s96]]
  %s98 = scalar_lea.smem %s0, 49
  %s99 = sld [smem:[%s98]]
  %s100 = sld [smem:[#allocation0]]
  $region253: #{forward.1} parent=0
    _
  %s102 = ssub.s32 1, %s100
  %s103 = scalar_select 0, %s102, %s100
  %v104 = vstv %s93
  %105 = vst [vmem:[#allocation2] sm:$0x1] %v104
  $region1: #{forward.1} parent=0
    #allocation3 [shape = 'u8[512]{0}', space=vmem, size = 0x400, scoped, tag = 'input window, operand 30, single buffered']
    #allocation4 [shape = 's32[2]{0}', space=sflag, size = 0x8, scoped, tag = 'scoped memory for forward.1']
    #allocation5 [shape = 's32[2]{0}', space=sflag, size = 0x8, scoped, tag = 'scoped memory for forward.1']
    #allocation6 [shape = 'u8[512]{0}', space=vmem, size = 0x400, scoped, tag = 'input window, operand 35, single buffered']
    #allocation7 [shape = 's32[1]{0}', space=sflag, size = 0x4, scoped, tag = 'scoped memory for forward.1']
    #allocation8 [shape = 'u8[512]{0}', space=vmem, size = 0x400, scoped, tag = 'input window, operand 38, single buffered']
    #allocation9 [shape = 'u8[512]{0}', space=vmem, size = 0x400, scoped, tag = 'input window, operand 40, single buffered']
    #allocation10 [shape = 's32[1]{0}', space=sflag, size = 0x4, scoped, tag = 'scoped memory for forward.1']
    #allocation11 [shape = 'u8[512]{0}', space=vmem, size = 0x400, scoped, tag = 'input window, operand 44, single buffered']
    #allocation12 [shape = 'u8[512]{0}', space=vmem, size = 0x400, scoped, tag = 'input window, operand 48, single buffered']
    #allocation13 [shape = 's32[1]{0}', space=sflag, size = 0x4, scoped, tag = 'scoped memory for forward.1']
    #allocation14 [shape = 'u8[1024]{0}', space=vmem, size = 0x400, scoped, tag = 'output window, operand 0']
    %106 = vsyncpa [#allocation4], 0
    %107 = vsyncpa [#allocation7], 0
    %108 = vsyncpa [#allocation10], 0
    %109 = vsyncpa [#allocation13], 0
    %110 = vsyncpa [#allocation5], 0
    %s111 = scalar_lea.sflag [#allocation5], 1
    %112 = vsyncpa %s111, 0
    loop: start=0, step=1, limit=4
    $region2: #{forward.1} parent=1 // loop_pre_header
      _
    $region3: #{forward.1} parent=1 // loop_header
      %s114 = sphi 0, %s118
      %p115 = scmp.ge.s32.totalorder %s114, 4
      %s124 = sphi 0, %s126
      %s127 = sphi 0, %s124
      %s128 = sphi 0, %s127
      %s144 = sphi 0, %s128
      %s150 = sphi 0, %s152
      %s153 = sphi 0, %s150
      %s154 = sphi 0, %s153
      %s170 = sphi 0, %s154
      %s174 = sphi 0, %s174
      %s176 = sphi 0, %s174
      %s177 = sphi 0, %s176
      %s191 = sphi 0, %s177
      %s195 = sphi 0, %s195
      %s197 = sphi 0, %s195
      %s198 = sphi 0, %s197
      %s212 = sphi 0, %s198
      %s216 = sphi 0, %s216
      %s218 = sphi 0, %s216
      %s219 = sphi 0, %s218
      %s233 = sphi 0, %s219
      %s237 = sphi 0, %s237
      %s239 = sphi 0, %s237
      %s240 = sphi 0, %s239
      %s254 = sphi 0, %s240
      %s258 = sphi 0, %s258
      %s260 = sphi 0, %s258
      %s261 = sphi 0, %s260
      %s275 = sphi 0, %s261
      %s279 = sphi 0, %s279
      %s281 = sphi 0, %s279
      %s282 = sphi 0, %s281
      %s296 = sphi 0, %s282
      %s300 = sphi 0, %s300
      %s302 = sphi 0, %s300
      %s303 = sphi 0, %s302
      %s317 = sphi 0, %s303
      %s321 = sphi 0, %s321
      %s323 = sphi 0, %s321
      %s324 = sphi 0, %s323
      %s338 = sphi 0, %s324
      %s342 = sphi 0, %s342
      %s344 = sphi 0, %s342
      %s345 = sphi 0, %s344
      %s359 = sphi 0, %s345
      %s363 = sphi 0, %s363
      %s365 = sphi 0, %s363
      %s366 = sphi 0, %s365
      %s380 = sphi 0, %s366
      %s384 = sphi 0, %s384
      %s386 = sphi 0, %s384
      %s387 = sphi 0, %s386
      %s401 = sphi 0, %s387
      %s405 = sphi 0, %s405
      %s407 = sphi 0, %s405
      %s408 = sphi 0, %s407
      %s422 = sphi 0, %s408
      %s426 = sphi 0, %s426
      %s428 = sphi 0, %s426
      %s429 = sphi 0, %s428
      %s443 = sphi 0, %s429
      %s447 = sphi 0, %s447
      %s449 = sphi 0, %s447
      %s450 = sphi 0, %s449
      %s464 = sphi 0, %s450
      %s468 = sphi 0, %s468
      %s470 = sphi 0, %s468
      %s471 = sphi 0, %s470
      %s485 = sphi 0, %s471
      %s489 = sphi 0, %s489
      %s491 = sphi 0, %s489
      %s492 = sphi 0, %s491
      %s506 = sphi 0, %s492
      %s510 = sphi 0, %s510
      %s512 = sphi 0, %s510
      %s513 = sphi 0, %s512
      %s527 = sphi 0, %s513
      %s531 = sphi 0, %s531
      %s533 = sphi 0, %s531
      %s534 = sphi 0, %s533
      %s548 = sphi 0, %s534
      %s552 = sphi 0, %s552
      %s554 = sphi 0, %s552
      %s555 = sphi 0, %s554
      %s569 = sphi 0, %s555
      %s573 = sphi 0, %s573
      %s575 = sphi 0, %s573
      %s576 = sphi 0, %s575
      %s590 = sphi 0, %s576
      %s594 = sphi 0, %s594
      %s596 = sphi 0, %s594
      %s597 = sphi 0, %s596
      %s611 = sphi 0, %s597
      %s615 = sphi 0, %s615
      %s617 = sphi 0, %s615
      %s618 = sphi 0, %s617
      %s632 = sphi 0, %s618
      %s636 = sphi 0, %s636
      %s638 = sphi 0, %s636
      %s639 = sphi 0, %s638
      %s653 = sphi 0, %s639
      %s657 = sphi 0, %s657
      %s659 = sphi 0, %s657
      %s660 = sphi 0, %s659
      %s674 = sphi 0, %s660
      %s678 = sphi 0, %s678
      %s680 = sphi 0, %s678
      %s681 = sphi 0, %s680
      %s695 = sphi 0, %s681
      %s699 = sphi 0, %s699
      %s701 = sphi 0, %s699
      %s702 = sphi 0, %s701
      %s716 = sphi 0, %s702
      %s720 = sphi 0, %s720
      %s722 = sphi 0, %s720
      %s723 = sphi 0, %s722
      %s737 = sphi 0, %s723
      %s741 = sphi 0, %s741
      %s743 = sphi 0, %s741
      %s744 = sphi 0, %s743
      %s758 = sphi 0, %s744
      %s762 = sphi 0, %s762
      %s764 = sphi 0, %s762
      %s765 = sphi 0, %s764
      %s779 = sphi 0, %s765
      %s783 = sphi 0, %s783
      %s785 = sphi 0, %s783
      %s786 = sphi 0, %s785
      %s800 = sphi 0, %s786
      %s804 = sphi 0, %s804
      %s806 = sphi 0, %s804
      %s807 = sphi 0, %s806
      %s821 = sphi 0, %s807
      %s825 = sphi 0, %s825
      %s827 = sphi 0, %s825
      %s828 = sphi 0, %s827
      %s842 = sphi 0, %s828
      %s846 = sphi 0, %s846
      %s848 = sphi 0, %s846
      %s849 = sphi 0, %s848
      %s863 = sphi 0, %s849
      %s867 = sphi 0, %s867
      %s869 = sphi 0, %s867
      %s870 = sphi 0, %s869
      %s884 = sphi 0, %s870
      %s888 = sphi 0, %s888
      %s890 = sphi 0, %s888
      %s891 = sphi 0, %s890
      %s905 = sphi 0, %s891
      %s909 = sphi 0, %s909
      %s911 = sphi 0, %s909
      %s912 = sphi 0, %s911
      %s926 = sphi 0, %s912
      %s930 = sphi 0, %s930
      %s932 = sphi 0, %s930
      %s933 = sphi 0, %s932
      %s947 = sphi 0, %s933
      %s951 = sphi 0, %s951
      %s953 = sphi 0, %s951
      %s954 = sphi 0, %s953
      %s968 = sphi 0, %s954
      %s972 = sphi 0, %s972
      %s974 = sphi 0, %s972
      %s975 = sphi 0, %s974
      %s989 = sphi 0, %s975
      %s993 = sphi 0, %s993
      %s995 = sphi 0, %s993
      %s996 = sphi 0, %s995
      %s1010 = sphi 0, %s996
      %s1014 = sphi 0, %s1014
      %s1016 = sphi 0, %s1014
      %s1017 = sphi 0, %s1016
      %s1031 = sphi 0, %s1017
      %s1035 = sphi 0, %s1035
      %s1037 = sphi 0, %s1035
      %s1038 = sphi 0, %s1037
      %s1052 = sphi 0, %s1038
      %s1056 = sphi 0, %s1056
      %s1058 = sphi 0, %s1056
      %s1059 = sphi 0, %s1058
      %s1073 = sphi 0, %s1059
      %s1077 = sphi 0, %s1077
      %s1079 = sphi 0, %s1077
      %s1080 = sphi 0, %s1079
      %s1094 = sphi 0, %s1080
      %s1098 = sphi 0, %s1098
      %s1100 = sphi 0, %s1098
      %s1101 = sphi 0, %s1100
      %s1115 = sphi 0, %s1101
      %s1119 = sphi 0, %s1119
      %s1121 = sphi 0, %s1119
      %s1122 = sphi 0, %s1121
      %s1136 = sphi 0, %s1122
      %s1140 = sphi 0, %s1140
      %s1142 = sphi 0, %s1140
      %s1143 = sphi 0, %s1142
      %s1157 = sphi 0, %s1143
      %s1163 = sphi 0, %s1165
      %s1166 = sphi 0, %s1163
      %s1167 = sphi 0, %s1166
      %s1183 = sphi 0, %s1167
    $region4: #{forward.1} parent=1 // loop_header_branch
      %117 = sbr.rel (%p115) target = $region8
    $region5: #{forward.1} parent=1 // loop_body
      %s119 = ssub.s32 %s114, 1
      %s120 = ssub.s32 %s114, 2
      %s121 = sadd.s32 %s114, 1
      %s122 = ssub.s32 %s114, %s121
      %p123 = scmp.eq.s32.totalorder %s122, 0
      %s125 = sadd.s32 %s124, 1
      %s126 = scalar_select %p123, %s124, %s125
      %p129 = pneg %p123
      %p130 = scmp.eq.s32.totalorder %s114, 1
      %p131 = por %p129, %p130
      %p132 = scmp.ne.s32.totalorder %s124, %s127
      %p133 = scmp.eq.s32.totalorder %s114, 0
      %p134 = por %p132, %p133
      %p135 = scmp.ne.s32.totalorder %s124, %s127
      %p136 = scmp.eq.s32.totalorder %s119, 1
      %p137 = por %p135, %p136
      %p138 = scmp.ne.s32.totalorder %s127, %s128
      %p139 = scmp.eq.s32.totalorder %s119, 0
      %p140 = por %p138, %p139
      %p141 = scmp.ne.s32.totalorder %s127, %s128
      %p142 = scmp.eq.s32.totalorder %s120, 1
      %p143 = por %p141, %p142
      %p145 = scmp.ne.s32.totalorder %s128, %s144
      %p146 = scmp.eq.s32.totalorder %s120, 0
      %p147 = por %p145, %p146
      %s148 = ssub.s32 %s114, %s121
      %p149 = scmp.eq.s32.totalorder %s148, 0
      %s151 = sadd.s32 %s150, 1
      %s152 = scalar_select %p149, %s150, %s151
      %p155 = pneg %p149
      %p156 = scmp.eq.s32.totalorder %s114, 1
      %p157 = por %p155, %p156
      %p158 = scmp.ne.s32.totalorder %s150, %s153
      %p159 = scmp.eq.s32.totalorder %s114, 0
      %p160 = por %p158, %p159
      %p161 = scmp.ne.s32.totalorder %s150, %s153
      %p162 = scmp.eq.s32.totalorder %s119, 1
      %p163 = por %p161, %p162
      %p164 = scmp.ne.s32.totalorder %s153, %s154
      %p165 = scmp.eq.s32.totalorder %s119, 0
      %p166 = por %p164, %p165
      %p167 = scmp.ne.s32.totalorder %s153, %s154
      %p168 = scmp.eq.s32.totalorder %s120, 1
      %p169 = por %p167, %p168
      %p171 = scmp.ne.s32.totalorder %s154, %s170
      %p172 = scmp.eq.s32.totalorder %s120, 0
      %p173 = por %p171, %p172
      %s175 = sadd.s32 %s174, 1
      %p178 = scmp.eq.s32.totalorder %s114, 1
      %p179 = scmp.ne.s32.totalorder %s174, %s176
      %p180 = scmp.eq.s32.totalorder %s114, 0
      %p181 = por %p179, %p180
      %p182 = scmp.ne.s32.totalorder %s174, %s176
      %p183 = scmp.eq.s32.totalorder %s119, 1
      %p184 = por %p182, %p183
      %p185 = scmp.ne.s32.totalorder %s176, %s177
      %p186 = scmp.eq.s32.totalorder %s119, 0
      %p187 = por %p185, %p186
      %p188 = scmp.ne.s32.totalorder %s176, %s177
      %p189 = scmp.eq.s32.totalorder %s120, 1
      %p190 = por %p188, %p189
      %p192 = scmp.ne.s32.totalorder %s177, %s191
      %p193 = scmp.eq.s32.totalorder %s120, 0
      %p194 = por %p192, %p193
      %s196 = sadd.s32 %s195, 1
      %p199 = scmp.eq.s32.totalorder %s114, 1
      %p200 = scmp.ne.s32.totalorder %s195, %s197
      %p201 = scmp.eq.s32.totalorder %s114, 0
      %p202 = por %p200, %p201
      %p203 = scmp.ne.s32.totalorder %s195, %s197
      %p204 = scmp.eq.s32.totalorder %s119, 1
      %p205 = por %p203, %p204
      %p206 = scmp.ne.s32.totalorder %s197, %s198
      %p207 = scmp.eq.s32.totalorder %s119, 0
      %p208 = por %p206, %p207
      %p209 = scmp.ne.s32.totalorder %s197, %s198
      %p210 = scmp.eq.s32.totalorder %s120, 1
      %p211 = por %p209, %p210
      %p213 = scmp.ne.s32.totalorder %s198, %s212
      %p214 = scmp.eq.s32.totalorder %s120, 0
      %p215 = por %p213, %p214
      %s217 = sadd.s32 %s216, 1
      %p220 = scmp.eq.s32.totalorder %s114, 1
      %p221 = scmp.ne.s32.totalorder %s216, %s218
      %p222 = scmp.eq.s32.totalorder %s114, 0
      %p223 = por %p221, %p222
      %p224 = scmp.ne.s32.totalorder %s216, %s218
      %p225 = scmp.eq.s32.totalorder %s119, 1
      %p226 = por %p224, %p225
      %p227 = scmp.ne.s32.totalorder %s218, %s219
      %p228 = scmp.eq.s32.totalorder %s119, 0
      %p229 = por %p227, %p228
      %p230 = scmp.ne.s32.totalorder %s218, %s219
      %p231 = scmp.eq.s32.totalorder %s120, 1
      %p232 = por %p230, %p231
      %p234 = scmp.ne.s32.totalorder %s219, %s233
      %p235 = scmp.eq.s32.totalorder %s120, 0
      %p236 = por %p234, %p235
      %s238 = sadd.s32 %s237, 1
      %p241 = scmp.eq.s32.totalorder %s114, 1
      %p242 = scmp.ne.s32.totalorder %s237, %s239
      %p243 = scmp.eq.s32.totalorder %s114, 0
      %p244 = por %p242, %p243
      %p245 = scmp.ne.s32.totalorder %s237, %s239
      %p246 = scmp.eq.s32.totalorder %s119, 1
      %p247 = por %p245, %p246
      %p248 = scmp.ne.s32.totalorder %s239, %s240
      %p249 = scmp.eq.s32.totalorder %s119, 0
      %p250 = por %p248, %p249
      %p251 = scmp.ne.s32.totalorder %s239, %s240
      %p252 = scmp.eq.s32.totalorder %s120, 1
      %p253 = por %p251, %p252
      %p255 = scmp.ne.s32.totalorder %s240, %s254
      %p256 = scmp.eq.s32.totalorder %s120, 0
      %p257 = por %p255, %p256
      %s259 = sadd.s32 %s258, 1
      %p262 = scmp.eq.s32.totalorder %s114, 1
      %p263 = scmp.ne.s32.totalorder %s258, %s260
      %p264 = scmp.eq.s32.totalorder %s114, 0
      %p265 = por %p263, %p264
      %p266 = scmp.ne.s32.totalorder %s258, %s260
      %p267 = scmp.eq.s32.totalorder %s119, 1
      %p268 = por %p266, %p267
      %p269 = scmp.ne.s32.totalorder %s260, %s261
      %p270 = scmp.eq.s32.totalorder %s119, 0
      %p271 = por %p269, %p270
      %p272 = scmp.ne.s32.totalorder %s260, %s261
      %p273 = scmp.eq.s32.totalorder %s120, 1
      %p274 = por %p272, %p273
      %p276 = scmp.ne.s32.totalorder %s261, %s275
      %p277 = scmp.eq.s32.totalorder %s120, 0
      %p278 = por %p276, %p277
      %s280 = sadd.s32 %s279, 1
      %p283 = scmp.eq.s32.totalorder %s114, 1
      %p284 = scmp.ne.s32.totalorder %s279, %s281
      %p285 = scmp.eq.s32.totalorder %s114, 0
      %p286 = por %p284, %p285
      %p287 = scmp.ne.s32.totalorder %s279, %s281
      %p288 = scmp.eq.s32.totalorder %s119, 1
      %p289 = por %p287, %p288
      %p290 = scmp.ne.s32.totalorder %s281, %s282
      %p291 = scmp.eq.s32.totalorder %s119, 0
      %p292 = por %p290, %p291
      %p293 = scmp.ne.s32.totalorder %s281, %s282
      %p294 = scmp.eq.s32.totalorder %s120, 1
      %p295 = por %p293, %p294
      %p297 = scmp.ne.s32.totalorder %s282, %s296
      %p298 = scmp.eq.s32.totalorder %s120, 0
      %p299 = por %p297, %p298
      %s301 = sadd.s32 %s300, 1
      %p304 = scmp.eq.s32.totalorder %s114, 1
      %p305 = scmp.ne.s32.totalorder %s300, %s302
      %p306 = scmp.eq.s32.totalorder %s114, 0
      %p307 = por %p305, %p306
      %p308 = scmp.ne.s32.totalorder %s300, %s302
      %p309 = scmp.eq.s32.totalorder %s119, 1
      %p310 = por %p308, %p309
      %p311 = scmp.ne.s32.totalorder %s302, %s303
      %p312 = scmp.eq.s32.totalorder %s119, 0
      %p313 = por %p311, %p312
      %p314 = scmp.ne.s32.totalorder %s302, %s303
      %p315 = scmp.eq.s32.totalorder %s120, 1
      %p316 = por %p314, %p315
      %p318 = scmp.ne.s32.totalorder %s303, %s317
      %p319 = scmp.eq.s32.totalorder %s120, 0
      %p320 = por %p318, %p319
      %s322 = sadd.s32 %s321, 1
      %p325 = scmp.eq.s32.totalorder %s114, 1
      %p326 = scmp.ne.s32.totalorder %s321, %s323
      %p327 = scmp.eq.s32.totalorder %s114, 0
      %p328 = por %p326, %p327
      %p329 = scmp.ne.s32.totalorder %s321, %s323
      %p330 = scmp.eq.s32.totalorder %s119, 1
      %p331 = por %p329, %p330
      %p332 = scmp.ne.s32.totalorder %s323, %s324
      %p333 = scmp.eq.s32.totalorder %s119, 0
      %p334 = por %p332, %p333
      %p335 = scmp.ne.s32.totalorder %s323, %s324
      %p336 = scmp.eq.s32.totalorder %s120, 1
      %p337 = por %p335, %p336
      %p339 = scmp.ne.s32.totalorder %s324, %s338
      %p340 = scmp.eq.s32.totalorder %s120, 0
      %p341 = por %p339, %p340
      %s343 = sadd.s32 %s342, 1
      %p346 = scmp.eq.s32.totalorder %s114, 1
      %p347 = scmp.ne.s32.totalorder %s342, %s344
      %p348 = scmp.eq.s32.totalorder %s114, 0
      %p349 = por %p347, %p348
      %p350 = scmp.ne.s32.totalorder %s342, %s344
      %p351 = scmp.eq.s32.totalorder %s119, 1
      %p352 = por %p350, %p351
      %p353 = scmp.ne.s32.totalorder %s344, %s345
      %p354 = scmp.eq.s32.totalorder %s119, 0
      %p355 = por %p353, %p354
      %p356 = scmp.ne.s32.totalorder %s344, %s345
      %p357 = scmp.eq.s32.totalorder %s120, 1
      %p358 = por %p356, %p357
      %p360 = scmp.ne.s32.totalorder %s345, %s359
      %p361 = scmp.eq.s32.totalorder %s120, 0
      %p362 = por %p360, %p361
      %s364 = sadd.s32 %s363, 1
      %p367 = scmp.eq.s32.totalorder %s114, 1
      %p368 = scmp.ne.s32.totalorder %s363, %s365
      %p369 = scmp.eq.s32.totalorder %s114, 0
      %p370 = por %p368, %p369
      %p371 = scmp.ne.s32.totalorder %s363, %s365
      %p372 = scmp.eq.s32.totalorder %s119, 1
      %p373 = por %p371, %p372
      %p374 = scmp.ne.s32.totalorder %s365, %s366
      %p375 = scmp.eq.s32.totalorder %s119, 0
      %p376 = por %p374, %p375
      %p377 = scmp.ne.s32.totalorder %s365, %s366
      %p378 = scmp.eq.s32.totalorder %s120, 1
      %p379 = por %p377, %p378
      %p381 = scmp.ne.s32.totalorder %s366, %s380
      %p382 = scmp.eq.s32.totalorder %s120, 0
      %p383 = por %p381, %p382
      %s385 = sadd.s32 %s384, 1
      %p388 = scmp.eq.s32.totalorder %s114, 1
      %p389 = scmp.ne.s32.totalorder %s384, %s386
      %p390 = scmp.eq.s32.totalorder %s114, 0
      %p391 = por %p389, %p390
      %p392 = scmp.ne.s32.totalorder %s384, %s386
      %p393 = scmp.eq.s32.totalorder %s119, 1
      %p394 = por %p392, %p393
      %p395 = scmp.ne.s32.totalorder %s386, %s387
      %p396 = scmp.eq.s32.totalorder %s119, 0
      %p397 = por %p395, %p396
      %p398 = scmp.ne.s32.totalorder %s386, %s387
      %p399 = scmp.eq.s32.totalorder %s120, 1
      %p400 = por %p398, %p399
      %p402 = scmp.ne.s32.totalorder %s387, %s401
      %p403 = scmp.eq.s32.totalorder %s120, 0
      %p404 = por %p402, %p403
      %s406 = sadd.s32 %s405, 1
      %p409 = scmp.eq.s32.totalorder %s114, 1
      %p410 = scmp.ne.s32.totalorder %s405, %s407
      %p411 = scmp.eq.s32.totalorder %s114, 0
      %p412 = por %p410, %p411
      %p413 = scmp.ne.s32.totalorder %s405, %s407
      %p414 = scmp.eq.s32.totalorder %s119, 1
      %p415 = por %p413, %p414
      %p416 = scmp.ne.s32.totalorder %s407, %s408
      %p417 = scmp.eq.s32.totalorder %s119, 0
      %p418 = por %p416, %p417
      %p419 = scmp.ne.s32.totalorder %s407, %s408
      %p420 = scmp.eq.s32.totalorder %s120, 1
      %p421 = por %p419, %p420
      %p423 = scmp.ne.s32.totalorder %s408, %s422
      %p424 = scmp.eq.s32.totalorder %s120, 0
      %p425 = por %p423, %p424
      %s427 = sadd.s32 %s426, 1
      %p430 = scmp.eq.s32.totalorder %s114, 1
      %p431 = scmp.ne.s32.totalorder %s426, %s428
      %p432 = scmp.eq.s32.totalorder %s114, 0
      %p433 = por %p431, %p432
      %p434 = scmp.ne.s32.totalorder %s426, %s428
      %p435 = scmp.eq.s32.totalorder %s119, 1
      %p436 = por %p434, %p435
      %p437 = scmp.ne.s32.totalorder %s428, %s429
      %p438 = scmp.eq.s32.totalorder %s119, 0
      %p439 = por %p437, %p438
      %p440 = scmp.ne.s32.totalorder %s428, %s429
      %p441 = scmp.eq.s32.totalorder %s120, 1
      %p442 = por %p440, %p441
      %p444 = scmp.ne.s32.totalorder %s429, %s443
      %p445 = scmp.eq.s32.totalorder %s120, 0
      %p446 = por %p444, %p445
      %s448 = sadd.s32 %s447, 1
      %p451 = scmp.eq.s32.totalorder %s114, 1
      %p452 = scmp.ne.s32.totalorder %s447, %s449
      %p453 = scmp.eq.s32.totalorder %s114, 0
      %p454 = por %p452, %p453
      %p455 = scmp.ne.s32.totalorder %s447, %s449
      %p456 = scmp.eq.s32.totalorder %s119, 1
      %p457 = por %p455, %p456
      %p458 = scmp.ne.s32.totalorder %s449, %s450
      %p459 = scmp.eq.s32.totalorder %s119, 0
      %p460 = por %p458, %p459
      %p461 = scmp.ne.s32.totalorder %s449, %s450
      %p462 = scmp.eq.s32.totalorder %s120, 1
      %p463 = por %p461, %p462
      %p465 = scmp.ne.s32.totalorder %s450, %s464
      %p466 = scmp.eq.s32.totalorder %s120, 0
      %p467 = por %p465, %p466
      %s469 = sadd.s32 %s468, 1
      %p472 = scmp.eq.s32.totalorder %s114, 1
      %p473 = scmp.ne.s32.totalorder %s468, %s470
      %p474 = scmp.eq.s32.totalorder %s114, 0
      %p475 = por %p473, %p474
      %p476 = scmp.ne.s32.totalorder %s468, %s470
      %p477 = scmp.eq.s32.totalorder %s119, 1
      %p478 = por %p476, %p477
      %p479 = scmp.ne.s32.totalorder %s470, %s471
      %p480 = scmp.eq.s32.totalorder %s119, 0
      %p481 = por %p479, %p480
      %p482 = scmp.ne.s32.totalorder %s470, %s471
      %p483 = scmp.eq.s32.totalorder %s120, 1
      %p484 = por %p482, %p483
      %p486 = scmp.ne.s32.totalorder %s471, %s485
      %p487 = scmp.eq.s32.totalorder %s120, 0
      %p488 = por %p486, %p487
      %s490 = sadd.s32 %s489, 1
      %p493 = scmp.eq.s32.totalorder %s114, 1
      %p494 = scmp.ne.s32.totalorder %s489, %s491
      %p495 = scmp.eq.s32.totalorder %s114, 0
      %p496 = por %p494, %p495
      %p497 = scmp.ne.s32.totalorder %s489, %s491
      %p498 = scmp.eq.s32.totalorder %s119, 1
      %p499 = por %p497, %p498
      %p500 = scmp.ne.s32.totalorder %s491, %s492
      %p501 = scmp.eq.s32.totalorder %s119, 0
      %p502 = por %p500, %p501
      %p503 = scmp.ne.s32.totalorder %s491, %s492
      %p504 = scmp.eq.s32.totalorder %s120, 1
      %p505 = por %p503, %p504
      %p507 = scmp.ne.s32.totalorder %s492, %s506
      %p508 = scmp.eq.s32.totalorder %s120, 0
      %p509 = por %p507, %p508
      %s511 = sadd.s32 %s510, 1
      %p514 = scmp.eq.s32.totalorder %s114, 1
      %p515 = scmp.ne.s32.totalorder %s510, %s512
      %p516 = scmp.eq.s32.totalorder %s114, 0
      %p517 = por %p515, %p516
      %p518 = scmp.ne.s32.totalorder %s510, %s512
      %p519 = scmp.eq.s32.totalorder %s119, 1
      %p520 = por %p518, %p519
      %p521 = scmp.ne.s32.totalorder %s512, %s513
      %p522 = scmp.eq.s32.totalorder %s119, 0
      %p523 = por %p521, %p522
      %p524 = scmp.ne.s32.totalorder %s512, %s513
      %p525 = scmp.eq.s32.totalorder %s120, 1
      %p526 = por %p524, %p525
      %p528 = scmp.ne.s32.totalorder %s513, %s527
      %p529 = scmp.eq.s32.totalorder %s120, 0
      %p530 = por %p528, %p529
      %s532 = sadd.s32 %s531, 1
      %p535 = scmp.eq.s32.totalorder %s114, 1
      %p536 = scmp.ne.s32.totalorder %s531, %s533
      %p537 = scmp.eq.s32.totalorder %s114, 0
      %p538 = por %p536, %p537
      %p539 = scmp.ne.s32.totalorder %s531, %s533
      %p540 = scmp.eq.s32.totalorder %s119, 1
      %p541 = por %p539, %p540
      %p542 = scmp.ne.s32.totalorder %s533, %s534
      %p543 = scmp.eq.s32.totalorder %s119, 0
      %p544 = por %p542, %p543
      %p545 = scmp.ne.s32.totalorder %s533, %s534
      %p546 = scmp.eq.s32.totalorder %s120, 1
      %p547 = por %p545, %p546
      %p549 = scmp.ne.s32.totalorder %s534, %s548
      %p550 = scmp.eq.s32.totalorder %s120, 0
      %p551 = por %p549, %p550
      %s553 = sadd.s32 %s552, 1
      %p556 = scmp.eq.s32.totalorder %s114, 1
      %p557 = scmp.ne.s32.totalorder %s552, %s554
      %p558 = scmp.eq.s32.totalorder %s114, 0
      %p559 = por %p557, %p558
      %p560 = scmp.ne.s32.totalorder %s552, %s554
      %p561 = scmp.eq.s32.totalorder %s119, 1
      %p562 = por %p560, %p561
      %p563 = scmp.ne.s32.totalorder %s554, %s555
      %p564 = scmp.eq.s32.totalorder %s119, 0
      %p565 = por %p563, %p564
      %p566 = scmp.ne.s32.totalorder %s554, %s555
      %p567 = scmp.eq.s32.totalorder %s120, 1
      %p568 = por %p566, %p567
      %p570 = scmp.ne.s32.totalorder %s555, %s569
      %p571 = scmp.eq.s32.totalorder %s120, 0
      %p572 = por %p570, %p571
      %s574 = sadd.s32 %s573, 1
      %p577 = scmp.eq.s32.totalorder %s114, 1
      %p578 = scmp.ne.s32.totalorder %s573, %s575
      %p579 = scmp.eq.s32.totalorder %s114, 0
      %p580 = por %p578, %p579
      %p581 = scmp.ne.s32.totalorder %s573, %s575
      %p582 = scmp.eq.s32.totalorder %s119, 1
      %p583 = por %p581, %p582
      %p584 = scmp.ne.s32.totalorder %s575, %s576
      %p585 = scmp.eq.s32.totalorder %s119, 0
      %p586 = por %p584, %p585
      %p587 = scmp.ne.s32.totalorder %s575, %s576
      %p588 = scmp.eq.s32.totalorder %s120, 1
      %p589 = por %p587, %p588
      %p591 = scmp.ne.s32.totalorder %s576, %s590
      %p592 = scmp.eq.s32.totalorder %s120, 0
      %p593 = por %p591, %p592
      %s595 = sadd.s32 %s594, 1
      %p598 = scmp.eq.s32.totalorder %s114, 1
      %p599 = scmp.ne.s32.totalorder %s594, %s596
      %p600 = scmp.eq.s32.totalorder %s114, 0
      %p601 = por %p599, %p600
      %p602 = scmp.ne.s32.totalorder %s594, %s596
      %p603 = scmp.eq.s32.totalorder %s119, 1
      %p604 = por %p602, %p603
      %p605 = scmp.ne.s32.totalorder %s596, %s597
      %p606 = scmp.eq.s32.totalorder %s119, 0
      %p607 = por %p605, %p606
      %p608 = scmp.ne.s32.totalorder %s596, %s597
      %p609 = scmp.eq.s32.totalorder %s120, 1
      %p610 = por %p608, %p609
      %p612 = scmp.ne.s32.totalorder %s597, %s611
      %p613 = scmp.eq.s32.totalorder %s120, 0
      %p614 = por %p612, %p613
      %s616 = sadd.s32 %s615, 1
      %p619 = scmp.eq.s32.totalorder %s114, 1
      %p620 = scmp.ne.s32.totalorder %s615, %s617
      %p621 = scmp.eq.s32.totalorder %s114, 0
      %p622 = por %p620, %p621
      %p623 = scmp.ne.s32.totalorder %s615, %s617
      %p624 = scmp.eq.s32.totalorder %s119, 1
      %p625 = por %p623, %p624
      %p626 = scmp.ne.s32.totalorder %s617, %s618
      %p627 = scmp.eq.s32.totalorder %s119, 0
      %p628 = por %p626, %p627
      %p629 = scmp.ne.s32.totalorder %s617, %s618
      %p630 = scmp.eq.s32.totalorder %s120, 1
      %p631 = por %p629, %p630
      %p633 = scmp.ne.s32.totalorder %s618, %s632
      %p634 = scmp.eq.s32.totalorder %s120, 0
      %p635 = por %p633, %p634
      %s637 = sadd.s32 %s636, 1
      %p640 = scmp.eq.s32.totalorder %s114, 1
      %p641 = scmp.ne.s32.totalorder %s636, %s638
      %p642 = scmp.eq.s32.totalorder %s114, 0
      %p643 = por %p641, %p642
      %p644 = scmp.ne.s32.totalorder %s636, %s638
      %p645 = scmp.eq.s32.totalorder %s119, 1
      %p646 = por %p644, %p645
      %p647 = scmp.ne.s32.totalorder %s638, %s639
      %p648 = scmp.eq.s32.totalorder %s119, 0
      %p649 = por %p647, %p648
      %p650 = scmp.ne.s32.totalorder %s638, %s639
      %p651 = scmp.eq.s32.totalorder %s120, 1
      %p652 = por %p650, %p651
      %p654 = scmp.ne.s32.totalorder %s639, %s653
      %p655 = scmp.eq.s32.totalorder %s120, 0
      %p656 = por %p654, %p655
      %s658 = sadd.s32 %s657, 1
      %p661 = scmp.eq.s32.totalorder %s114, 1
      %p662 = scmp.ne.s32.totalorder %s657, %s659
      %p663 = scmp.eq.s32.totalorder %s114, 0
      %p664 = por %p662, %p663
      %p665 = scmp.ne.s32.totalorder %s657, %s659
      %p666 = scmp.eq.s32.totalorder %s119, 1
      %p667 = por %p665, %p666
      %p668 = scmp.ne.s32.totalorder %s659, %s660
      %p669 = scmp.eq.s32.totalorder %s119, 0
      %p670 = por %p668, %p669
      %p671 = scmp.ne.s32.totalorder %s659, %s660
      %p672 = scmp.eq.s32.totalorder %s120, 1
      %p673 = por %p671, %p672
      %p675 = scmp.ne.s32.totalorder %s660, %s674
      %p676 = scmp.eq.s32.totalorder %s120, 0
      %p677 = por %p675, %p676
      %s679 = sadd.s32 %s678, 1
      %p682 = scmp.eq.s32.totalorder %s114, 1
      %p683 = scmp.ne.s32.totalorder %s678, %s680
      %p684 = scmp.eq.s32.totalorder %s114, 0
      %p685 = por %p683, %p684
      %p686 = scmp.ne.s32.totalorder %s678, %s680
      %p687 = scmp.eq.s32.totalorder %s119, 1
      %p688 = por %p686, %p687
      %p689 = scmp.ne.s32.totalorder %s680, %s681
      %p690 = scmp.eq.s32.totalorder %s119, 0
      %p691 = por %p689, %p690
      %p692 = scmp.ne.s32.totalorder %s680, %s681
      %p693 = scmp.eq.s32.totalorder %s120, 1
      %p694 = por %p692, %p693
      %p696 = scmp.ne.s32.totalorder %s681, %s695
      %p697 = scmp.eq.s32.totalorder %s120, 0
      %p698 = por %p696, %p697
      %s700 = sadd.s32 %s699, 1
      %p703 = scmp.eq.s32.totalorder %s114, 1
      %p704 = scmp.ne.s32.totalorder %s699, %s701
      %p705 = scmp.eq.s32.totalorder %s114, 0
      %p706 = por %p704, %p705
      %p707 = scmp.ne.s32.totalorder %s699, %s701
      %p708 = scmp.eq.s32.totalorder %s119, 1
      %p709 = por %p707, %p708
      %p710 = scmp.ne.s32.totalorder %s701, %s702
      %p711 = scmp.eq.s32.totalorder %s119, 0
      %p712 = por %p710, %p711
      %p713 = scmp.ne.s32.totalorder %s701, %s702
      %p714 = scmp.eq.s32.totalorder %s120, 1
      %p715 = por %p713, %p714
      %p717 = scmp.ne.s32.totalorder %s702, %s716
      %p718 = scmp.eq.s32.totalorder %s120, 0
      %p719 = por %p717, %p718
      %s721 = sadd.s32 %s720, 1
      %p724 = scmp.eq.s32.totalorder %s114, 1
      %p725 = scmp.ne.s32.totalorder %s720, %s722
      %p726 = scmp.eq.s32.totalorder %s114, 0
      %p727 = por %p725, %p726
      %p728 = scmp.ne.s32.totalorder %s720, %s722
      %p729 = scmp.eq.s32.totalorder %s119, 1
      %p730 = por %p728, %p729
      %p731 = scmp.ne.s32.totalorder %s722, %s723
      %p732 = scmp.eq.s32.totalorder %s119, 0
      %p733 = por %p731, %p732
      %p734 = scmp.ne.s32.totalorder %s722, %s723
      %p735 = scmp.eq.s32.totalorder %s120, 1
      %p736 = por %p734, %p735
      %p738 = scmp.ne.s32.totalorder %s723, %s737
      %p739 = scmp.eq.s32.totalorder %s120, 0
      %p740 = por %p738, %p739
      %s742 = sadd.s32 %s741, 1
      %p745 = scmp.eq.s32.totalorder %s114, 1
      %p746 = scmp.ne.s32.totalorder %s741, %s743
      %p747 = scmp.eq.s32.totalorder %s114, 0
      %p748 = por %p746, %p747
      %p749 = scmp.ne.s32.totalorder %s741, %s743
      %p750 = scmp.eq.s32.totalorder %s119, 1
      %p751 = por %p749, %p750
      %p752 = scmp.ne.s32.totalorder %s743, %s744
      %p753 = scmp.eq.s32.totalorder %s119, 0
      %p754 = por %p752, %p753
      %p755 = scmp.ne.s32.totalorder %s743, %s744
      %p756 = scmp.eq.s32.totalorder %s120, 1
      %p757 = por %p755, %p756
      %p759 = scmp.ne.s32.totalorder %s744, %s758
      %p760 = scmp.eq.s32.totalorder %s120, 0
      %p761 = por %p759, %p760
      %s763 = sadd.s32 %s762, 1
      %p766 = scmp.eq.s32.totalorder %s114, 1
      %p767 = scmp.ne.s32.totalorder %s762, %s764
      %p768 = scmp.eq.s32.totalorder %s114, 0
      %p769 = por %p767, %p768
      %p770 = scmp.ne.s32.totalorder %s762, %s764
      %p771 = scmp.eq.s32.totalorder %s119, 1
      %p772 = por %p770, %p771
      %p773 = scmp.ne.s32.totalorder %s764, %s765
      %p774 = scmp.eq.s32.totalorder %s119, 0
      %p775 = por %p773, %p774
      %p776 = scmp.ne.s32.totalorder %s764, %s765
      %p777 = scmp.eq.s32.totalorder %s120, 1
      %p778 = por %p776, %p777
      %p780 = scmp.ne.s32.totalorder %s765, %s779
      %p781 = scmp.eq.s32.totalorder %s120, 0
      %p782 = por %p780, %p781
      %s784 = sadd.s32 %s783, 1
      %p787 = scmp.eq.s32.totalorder %s114, 1
      %p788 = scmp.ne.s32.totalorder %s783, %s785
      %p789 = scmp.eq.s32.totalorder %s114, 0
      %p790 = por %p788, %p789
      %p791 = scmp.ne.s32.totalorder %s783, %s785
      %p792 = scmp.eq.s32.totalorder %s119, 1
      %p793 = por %p791, %p792
      %p794 = scmp.ne.s32.totalorder %s785, %s786
      %p795 = scmp.eq.s32.totalorder %s119, 0
      %p796 = por %p794, %p795
      %p797 = scmp.ne.s32.totalorder %s785, %s786
      %p798 = scmp.eq.s32.totalorder %s120, 1
      %p799 = por %p797, %p798
      %p801 = scmp.ne.s32.totalorder %s786, %s800
      %p802 = scmp.eq.s32.totalorder %s120, 0
      %p803 = por %p801, %p802
      %s805 = sadd.s32 %s804, 1
      %p808 = scmp.eq.s32.totalorder %s114, 1
      %p809 = scmp.ne.s32.totalorder %s804, %s806
      %p810 = scmp.eq.s32.totalorder %s114, 0
      %p811 = por %p809, %p810
      %p812 = scmp.ne.s32.totalorder %s804, %s806
      %p813 = scmp.eq.s32.totalorder %s119, 1
      %p814 = por %p812, %p813
      %p815 = scmp.ne.s32.totalorder %s806, %s807
      %p816 = scmp.eq.s32.totalorder %s119, 0
      %p817 = por %p815, %p816
      %p818 = scmp.ne.s32.totalorder %s806, %s807
      %p819 = scmp.eq.s32.totalorder %s120, 1
      %p820 = por %p818, %p819
      %p822 = scmp.ne.s32.totalorder %s807, %s821
      %p823 = scmp.eq.s32.totalorder %s120, 0
      %p824 = por %p822, %p823
      %s826 = sadd.s32 %s825, 1
      %p829 = scmp.eq.s32.totalorder %s114, 1
      %p830 = scmp.ne.s32.totalorder %s825, %s827
      %p831 = scmp.eq.s32.totalorder %s114, 0
      %p832 = por %p830, %p831
      %p833 = scmp.ne.s32.totalorder %s825, %s827
      %p834 = scmp.eq.s32.totalorder %s119, 1
      %p835 = por %p833, %p834
      %p836 = scmp.ne.s32.totalorder %s827, %s828
      %p837 = scmp.eq.s32.totalorder %s119, 0
      %p838 = por %p836, %p837
      %p839 = scmp.ne.s32.totalorder %s827, %s828
      %p840 = scmp.eq.s32.totalorder %s120, 1
      %p841 = por %p839, %p840
      %p843 = scmp.ne.s32.totalorder %s828, %s842
      %p844 = scmp.eq.s32.totalorder %s120, 0
      %p845 = por %p843, %p844
      %s847 = sadd.s32 %s846, 1
      %p850 = scmp.eq.s32.totalorder %s114, 1
      %p851 = scmp.ne.s32.totalorder %s846, %s848
      %p852 = scmp.eq.s32.totalorder %s114, 0
      %p853 = por %p851, %p852
      %p854 = scmp.ne.s32.totalorder %s846, %s848
      %p855 = scmp.eq.s32.totalorder %s119, 1
      %p856 = por %p854, %p855
      %p857 = scmp.ne.s32.totalorder %s848, %s849
      %p858 = scmp.eq.s32.totalorder %s119, 0
      %p859 = por %p857, %p858
      %p860 = scmp.ne.s32.totalorder %s848, %s849
      %p861 = scmp.eq.s32.totalorder %s120, 1
      %p862 = por %p860, %p861
      %p864 = scmp.ne.s32.totalorder %s849, %s863
      %p865 = scmp.eq.s32.totalorder %s120, 0
      %p866 = por %p864, %p865
      %s868 = sadd.s32 %s867, 1
      %p871 = scmp.eq.s32.totalorder %s114, 1
      %p872 = scmp.ne.s32.totalorder %s867, %s869
      %p873 = scmp.eq.s32.totalorder %s114, 0
      %p874 = por %p872, %p873
      %p875 = scmp.ne.s32.totalorder %s867, %s869
      %p876 = scmp.eq.s32.totalorder %s119, 1
      %p877 = por %p875, %p876
      %p878 = scmp.ne.s32.totalorder %s869, %s870
      %p879 = scmp.eq.s32.totalorder %s119, 0
      %p880 = por %p878, %p879
      %p881 = scmp.ne.s32.totalorder %s869, %s870
      %p882 = scmp.eq.s32.totalorder %s120, 1
      %p883 = por %p881, %p882
      %p885 = scmp.ne.s32.totalorder %s870, %s884
      %p886 = scmp.eq.s32.totalorder %s120, 0
      %p887 = por %p885, %p886
      %s889 = sadd.s32 %s888, 1
      %p892 = scmp.eq.s32.totalorder %s114, 1
      %p893 = scmp.ne.s32.totalorder %s888, %s890
      %p894 = scmp.eq.s32.totalorder %s114, 0
      %p895 = por %p893, %p894
      %p896 = scmp.ne.s32.totalorder %s888, %s890
      %p897 = scmp.eq.s32.totalorder %s119, 1
      %p898 = por %p896, %p897
      %p899 = scmp.ne.s32.totalorder %s890, %s891
      %p900 = scmp.eq.s32.totalorder %s119, 0
      %p901 = por %p899, %p900
      %p902 = scmp.ne.s32.totalorder %s890, %s891
      %p903 = scmp.eq.s32.totalorder %s120, 1
      %p904 = por %p902, %p903
      %p906 = scmp.ne.s32.totalorder %s891, %s905
      %p907 = scmp.eq.s32.totalorder %s120, 0
      %p908 = por %p906, %p907
      %s910 = sadd.s32 %s909, 1
      %p913 = scmp.eq.s32.totalorder %s114, 1
      %p914 = scmp.ne.s32.totalorder %s909, %s911
      %p915 = scmp.eq.s32.totalorder %s114, 0
      %p916 = por %p914, %p915
      %p917 = scmp.ne.s32.totalorder %s909, %s911
      %p918 = scmp.eq.s32.totalorder %s119, 1
      %p919 = por %p917, %p918
      %p920 = scmp.ne.s32.totalorder %s911, %s912
      %p921 = scmp.eq.s32.totalorder %s119, 0
      %p922 = por %p920, %p921
      %p923 = scmp.ne.s32.totalorder %s911, %s912
      %p924 = scmp.eq.s32.totalorder %s120, 1
      %p925 = por %p923, %p924
      %p927 = scmp.ne.s32.totalorder %s912, %s926
      %p928 = scmp.eq.s32.totalorder %s120, 0
      %p929 = por %p927, %p928
      %s931 = sadd.s32 %s930, 1
      %p934 = scmp.eq.s32.totalorder %s114, 1
      %p935 = scmp.ne.s32.totalorder %s930, %s932
      %p936 = scmp.eq.s32.totalorder %s114, 0
      %p937 = por %p935, %p936
      %p938 = scmp.ne.s32.totalorder %s930, %s932
      %p939 = scmp.eq.s32.totalorder %s119, 1
      %p940 = por %p938, %p939
      %p941 = scmp.ne.s32.totalorder %s932, %s933
      %p942 = scmp.eq.s32.totalorder %s119, 0
      %p943 = por %p941, %p942
      %p944 = scmp.ne.s32.totalorder %s932, %s933
      %p945 = scmp.eq.s32.totalorder %s120, 1
      %p946 = por %p944, %p945
      %p948 = scmp.ne.s32.totalorder %s933, %s947
      %p949 = scmp.eq.s32.totalorder %s120, 0
      %p950 = por %p948, %p949
      %s952 = sadd.s32 %s951, 1
      %p955 = scmp.eq.s32.totalorder %s114, 1
      %p956 = scmp.ne.s32.totalorder %s951, %s953
      %p957 = scmp.eq.s32.totalorder %s114, 0
      %p958 = por %p956, %p957
      %p959 = scmp.ne.s32.totalorder %s951, %s953
      %p960 = scmp.eq.s32.totalorder %s119, 1
      %p961 = por %p959, %p960
      %p962 = scmp.ne.s32.totalorder %s953, %s954
      %p963 = scmp.eq.s32.totalorder %s119, 0
      %p964 = por %p962, %p963
      %p965 = scmp.ne.s32.totalorder %s953, %s954
      %p966 = scmp.eq.s32.totalorder %s120, 1
      %p967 = por %p965, %p966
      %p969 = scmp.ne.s32.totalorder %s954, %s968
      %p970 = scmp.eq.s32.totalorder %s120, 0
      %p971 = por %p969, %p970
      %s973 = sadd.s32 %s972, 1
      %p976 = scmp.eq.s32.totalorder %s114, 1
      %p977 = scmp.ne.s32.totalorder %s972, %s974
      %p978 = scmp.eq.s32.totalorder %s114, 0
      %p979 = por %p977, %p978
      %p980 = scmp.ne.s32.totalorder %s972, %s974
      %p981 = scmp.eq.s32.totalorder %s119, 1
      %p982 = por %p980, %p981
      %p983 = scmp.ne.s32.totalorder %s974, %s975
      %p984 = scmp.eq.s32.totalorder %s119, 0
      %p985 = por %p983, %p984
      %p986 = scmp.ne.s32.totalorder %s974, %s975
      %p987 = scmp.eq.s32.totalorder %s120, 1
      %p988 = por %p986, %p987
      %p990 = scmp.ne.s32.totalorder %s975, %s989
      %p991 = scmp.eq.s32.totalorder %s120, 0
      %p992 = por %p990, %p991
      %s994 = sadd.s32 %s993, 1
      %p997 = scmp.eq.s32.totalorder %s114, 1
      %p998 = scmp.ne.s32.totalorder %s993, %s995
      %p999 = scmp.eq.s32.totalorder %s114, 0
      %p1000 = por %p998, %p999
      %p1001 = scmp.ne.s32.totalorder %s993, %s995
      %p1002 = scmp.eq.s32.totalorder %s119, 1
      %p1003 = por %p1001, %p1002
      %p1004 = scmp.ne.s32.totalorder %s995, %s996
      %p1005 = scmp.eq.s32.totalorder %s119, 0
      %p1006 = por %p1004, %p1005
      %p1007 = scmp.ne.s32.totalorder %s995, %s996
      %p1008 = scmp.eq.s32.totalorder %s120, 1
      %p1009 = por %p1007, %p1008
      %p1011 = scmp.ne.s32.totalorder %s996, %s1010
      %p1012 = scmp.eq.s32.totalorder %s120, 0
      %p1013 = por %p1011, %p1012
      %s1015 = sadd.s32 %s1014, 1
      %p1018 = scmp.eq.s32.totalorder %s114, 1
      %p1019 = scmp.ne.s32.totalorder %s1014, %s1016
      %p1020 = scmp.eq.s32.totalorder %s114, 0
      %p1021 = por %p1019, %p1020
      %p1022 = scmp.ne.s32.totalorder %s1014, %s1016
      %p1023 = scmp.eq.s32.totalorder %s119, 1
      %p1024 = por %p1022, %p1023
      %p1025 = scmp.ne.s32.totalorder %s1016, %s1017
      %p1026 = scmp.eq.s32.totalorder %s119, 0
      %p1027 = por %p1025, %p1026
      %p1028 = scmp.ne.s32.totalorder %s1016, %s1017
      %p1029 = scmp.eq.s32.totalorder %s120, 1
      %p1030 = por %p1028, %p1029
      %p1032 = scmp.ne.s32.totalorder %s1017, %s1031
      %p1033 = scmp.eq.s32.totalorder %s120, 0
      %p1034 = por %p1032, %p1033
      %s1036 = sadd.s32 %s1035, 1
      %p1039 = scmp.eq.s32.totalorder %s114, 1
      %p1040 = scmp.ne.s32.totalorder %s1035, %s1037
      %p1041 = scmp.eq.s32.totalorder %s114, 0
      %p1042 = por %p1040, %p1041
      %p1043 = scmp.ne.s32.totalorder %s1035, %s1037
      %p1044 = scmp.eq.s32.totalorder %s119, 1
      %p1045 = por %p1043, %p1044
      %p1046 = scmp.ne.s32.totalorder %s1037, %s1038
      %p1047 = scmp.eq.s32.totalorder %s119, 0
      %p1048 = por %p1046, %p1047
      %p1049 = scmp.ne.s32.totalorder %s1037, %s1038
      %p1050 = scmp.eq.s32.totalorder %s120, 1
      %p1051 = por %p1049, %p1050
      %p1053 = scmp.ne.s32.totalorder %s1038, %s1052
      %p1054 = scmp.eq.s32.totalorder %s120, 0
      %p1055 = por %p1053, %p1054
      %s1057 = sadd.s32 %s1056, 1
      %p1060 = scmp.eq.s32.totalorder %s114, 1
      %p1061 = scmp.ne.s32.totalorder %s1056, %s1058
      %p1062 = scmp.eq.s32.totalorder %s114, 0
      %p1063 = por %p1061, %p1062
      %p1064 = scmp.ne.s32.totalorder %s1056, %s1058
      %p1065 = scmp.eq.s32.totalorder %s119, 1
      %p1066 = por %p1064, %p1065
      %p1067 = scmp.ne.s32.totalorder %s1058, %s1059
      %p1068 = scmp.eq.s32.totalorder %s119, 0
      %p1069 = por %p1067, %p1068
      %p1070 = scmp.ne.s32.totalorder %s1058, %s1059
      %p1071 = scmp.eq.s32.totalorder %s120, 1
      %p1072 = por %p1070, %p1071
      %p1074 = scmp.ne.s32.totalorder %s1059, %s1073
      %p1075 = scmp.eq.s32.totalorder %s120, 0
      %p1076 = por %p1074, %p1075
      %s1078 = sadd.s32 %s1077, 1
      %p1081 = scmp.eq.s32.totalorder %s114, 1
      %p1082 = scmp.ne.s32.totalorder %s1077, %s1079
      %p1083 = scmp.eq.s32.totalorder %s114, 0
      %p1084 = por %p1082, %p1083
      %p1085 = scmp.ne.s32.totalorder %s1077, %s1079
      %p1086 = scmp.eq.s32.totalorder %s119, 1
      %p1087 = por %p1085, %p1086
      %p1088 = scmp.ne.s32.totalorder %s1079, %s1080
      %p1089 = scmp.eq.s32.totalorder %s119, 0
      %p1090 = por %p1088, %p1089
      %p1091 = scmp.ne.s32.totalorder %s1079, %s1080
      %p1092 = scmp.eq.s32.totalorder %s120, 1
      %p1093 = por %p1091, %p1092
      %p1095 = scmp.ne.s32.totalorder %s1080, %s1094
      %p1096 = scmp.eq.s32.totalorder %s120, 0
      %p1097 = por %p1095, %p1096
      %s1099 = sadd.s32 %s1098, 1
      %p1102 = scmp.eq.s32.totalorder %s114, 1
      %p1103 = scmp.ne.s32.totalorder %s1098, %s1100
      %p1104 = scmp.eq.s32.totalorder %s114, 0
      %p1105 = por %p1103, %p1104
      %p1106 = scmp.ne.s32.totalorder %s1098, %s1100
      %p1107 = scmp.eq.s32.totalorder %s119, 1
      %p1108 = por %p1106, %p1107
      %p1109 = scmp.ne.s32.totalorder %s1100, %s1101
      %p1110 = scmp.eq.s32.totalorder %s119, 0
      %p1111 = por %p1109, %p1110
      %p1112 = scmp.ne.s32.totalorder %s1100, %s1101
      %p1113 = scmp.eq.s32.totalorder %s120, 1
      %p1114 = por %p1112, %p1113
      %p1116 = scmp.ne.s32.totalorder %s1101, %s1115
      %p1117 = scmp.eq.s32.totalorder %s120, 0
      %p1118 = por %p1116, %p1117
      %s1120 = sadd.s32 %s1119, 1
      %p1123 = scmp.eq.s32.totalorder %s114, 1
      %p1124 = scmp.ne.s32.totalorder %s1119, %s1121
      %p1125 = scmp.eq.s32.totalorder %s114, 0
      %p1126 = por %p1124, %p1125
      %p1127 = scmp.ne.s32.totalorder %s1119, %s1121
      %p1128 = scmp.eq.s32.totalorder %s119, 1
      %p1129 = por %p1127, %p1128
      %p1130 = scmp.ne.s32.totalorder %s1121, %s1122
      %p1131 = scmp.eq.s32.totalorder %s119, 0
      %p1132 = por %p1130, %p1131
      %p1133 = scmp.ne.s32.totalorder %s1121, %s1122
      %p1134 = scmp.eq.s32.totalorder %s120, 1
      %p1135 = por %p1133, %p1134
      %p1137 = scmp.ne.s32.totalorder %s1122, %s1136
      %p1138 = scmp.eq.s32.totalorder %s120, 0
      %p1139 = por %p1137, %p1138
      %s1141 = sadd.s32 %s1140, 1
      %p1144 = scmp.eq.s32.totalorder %s114, 1
      %p1145 = scmp.ne.s32.totalorder %s1140, %s1142
      %p1146 = scmp.eq.s32.totalorder %s114, 0
      %p1147 = por %p1145, %p1146
      %p1148 = scmp.ne.s32.totalorder %s1140, %s1142
      %p1149 = scmp.eq.s32.totalorder %s119, 1
      %p1150 = por %p1148, %p1149
      %p1151 = scmp.ne.s32.totalorder %s1142, %s1143
      %p1152 = scmp.eq.s32.totalorder %s119, 0
      %p1153 = por %p1151, %p1152
      %p1154 = scmp.ne.s32.totalorder %s1142, %s1143
      %p1155 = scmp.eq.s32.totalorder %s120, 1
      %p1156 = por %p1154, %p1155
      %p1158 = scmp.ne.s32.totalorder %s1143, %s1157
      %p1159 = scmp.eq.s32.totalorder %s120, 0
      %p1160 = por %p1158, %p1159
      %s1161 = ssub.s32 %s114, %s121
      %p1162 = scmp.eq.s32.totalorder %s1161, 0
      %s1164 = sadd.s32 %s1163, 1
      %s1165 = scalar_select %p1162, %s1163, %s1164
      %p1168 = pneg %p1162
      %p1169 = scmp.eq.s32.totalorder %s114, 1
      %p1170 = por %p1168, %p1169
      %p1171 = scmp.ne.s32.totalorder %s1163, %s1166
      %p1172 = scmp.eq.s32.totalorder %s114, 0
      %p1173 = por %p1171, %p1172
      %p1174 = scmp.ne.s32.totalorder %s1163, %s1166
      %p1175 = scmp.eq.s32.totalorder %s119, 1
      %p1176 = por %p1174, %p1175
      %p1177 = scmp.ne.s32.totalorder %s1166, %s1167
      %p1178 = scmp.eq.s32.totalorder %s119, 0
      %p1179 = por %p1177, %p1178
      %p1180 = scmp.ne.s32.totalorder %s1166, %s1167
      %p1181 = scmp.eq.s32.totalorder %s120, 1
      %p1182 = por %p1180, %p1181
      %p1184 = scmp.ne.s32.totalorder %s1167, %s1183
      %p1185 = scmp.eq.s32.totalorder %s120, 0
      %p1186 = por %p1184, %p1185
      %p1187 = scmp.le.s32.totalorder 1, %s114
      %p1188 = scmp.lt.s32.totalorder %s114, 3
      %p1189 = pnand %p1187, %p1188
      %p1190 = pneg %p1189
      // Predicated region
      $region9: #{forward.1} parent=5 // pred_check
        _
      $region10: #{forward.1} parent=5 // pred_check_branch
        %1192 = sbr.rel (%p1189) target = $region12
      $region11: #{forward.1} parent=5 // pred_region
        %s1193 = ssub.s32 %s114, 1
        // Predicated region
        $region13: #{forward.1} parent=11 // pred_check
          %p1194 = pneg %p187
        $region14: #{forward.1} parent=11 // pred_check_branch
          %1196 = sbr.rel (%p1194) target = $region16
        $region15: #{forward.1} parent=11 // pred_region
          _
        $region16: #{forward.1} parent=11 // pred_fallthru
          _
        // Predicated region
        $region17: #{forward.1} parent=11 // pred_check
          %p1197 = pneg %p208
        $region18: #{forward.1} parent=11 // pred_check_branch
          %1199 = sbr.rel (%p1197) target = $region20
        $region19: #{forward.1} parent=11 // pred_region
          _
        $region20: #{forward.1} parent=11 // pred_fallthru
          _
        // Predicated region
        $region21: #{forward.1} parent=11 // pred_check
          %p1200 = pneg %p229
        $region22: #{forward.1} parent=11 // pred_check_branch
          %1202 = sbr.rel (%p1200) target = $region24
        $region23: #{forward.1} parent=11 // pred_region
          _
        $region24: #{forward.1} parent=11 // pred_fallthru
          _
        // Predicated region
        $region25: #{forward.1} parent=11 // pred_check
          %p1203 = pneg %p250
        $region26: #{forward.1} parent=11 // pred_check_branch
          %1205 = sbr.rel (%p1203) target = $region28
        $region27: #{forward.1} parent=11 // pred_region
          _
        $region28: #{forward.1} parent=11 // pred_fallthru
          _
        // Predicated region
        $region29: #{forward.1} parent=11 // pred_check
          %p1206 = pneg %p271
        $region30: #{forward.1} parent=11 // pred_check_branch
          %1208 = sbr.rel (%p1206) target = $region32
        $region31: #{forward.1} parent=11 // pred_region
          _
        $region32: #{forward.1} parent=11 // pred_fallthru
          _
        // Predicated region
        $region33: #{forward.1} parent=11 // pred_check
          %p1209 = pneg %p292
        $region34: #{forward.1} parent=11 // pred_check_branch
          %1211 = sbr.rel (%p1209) target = $region36
        $region35: #{forward.1} parent=11 // pred_region
          _
        $region36: #{forward.1} parent=11 // pred_fallthru
          _
        // Predicated region
        $region37: #{forward.1} parent=11 // pred_check
          %p1212 = pneg %p313
        $region38: #{forward.1} parent=11 // pred_check_branch
          %1214 = sbr.rel (%p1212) target = $region40
        $region39: #{forward.1} parent=11 // pred_region
          _
        $region40: #{forward.1} parent=11 // pred_fallthru
          _
        // Predicated region
        $region41: #{forward.1} parent=11 // pred_check
          %p1215 = pneg %p334
        $region42: #{forward.1} parent=11 // pred_check_branch
          %1217 = sbr.rel (%p1215) target = $region44
        $region43: #{forward.1} parent=11 // pred_region
          _
        $region44: #{forward.1} parent=11 // pred_fallthru
          _
        // Predicated region
        $region45: #{forward.1} parent=11 // pred_check
          %p1218 = pneg %p355
        $region46: #{forward.1} parent=11 // pred_check_branch
          %1220 = sbr.rel (%p1218) target = $region48
        $region47: #{forward.1} parent=11 // pred_region
          _
        $region48: #{forward.1} parent=11 // pred_fallthru
          _
        // Predicated region
        $region49: #{forward.1} parent=11 // pred_check
          %p1221 = pneg %p376
        $region50: #{forward.1} parent=11 // pred_check_branch
          %1223 = sbr.rel (%p1221) target = $region52
        $region51: #{forward.1} parent=11 // pred_region
          _
        $region52: #{forward.1} parent=11 // pred_fallthru
          _
        // Predicated region
        $region53: #{forward.1} parent=11 // pred_check
          %p1224 = pneg %p397
        $region54: #{forward.1} parent=11 // pred_check_branch
          %1226 = sbr.rel (%p1224) target = $region56
        $region55: #{forward.1} parent=11 // pred_region
          _
        $region56: #{forward.1} parent=11 // pred_fallthru
          _
        // Predicated region
        $region57: #{forward.1} parent=11 // pred_check
          %p1227 = pneg %p418
        $region58: #{forward.1} parent=11 // pred_check_branch
          %1229 = sbr.rel (%p1227) target = $region60
        $region59: #{forward.1} parent=11 // pred_region
          _
        $region60: #{forward.1} parent=11 // pred_fallthru
          _
        // Predicated region
        $region61: #{forward.1} parent=11 // pred_check
          %p1230 = pneg %p439
        $region62: #{forward.1} parent=11 // pred_check_branch
          %1232 = sbr.rel (%p1230) target = $region64
        $region63: #{forward.1} parent=11 // pred_region
          _
        $region64: #{forward.1} parent=11 // pred_fallthru
          _
        // Predicated region
        $region65: #{forward.1} parent=11 // pred_check
          %p1233 = pneg %p460
        $region66: #{forward.1} parent=11 // pred_check_branch
          %1235 = sbr.rel (%p1233) target = $region68
        $region67: #{forward.1} parent=11 // pred_region
          _
        $region68: #{forward.1} parent=11 // pred_fallthru
          _
        // Predicated region
        $region69: #{forward.1} parent=11 // pred_check
          %p1236 = pneg %p481
        $region70: #{forward.1} parent=11 // pred_check_branch
          %1238 = sbr.rel (%p1236) target = $region72
        $region71: #{forward.1} parent=11 // pred_region
          _
        $region72: #{forward.1} parent=11 // pred_fallthru
          _
        // Predicated region
        $region73: #{forward.1} parent=11 // pred_check
          %p1239 = pneg %p502
        $region74: #{forward.1} parent=11 // pred_check_branch
          %1241 = sbr.rel (%p1239) target = $region76
        $region75: #{forward.1} parent=11 // pred_region
          _
        $region76: #{forward.1} parent=11 // pred_fallthru
          _
        // Predicated region
        $region77: #{forward.1} parent=11 // pred_check
          %p1242 = pneg %p523
        $region78: #{forward.1} parent=11 // pred_check_branch
          %1244 = sbr.rel (%p1242) target = $region80
        $region79: #{forward.1} parent=11 // pred_region
          _
        $region80: #{forward.1} parent=11 // pred_fallthru
          _
        // Predicated region
        $region81: #{forward.1} parent=11 // pred_check
          %p1245 = pneg %p544
        $region82: #{forward.1} parent=11 // pred_check_branch
          %1247 = sbr.rel (%p1245) target = $region84
        $region83: #{forward.1} parent=11 // pred_region
          _
        $region84: #{forward.1} parent=11 // pred_fallthru
          _
        // Predicated region
        $region85: #{forward.1} parent=11 // pred_check
          %p1248 = pneg %p565
        $region86: #{forward.1} parent=11 // pred_check_branch
          %1250 = sbr.rel (%p1248) target = $region88
        $region87: #{forward.1} parent=11 // pred_region
          _
        $region88: #{forward.1} parent=11 // pred_fallthru
          _
        // Predicated region
        $region89: #{forward.1} parent=11 // pred_check
          %p1251 = pneg %p586
        $region90: #{forward.1} parent=11 // pred_check_branch
          %1253 = sbr.rel (%p1251) target = $region92
        $region91: #{forward.1} parent=11 // pred_region
          _
        $region92: #{forward.1} parent=11 // pred_fallthru
          _
        // Predicated region
        $region93: #{forward.1} parent=11 // pred_check
          %p1254 = pneg %p607
        $region94: #{forward.1} parent=11 // pred_check_branch
          %1256 = sbr.rel (%p1254) target = $region96
        $region95: #{forward.1} parent=11 // pred_region
          _
        $region96: #{forward.1} parent=11 // pred_fallthru
          _
        // Predicated region
        $region97: #{forward.1} parent=11 // pred_check
          %p1257 = pneg %p628
        $region98: #{forward.1} parent=11 // pred_check_branch
          %1259 = sbr.rel (%p1257) target = $region100
        $region99: #{forward.1} parent=11 // pred_region
          _
        $region100: #{forward.1} parent=11 // pred_fallthru
          _
        // Predicated region
        $region101: #{forward.1} parent=11 // pred_check
          %p1260 = pneg %p649
        $region102: #{forward.1} parent=11 // pred_check_branch
          %1262 = sbr.rel (%p1260) target = $region104
        $region103: #{forward.1} parent=11 // pred_region
          _
        $region104: #{forward.1} parent=11 // pred_fallthru
          _
        // Predicated region
        $region105: #{forward.1} parent=11 // pred_check
          %p1263 = pneg %p670
        $region106: #{forward.1} parent=11 // pred_check_branch
          %1265 = sbr.rel (%p1263) target = $region108
        $region107: #{forward.1} parent=11 // pred_region
          _
        $region108: #{forward.1} parent=11 // pred_fallthru
          _
        // Predicated region
        $region109: #{forward.1} parent=11 // pred_check
          %p1266 = pneg %p691
        $region110: #{forward.1} parent=11 // pred_check_branch
          %1268 = sbr.rel (%p1266) target = $region112
        $region111: #{forward.1} parent=11 // pred_region
          _
        $region112: #{forward.1} parent=11 // pred_fallthru
          _
        // Predicated region
        $region113: #{forward.1} parent=11 // pred_check
          %p1269 = pneg %p712
        $region114: #{forward.1} parent=11 // pred_check_branch
          %1271 = sbr.rel (%p1269) target = $region116
        $region115: #{forward.1} parent=11 // pred_region
          _
        $region116: #{forward.1} parent=11 // pred_fallthru
          _
        // Predicated region
        $region117: #{forward.1} parent=11 // pred_check
          %p1272 = pneg %p733
        $region118: #{forward.1} parent=11 // pred_check_branch
          %1274 = sbr.rel (%p1272) target = $region120
        $region119: #{forward.1} parent=11 // pred_region
          _
        $region120: #{forward.1} parent=11 // pred_fallthru
          _
        // Predicated region
        $region121: #{forward.1} parent=11 // pred_check
          %p1275 = pneg %p754
        $region122: #{forward.1} parent=11 // pred_check_branch
          %1277 = sbr.rel (%p1275) target = $region124
        $region123: #{forward.1} parent=11 // pred_region
          _
        $region124: #{forward.1} parent=11 // pred_fallthru
          _
        // Predicated region
        $region125: #{forward.1} parent=11 // pred_check
          %p1278 = pneg %p775
        $region126: #{forward.1} parent=11 // pred_check_branch
          %1280 = sbr.rel (%p1278) target = $region128
        $region127: #{forward.1} parent=11 // pred_region
          %s1282 = ssub.s32 16, 16
          %1283 = vsyncadd [#allocation4], %s1282
          %s1285 = sshll.u32 [#allocation3], 4
          %s1286 = int_to_ptr.vmem [resolvable:$true] %s1285
          %1288 = dma.hbm_to_vmem [thread:$0]  %s61, 16, %s1286, [#allocation4]
        $region128: #{forward.1} parent=11 // pred_fallthru
          _
        // Predicated region
        $region129: #{forward.1} parent=11 // pred_check
          %p1289 = pneg %p796
        $region130: #{forward.1} parent=11 // pred_check_branch
          %1291 = sbr.rel (%p1289) target = $region132
        $region131: #{forward.1} parent=11 // pred_region
          _
        $region132: #{forward.1} parent=11 // pred_fallthru
          _
        // Predicated region
        $region133: #{forward.1} parent=11 // pred_check
          %p1292 = pneg %p817
        $region134: #{forward.1} parent=11 // pred_check_branch
          %1294 = sbr.rel (%p1292) target = $region136
        $region135: #{forward.1} parent=11 // pred_region
          _
        $region136: #{forward.1} parent=11 // pred_fallthru
          _
        // Predicated region
        $region137: #{forward.1} parent=11 // pred_check
          %p1295 = pneg %p838
        $region138: #{forward.1} parent=11 // pred_check_branch
          %1297 = sbr.rel (%p1295) target = $region140
        $region139: #{forward.1} parent=11 // pred_region
          _
        $region140: #{forward.1} parent=11 // pred_fallthru
          _
        // Predicated region
        $region141: #{forward.1} parent=11 // pred_check
          %p1298 = pneg %p859
        $region142: #{forward.1} parent=11 // pred_check_branch
          %1300 = sbr.rel (%p1298) target = $region144
        $region143: #{forward.1} parent=11 // pred_region
          _
        $region144: #{forward.1} parent=11 // pred_fallthru
          _
        // Predicated region
        $region145: #{forward.1} parent=11 // pred_check
          %p1301 = pneg %p880
        $region146: #{forward.1} parent=11 // pred_check_branch
          %1303 = sbr.rel (%p1301) target = $region148
        $region147: #{forward.1} parent=11 // pred_region
          %s1305 = ssub.s32 16, 16
          %1306 = vsyncadd [#allocation7], %s1305
          %s1308 = sshll.u32 [#allocation6], 4
          %s1309 = int_to_ptr.vmem [resolvable:$true] %s1308
          %1311 = dma.hbm_to_vmem [thread:$0]  %s71, 16, %s1309, [#allocation7]
        $region148: #{forward.1} parent=11 // pred_fallthru
          _
        // Predicated region
        $region149: #{forward.1} parent=11 // pred_check
          %p1312 = pneg %p901
        $region150: #{forward.1} parent=11 // pred_check_branch
          %1314 = sbr.rel (%p1312) target = $region152
        $region151: #{forward.1} parent=11 // pred_region
          _
        $region152: #{forward.1} parent=11 // pred_fallthru
          _
        // Predicated region
        $region153: #{forward.1} parent=11 // pred_check
          %p1315 = pneg %p922
        $region154: #{forward.1} parent=11 // pred_check_branch
          %1317 = sbr.rel (%p1315) target = $region156
        $region155: #{forward.1} parent=11 // pred_region
          _
        $region156: #{forward.1} parent=11 // pred_fallthru
          _
        // Predicated region
        $region157: #{forward.1} parent=11 // pred_check
          %p1318 = pneg %p943
        $region158: #{forward.1} parent=11 // pred_check_branch
          %1320 = sbr.rel (%p1318) target = $region160
        $region159: #{forward.1} parent=11 // pred_region
          %s1322 = ssub.s32 16, 16
          %1323 = vsyncadd [#allocation7], %s1322
          %s1325 = sshll.u32 [#allocation8], 4
          %s1326 = int_to_ptr.vmem [resolvable:$true] %s1325
          %1328 = dma.hbm_to_vmem [thread:$0]  %s77, 16, %s1326, [#allocation7]
        $region160: #{forward.1} parent=11 // pred_fallthru
          _
        // Predicated region
        $region161: #{forward.1} parent=11 // pred_check
          %p1329 = pneg %p964
        $region162: #{forward.1} parent=11 // pred_check_branch
          %1331 = sbr.rel (%p1329) target = $region164
        $region163: #{forward.1} parent=11 // pred_region
          _
        $region164: #{forward.1} parent=11 // pred_fallthru
          _
        // Predicated region
        $region165: #{forward.1} parent=11 // pred_check
          %p1332 = pneg %p985
        $region166: #{forward.1} parent=11 // pred_check_branch
          %1334 = sbr.rel (%p1332) target = $region168
        $region167: #{forward.1} parent=11 // pred_region
          %s1336 = ssub.s32 16, 16
          %1337 = vsyncadd [#allocation10], %s1336
          %s1339 = sshll.u32 [#allocation9], 4
          %s1340 = int_to_ptr.vmem [resolvable:$true] %s1339
          %1342 = dma.hbm_to_vmem [thread:$0]  %s81, 16, %s1340, [#allocation10]
        $region168: #{forward.1} parent=11 // pred_fallthru
          _
        // Predicated region
        $region169: #{forward.1} parent=11 // pred_check
          %p1343 = pneg %p1006
        $region170: #{forward.1} parent=11 // pred_check_branch
          %1345 = sbr.rel (%p1343) target = $region172
        $region171: #{forward.1} parent=11 // pred_region
          _
        $region172: #{forward.1} parent=11 // pred_fallthru
          _
        // Predicated region
        $region173: #{forward.1} parent=11 // pred_check
          %p1346 = pneg %p1027
        $region174: #{forward.1} parent=11 // pred_check_branch
          %1348 = sbr.rel (%p1346) target = $region176
        $region175: #{forward.1} parent=11 // pred_region
          _
        $region176: #{forward.1} parent=11 // pred_fallthru
          _
        // Predicated region
        $region177: #{forward.1} parent=11 // pred_check
          %p1349 = pneg %p1048
        $region178: #{forward.1} parent=11 // pred_check_branch
          %1351 = sbr.rel (%p1349) target = $region180
        $region179: #{forward.1} parent=11 // pred_region
          _
        $region180: #{forward.1} parent=11 // pred_fallthru
          _
        // Predicated region
        $region181: #{forward.1} parent=11 // pred_check
          %p1352 = pneg %p1069
        $region182: #{forward.1} parent=11 // pred_check_branch
          %1354 = sbr.rel (%p1352) target = $region184
        $region183: #{forward.1} parent=11 // pred_region
          %s1356 = ssub.s32 16, 16
          %1357 = vsyncadd [#allocation10], %s1356
          %s1359 = sshll.u32 [#allocation11], 4
          %s1360 = int_to_ptr.vmem [resolvable:$true] %s1359
          %1362 = dma.hbm_to_vmem [thread:$0]  %s89, 16, %s1360, [#allocation10]
        $region184: #{forward.1} parent=11 // pred_fallthru
          _
        // Predicated region
        $region185: #{forward.1} parent=11 // pred_check
          %p1363 = pneg %p1090
        $region186: #{forward.1} parent=11 // pred_check_branch
          %1365 = sbr.rel (%p1363) target = $region188
        $region187: #{forward.1} parent=11 // pred_region
          _
        $region188: #{forward.1} parent=11 // pred_fallthru
          _
        // Predicated region
        $region189: #{forward.1} parent=11 // pred_check
          %p1366 = pneg %p1111
        $region190: #{forward.1} parent=11 // pred_check_branch
          %1368 = sbr.rel (%p1366) target = $region192
        $region191: #{forward.1} parent=11 // pred_region
          _
        $region192: #{forward.1} parent=11 // pred_fallthru
          _
        // Predicated region
        $region193: #{forward.1} parent=11 // pred_check
          %p1369 = pneg %p1132
        $region194: #{forward.1} parent=11 // pred_check_branch
          %1371 = sbr.rel (%p1369) target = $region196
        $region195: #{forward.1} parent=11 // pred_region
          _
        $region196: #{forward.1} parent=11 // pred_fallthru
          _
        // Predicated region
        $region197: #{forward.1} parent=11 // pred_check
          %p1372 = pneg %p1153
        $region198: #{forward.1} parent=11 // pred_check_branch
          %1374 = sbr.rel (%p1372) target = $region200
        $region199: #{forward.1} parent=11 // pred_region
          %s1376 = ssub.s32 16, 16
          %1377 = vsyncadd [#allocation13], %s1376
          %s1379 = sshll.u32 [#allocation12], 4
          %s1380 = int_to_ptr.vmem [resolvable:$true] %s1379
          %1382 = dma.hbm_to_vmem [thread:$0]  %s97, 16, %s1380, [#allocation13]
        $region200: #{forward.1} parent=11 // pred_fallthru
          _
      $region12: #{forward.1} parent=5 // pred_fallthru
        _
      %p1383 = scmp.lt.s32.totalorder %s114, 2
      // Predicated region
      $region201: #{forward.1} parent=5 // pred_check
        %p1384 = pneg %p1383
      $region202: #{forward.1} parent=5 // pred_check_branch
        %1386 = sbr.rel (%p1384) target = $region204
      $region203: #{forward.1} parent=5 // pred_region
        // Predicated region
        $region205: #{forward.1} parent=203 // pred_check
          %p1387 = pneg %p134
        $region206: #{forward.1} parent=203 // pred_check_branch
          %1389 = sbr.rel (%p1387) target = $region208
        $region207: #{forward.1} parent=203 // pred_region
          %p1390 = scmp.lt.s32.totalorder %s114, 1
          %s1391 = scalar_select %p1390, %s114, 1
          %s1392 = smul.addr %s1391, 28
          %s1393 = smul.addr %s1392, 4
          %s1394 = scalar_lea.vmem %s1, %s1393
        $region208: #{forward.1} parent=203 // pred_fallthru
          _
        // Predicated region
        $region209: #{forward.1} parent=203 // pred_check
          %p1395 = pneg %p160
        $region210: #{forward.1} parent=203 // pred_check_branch
          %1397 = sbr.rel (%p1395) target = $region212
        $region211: #{forward.1} parent=203 // pred_region
          %p1398 = scmp.lt.s32.totalorder %s114, 1
          %s1399 = scalar_select %p1398, %s114, 1
          %s1400 = smul.addr %s1399, 16
          %s1401 = smul.addr %s1400, 4
          %s1402 = scalar_lea.vmem %s3, %s1401
        $region212: #{forward.1} parent=203 // pred_fallthru
          _
      $region204: #{forward.1} parent=5 // pred_fallthru
        _
      %p1403 = scmp.le.s32.totalorder 1, %s114
      %p1404 = scmp.lt.s32.totalorder %s114, 3
      %p1405 = pnand %p1403, %p1404
      %p1406 = pneg %p1405
      // Predicated region
      $region213: #{forward.1} parent=5 // pred_check
        _
      $region214: #{forward.1} parent=5 // pred_check_branch
        %1408 = sbr.rel (%p1405) target = $region216
      $region215: #{forward.1} parent=5 // pred_region
        %s1409 = ssub.s32 %s114, 1
        // Predicated region
        $region217: #{forward.1} parent=215 // pred_check
          %p1410 = pneg %p775
        $region218: #{forward.1} parent=215 // pred_check_branch
          %1412 = sbr.rel (%p1410) target = $region220
        $region219: #{forward.1} parent=215 // pred_region
          %1413 = dma.done [#allocation4], 16
        $region220: #{forward.1} parent=215 // pred_fallthru
          _
        // Predicated region
        $region221: #{forward.1} parent=215 // pred_check
          %p1414 = pneg %p880
        $region222: #{forward.1} parent=215 // pred_check_branch
          %1416 = sbr.rel (%p1414) target = $region224
        $region223: #{forward.1} parent=215 // pred_region
          %1417 = dma.done [#allocation7], 16
        $region224: #{forward.1} parent=215 // pred_fallthru
          _
        // Predicated region
        $region225: #{forward.1} parent=215 // pred_check
          %p1418 = pneg %p943
        $region226: #{forward.1} parent=215 // pred_check_branch
          %1420 = sbr.rel (%p1418) target = $region228
        $region227: #{forward.1} parent=215 // pred_region
          %1421 = dma.done [#allocation7], 16
        $region228: #{forward.1} parent=215 // pred_fallthru
          _
        // Predicated region
        $region229: #{forward.1} parent=215 // pred_check
          %p1422 = pneg %p985
        $region230: #{forward.1} parent=215 // pred_check_branch
          %1424 = sbr.rel (%p1422) target = $region232
        $region231: #{forward.1} parent=215 // pred_region
          %1425 = dma.done [#allocation10], 16
        $region232: #{forward.1} parent=215 // pred_fallthru
          _
        // Predicated region
        $region233: #{forward.1} parent=215 // pred_check
          %p1426 = pneg %p1069
        $region234: #{forward.1} parent=215 // pred_check_branch
          %1428 = sbr.rel (%p1426) target = $region236
        $region235: #{forward.1} parent=215 // pred_region
          %1429 = dma.done [#allocation10], 16
        $region236: #{forward.1} parent=215 // pred_fallthru
          _
        // Predicated region
        $region237: #{forward.1} parent=215 // pred_check
          %p1430 = pneg %p1153
        $region238: #{forward.1} parent=215 // pred_check_branch
          %1432 = sbr.rel (%p1430) target = $region240
        $region239: #{forward.1} parent=215 // pred_region
          %1433 = dma.done [#allocation13], 16
        $region240: #{forward.1} parent=215 // pred_fallthru
          _
        %p1434 = scmp.lt.s32.totalorder %s119, 1
        %s1435 = scalar_select %p1434, %s119, 1
        %s1436 = smul.addr %s1435, 28
        %s1437 = smul.addr %s1436, 4
        %s1438 = scalar_lea.vmem %s1, %s1437
        %p1439 = pneg %p140
        %p1440 = pneg %p137
        %p1441 = scmp.lt.s32.totalorder %s119, 1
        %s1442 = scalar_select %p1441, %s119, 1
        %s1443 = smul.addr %s1442, 16
        %s1444 = smul.addr %s1443, 4
        %s1445 = scalar_lea.vmem %s3, %s1444
        %p1446 = pneg %p166
        %p1447 = pneg %p163
        %p1448 = pneg %p187
        %p1449 = pneg %p184
        %p1450 = pneg %p208
        %p1451 = pneg %p205
        %p1452 = pneg %p229
        %p1453 = pneg %p226
        %p1454 = pneg %p250
        %p1455 = pneg %p247
        %p1456 = pneg %p271
        %p1457 = pneg %p268
        %p1458 = pneg %p292
        %p1459 = pneg %p289
        %p1460 = pneg %p313
        %p1461 = pneg %p310
        %p1462 = pneg %p334
        %p1463 = pneg %p331
        %p1464 = pneg %p355
        %p1465 = pneg %p352
        %p1466 = pneg %p376
        %p1467 = pneg %p373
        %p1468 = pneg %p397
        %p1469 = pneg %p394
        %p1470 = pneg %p418
        %p1471 = pneg %p415
        %p1472 = pneg %p439
        %p1473 = pneg %p436
        %p1474 = pneg %p460
        %p1475 = pneg %p457
        %p1476 = pneg %p481
        %p1477 = pneg %p478
        %p1478 = pneg %p502
        %p1479 = pneg %p499
        %p1480 = pneg %p523
        %p1481 = pneg %p520
        %p1482 = pneg %p544
        %p1483 = pneg %p541
        %p1484 = pneg %p565
        %p1485 = pneg %p562
        %p1486 = pneg %p586
        %p1487 = pneg %p583
        %p1488 = pneg %p607
        %p1489 = pneg %p604
        %p1490 = pneg %p628
        %p1491 = pneg %p625
        %p1492 = pneg %p649
        %p1493 = pneg %p646
        %p1494 = pneg %p670
        %p1495 = pneg %p667
        %p1496 = pneg %p691
        %p1497 = pneg %p688
        %p1498 = pneg %p712
        %p1499 = pneg %p709
        %p1500 = pneg %p733
        %p1501 = pneg %p730
        %p1502 = pneg %p754
        %p1503 = pneg %p751
        %p1504 = pneg %p775
        %p1505 = pneg %p772
        %p1506 = pneg %p796
        %p1507 = pneg %p793
        %p1508 = pneg %p817
        %p1509 = pneg %p814
        %p1510 = pneg %p838
        %p1511 = pneg %p835
        %p1512 = pneg %p859
        %p1513 = pneg %p856
        %p1514 = pneg %p880
        %p1515 = pneg %p877
        %p1516 = pneg %p901
        %p1517 = pneg %p898
        %p1518 = pneg %p922
        %p1519 = pneg %p919
        %p1520 = pneg %p943
        %p1521 = pneg %p940
        %p1522 = pneg %p964
        %p1523 = pneg %p961
        %p1524 = pneg %p985
        %p1525 = pneg %p982
        %p1526 = pneg %p1006
        %p1527 = pneg %p1003
        %p1528 = pneg %p1027
        %p1529 = pneg %p1024
        %p1530 = pneg %p1048
        %p1531 = pneg %p1045
        %p1532 = pneg %p1069
        %p1533 = pneg %p1066
        %p1534 = pneg %p1090
        %p1535 = pneg %p1087
        %p1536 = pneg %p1111
        %p1537 = pneg %p1108
        %p1538 = pneg %p1132
        %p1539 = pneg %p1129
        %p1540 = pneg %p1153
        %p1541 = pneg %p1150
        %p1542 = pneg %p1179
        %p1543 = pneg %p1176
        %s1544 = sand.u32 %s1166, 1
        %s1545 = scalar_lea.sflag [#allocation5], %s1544
        %s1546 = sand.u32 %s1166, 1
        %s1547 = scalar_lea.vmem [#allocation14], %s1546
        %p1548 = scmp.lt.s32.totalorder %s119, 1
        %s1549 = scalar_select %p1548, %s119, 1
        %s1550 = smul.addr %s1549, 28
        %s1551 = smul.addr %s1550, 4
        %s1552 = scalar_lea.vmem %s1, %s1551
        %p1553 = scmp.lt.s32.totalorder %s119, 1
        %s1554 = scalar_select %p1553, %s119, 1
        %s1555 = smul.addr %s1554, 16
        %s1556 = smul.addr %s1555, 4
        %s1557 = scalar_lea.vmem %s3, %s1556
        %v1559 = vld [vmem:[%s1552] sm:$0xf]
        %v1560 = vld [vmem:[%s1552 + $0x4] sm:$0xf]
        %v1561 = vld [vmem:[%s1552 + $0x8] sm:$0xf]
        %v1562 = vld [vmem:[%s1552 + $0xc] sm:$0xf]
        %v1563 = vld [vmem:[%s1552 + $0x10] sm:$0xf]
        %v1564 = vld [vmem:[%s1552 + $0x14] sm:$0xf]
        %v1565 = vld [vmem:[%s1552 + $0x18] sm:$0xf]
        %v1566 = vld [vmem:[%s1552 + $0x1c] sm:$0xf]
        %v1567 = vld [vmem:[%s1552 + $0x20] sm:$0xf]
        %v1568 = vld [vmem:[%s1552 + $0x24] sm:$0xf]
        %v1569 = vld [vmem:[%s1552 + $0x28] sm:$0xf]
        %v1570 = vld [vmem:[%s1552 + $0x2c] sm:$0xf]
        %v1571 = vld [vmem:[%s1552 + $0x30] sm:$0xf]
        %v1572 = vld [vmem:[%s1552 + $0x34] sm:$0xf]
        %v1573 = vld [vmem:[%s1552 + $0x38] sm:$0xf]
        %v1574 = vld [vmem:[%s1552 + $0x3c] sm:$0xf]
        %v1575 = vld [vmem:[%s1552 + $0x40] sm:$0xf]
        %v1576 = vld [vmem:[%s1552 + $0x44] sm:$0xf]
        %v1577 = vld [vmem:[%s1552 + $0x48] sm:$0xf]
        %v1578 = vld [vmem:[%s1552 + $0x4c] sm:$0xf]
        %v1579 = vld [vmem:[%s1552 + $0x50] sm:$0xf]
        %v1580 = vld [vmem:[%s1552 + $0x54] sm:$0xf]
        %v1581 = vld [vmem:[%s1552 + $0x58] sm:$0xf]
        %v1582 = vld [vmem:[%s1552 + $0x5c] sm:$0xf]
        %v1583 = vld [vmem:[%s1552 + $0x60] sm:$0xf]
        %v1584 = vld [vmem:[%s1552 + $0x64] sm:$0xf]
        %v1585 = vld [vmem:[%s1552 + $0x68] sm:$0xf]
        %v1586 = vld [vmem:[%s1552 + $0x6c] sm:$0xf]
        %v1587 = vld [vmem:[%s23] sm:$0x3]
        %v1588 = vld [vmem:[%s25] sm:$0x1]
        %v1590 = vlaneseq
        %v1591 = vshrl.u32 %v1590, 7
        %v1592 = vsub.s32 0, %v1591
        %v1593 = vrot.slane %v1588, %v1592
        %v1623 = vunpack.c.l.b16 %v1559
        %v1624 = vunpack.c.l.b16 %v1560
        %v1625 = vunpack.c.l.b16 %v1561
        %v1626 = vunpack.c.l.b16 %v1562
        %v1627 = vunpack.c.l.b16 %v1563
        %v1628 = vunpack.c.l.b16 %v1564
        %v1629 = vunpack.c.l.b16 %v1565
        %v1630 = vunpack.c.l.b16 %v1566
        %v1631 = vunpack.c.l.b16 %v1567
        %v1632 = vunpack.c.l.b16 %v1568
        %v1633 = vunpack.c.l.b16 %v1569
        %v1634 = vunpack.c.l.b16 %v1570
        %v1635 = vunpack.c.l.b16 %v1571
        %v1636 = vunpack.c.l.b16 %v1572
        %v1637 = vunpack.c.l.b16 %v1573
        %v1638 = vunpack.c.l.b16 %v1574
        %v1639 = vunpack.c.l.b16 %v1575
        %v1640 = vunpack.c.l.b16 %v1576
        %v1641 = vunpack.c.l.b16 %v1577
        %v1642 = vunpack.c.l.b16 %v1578
        %v1643 = vunpack.c.l.b16 %v1579
        %v1644 = vunpack.c.l.b16 %v1580
        %v1645 = vunpack.c.l.b16 %v1581
        %v1646 = vunpack.c.l.b16 %v1582
        %v1647 = vunpack.c.l.b16 %v1583
        %v1648 = vunpack.c.l.b16 %v1584
        %v1649 = vunpack.c.l.b16 %v1585
        %v1650 = vunpack.c.l.b16 %v1586
        %v1651 = vpack.c.b16 %v1624, %v1623
        %v1652 = vpack.c.b16 %v1626, %v1625
        %v1653 = vpack.c.b16 %v1628, %v1627
        %v1654 = vpack.c.b16 %v1630, %v1629
        %v1655 = vpack.c.b16 %v1632, %v1631
        %v1656 = vpack.c.b16 %v1634, %v1633
        %v1657 = vpack.c.b16 %v1636, %v1635
        %v1658 = vpack.c.b16 %v1638, %v1637
        %v1659 = vpack.c.b16 %v1640, %v1639
        %v1660 = vpack.c.b16 %v1642, %v1641
        %v1661 = vpack.c.b16 %v1644, %v1643
        %v1662 = vpack.c.b16 %v1646, %v1645
        %v1663 = vpack.c.b16 %v1648, %v1647
        %v1664 = vpack.c.b16 %v1650, %v1649
        %vm1665 = vcmask 23552
        %v1667 = vsel %vm1665, %v1651, 0
        %v1670 = vsel %vm1665, %v1652, 0
        %v1673 = vsel %vm1665, %v1653, 0
        %v1676 = vsel %vm1665, %v1654, 0
        %v1679 = vsel %vm1665, %v1655, 0
        %v1682 = vsel %vm1665, %v1656, 0
        %v1685 = vsel %vm1665, %v1657, 0
        %v1688 = vsel %vm1665, %v1658, 0
        %v1691 = vsel %vm1665, %v1659, 0
        %v1694 = vsel %vm1665, %v1660, 0
        %v1697 = vsel %vm1665, %v1661, 0
        %v1700 = vsel %vm1665, %v1662, 0
        %v1703 = vsel %vm1665, %v1663, 0
        %v1706 = vsel %vm1665, %v1664, 0
        %vm1708 = vcmask 1040384
        %vm1709 = vcmask 1041408
        %v1710 = vsel %vm1708, 4294967295, 65535
        %v1711 = vsel %vm1709, %v1710, 0
        %v1713 = vand.u32 %v1587, %v1711
        %1715 = vmatprep.subr.bf16.mxu0 0
        %1716 = vmatpush1.bf16.msra.mxu0 %v1713
        %1717 = vmatprep.subr.bf16.mxu0 0
        %1718 = vmatpush1.bf16.msra.mxu0 0
        %1719 = vmatprep.subr.bf16.mxu0 0
        %1720 = vmatpush1.bf16.msra.mxu0 0
        %1721 = vmatprep.subr.bf16.mxu0 0
        %1722 = vmatpush1.bf16.msra.mxu0 0
        %1723 = vmatprep.subr.bf16.mxu0 0
        %1724 = vmatpush1.bf16.msra.mxu0 0
        %1725 = vmatprep.subr.bf16.mxu0 0
        %1726 = vmatpush1.bf16.msra.mxu0 0
        %1727 = vmatprep.subr.bf16.mxu0 0
        %1728 = vmatpush1.bf16.msra.mxu0 0
        %1729 = vmatprep.subr.bf16.mxu0 0
        %1730 = vmatpush1.bf16.msra.mxu0 0
        %1731 = vmatprep.subr.bf16.mxu0 0
        %1732 = vmatpush1.bf16.msra.mxu0 0
        %1733 = vmatprep.subr.bf16.mxu0 0
        %1734 = vmatpush1.bf16.msra.mxu0 0
        %1735 = vmatprep.subr.bf16.mxu0 0
        %1736 = vmatpush1.bf16.msra.mxu0 0
        %1737 = vmatprep.subr.bf16.mxu0 0
        %1738 = vmatpush1.bf16.msra.mxu0 0
        %1739 = vmatprep.subr.bf16.mxu0 0
        %1740 = vmatpush1.bf16.msra.mxu0 0
        %1741 = vmatprep.subr.bf16.mxu0 0
        %1742 = vmatpush1.bf16.msra.mxu0 0
        %1743 = vmatprep.subr.bf16.mxu0 0
        %1744 = vmatpush1.bf16.msra.mxu0 0
        %1745 = vmatprep.subr.bf16.mxu0 0
        %1746 = vmatpush1.bf16.msra.mxu0 0
        %1747 = vmatprep.mubr.bf16.mxu0 0
        %1748 = vmatmul.mubr.bf16.gmra.mrb[0].mxu0 %v1667
        %v1749 = vpop.f32.mrb[0].mxu0
        %v1750 = vadd.f32 %v1593, %v1749
        %v1751 = vpop.f32.mrb[0].mxu0
        %v1752 = vpop.f32.mrb[0].mxu0
        %v1753 = vadd.f32 %v1593, %v1752
        %v1754 = vpop.f32.mrb[0].mxu0
        %1755 = vmatprep.mubr.bf16.mxu0 0
        %1756 = vmatmul.mubr.bf16.gmra.mrb[0].mxu0 %v1670
        %v1757 = vpop.f32.mrb[0].mxu0
        %v1758 = vadd.f32 %v1593, %v1757
        %v1759 = vpop.f32.mrb[0].mxu0
        %v1760 = vpop.f32.mrb[0].mxu0
        %v1761 = vadd.f32 %v1593, %v1760
        %v1762 = vpop.f32.mrb[0].mxu0
        %1763 = vmatprep.mubr.bf16.mxu0 0
        %1764 = vmatmul.mubr.bf16.gmra.mrb[0].mxu0 %v1673
        %v1765 = vpop.f32.mrb[0].mxu0
        %v1766 = vadd.f32 %v1593, %v1765
        %v1767 = vpop.f32.mrb[0].mxu0
        %v1768 = vpop.f32.mrb[0].mxu0
        %v1769 = vadd.f32 %v1593, %v1768
        %v1770 = vpop.f32.mrb[0].mxu0
        %1771 = vmatprep.mubr.bf16.mxu0 0
        %1772 = vmatmul.mubr.bf16.gmra.mrb[0].mxu0 %v1676
        %v1773 = vpop.f32.mrb[0].mxu0
        %v1774 = vadd.f32 %v1593, %v1773
        %v1775 = vpop.f32.mrb[0].mxu0
        %v1776 = vpop.f32.mrb[0].mxu0
        %v1777 = vadd.f32 %v1593, %v1776
        %v1778 = vpop.f32.mrb[0].mxu0
        %1779 = vmatprep.mubr.bf16.mxu0 0
        %1780 = vmatmul.mubr.bf16.gmra.mrb[0].mxu0 %v1679
        %v1781 = vpop.f32.mrb[0].mxu0
        %v1782 = vadd.f32 %v1593, %v1781
        %v1783 = vpop.f32.mrb[0].mxu0
        %v1784 = vpop.f32.mrb[0].mxu0
        %v1785 = vadd.f32 %v1593, %v1784
        %v1786 = vpop.f32.mrb[0].mxu0
        %1787 = vmatprep.mubr.bf16.mxu0 0
        %1788 = vmatmul.mubr.bf16.gmra.mrb[0].mxu0 %v1682
        %v1789 = vpop.f32.mrb[0].mxu0
        %v1790 = vadd.f32 %v1593, %v1789
        %v1791 = vpop.f32.mrb[0].mxu0
        %v1792 = vpop.f32.mrb[0].mxu0
        %v1793 = vadd.f32 %v1593, %v1792
        %v1794 = vpop.f32.mrb[0].mxu0
        %1795 = vmatprep.mubr.bf16.mxu0 0
        %1796 = vmatmul.mubr.bf16.gmra.mrb[0].mxu0 %v1685
        %v1797 = vpop.f32.mrb[0].mxu0
        %v1798 = vadd.f32 %v1593, %v1797
        %v1799 = vpop.f32.mrb[0].mxu0
        %v1800 = vpop.f32.mrb[0].mxu0
        %v1801 = vadd.f32 %v1593, %v1800
        %v1802 = vpop.f32.mrb[0].mxu0
        %1803 = vmatprep.mubr.bf16.mxu0 0
        %1804 = vmatmul.mubr.bf16.gmra.mrb[0].mxu0 %v1688
        %v1805 = vpop.f32.mrb[0].mxu0
        %v1806 = vadd.f32 %v1593, %v1805
        %v1807 = vpop.f32.mrb[0].mxu0
        %v1808 = vpop.f32.mrb[0].mxu0
        %v1809 = vadd.f32 %v1593, %v1808
        %v1810 = vpop.f32.mrb[0].mxu0
        %1811 = vmatprep.mubr.bf16.mxu0 0
        %1812 = vmatmul.mubr.bf16.gmra.mrb[0].mxu0 %v1691
        %v1813 = vpop.f32.mrb[0].mxu0
        %v1814 = vadd.f32 %v1593, %v1813
        %v1815 = vpop.f32.mrb[0].mxu0
        %v1816 = vpop.f32.mrb[0].mxu0
        %v1817 = vadd.f32 %v1593, %v1816
        %v1818 = vpop.f32.mrb[0].mxu0
        %1819 = vmatprep.mubr.bf16.mxu0 0
        %1820 = vmatmul.mubr.bf16.gmra.mrb[0].mxu0 %v1694
        %v1821 = vpop.f32.mrb[0].mxu0
        %v1822 = vadd.f32 %v1593, %v1821
        %v1823 = vpop.f32.mrb[0].mxu0
        %v1824 = vpop.f32.mrb[0].mxu0
        %v1825 = vadd.f32 %v1593, %v1824
        %v1826 = vpop.f32.mrb[0].mxu0
        %1827 = vmatprep.mubr.bf16.mxu0 0
        %1828 = vmatmul.mubr.bf16.gmra.mrb[0].mxu0 %v1697
        %v1829 = vpop.f32.mrb[0].mxu0
        %v1830 = vadd.f32 %v1593, %v1829
        %v1831 = vpop.f32.mrb[0].mxu0
        %v1832 = vpop.f32.mrb[0].mxu0
        %v1833 = vadd.f32 %v1593, %v1832
        %v1834 = vpop.f32.mrb[0].mxu0
        %1835 = vmatprep.mubr.bf16.mxu0 0
        %1836 = vmatmul.mubr.bf16.gmra.mrb[0].mxu0 %v1700
        %v1837 = vpop.f32.mrb[0].mxu0
        %v1838 = vadd.f32 %v1593, %v1837
        %v1839 = vpop.f32.mrb[0].mxu0
        %v1840 = vpop.f32.mrb[0].mxu0
        %v1841 = vadd.f32 %v1593, %v1840
        %v1842 = vpop.f32.mrb[0].mxu0
        %1843 = vmatprep.mubr.bf16.mxu0 0
        %1844 = vmatmul.mubr.bf16.gmra.mrb[0].mxu0 %v1703
        %v1845 = vpop.f32.mrb[0].mxu0
        %v1846 = vadd.f32 %v1593, %v1845
        %v1847 = vpop.f32.mrb[0].mxu0
        %v1848 = vpop.f32.mrb[0].mxu0
        %v1849 = vadd.f32 %v1593, %v1848
        %v1850 = vpop.f32.mrb[0].mxu0
        %1851 = vmatprep.mubr.bf16.mxu0 0
        %1852 = vmatmul.mubr.bf16.gmra.mrb[0].mxu0 %v1706
        %v1853 = vpop.f32.mrb[0].mxu0
        %v1854 = vadd.f32 %v1593, %v1853
        %v1855 = vpop.f32.mrb[0].mxu0
        %v1856 = vpop.f32.mrb[0].mxu0
        %v1857 = vadd.f32 %v1593, %v1856
        %v1858 = vpop.f32.mrb[0].mxu0
        %1859 = vdwg.mxu0
        %v1860 = vmax.f32 %v1750, 0.0
        %v1861 = vmax.f32 %v1753, 0.0
        %v1862 = vmax.f32 %v1758, 0.0
        %v1863 = vmax.f32 %v1761, 0.0
        %v1864 = vmax.f32 %v1766, 0.0
        %v1865 = vmax.f32 %v1769, 0.0
        %v1866 = vmax.f32 %v1774, 0.0
        %v1867 = vmax.f32 %v1777, 0.0
        %v1868 = vmax.f32 %v1782, 0.0
        %v1869 = vmax.f32 %v1785, 0.0
        %v1870 = vmax.f32 %v1790, 0.0
        %v1871 = vmax.f32 %v1793, 0.0
        %v1872 = vmax.f32 %v1798, 0.0
        %v1873 = vmax.f32 %v1801, 0.0
        %v1874 = vmax.f32 %v1806, 0.0
        %v1875 = vmax.f32 %v1809, 0.0
        %v1876 = vmax.f32 %v1814, 0.0
        %v1877 = vmax.f32 %v1817, 0.0
        %v1878 = vmax.f32 %v1822, 0.0
        %v1879 = vmax.f32 %v1825, 0.0
        %v1880 = vmax.f32 %v1830, 0.0
        %v1881 = vmax.f32 %v1833, 0.0
        %v1882 = vmax.f32 %v1838, 0.0
        %v1883 = vmax.f32 %v1841, 0.0
        %v1884 = vmax.f32 %v1846, 0.0
        %v1885 = vmax.f32 %v1849, 0.0
        %v1886 = vmax.f32 %v1854, 0.0
        %v1887 = vmax.f32 %v1857, 0.0
        %v1888 = vld [vmem:[%s1557] sm:$0xf]
        %v1889 = vld [vmem:[%s1557 + $0x4] sm:$0xf]
        %v1890 = vld [vmem:[%s1557 + $0x8] sm:$0xf]
        %v1891 = vld [vmem:[%s1557 + $0xc] sm:$0xf]
        %v1892 = vld [vmem:[%s1557 + $0x10] sm:$0xf]
        %v1893 = vld [vmem:[%s1557 + $0x14] sm:$0xf]
        %v1894 = vld [vmem:[%s1557 + $0x18] sm:$0xf]
        %v1895 = vld [vmem:[%s1557 + $0x1c] sm:$0xf]
        %v1896 = vld [vmem:[%s1557 + $0x20] sm:$0xf]
        %v1897 = vld [vmem:[%s1557 + $0x24] sm:$0xf]
        %v1898 = vld [vmem:[%s1557 + $0x28] sm:$0xf]
        %v1899 = vld [vmem:[%s1557 + $0x2c] sm:$0xf]
        %v1900 = vld [vmem:[%s1557 + $0x30] sm:$0xf]
        %v1901 = vld [vmem:[%s1557 + $0x34] sm:$0xf]
        %v1902 = vld [vmem:[%s1557 + $0x38] sm:$0xf]
        %v1903 = vld [vmem:[%s1557 + $0x3c] sm:$0xf]
        %v1904 = vld [vmem:[%s55] sm:$0xf]
        %v1905 = vld [vmem:[%s55 + $0x4] sm:$0x1]
        %v1906 = vld [vmem:[%s57] sm:$0x1]
        %v1908 = vlaneseq
        %v1909 = vshrl.u32 %v1908, 7
        %v1910 = vsub.s32 0, %v1909
        %v1911 = vrot.slane %v1906, %v1910
        %v1929 = vunpack.c.l.b16 %v1888
        %v1930 = vunpack.c.l.b16 %v1889
        %v1931 = vunpack.c.l.b16 %v1890
        %v1932 = vunpack.c.l.b16 %v1891
        %v1933 = vunpack.c.l.b16 %v1892
        %v1934 = vunpack.c.l.b16 %v1893
        %v1935 = vunpack.c.l.b16 %v1894
        %v1936 = vunpack.c.l.b16 %v1895
        %v1937 = vunpack.c.l.b16 %v1896
        %v1938 = vunpack.c.l.b16 %v1897
        %v1939 = vunpack.c.l.b16 %v1898
        %v1940 = vunpack.c.l.b16 %v1899
        %v1941 = vunpack.c.l.b16 %v1900
        %v1942 = vunpack.c.l.b16 %v1901
        %v1943 = vunpack.c.l.b16 %v1902
        %v1944 = vunpack.c.l.b16 %v1903
        %v1945 = vpack.c.b16 %v1930, %v1929
        %v1946 = vpack.c.b16 %v1932, %v1931
        %v1947 = vpack.c.b16 %v1934, %v1933
        %v1948 = vpack.c.b16 %v1936, %v1935
        %v1949 = vpack.c.b16 %v1938, %v1937
        %v1950 = vpack.c.b16 %v1940, %v1939
        %v1951 = vpack.c.b16 %v1942, %v1941
        %v1952 = vpack.c.b16 %v1944, %v1943
        %v1955 = vunpack.c.l.b16 %v1904
        %v1956 = vunpack.c.l.b16 %v1905
        %v1957 = vpack.c.b16 %v1956, %v1955
        %vm1958 = vcmask 72704
        %v1960 = vsel %vm1958, %v1945, 0
        %v1963 = vsel %vm1958, %v1946, 0
        %v1966 = vsel %vm1958, %v1947, 0
        %v1969 = vsel %vm1958, %v1948, 0
        %v1972 = vsel %vm1958, %v1949, 0
        %v1975 = vsel %vm1958, %v1950, 0
        %v1978 = vsel %vm1958, %v1951, 0
        %v1981 = vsel %vm1958, %v1952, 0
        %vm1983 = vcmask 1043456
        %vm1984 = vcmask 1044480
        %v1985 = vsel %vm1983, 4294967295, 65535
        %v1986 = vsel %vm1984, %v1985, 0
        %v1988 = vand.u32 %v1957, %v1986
        %1990 = vmatprep.subr.bf16.mxu0 0
        %1991 = vmatpush1.bf16.msra.mxu0 %v1988
        %1992 = vmatprep.subr.bf16.mxu0 0
        %1993 = vmatpush1.bf16.msra.mxu0 0
        %1994 = vmatprep.subr.bf16.mxu0 0
        %1995 = vmatpush1.bf16.msra.mxu0 0
        %1996 = vmatprep.subr.bf16.mxu0 0
        %1997 = vmatpush1.bf16.msra.mxu0 0
        %1998 = vmatprep.subr.bf16.mxu0 0
        %1999 = vmatpush1.bf16.msra.mxu0 0
        %2000 = vmatprep.subr.bf16.mxu0 0
        %2001 = vmatpush1.bf16.msra.mxu0 0
        %2002 = vmatprep.subr.bf16.mxu0 0
        %2003 = vmatpush1.bf16.msra.mxu0 0
        %2004 = vmatprep.subr.bf16.mxu0 0
        %2005 = vmatpush1.bf16.msra.mxu0 0
        %2006 = vmatprep.subr.bf16.mxu0 0
        %2007 = vmatpush1.bf16.msra.mxu0 0
        %2008 = vmatprep.subr.bf16.mxu0 0
        %2009 = vmatpush1.bf16.msra.mxu0 0
        %2010 = vmatprep.subr.bf16.mxu0 0
        %2011 = vmatpush1.bf16.msra.mxu0 0
        %2012 = vmatprep.subr.bf16.mxu0 0
        %2013 = vmatpush1.bf16.msra.mxu0 0
        %2014 = vmatprep.subr.bf16.mxu0 0
        %2015 = vmatpush1.bf16.msra.mxu0 0
        %2016 = vmatprep.subr.bf16.mxu0 0
        %2017 = vmatpush1.bf16.msra.mxu0 0
        %2018 = vmatprep.subr.bf16.mxu0 0
        %2019 = vmatpush1.bf16.msra.mxu0 0
        %2020 = vmatprep.subr.bf16.mxu0 0
        %2021 = vmatpush1.bf16.msra.mxu0 0
        %2022 = vmatprep.mubr.bf16.mxu0 0
        %2023 = vmatmul.mubr.bf16.gmra.mrb[0].mxu0 %v1960
        %v2024 = vpop.f32.mrb[0].mxu0
        %v2025 = vadd.f32 %v1911, %v2024
        %v2026 = vpop.f32.mrb[0].mxu0
        %v2027 = vpop.f32.mrb[0].mxu0
        %v2028 = vadd.f32 %v1911, %v2027
        %v2029 = vpop.f32.mrb[0].mxu0
        %2030 = vmatprep.mubr.bf16.mxu0 0
        %2031 = vmatmul.mubr.bf16.gmra.mrb[0].mxu0 %v1963
        %v2032 = vpop.f32.mrb[0].mxu0
        %v2033 = vadd.f32 %v1911, %v2032
        %v2034 = vpop.f32.mrb[0].mxu0
        %v2035 = vpop.f32.mrb[0].mxu0
        %v2036 = vadd.f32 %v1911, %v2035
        %v2037 = vpop.f32.mrb[0].mxu0
        %2038 = vmatprep.mubr.bf16.mxu0 0
        %2039 = vmatmul.mubr.bf16.gmra.mrb[0].mxu0 %v1966
        %v2040 = vpop.f32.mrb[0].mxu0
        %v2041 = vadd.f32 %v1911, %v2040
        %v2042 = vpop.f32.mrb[0].mxu0
        %v2043 = vpop.f32.mrb[0].mxu0
        %v2044 = vadd.f32 %v1911, %v2043
        %v2045 = vpop.f32.mrb[0].mxu0
        %2046 = vmatprep.mubr.bf16.mxu0 0
        %2047 = vmatmul.mubr.bf16.gmra.mrb[0].mxu0 %v1969
        %v2048 = vpop.f32.mrb[0].mxu0
        %v2049 = vadd.f32 %v1911, %v2048
        %v2050 = vpop.f32.mrb[0].mxu0
        %v2051 = vpop.f32.mrb[0].mxu0
        %v2052 = vadd.f32 %v1911, %v2051
        %v2053 = vpop.f32.mrb[0].mxu0
        %2054 = vmatprep.mubr.bf16.mxu0 0
        %2055 = vmatmul.mubr.bf16.gmra.mrb[0].mxu0 %v1972
        %v2056 = vpop.f32.mrb[0].mxu0
        %v2057 = vadd.f32 %v1911, %v2056
        %v2058 = vpop.f32.mrb[0].mxu0
        %v2059 = vpop.f32.mrb[0].mxu0
        %v2060 = vadd.f32 %v1911, %v2059
        %v2061 = vpop.f32.mrb[0].mxu0
        %2062 = vmatprep.mubr.bf16.mxu0 0
        %2063 = vmatmul.mubr.bf16.gmra.mrb[0].mxu0 %v1975
        %v2064 = vpop.f32.mrb[0].mxu0
        %v2065 = vadd.f32 %v1911, %v2064
        %v2066 = vpop.f32.mrb[0].mxu0
        %v2067 = vpop.f32.mrb[0].mxu0
        %v2068 = vadd.f32 %v1911, %v2067
        %v2069 = vpop.f32.mrb[0].mxu0
        %2070 = vmatprep.mubr.bf16.mxu0 0
        %2071 = vmatmul.mubr.bf16.gmra.mrb[0].mxu0 %v1978
        %v2072 = vpop.f32.mrb[0].mxu0
        %v2073 = vadd.f32 %v1911, %v2072
        %v2074 = vpop.f32.mrb[0].mxu0
        %v2075 = vpop.f32.mrb[0].mxu0
        %v2076 = vadd.f32 %v1911, %v2075
        %v2077 = vpop.f32.mrb[0].mxu0
        %2078 = vmatprep.mubr.bf16.mxu0 0
        %2079 = vmatmul.mubr.bf16.gmra.mrb[0].mxu0 %v1981
        %v2080 = vpop.f32.mrb[0].mxu0
        %v2081 = vadd.f32 %v1911, %v2080
        %v2082 = vpop.f32.mrb[0].mxu0
        %v2083 = vpop.f32.mrb[0].mxu0
        %v2084 = vadd.f32 %v1911, %v2083
        %v2085 = vpop.f32.mrb[0].mxu0
        %2086 = vdwg.mxu0
        %v2087 = vmax.f32 %v2025, 0.0
        %v2088 = vmax.f32 %v2028, 0.0
        %v2089 = vmax.f32 %v2033, 0.0
        %v2090 = vmax.f32 %v2036, 0.0
        %v2091 = vmax.f32 %v2041, 0.0
        %v2092 = vmax.f32 %v2044, 0.0
        %v2093 = vmax.f32 %v2049, 0.0
        %v2094 = vmax.f32 %v2052, 0.0
        %v2095 = vmax.f32 %v2057, 0.0
        %v2096 = vmax.f32 %v2060, 0.0
        %v2097 = vmax.f32 %v2065, 0.0
        %v2098 = vmax.f32 %v2068, 0.0
        %v2099 = vmax.f32 %v2073, 0.0
        %v2100 = vmax.f32 %v2076, 0.0
        %v2101 = vmax.f32 %v2081, 0.0
        %v2102 = vmax.f32 %v2084, 0.0
        %v2103 = vld [vmem:[%s5] sm:$0xff]
        %v2104 = vld [vmem:[%s5 + $0x8] sm:$0xff]
        %v2105 = vld [vmem:[%s5 + $0x10] sm:$0xff]
        %v2106 = vld [vmem:[%s5 + $0x18] sm:$0xff]
        %v2107 = vld [vmem:[%s5 + $0x20] sm:$0xff]
        %v2108 = vld [vmem:[%s5 + $0x28] sm:$0xff]
        %v2109 = vld [vmem:[%s5 + $0x30] sm:$0xff]
        %v2110 = vld [vmem:[%s5 + $0x38] sm:$0xff]
        %v2111 = vld [vmem:[%s5 + $0x40] sm:$0xff]
        %v2112 = vld [vmem:[%s5 + $0x48] sm:$0xff]
        %v2113 = vld [vmem:[%s5 + $0x50] sm:$0xff]
        %v2114 = vld [vmem:[%s5 + $0x58] sm:$0xff]
        %v2115 = vld [vmem:[%s5 + $0x60] sm:$0xff]
        %v2116 = vld [vmem:[%s5 + $0x68] sm:$0xff]
        %v2117 = vld [vmem:[%s5 + $0x70] sm:$0xff]
        %v2118 = vld [vmem:[%s5 + $0x78] sm:$0xff]
        %v2119 = vld [vmem:[%s5 + $0x80] sm:$0xff]
        %v2120 = vld [vmem:[%s5 + $0x88] sm:$0xff]
        %v2121 = vld [vmem:[%s5 + $0x90] sm:$0xff]
        %v2122 = vld [vmem:[%s5 + $0x98] sm:$0xff]
        %v2123 = vld [vmem:[%s5 + $0xa0] sm:$0xff]
        %v2124 = vld [vmem:[%s5 + $0xa8] sm:$0xff]
        %v2125 = vld [vmem:[%s5 + $0xb0] sm:$0xff]
        %v2126 = vld [vmem:[%s5 + $0xb8] sm:$0xff]
        %v2127 = vld [vmem:[%s5 + $0xc0] sm:$0xff]
        %v2128 = vld [vmem:[%s5 + $0xc8] sm:$0xff]
        %v2129 = vld [vmem:[%s5 + $0xd0] sm:$0xff]
        %v2130 = vld [vmem:[%s5 + $0xd8] sm:$0xff]
        %v2131 = vpack.c.bf16 %v1861, %v1860
        %v2132 = vpack.c.bf16 %v1863, %v1862
        %v2133 = vpack.c.bf16 %v1865, %v1864
        %v2134 = vpack.c.bf16 %v1867, %v1866
        %v2135 = vpack.c.bf16 %v1869, %v1868
        %v2136 = vpack.c.bf16 %v1871, %v1870
        %v2137 = vpack.c.bf16 %v1873, %v1872
        %v2138 = vpack.c.bf16 %v1875, %v1874
        %v2139 = vpack.c.bf16 %v1877, %v1876
        %v2140 = vpack.c.bf16 %v1879, %v1878
        %v2141 = vpack.c.bf16 %v1881, %v1880
        %v2142 = vpack.c.bf16 %v1883, %v1882
        %v2143 = vpack.c.bf16 %v1885, %v1884
        %v2144 = vpack.c.bf16 %v1887, %v1886
        %v2173 = vunpack.c.l.b16 %v2103
        %v2174 = vunpack.c.h.b16 %v2103
        %v2175 = vunpack.c.l.b16 %v2104
        %v2176 = vunpack.c.h.b16 %v2104
        %v2177 = vunpack.c.l.b16 %v2105
        %v2178 = vunpack.c.h.b16 %v2105
        %v2179 = vunpack.c.l.b16 %v2106
        %v2180 = vunpack.c.h.b16 %v2106
        %v2181 = vunpack.c.l.b16 %v2107
        %v2182 = vunpack.c.h.b16 %v2107
        %v2183 = vunpack.c.l.b16 %v2108
        %v2184 = vunpack.c.h.b16 %v2108
        %v2185 = vunpack.c.l.b16 %v2109
        %v2186 = vunpack.c.h.b16 %v2109
        %v2187 = vunpack.c.l.b16 %v2110
        %v2188 = vunpack.c.h.b16 %v2110
        %v2189 = vunpack.c.l.b16 %v2111
        %v2190 = vunpack.c.h.b16 %v2111
        %v2191 = vunpack.c.l.b16 %v2112
        %v2192 = vunpack.c.h.b16 %v2112
        %v2193 = vunpack.c.l.b16 %v2113
        %v2194 = vunpack.c.h.b16 %v2113
        %v2195 = vunpack.c.l.b16 %v2114
        %v2196 = vunpack.c.h.b16 %v2114
        %v2197 = vunpack.c.l.b16 %v2115
        %v2198 = vunpack.c.h.b16 %v2115
        %v2199 = vunpack.c.l.b16 %v2116
        %v2200 = vunpack.c.h.b16 %v2116
        %v2201 = vunpack.c.l.b16 %v2117
        %v2202 = vunpack.c.h.b16 %v2117
        %v2203 = vunpack.c.l.b16 %v2118
        %v2204 = vunpack.c.h.b16 %v2118
        %v2205 = vunpack.c.l.b16 %v2119
        %v2206 = vunpack.c.h.b16 %v2119
        %v2207 = vunpack.c.l.b16 %v2120
        %v2208 = vunpack.c.h.b16 %v2120
        %v2209 = vunpack.c.l.b16 %v2121
        %v2210 = vunpack.c.h.b16 %v2121
        %v2211 = vunpack.c.l.b16 %v2122
        %v2212 = vunpack.c.h.b16 %v2122
        %v2213 = vunpack.c.l.b16 %v2123
        %v2214 = vunpack.c.h.b16 %v2123
        %v2215 = vunpack.c.l.b16 %v2124
        %v2216 = vunpack.c.h.b16 %v2124
        %v2217 = vunpack.c.l.b16 %v2125
        %v2218 = vunpack.c.h.b16 %v2125
        %v2219 = vunpack.c.l.b16 %v2126
        %v2220 = vunpack.c.h.b16 %v2126
        %v2221 = vunpack.c.l.b16 %v2127
        %v2222 = vunpack.c.h.b16 %v2127
        %v2223 = vunpack.c.l.b16 %v2128
        %v2224 = vunpack.c.h.b16 %v2128
        %v2225 = vunpack.c.l.b16 %v2129
        %v2226 = vunpack.c.h.b16 %v2129
        %v2227 = vunpack.c.l.b16 %v2130
        %v2228 = vunpack.c.h.b16 %v2130
        %v2229 = vpack.c.b16 %v2175, %v2173
        %v2230 = vpack.c.b16 %v2176, %v2174
        %v2231 = vpack.c.b16 %v2179, %v2177
        %v2232 = vpack.c.b16 %v2180, %v2178
        %v2233 = vpack.c.b16 %v2183, %v2181
        %v2234 = vpack.c.b16 %v2184, %v2182
        %v2235 = vpack.c.b16 %v2187, %v2185
        %v2236 = vpack.c.b16 %v2188, %v2186
        %v2237 = vpack.c.b16 %v2191, %v2189
        %v2238 = vpack.c.b16 %v2192, %v2190
        %v2239 = vpack.c.b16 %v2195, %v2193
        %v2240 = vpack.c.b16 %v2196, %v2194
        %v2241 = vpack.c.b16 %v2199, %v2197
        %v2242 = vpack.c.b16 %v2200, %v2198
        %v2243 = vpack.c.b16 %v2203, %v2201
        %v2244 = vpack.c.b16 %v2204, %v2202
        %v2245 = vpack.c.b16 %v2207, %v2205
        %v2246 = vpack.c.b16 %v2208, %v2206
        %v2247 = vpack.c.b16 %v2211, %v2209
        %v2248 = vpack.c.b16 %v2212, %v2210
        %v2249 = vpack.c.b16 %v2215, %v2213
        %v2250 = vpack.c.b16 %v2216, %v2214
        %v2251 = vpack.c.b16 %v2219, %v2217
        %v2252 = vpack.c.b16 %v2220, %v2218
        %v2253 = vpack.c.b16 %v2223, %v2221
        %v2254 = vpack.c.b16 %v2224, %v2222
        %v2255 = vpack.c.b16 %v2227, %v2225
        %v2256 = vpack.c.b16 %v2228, %v2226
        %vm2271 = vcmask 785408
        %v2273 = vsel %vm2271, %v2230, 0
        %v2276 = vsel %vm2271, %v2232, 0
        %v2279 = vsel %vm2271, %v2234, 0
        %v2282 = vsel %vm2271, %v2236, 0
        %v2285 = vsel %vm2271, %v2238, 0
        %v2288 = vsel %vm2271, %v2240, 0
        %v2291 = vsel %vm2271, %v2242, 0
        %v2294 = vsel %vm2271, %v2244, 0
        %v2297 = vsel %vm2271, %v2246, 0
        %v2300 = vsel %vm2271, %v2248, 0
        %v2303 = vsel %vm2271, %v2250, 0
        %v2306 = vsel %vm2271, %v2252, 0
        %v2309 = vsel %vm2271, %v2254, 0
        %v2312 = vsel %vm2271, %v2256, 0
        %2314 = vmatprep.subr.bf16.mxu0 0
        %2315 = vmatpush1.bf16.msra.mxu0 %v2131
        %2316 = vmatprep.subr.bf16.mxu0 0
        %2317 = vmatpush1.bf16.msra.mxu0 %v2132
        %2318 = vmatprep.subr.bf16.mxu0 0
        %2319 = vmatpush1.bf16.msra.mxu0 %v2133
        %2320 = vmatprep.subr.bf16.mxu0 0
        %2321 = vmatpush1.bf16.msra.mxu0 %v2134
        %2322 = vmatprep.subr.bf16.mxu0 0
        %2323 = vmatpush1.bf16.msra.mxu0 %v2135
        %2324 = vmatprep.subr.bf16.mxu0 0
        %2325 = vmatpush1.bf16.msra.mxu0 %v2136
        %2326 = vmatprep.subr.bf16.mxu0 0
        %2327 = vmatpush1.bf16.msra.mxu0 %v2137
        %2328 = vmatprep.subr.bf16.mxu0 0
        %2329 = vmatpush1.bf16.msra.mxu0 %v2138
        %2330 = vmatprep.subr.bf16.mxu0 0
        %2331 = vmatpush1.bf16.msra.mxu0 %v2139
        %2332 = vmatprep.subr.bf16.mxu0 0
        %2333 = vmatpush1.bf16.msra.mxu0 %v2140
        %2334 = vmatprep.subr.bf16.mxu0 0
        %2335 = vmatpush1.bf16.msra.mxu0 %v2141
        %2336 = vmatprep.subr.bf16.mxu0 0
        %2337 = vmatpush1.bf16.msra.mxu0 %v2142
        %2338 = vmatprep.subr.bf16.mxu0 0
        %2339 = vmatpush1.bf16.msra.mxu0 %v2143
        %2340 = vmatprep.subr.bf16.mxu0 0
        %2341 = vmatpush1.bf16.msra.mxu0 %v2144
        %2342 = vmatprep.subr.bf16.mxu0 0
        %2343 = vmatpush1.bf16.msra.mxu0 0
        %2344 = vmatprep.subr.bf16.mxu0 0
        %2345 = vmatpush1.bf16.msra.mxu0 0
        %2346 = vmatprep.mubr.bf16.mxu0 %v2273
        %2347 = vmatmul.mubr.bf16.gmra.mrb[0].mxu0 %v2229
        %v2348 = vpop.f32.mrb[0].mxu0
        %v2349 = vadd.f32 0.0, %v2348
        %v2350 = vpop.f32.mrb[0].mxu0
        %v2351 = vpop.f32.mrb[0].mxu0
        %v2352 = vadd.f32 0.0, %v2351
        %v2353 = vpop.f32.mrb[0].mxu0
        %2354 = vmatprep.mubr.bf16.mxu0 %v2276
        %2355 = vmatmul.mubr.bf16.gmra.mrb[0].mxu0 %v2231
        %v2356 = vpop.f32.mrb[0].mxu0
        %v2357 = vadd.f32 0.0, %v2356
        %v2358 = vpop.f32.mrb[0].mxu0
        %v2359 = vpop.f32.mrb[0].mxu0
        %v2360 = vadd.f32 0.0, %v2359
        %v2361 = vpop.f32.mrb[0].mxu0
        %2362 = vmatprep.mubr.bf16.mxu0 %v2279
        %2363 = vmatmul.mubr.bf16.gmra.mrb[0].mxu0 %v2233
        %v2364 = vpop.f32.mrb[0].mxu0
        %v2365 = vadd.f32 0.0, %v2364
        %v2366 = vpop.f32.mrb[0].mxu0
        %v2367 = vpop.f32.mrb[0].mxu0
        %v2368 = vadd.f32 0.0, %v2367
        %v2369 = vpop.f32.mrb[0].mxu0
        %2370 = vmatprep.mubr.bf16.mxu0 %v2282
        %2371 = vmatmul.mubr.bf16.gmra.mrb[0].mxu0 %v2235
        %v2372 = vpop.f32.mrb[0].mxu0
        %v2373 = vadd.f32 0.0, %v2372
        %v2374 = vpop.f32.mrb[0].mxu0
        %v2375 = vpop.f32.mrb[0].mxu0
        %v2376 = vadd.f32 0.0, %v2375
        %v2377 = vpop.f32.mrb[0].mxu0
        %2378 = vmatprep.mubr.bf16.mxu0 %v2285
        %2379 = vmatmul.mubr.bf16.gmra.mrb[0].mxu0 %v2237
        %v2380 = vpop.f32.mrb[0].mxu0
        %v2381 = vadd.f32 0.0, %v2380
        %v2382 = vpop.f32.mrb[0].mxu0
        %v2383 = vpop.f32.mrb[0].mxu0
        %v2384 = vadd.f32 0.0, %v2383
        %v2385 = vpop.f32.mrb[0].mxu0
        %2386 = vmatprep.mubr.bf16.mxu0 %v2288
        %2387 = vmatmul.mubr.bf16.gmra.mrb[0].mxu0 %v2239
        %v2388 = vpop.f32.mrb[0].mxu0
        %v2389 = vadd.f32 0.0, %v2388
        %v2390 = vpop.f32.mrb[0].mxu0
        %v2391 = vpop.f32.mrb[0].mxu0
        %v2392 = vadd.f32 0.0, %v2391
        %v2393 = vpop.f32.mrb[0].mxu0
        %2394 = vmatprep.mubr.bf16.mxu0 %v2291
        %2395 = vmatmul.mubr.bf16.gmra.mrb[0].mxu0 %v2241
        %v2396 = vpop.f32.mrb[0].mxu0
        %v2397 = vadd.f32 0.0, %v2396
        %v2398 = vpop.f32.mrb[0].mxu0
        %v2399 = vpop.f32.mrb[0].mxu0
        %v2400 = vadd.f32 0.0, %v2399
        %v2401 = vpop.f32.mrb[0].mxu0
        %2402 = vmatprep.mubr.bf16.mxu0 %v2294
        %2403 = vmatmul.mubr.bf16.gmra.mrb[0].mxu0 %v2243
        %v2404 = vpop.f32.mrb[0].mxu0
        %v2405 = vadd.f32 0.0, %v2404
        %v2406 = vpop.f32.mrb[0].mxu0
        %v2407 = vpop.f32.mrb[0].mxu0
        %v2408 = vadd.f32 0.0, %v2407
        %v2409 = vpop.f32.mrb[0].mxu0
        %2410 = vmatprep.mubr.bf16.mxu0 %v2297
        %2411 = vmatmul.mubr.bf16.gmra.mrb[0].mxu0 %v2245
        %v2412 = vpop.f32.mrb[0].mxu0
        %v2413 = vadd.f32 0.0, %v2412
        %v2414 = vpop.f32.mrb[0].mxu0
        %v2415 = vpop.f32.mrb[0].mxu0
        %v2416 = vadd.f32 0.0, %v2415
        %v2417 = vpop.f32.mrb[0].mxu0
        %2418 = vmatprep.mubr.bf16.mxu0 %v2300
        %2419 = vmatmul.mubr.bf16.gmra.mrb[0].mxu0 %v2247
        %v2420 = vpop.f32.mrb[0].mxu0
        %v2421 = vadd.f32 0.0, %v2420
        %v2422 = vpop.f32.mrb[0].mxu0
        %v2423 = vpop.f32.mrb[0].mxu0
        %v2424 = vadd.f32 0.0, %v2423
        %v2425 = vpop.f32.mrb[0].mxu0
        %2426 = vmatprep.mubr.bf16.mxu0 %v2303
        %2427 = vmatmul.mubr.bf16.gmra.mrb[0].mxu0 %v2249
        %v2428 = vpop.f32.mrb[0].mxu0
        %v2429 = vadd.f32 0.0, %v2428
        %v2430 = vpop.f32.mrb[0].mxu0
        %v2431 = vpop.f32.mrb[0].mxu0
        %v2432 = vadd.f32 0.0, %v2431
        %v2433 = vpop.f32.mrb[0].mxu0
        %2434 = vmatprep.mubr.bf16.mxu0 %v2306
        %2435 = vmatmul.mubr.bf16.gmra.mrb[0].mxu0 %v2251
        %v2436 = vpop.f32.mrb[0].mxu0
        %v2437 = vadd.f32 0.0, %v2436
        %v2438 = vpop.f32.mrb[0].mxu0
        %v2439 = vpop.f32.mrb[0].mxu0
        %v2440 = vadd.f32 0.0, %v2439
        %v2441 = vpop.f32.mrb[0].mxu0
        %2442 = vmatprep.mubr.bf16.mxu0 %v2309
        %2443 = vmatmul.mubr.bf16.gmra.mrb[0].mxu0 %v2253
        %v2444 = vpop.f32.mrb[0].mxu0
        %v2445 = vadd.f32 0.0, %v2444
        %v2446 = vpop.f32.mrb[0].mxu0
        %v2447 = vpop.f32.mrb[0].mxu0
        %v2448 = vadd.f32 0.0, %v2447
        %v2449 = vpop.f32.mrb[0].mxu0
        %2450 = vmatprep.mubr.bf16.mxu0 %v2312
        %2451 = vmatmul.mubr.bf16.gmra.mrb[0].mxu0 %v2255
        %v2452 = vpop.f32.mrb[0].mxu0
        %v2453 = vadd.f32 0.0, %v2452
        %v2454 = vpop.f32.mrb[0].mxu0
        %v2455 = vpop.f32.mrb[0].mxu0
        %v2456 = vadd.f32 0.0, %v2455
        %v2457 = vpop.f32.mrb[0].mxu0
        %2458 = vdwg.mxu0
        %v2459 = vld [vmem:[%s27] sm:$0xf]
        %v2460 = vld [vmem:[%s27 + $0x4] sm:$0xf]
        %v2461 = vld [vmem:[%s27 + $0x8] sm:$0xf]
        %v2462 = vld [vmem:[%s27 + $0xc] sm:$0xf]
        %v2463 = vpack.c.bf16 %v2352, %v2349
        %v2464 = vpack.c.bf16 %v2360, %v2357
        %v2465 = vpack.c.bf16 %v2368, %v2365
        %v2466 = vpack.c.bf16 %v2376, %v2373
        %v2467 = vpack.c.bf16 %v2384, %v2381
        %v2468 = vpack.c.bf16 %v2392, %v2389
        %v2469 = vpack.c.bf16 %v2400, %v2397
        %v2470 = vpack.c.bf16 %v2408, %v2405
        %v2471 = vpack.c.bf16 %v2416, %v2413
        %v2472 = vpack.c.bf16 %v2424, %v2421
        %v2473 = vpack.c.bf16 %v2432, %v2429
        %v2474 = vpack.c.bf16 %v2440, %v2437
        %v2475 = vpack.c.bf16 %v2448, %v2445
        %v2476 = vpack.c.bf16 %v2456, %v2453
        %v2477 = vld [vmem:[%s29] sm:$0x1]
        %v2479 = vlaneseq
        %v2480 = vshrl.u32 %v2479, 7
        %v2481 = vsub.s32 0, %v2480
        %v2482 = vrot.slane %v2477, %v2481
        %v2488 = vunpack.c.l.b16 %v2459
        %v2489 = vunpack.c.l.b16 %v2460
        %v2490 = vunpack.c.l.b16 %v2461
        %v2491 = vunpack.c.l.b16 %v2462
        %v2492 = vpack.c.b16 %v2489, %v2488
        %v2493 = vpack.c.b16 %v2491, %v2490
        %vm2496 = vcmask 261120
        %v2498 = vsel %vm2496, %v2463, 0
        %v2501 = vsel %vm2496, %v2464, 0
        %v2504 = vsel %vm2496, %v2465, 0
        %v2507 = vsel %vm2496, %v2466, 0
        %v2510 = vsel %vm2496, %v2467, 0
        %v2513 = vsel %vm2496, %v2468, 0
        %v2516 = vsel %vm2496, %v2469, 0
        %v2519 = vsel %vm2496, %v2470, 0
        %v2522 = vsel %vm2496, %v2471, 0
        %v2525 = vsel %vm2496, %v2472, 0
        %v2528 = vsel %vm2496, %v2473, 0
        %v2531 = vsel %vm2496, %v2474, 0
        %v2534 = vsel %vm2496, %v2475, 0
        %v2537 = vsel %vm2496, %v2476, 0
        %2539 = vmatprep.subr.bf16.mxu0 0
        %2540 = vmatpush1.bf16.msra.mxu0 %v2492
        %2541 = vmatprep.subr.bf16.mxu0 0
        %2542 = vmatpush1.bf16.msra.mxu0 %v2493
        %2543 = vmatprep.subr.bf16.mxu0 0
        %2544 = vmatpush1.bf16.msra.mxu0 0
        %2545 = vmatprep.subr.bf16.mxu0 0
        %2546 = vmatpush1.bf16.msra.mxu0 0
        %2547 = vmatprep.subr.bf16.mxu0 0
        %2548 = vmatpush1.bf16.msra.mxu0 0
        %2549 = vmatprep.subr.bf16.mxu0 0
        %2550 = vmatpush1.bf16.msra.mxu0 0
        %2551 = vmatprep.subr.bf16.mxu0 0
        %2552 = vmatpush1.bf16.msra.mxu0 0
        %2553 = vmatprep.subr.bf16.mxu0 0
        %2554 = vmatpush1.bf16.msra.mxu0 0
        %2555 = vmatprep.subr.bf16.mxu0 0
        %2556 = vmatpush1.bf16.msra.mxu0 0
        %2557 = vmatprep.subr.bf16.mxu0 0
        %2558 = vmatpush1.bf16.msra.mxu0 0
        %2559 = vmatprep.subr.bf16.mxu0 0
        %2560 = vmatpush1.bf16.msra.mxu0 0
        %2561 = vmatprep.subr.bf16.mxu0 0
        %2562 = vmatpush1.bf16.msra.mxu0 0
        %2563 = vmatprep.subr.bf16.mxu0 0
        %2564 = vmatpush1.bf16.msra.mxu0 0
        %2565 = vmatprep.subr.bf16.mxu0 0
        %2566 = vmatpush1.bf16.msra.mxu0 0
        %2567 = vmatprep.subr.bf16.mxu0 0
        %2568 = vmatpush1.bf16.msra.mxu0 0
        %2569 = vmatprep.subr.bf16.mxu0 0
        %2570 = vmatpush1.bf16.msra.mxu0 0
        %2571 = vmatprep.mubr.bf16.mxu0 0
        %2572 = vmatmul.mubr.bf16.gmra.mrb[0].mxu0 %v2498
        %v2573 = vpop.f32.mrb[0].mxu0
        %v2574 = vadd.f32 %v2482, %v2573
        %v2575 = vpop.f32.mrb[0].mxu0
        %v2576 = vpop.f32.mrb[0].mxu0
        %v2577 = vadd.f32 %v2482, %v2576
        %v2578 = vpop.f32.mrb[0].mxu0
        %2579 = vmatprep.mubr.bf16.mxu0 0
        %2580 = vmatmul.mubr.bf16.gmra.mrb[0].mxu0 %v2501
        %v2581 = vpop.f32.mrb[0].mxu0
        %v2582 = vadd.f32 %v2482, %v2581
        %v2583 = vpop.f32.mrb[0].mxu0
        %v2584 = vpop.f32.mrb[0].mxu0
        %v2585 = vadd.f32 %v2482, %v2584
        %v2586 = vpop.f32.mrb[0].mxu0
        %2587 = vmatprep.mubr.bf16.mxu0 0
        %2588 = vmatmul.mubr.bf16.gmra.mrb[0].mxu0 %v2504
        %v2589 = vpop.f32.mrb[0].mxu0
        %v2590 = vadd.f32 %v2482, %v2589
        %v2591 = vpop.f32.mrb[0].mxu0
        %v2592 = vpop.f32.mrb[0].mxu0
        %v2593 = vadd.f32 %v2482, %v2592
        %v2594 = vpop.f32.mrb[0].mxu0
        %2595 = vmatprep.mubr.bf16.mxu0 0
        %2596 = vmatmul.mubr.bf16.gmra.mrb[0].mxu0 %v2507
        %v2597 = vpop.f32.mrb[0].mxu0
        %v2598 = vadd.f32 %v2482, %v2597
        %v2599 = vpop.f32.mrb[0].mxu0
        %v2600 = vpop.f32.mrb[0].mxu0
        %v2601 = vadd.f32 %v2482, %v2600
        %v2602 = vpop.f32.mrb[0].mxu0
        %2603 = vmatprep.mubr.bf16.mxu0 0
        %2604 = vmatmul.mubr.bf16.gmra.mrb[0].mxu0 %v2510
        %v2605 = vpop.f32.mrb[0].mxu0
        %v2606 = vadd.f32 %v2482, %v2605
        %v2607 = vpop.f32.mrb[0].mxu0
        %v2608 = vpop.f32.mrb[0].mxu0
        %v2609 = vadd.f32 %v2482, %v2608
        %v2610 = vpop.f32.mrb[0].mxu0
        %2611 = vmatprep.mubr.bf16.mxu0 0
        %2612 = vmatmul.mubr.bf16.gmra.mrb[0].mxu0 %v2513
        %v2613 = vpop.f32.mrb[0].mxu0
        %v2614 = vadd.f32 %v2482, %v2613
        %v2615 = vpop.f32.mrb[0].mxu0
        %v2616 = vpop.f32.mrb[0].mxu0
        %v2617 = vadd.f32 %v2482, %v2616
        %v2618 = vpop.f32.mrb[0].mxu0
        %2619 = vmatprep.mubr.bf16.mxu0 0
        %2620 = vmatmul.mubr.bf16.gmra.mrb[0].mxu0 %v2516
        %v2621 = vpop.f32.mrb[0].mxu0
        %v2622 = vadd.f32 %v2482, %v2621
        %v2623 = vpop.f32.mrb[0].mxu0
        %v2624 = vpop.f32.mrb[0].mxu0
        %v2625 = vadd.f32 %v2482, %v2624
        %v2626 = vpop.f32.mrb[0].mxu0
        %2627 = vmatprep.mubr.bf16.mxu0 0
        %2628 = vmatmul.mubr.bf16.gmra.mrb[0].mxu0 %v2519
        %v2629 = vpop.f32.mrb[0].mxu0
        %v2630 = vadd.f32 %v2482, %v2629
        %v2631 = vpop.f32.mrb[0].mxu0
        %v2632 = vpop.f32.mrb[0].mxu0
        %v2633 = vadd.f32 %v2482, %v2632
        %v2634 = vpop.f32.mrb[0].mxu0
        %2635 = vmatprep.mubr.bf16.mxu0 0
        %2636 = vmatmul.mubr.bf16.gmra.mrb[0].mxu0 %v2522
        %v2637 = vpop.f32.mrb[0].mxu0
        %v2638 = vadd.f32 %v2482, %v2637
        %v2639 = vpop.f32.mrb[0].mxu0
        %v2640 = vpop.f32.mrb[0].mxu0
        %v2641 = vadd.f32 %v2482, %v2640
        %v2642 = vpop.f32.mrb[0].mxu0
        %2643 = vmatprep.mubr.bf16.mxu0 0
        %2644 = vmatmul.mubr.bf16.gmra.mrb[0].mxu0 %v2525
        %v2645 = vpop.f32.mrb[0].mxu0
        %v2646 = vadd.f32 %v2482, %v2645
        %v2647 = vpop.f32.mrb[0].mxu0
        %v2648 = vpop.f32.mrb[0].mxu0
        %v2649 = vadd.f32 %v2482, %v2648
        %v2650 = vpop.f32.mrb[0].mxu0
        %2651 = vmatprep.mubr.bf16.mxu0 0
        %2652 = vmatmul.mubr.bf16.gmra.mrb[0].mxu0 %v2528
        %v2653 = vpop.f32.mrb[0].mxu0
        %v2654 = vadd.f32 %v2482, %v2653
        %v2655 = vpop.f32.mrb[0].mxu0
        %v2656 = vpop.f32.mrb[0].mxu0
        %v2657 = vadd.f32 %v2482, %v2656
        %v2658 = vpop.f32.mrb[0].mxu0
        %2659 = vmatprep.mubr.bf16.mxu0 0
        %2660 = vmatmul.mubr.bf16.gmra.mrb[0].mxu0 %v2531
        %v2661 = vpop.f32.mrb[0].mxu0
        %v2662 = vadd.f32 %v2482, %v2661
        %v2663 = vpop.f32.mrb[0].mxu0
        %v2664 = vpop.f32.mrb[0].mxu0
        %v2665 = vadd.f32 %v2482, %v2664
        %v2666 = vpop.f32.mrb[0].mxu0
        %2667 = vmatprep.mubr.bf16.mxu0 0
        %2668 = vmatmul.mubr.bf16.gmra.mrb[0].mxu0 %v2534
        %v2669 = vpop.f32.mrb[0].mxu0
        %v2670 = vadd.f32 %v2482, %v2669
        %v2671 = vpop.f32.mrb[0].mxu0
        %v2672 = vpop.f32.mrb[0].mxu0
        %v2673 = vadd.f32 %v2482, %v2672
        %v2674 = vpop.f32.mrb[0].mxu0
        %2675 = vmatprep.mubr.bf16.mxu0 0
        %2676 = vmatmul.mubr.bf16.gmra.mrb[0].mxu0 %v2537
        %v2677 = vpop.f32.mrb[0].mxu0
        %v2678 = vadd.f32 %v2482, %v2677
        %v2679 = vpop.f32.mrb[0].mxu0
        %v2680 = vpop.f32.mrb[0].mxu0
        %v2681 = vadd.f32 %v2482, %v2680
        %v2682 = vpop.f32.mrb[0].mxu0
        %2683 = vdwg.mxu0
        %v2684 = vmax.f32 %v2574, 0.0
        %v2685 = vmax.f32 %v2577, 0.0
        %v2686 = vmax.f32 %v2582, 0.0
        %v2687 = vmax.f32 %v2585, 0.0
        %v2688 = vmax.f32 %v2590, 0.0
        %v2689 = vmax.f32 %v2593, 0.0
        %v2690 = vmax.f32 %v2598, 0.0
        %v2691 = vmax.f32 %v2601, 0.0
        %v2692 = vmax.f32 %v2606, 0.0
        %v2693 = vmax.f32 %v2609, 0.0
        %v2694 = vmax.f32 %v2614, 0.0
        %v2695 = vmax.f32 %v2617, 0.0
        %v2696 = vmax.f32 %v2622, 0.0
        %v2697 = vmax.f32 %v2625, 0.0
        %v2698 = vmax.f32 %v2630, 0.0
        %v2699 = vmax.f32 %v2633, 0.0
        %v2700 = vmax.f32 %v2638, 0.0
        %v2701 = vmax.f32 %v2641, 0.0
        %v2702 = vmax.f32 %v2646, 0.0
        %v2703 = vmax.f32 %v2649, 0.0
        %v2704 = vmax.f32 %v2654, 0.0
        %v2705 = vmax.f32 %v2657, 0.0
        %v2706 = vmax.f32 %v2662, 0.0
        %v2707 = vmax.f32 %v2665, 0.0
        %v2708 = vmax.f32 %v2670, 0.0
        %v2709 = vmax.f32 %v2673, 0.0
        %v2710 = vmax.f32 %v2678, 0.0
        %v2711 = vmax.f32 %v2681, 0.0
        %v2712 = vpack.c.bf16 %v2685, %v2684
        %v2713 = vpack.c.bf16 %v2687, %v2686
        %v2714 = vpack.c.bf16 %v2689, %v2688
        %v2715 = vpack.c.bf16 %v2691, %v2690
        %v2716 = vpack.c.bf16 %v2693, %v2692
        %v2717 = vpack.c.bf16 %v2695, %v2694
        %v2718 = vpack.c.bf16 %v2697, %v2696
        %v2719 = vpack.c.bf16 %v2699, %v2698
        %v2720 = vpack.c.bf16 %v2701, %v2700
        %v2721 = vpack.c.bf16 %v2703, %v2702
        %v2722 = vpack.c.bf16 %v2705, %v2704
        %v2723 = vpack.c.bf16 %v2707, %v2706
        %v2724 = vpack.c.bf16 %v2709, %v2708
        %v2725 = vpack.c.bf16 %v2711, %v2710
        %v2726 = vld [vmem:[%s31] sm:$0xf]
        %v2727 = vld [vmem:[%s31 + $0x4] sm:$0xf]
        %v2728 = vld [vmem:[%s31 + $0x8] sm:$0xf]
        %v2729 = vld [vmem:[%s31 + $0xc] sm:$0xf]
        %s2730 = scalar_lea.vmem %s31, 16
        %v2731 = vld [vmem:[%s2730] sm:$0xf]
        %v2732 = vld [vmem:[%s2730 + $0x4] sm:$0xf]
        %v2733 = vld [vmem:[%s2730 + $0x8] sm:$0xf]
        %v2734 = vld [vmem:[%s2730 + $0xc] sm:$0xf]
        %v2739 = vunpack.c.l.b16 %v2731
        %v2740 = vunpack.c.l.b16 %v2732
        %v2741 = vunpack.c.l.b16 %v2733
        %v2742 = vunpack.c.l.b16 %v2734
        %v2743 = vpack.c.b16 %v2740, %v2739
        %v2744 = vpack.c.b16 %v2742, %v2741
        %v2748 = vsel %vm2496, %v2713, 0
        %v2751 = vsel %vm2496, %v2714, 0
        %v2754 = vsel %vm2496, %v2715, 0
        %v2757 = vsel %vm2496, %v2716, 0
        %v2760 = vsel %vm2496, %v2717, 0
        %v2763 = vsel %vm2496, %v2718, 0
        %v2766 = vsel %vm2496, %v2719, 0
        %v2769 = vsel %vm2496, %v2720, 0
        %v2772 = vsel %vm2496, %v2721, 0
        %v2775 = vsel %vm2496, %v2722, 0
        %v2778 = vsel %vm2496, %v2723, 0
        %v2781 = vsel %vm2496, %v2724, 0
        %2783 = vmatprep.subr.bf16.mxu0 0
        %2784 = vmatpush1.bf16.msra.mxu0 %v2743
        %2785 = vmatprep.subr.bf16.mxu0 0
        %2786 = vmatpush1.bf16.msra.mxu0 %v2744
        %2787 = vmatprep.subr.bf16.mxu0 0
        %2788 = vmatpush1.bf16.msra.mxu0 0
        %2789 = vmatprep.subr.bf16.mxu0 0
        %2790 = vmatpush1.bf16.msra.mxu0 0
        %2791 = vmatprep.subr.bf16.mxu0 0
        %2792 = vmatpush1.bf16.msra.mxu0 0
        %2793 = vmatprep.subr.bf16.mxu0 0
        %2794 = vmatpush1.bf16.msra.mxu0 0
        %2795 = vmatprep.subr.bf16.mxu0 0
        %2796 = vmatpush1.bf16.msra.mxu0 0
        %2797 = vmatprep.subr.bf16.mxu0 0
        %2798 = vmatpush1.bf16.msra.mxu0 0
        %2799 = vmatprep.subr.bf16.mxu0 0
        %2800 = vmatpush1.bf16.msra.mxu0 0
        %2801 = vmatprep.subr.bf16.mxu0 0
        %2802 = vmatpush1.bf16.msra.mxu0 0
        %2803 = vmatprep.subr.bf16.mxu0 0
        %2804 = vmatpush1.bf16.msra.mxu0 0
        %2805 = vmatprep.subr.bf16.mxu0 0
        %2806 = vmatpush1.bf16.msra.mxu0 0
        %2807 = vmatprep.subr.bf16.mxu0 0
        %2808 = vmatpush1.bf16.msra.mxu0 0
        %2809 = vmatprep.subr.bf16.mxu0 0
        %2810 = vmatpush1.bf16.msra.mxu0 0
        %2811 = vmatprep.subr.bf16.mxu0 0
        %2812 = vmatpush1.bf16.msra.mxu0 0
        %2813 = vmatprep.subr.bf16.mxu0 0
        %2814 = vmatpush1.bf16.msra.mxu0 0
        %2815 = vmatprep.mubr.bf16.mxu0 0
        %2816 = vmatmul.mubr.bf16.gmra.mrb[0].mxu0 %v2748
        %v2817 = vpop.f32.mrb[0].mxu0
        %v2818 = vadd.f32 0.0, %v2817
        %v2819 = vpop.f32.mrb[0].mxu0
        %v2820 = vpop.f32.mrb[0].mxu0
        %v2821 = vadd.f32 0.0, %v2820
        %v2822 = vpop.f32.mrb[0].mxu0
        %2823 = vmatprep.mubr.bf16.mxu0 0
        %2824 = vmatmul.mubr.bf16.gmra.mrb[0].mxu0 %v2751
        %v2825 = vpop.f32.mrb[0].mxu0
        %v2826 = vadd.f32 0.0, %v2825
        %v2827 = vpop.f32.mrb[0].mxu0
        %v2828 = vpop.f32.mrb[0].mxu0
        %v2829 = vadd.f32 0.0, %v2828
        %v2830 = vpop.f32.mrb[0].mxu0
        %2831 = vmatprep.mubr.bf16.mxu0 0
        %2832 = vmatmul.mubr.bf16.gmra.mrb[0].mxu0 %v2754
        %v2833 = vpop.f32.mrb[0].mxu0
        %v2834 = vadd.f32 0.0, %v2833
        %v2835 = vpop.f32.mrb[0].mxu0
        %v2836 = vpop.f32.mrb[0].mxu0
        %v2837 = vadd.f32 0.0, %v2836
        %v2838 = vpop.f32.mrb[0].mxu0
        %2839 = vmatprep.mubr.bf16.mxu0 0
        %2840 = vmatmul.mubr.bf16.gmra.mrb[0].mxu0 %v2757
        %v2841 = vpop.f32.mrb[0].mxu0
        %v2842 = vadd.f32 0.0, %v2841
        %v2843 = vpop.f32.mrb[0].mxu0
        %v2844 = vpop.f32.mrb[0].mxu0
        %v2845 = vadd.f32 0.0, %v2844
        %v2846 = vpop.f32.mrb[0].mxu0
        %2847 = vmatprep.mubr.bf16.mxu0 0
        %2848 = vmatmul.mubr.bf16.gmra.mrb[0].mxu0 %v2760
        %v2849 = vpop.f32.mrb[0].mxu0
        %v2850 = vadd.f32 0.0, %v2849
        %v2851 = vpop.f32.mrb[0].mxu0
        %v2852 = vpop.f32.mrb[0].mxu0
        %v2853 = vadd.f32 0.0, %v2852
        %v2854 = vpop.f32.mrb[0].mxu0
        %2855 = vmatprep.mubr.bf16.mxu0 0
        %2856 = vmatmul.mubr.bf16.gmra.mrb[0].mxu0 %v2763
        %v2857 = vpop.f32.mrb[0].mxu0
        %v2858 = vadd.f32 0.0, %v2857
        %v2859 = vpop.f32.mrb[0].mxu0
        %v2860 = vpop.f32.mrb[0].mxu0
        %v2861 = vadd.f32 0.0, %v2860
        %v2862 = vpop.f32.mrb[0].mxu0
        %2863 = vmatprep.mubr.bf16.mxu0 0
        %2864 = vmatmul.mubr.bf16.gmra.mrb[0].mxu0 %v2766
        %v2865 = vpop.f32.mrb[0].mxu0
        %v2866 = vadd.f32 0.0, %v2865
        %v2867 = vpop.f32.mrb[0].mxu0
        %v2868 = vpop.f32.mrb[0].mxu0
        %v2869 = vadd.f32 0.0, %v2868
        %v2870 = vpop.f32.mrb[0].mxu0
        %2871 = vmatprep.mubr.bf16.mxu0 0
        %2872 = vmatmul.mubr.bf16.gmra.mrb[0].mxu0 %v2769
        %v2873 = vpop.f32.mrb[0].mxu0
        %v2874 = vadd.f32 0.0, %v2873
        %v2875 = vpop.f32.mrb[0].mxu0
        %v2876 = vpop.f32.mrb[0].mxu0
        %v2877 = vadd.f32 0.0, %v2876
        %v2878 = vpop.f32.mrb[0].mxu0
        %2879 = vmatprep.mubr.bf16.mxu0 0
        %2880 = vmatmul.mubr.bf16.gmra.mrb[0].mxu0 %v2772
        %v2881 = vpop.f32.mrb[0].mxu0
        %v2882 = vadd.f32 0.0, %v2881
        %v2883 = vpop.f32.mrb[0].mxu0
        %v2884 = vpop.f32.mrb[0].mxu0
        %v2885 = vadd.f32 0.0, %v2884
        %v2886 = vpop.f32.mrb[0].mxu0
        %2887 = vmatprep.mubr.bf16.mxu0 0
        %2888 = vmatmul.mubr.bf16.gmra.mrb[0].mxu0 %v2775
        %v2889 = vpop.f32.mrb[0].mxu0
        %v2890 = vadd.f32 0.0, %v2889
        %v2891 = vpop.f32.mrb[0].mxu0
        %v2892 = vpop.f32.mrb[0].mxu0
        %v2893 = vadd.f32 0.0, %v2892
        %v2894 = vpop.f32.mrb[0].mxu0
        %2895 = vmatprep.mubr.bf16.mxu0 0
        %2896 = vmatmul.mubr.bf16.gmra.mrb[0].mxu0 %v2778
        %v2897 = vpop.f32.mrb[0].mxu0
        %v2898 = vadd.f32 0.0, %v2897
        %v2899 = vpop.f32.mrb[0].mxu0
        %v2900 = vpop.f32.mrb[0].mxu0
        %v2901 = vadd.f32 0.0, %v2900
        %v2902 = vpop.f32.mrb[0].mxu0
        %2903 = vmatprep.mubr.bf16.mxu0 0
        %2904 = vmatmul.mubr.bf16.gmra.mrb[0].mxu0 %v2781
        %v2905 = vpop.f32.mrb[0].mxu0
        %v2906 = vadd.f32 0.0, %v2905
        %v2907 = vpop.f32.mrb[0].mxu0
        %v2908 = vpop.f32.mrb[0].mxu0
        %v2909 = vadd.f32 0.0, %v2908
        %v2910 = vpop.f32.mrb[0].mxu0
        %2911 = vdwg.mxu0
        %v2916 = vunpack.c.l.b16 %v2726
        %v2917 = vunpack.c.l.b16 %v2727
        %v2918 = vunpack.c.l.b16 %v2728
        %v2919 = vunpack.c.l.b16 %v2729
        %v2920 = vpack.c.b16 %v2917, %v2916
        %v2921 = vpack.c.b16 %v2919, %v2918
        %v2925 = vsel %vm2496, %v2712, 0
        %2927 = vmatprep.subr.bf16.mxu0 0
        %2928 = vmatpush1.bf16.msra.mxu0 %v2920
        %2929 = vmatprep.subr.bf16.mxu0 0
        %2930 = vmatpush1.bf16.msra.mxu0 %v2921
        %2931 = vmatprep.subr.bf16.mxu0 0
        %2932 = vmatpush1.bf16.msra.mxu0 0
        %2933 = vmatprep.subr.bf16.mxu0 0
        %2934 = vmatpush1.bf16.msra.mxu0 0
        %2935 = vmatprep.subr.bf16.mxu0 0
        %2936 = vmatpush1.bf16.msra.mxu0 0
        %2937 = vmatprep.subr.bf16.mxu0 0
        %2938 = vmatpush1.bf16.msra.mxu0 0
        %2939 = vmatprep.subr.bf16.mxu0 0
        %2940 = vmatpush1.bf16.msra.mxu0 0
        %2941 = vmatprep.subr.bf16.mxu0 0
        %2942 = vmatpush1.bf16.msra.mxu0 0
        %2943 = vmatprep.subr.bf16.mxu0 0
        %2944 = vmatpush1.bf16.msra.mxu0 0
        %2945 = vmatprep.subr.bf16.mxu0 0
        %2946 = vmatpush1.bf16.msra.mxu0 0
        %2947 = vmatprep.subr.bf16.mxu0 0
        %2948 = vmatpush1.bf16.msra.mxu0 0
        %2949 = vmatprep.subr.bf16.mxu0 0
        %2950 = vmatpush1.bf16.msra.mxu0 0
        %2951 = vmatprep.subr.bf16.mxu0 0
        %2952 = vmatpush1.bf16.msra.mxu0 0
        %2953 = vmatprep.subr.bf16.mxu0 0
        %2954 = vmatpush1.bf16.msra.mxu0 0
        %2955 = vmatprep.subr.bf16.mxu0 0
        %2956 = vmatpush1.bf16.msra.mxu0 0
        %2957 = vmatprep.subr.bf16.mxu0 0
        %2958 = vmatpush1.bf16.msra.mxu0 0
        %2959 = vmatprep.mubr.bf16.mxu0 0
        %2960 = vmatmul.mubr.bf16.gmra.mrb[0].mxu0 %v2925
        %v2961 = vpop.f32.mrb[0].mxu0
        %v2962 = vadd.f32 %v2818, %v2961
        %v2963 = vpop.f32.mrb[0].mxu0
        %v2964 = vpop.f32.mrb[0].mxu0
        %v2965 = vadd.f32 %v2821, %v2964
        %v2966 = vpop.f32.mrb[0].mxu0
        %2967 = vmatprep.mubr.bf16.mxu0 0
        %2968 = vmatmul.mubr.bf16.gmra.mrb[0].mxu0 %v2748
        %v2969 = vpop.f32.mrb[0].mxu0
        %v2970 = vadd.f32 %v2826, %v2969
        %v2971 = vpop.f32.mrb[0].mxu0
        %v2972 = vpop.f32.mrb[0].mxu0
        %v2973 = vadd.f32 %v2829, %v2972
        %v2974 = vpop.f32.mrb[0].mxu0
        %2975 = vmatprep.mubr.bf16.mxu0 0
        %2976 = vmatmul.mubr.bf16.gmra.mrb[0].mxu0 %v2751
        %v2977 = vpop.f32.mrb[0].mxu0
        %v2978 = vadd.f32 %v2834, %v2977
        %v2979 = vpop.f32.mrb[0].mxu0
        %v2980 = vpop.f32.mrb[0].mxu0
        %v2981 = vadd.f32 %v2837, %v2980
        %v2982 = vpop.f32.mrb[0].mxu0
        %2983 = vmatprep.mubr.bf16.mxu0 0
        %2984 = vmatmul.mubr.bf16.gmra.mrb[0].mxu0 %v2754
        %v2985 = vpop.f32.mrb[0].mxu0
        %v2986 = vadd.f32 %v2842, %v2985
        %v2987 = vpop.f32.mrb[0].mxu0
        %v2988 = vpop.f32.mrb[0].mxu0
        %v2989 = vadd.f32 %v2845, %v2988
        %v2990 = vpop.f32.mrb[0].mxu0
        %2991 = vmatprep.mubr.bf16.mxu0 0
        %2992 = vmatmul.mubr.bf16.gmra.mrb[0].mxu0 %v2757
        %v2993 = vpop.f32.mrb[0].mxu0
        %v2994 = vadd.f32 %v2850, %v2993
        %v2995 = vpop.f32.mrb[0].mxu0
        %v2996 = vpop.f32.mrb[0].mxu0
        %v2997 = vadd.f32 %v2853, %v2996
        %v2998 = vpop.f32.mrb[0].mxu0
        %2999 = vmatprep.mubr.bf16.mxu0 0
        %3000 = vmatmul.mubr.bf16.gmra.mrb[0].mxu0 %v2760
        %v3001 = vpop.f32.mrb[0].mxu0
        %v3002 = vadd.f32 %v2858, %v3001
        %v3003 = vpop.f32.mrb[0].mxu0
        %v3004 = vpop.f32.mrb[0].mxu0
        %v3005 = vadd.f32 %v2861, %v3004
        %v3006 = vpop.f32.mrb[0].mxu0
        %3007 = vmatprep.mubr.bf16.mxu0 0
        %3008 = vmatmul.mubr.bf16.gmra.mrb[0].mxu0 %v2763
        %v3009 = vpop.f32.mrb[0].mxu0
        %v3010 = vadd.f32 %v2866, %v3009
        %v3011 = vpop.f32.mrb[0].mxu0
        %v3012 = vpop.f32.mrb[0].mxu0
        %v3013 = vadd.f32 %v2869, %v3012
        %v3014 = vpop.f32.mrb[0].mxu0
        %3015 = vmatprep.mubr.bf16.mxu0 0
        %3016 = vmatmul.mubr.bf16.gmra.mrb[0].mxu0 %v2766
        %v3017 = vpop.f32.mrb[0].mxu0
        %v3018 = vadd.f32 %v2874, %v3017
        %v3019 = vpop.f32.mrb[0].mxu0
        %v3020 = vpop.f32.mrb[0].mxu0
        %v3021 = vadd.f32 %v2877, %v3020
        %v3022 = vpop.f32.mrb[0].mxu0
        %3023 = vmatprep.mubr.bf16.mxu0 0
        %3024 = vmatmul.mubr.bf16.gmra.mrb[0].mxu0 %v2769
        %v3025 = vpop.f32.mrb[0].mxu0
        %v3026 = vadd.f32 %v2882, %v3025
        %v3027 = vpop.f32.mrb[0].mxu0
        %v3028 = vpop.f32.mrb[0].mxu0
        %v3029 = vadd.f32 %v2885, %v3028
        %v3030 = vpop.f32.mrb[0].mxu0
        %3031 = vmatprep.mubr.bf16.mxu0 0
        %3032 = vmatmul.mubr.bf16.gmra.mrb[0].mxu0 %v2772
        %v3033 = vpop.f32.mrb[0].mxu0
        %v3034 = vadd.f32 %v2890, %v3033
        %v3035 = vpop.f32.mrb[0].mxu0
        %v3036 = vpop.f32.mrb[0].mxu0
        %v3037 = vadd.f32 %v2893, %v3036
        %v3038 = vpop.f32.mrb[0].mxu0
        %3039 = vmatprep.mubr.bf16.mxu0 0
        %3040 = vmatmul.mubr.bf16.gmra.mrb[0].mxu0 %v2775
        %v3041 = vpop.f32.mrb[0].mxu0
        %v3042 = vadd.f32 %v2898, %v3041
        %v3043 = vpop.f32.mrb[0].mxu0
        %v3044 = vpop.f32.mrb[0].mxu0
        %v3045 = vadd.f32 %v2901, %v3044
        %v3046 = vpop.f32.mrb[0].mxu0
        %3047 = vmatprep.mubr.bf16.mxu0 0
        %3048 = vmatmul.mubr.bf16.gmra.mrb[0].mxu0 %v2778
        %v3049 = vpop.f32.mrb[0].mxu0
        %v3050 = vadd.f32 %v2906, %v3049
        %v3051 = vpop.f32.mrb[0].mxu0
        %v3052 = vpop.f32.mrb[0].mxu0
        %v3053 = vadd.f32 %v2909, %v3052
        %v3054 = vpop.f32.mrb[0].mxu0
        %3055 = vdwg.mxu0
        %s3056 = scalar_lea.vmem %s31, 32
        %v3057 = vld [vmem:[%s3056] sm:$0xf]
        %v3058 = vld [vmem:[%s3056 + $0x4] sm:$0xf]
        %v3059 = vld [vmem:[%s3056 + $0x8] sm:$0xf]
        %v3060 = vld [vmem:[%s3056 + $0xc] sm:$0xf]
        %v3065 = vunpack.c.l.b16 %v3057
        %v3066 = vunpack.c.l.b16 %v3058
        %v3067 = vunpack.c.l.b16 %v3059
        %v3068 = vunpack.c.l.b16 %v3060
        %v3069 = vpack.c.b16 %v3066, %v3065
        %v3070 = vpack.c.b16 %v3068, %v3067
        %v3074 = vsel %vm2496, %v2725, 0
        %3076 = vmatprep.subr.bf16.mxu0 0
        %3077 = vmatpush1.bf16.msra.mxu0 %v3069
        %3078 = vmatprep.subr.bf16.mxu0 0
        %3079 = vmatpush1.bf16.msra.mxu0 %v3070
        %3080 = vmatprep.subr.bf16.mxu0 0
        %3081 = vmatpush1.bf16.msra.mxu0 0
        %3082 = vmatprep.subr.bf16.mxu0 0
        %3083 = vmatpush1.bf16.msra.mxu0 0
        %3084 = vmatprep.subr.bf16.mxu0 0
        %3085 = vmatpush1.bf16.msra.mxu0 0
        %3086 = vmatprep.subr.bf16.mxu0 0
        %3087 = vmatpush1.bf16.msra.mxu0 0
        %3088 = vmatprep.subr.bf16.mxu0 0
        %3089 = vmatpush1.bf16.msra.mxu0 0
        %3090 = vmatprep.subr.bf16.mxu0 0
        %3091 = vmatpush1.bf16.msra.mxu0 0
        %3092 = vmatprep.subr.bf16.mxu0 0
        %3093 = vmatpush1.bf16.msra.mxu0 0
        %3094 = vmatprep.subr.bf16.mxu0 0
        %3095 = vmatpush1.bf16.msra.mxu0 0
        %3096 = vmatprep.subr.bf16.mxu0 0
        %3097 = vmatpush1.bf16.msra.mxu0 0
        %3098 = vmatprep.subr.bf16.mxu0 0
        %3099 = vmatpush1.bf16.msra.mxu0 0
        %3100 = vmatprep.subr.bf16.mxu0 0
        %3101 = vmatpush1.bf16.msra.mxu0 0
        %3102 = vmatprep.subr.bf16.mxu0 0
        %3103 = vmatpush1.bf16.msra.mxu0 0
        %3104 = vmatprep.subr.bf16.mxu0 0
        %3105 = vmatpush1.bf16.msra.mxu0 0
        %3106 = vmatprep.subr.bf16.mxu0 0
        %3107 = vmatpush1.bf16.msra.mxu0 0
        %3108 = vmatprep.mubr.bf16.mxu0 0
        %3109 = vmatmul.mubr.bf16.gmra.mrb[0].mxu0 %v2751
        %v3110 = vpop.f32.mrb[0].mxu0
        %v3111 = vadd.f32 0.0, %v3110
        %v3112 = vpop.f32.mrb[0].mxu0
        %v3113 = vpop.f32.mrb[0].mxu0
        %v3114 = vadd.f32 0.0, %v3113
        %v3115 = vpop.f32.mrb[0].mxu0
        %3116 = vmatprep.mubr.bf16.mxu0 0
        %3117 = vmatmul.mubr.bf16.gmra.mrb[0].mxu0 %v2754
        %v3118 = vpop.f32.mrb[0].mxu0
        %v3119 = vadd.f32 0.0, %v3118
        %v3120 = vpop.f32.mrb[0].mxu0
        %v3121 = vpop.f32.mrb[0].mxu0
        %v3122 = vadd.f32 0.0, %v3121
        %v3123 = vpop.f32.mrb[0].mxu0
        %3124 = vmatprep.mubr.bf16.mxu0 0
        %3125 = vmatmul.mubr.bf16.gmra.mrb[0].mxu0 %v2757
        %v3126 = vpop.f32.mrb[0].mxu0
        %v3127 = vadd.f32 0.0, %v3126
        %v3128 = vpop.f32.mrb[0].mxu0
        %v3129 = vpop.f32.mrb[0].mxu0
        %v3130 = vadd.f32 0.0, %v3129
        %v3131 = vpop.f32.mrb[0].mxu0
        %3132 = vmatprep.mubr.bf16.mxu0 0
        %3133 = vmatmul.mubr.bf16.gmra.mrb[0].mxu0 %v2760
        %v3134 = vpop.f32.mrb[0].mxu0
        %v3135 = vadd.f32 0.0, %v3134
        %v3136 = vpop.f32.mrb[0].mxu0
        %v3137 = vpop.f32.mrb[0].mxu0
        %v3138 = vadd.f32 0.0, %v3137
        %v3139 = vpop.f32.mrb[0].mxu0
        %3140 = vmatprep.mubr.bf16.mxu0 0
        %3141 = vmatmul.mubr.bf16.gmra.mrb[0].mxu0 %v2763
        %v3142 = vpop.f32.mrb[0].mxu0
        %v3143 = vadd.f32 0.0, %v3142
        %v3144 = vpop.f32.mrb[0].mxu0
        %v3145 = vpop.f32.mrb[0].mxu0
        %v3146 = vadd.f32 0.0, %v3145
        %v3147 = vpop.f32.mrb[0].mxu0
        %3148 = vmatprep.mubr.bf16.mxu0 0
        %3149 = vmatmul.mubr.bf16.gmra.mrb[0].mxu0 %v2766
        %v3150 = vpop.f32.mrb[0].mxu0
        %v3151 = vadd.f32 0.0, %v3150
        %v3152 = vpop.f32.mrb[0].mxu0
        %v3153 = vpop.f32.mrb[0].mxu0
        %v3154 = vadd.f32 0.0, %v3153
        %v3155 = vpop.f32.mrb[0].mxu0
        %3156 = vmatprep.mubr.bf16.mxu0 0
        %3157 = vmatmul.mubr.bf16.gmra.mrb[0].mxu0 %v2769
        %v3158 = vpop.f32.mrb[0].mxu0
        %v3159 = vadd.f32 0.0, %v3158
        %v3160 = vpop.f32.mrb[0].mxu0
        %v3161 = vpop.f32.mrb[0].mxu0
        %v3162 = vadd.f32 0.0, %v3161
        %v3163 = vpop.f32.mrb[0].mxu0
        %3164 = vmatprep.mubr.bf16.mxu0 0
        %3165 = vmatmul.mubr.bf16.gmra.mrb[0].mxu0 %v2772
        %v3166 = vpop.f32.mrb[0].mxu0
        %v3167 = vadd.f32 0.0, %v3166
        %v3168 = vpop.f32.mrb[0].mxu0
        %v3169 = vpop.f32.mrb[0].mxu0
        %v3170 = vadd.f32 0.0, %v3169
        %v3171 = vpop.f32.mrb[0].mxu0
        %3172 = vmatprep.mubr.bf16.mxu0 0
        %3173 = vmatmul.mubr.bf16.gmra.mrb[0].mxu0 %v2775
        %v3174 = vpop.f32.mrb[0].mxu0
        %v3175 = vadd.f32 0.0, %v3174
        %v3176 = vpop.f32.mrb[0].mxu0
        %v3177 = vpop.f32.mrb[0].mxu0
        %v3178 = vadd.f32 0.0, %v3177
        %v3179 = vpop.f32.mrb[0].mxu0
        %3180 = vmatprep.mubr.bf16.mxu0 0
        %3181 = vmatmul.mubr.bf16.gmra.mrb[0].mxu0 %v2778
        %v3182 = vpop.f32.mrb[0].mxu0
        %v3183 = vadd.f32 0.0, %v3182
        %v3184 = vpop.f32.mrb[0].mxu0
        %v3185 = vpop.f32.mrb[0].mxu0
        %v3186 = vadd.f32 0.0, %v3185
        %v3187 = vpop.f32.mrb[0].mxu0
        %3188 = vmatprep.mubr.bf16.mxu0 0
        %3189 = vmatmul.mubr.bf16.gmra.mrb[0].mxu0 %v2781
        %v3190 = vpop.f32.mrb[0].mxu0
        %v3191 = vadd.f32 0.0, %v3190
        %v3192 = vpop.f32.mrb[0].mxu0
        %v3193 = vpop.f32.mrb[0].mxu0
        %v3194 = vadd.f32 0.0, %v3193
        %v3195 = vpop.f32.mrb[0].mxu0
        %3196 = vmatprep.mubr.bf16.mxu0 0
        %3197 = vmatmul.mubr.bf16.gmra.mrb[0].mxu0 %v3074
        %v3198 = vpop.f32.mrb[0].mxu0
        %v3199 = vadd.f32 0.0, %v3198
        %v3200 = vpop.f32.mrb[0].mxu0
        %v3201 = vpop.f32.mrb[0].mxu0
        %v3202 = vadd.f32 0.0, %v3201
        %v3203 = vpop.f32.mrb[0].mxu0
        %3204 = vdwg.mxu0
        %v3205 = vadd.f32 %v2962, %v3111
        %v3206 = vadd.f32 %v2965, %v3114
        %v3207 = vadd.f32 %v2970, %v3119
        %v3208 = vadd.f32 %v2973, %v3122
        %v3209 = vadd.f32 %v2978, %v3127
        %v3210 = vadd.f32 %v2981, %v3130
        %v3211 = vadd.f32 %v2986, %v3135
        %v3212 = vadd.f32 %v2989, %v3138
        %v3213 = vadd.f32 %v2994, %v3143
        %v3214 = vadd.f32 %v2997, %v3146
        %v3215 = vadd.f32 %v3002, %v3151
        %v3216 = vadd.f32 %v3005, %v3154
        %v3217 = vadd.f32 %v3010, %v3159
        %v3218 = vadd.f32 %v3013, %v3162
        %v3219 = vadd.f32 %v3018, %v3167
        %v3220 = vadd.f32 %v3021, %v3170
        %v3221 = vadd.f32 %v3026, %v3175
        %v3222 = vadd.f32 %v3029, %v3178
        %v3223 = vadd.f32 %v3034, %v3183
        %v3224 = vadd.f32 %v3037, %v3186
        %v3225 = vadd.f32 %v3042, %v3191
        %v3226 = vadd.f32 %v3045, %v3194
        %v3227 = vadd.f32 %v3050, %v3199
        %v3228 = vadd.f32 %v3053, %v3202
        %v3229 = vld [vmem:[%s33] sm:$0x1]
        %v3231 = vlaneseq
        %v3232 = vshrl.u32 %v3231, 7
        %v3233 = vsub.s32 0, %v3232
        %v3234 = vrot.slane %v3229, %v3233
        %v3236 = vadd.f32 %v3205, %v3234
        %v3237 = vadd.f32 %v3206, %v3234
        %v3238 = vadd.f32 %v3207, %v3234
        %v3239 = vadd.f32 %v3208, %v3234
        %v3240 = vadd.f32 %v3209, %v3234
        %v3241 = vadd.f32 %v3210, %v3234
        %v3242 = vadd.f32 %v3211, %v3234
        %v3243 = vadd.f32 %v3212, %v3234
        %v3244 = vadd.f32 %v3213, %v3234
        %v3245 = vadd.f32 %v3214, %v3234
        %v3246 = vadd.f32 %v3215, %v3234
        %v3247 = vadd.f32 %v3216, %v3234
        %v3248 = vadd.f32 %v3217, %v3234
        %v3249 = vadd.f32 %v3218, %v3234
        %v3250 = vadd.f32 %v3219, %v3234
        %v3251 = vadd.f32 %v3220, %v3234
        %v3252 = vadd.f32 %v3221, %v3234
        %v3253 = vadd.f32 %v3222, %v3234
        %v3254 = vadd.f32 %v3223, %v3234
        %v3255 = vadd.f32 %v3224, %v3234
        %v3256 = vadd.f32 %v3225, %v3234
        %v3257 = vadd.f32 %v3226, %v3234
        %v3258 = vadd.f32 %v3227, %v3234
        %v3259 = vadd.f32 %v3228, %v3234
        %v3260 = vmax.f32 %v3236, 0.0
        %v3261 = vmax.f32 %v3237, 0.0
        %v3262 = vmax.f32 %v3238, 0.0
        %v3263 = vmax.f32 %v3239, 0.0
        %v3264 = vmax.f32 %v3240, 0.0
        %v3265 = vmax.f32 %v3241, 0.0
        %v3266 = vmax.f32 %v3242, 0.0
        %v3267 = vmax.f32 %v3243, 0.0
        %v3268 = vmax.f32 %v3244, 0.0
        %v3269 = vmax.f32 %v3245, 0.0
        %v3270 = vmax.f32 %v3246, 0.0
        %v3271 = vmax.f32 %v3247, 0.0
        %v3272 = vmax.f32 %v3248, 0.0
        %v3273 = vmax.f32 %v3249, 0.0
        %v3274 = vmax.f32 %v3250, 0.0
        %v3275 = vmax.f32 %v3251, 0.0
        %v3276 = vmax.f32 %v3252, 0.0
        %v3277 = vmax.f32 %v3253, 0.0
        %v3278 = vmax.f32 %v3254, 0.0
        %v3279 = vmax.f32 %v3255, 0.0
        %v3280 = vmax.f32 %v3256, 0.0
        %v3281 = vmax.f32 %v3257, 0.0
        %v3282 = vmax.f32 %v3258, 0.0
        %v3283 = vmax.f32 %v3259, 0.0
        %v3284 = vld [vmem:[%s19] sm:$0xff]
        %v3285 = vld [vmem:[%s19 + $0x8] sm:$0xff]
        %v3286 = vld [vmem:[%s19 + $0x10] sm:$0xff]
        %v3287 = vld [vmem:[%s19 + $0x18] sm:$0xff]
        %v3288 = vld [vmem:[%s19 + $0x20] sm:$0xff]
        %v3289 = vld [vmem:[%s19 + $0x28] sm:$0xff]
        %v3290 = vld [vmem:[%s19 + $0x30] sm:$0xff]
        %v3291 = vld [vmem:[%s19 + $0x38] sm:$0xff]
        %v3292 = vld [vmem:[%s19 + $0x40] sm:$0xff]
        %v3293 = vld [vmem:[%s19 + $0x48] sm:$0xff]
        %v3294 = vld [vmem:[%s19 + $0x50] sm:$0xff]
        %v3295 = vld [vmem:[%s19 + $0x58] sm:$0xff]
        %v3296 = vld [vmem:[%s19 + $0x60] sm:$0xff]
        %v3297 = vld [vmem:[%s19 + $0x68] sm:$0xff]
        %v3298 = vld [vmem:[%s19 + $0x70] sm:$0xff]
        %v3299 = vld [vmem:[%s19 + $0x78] sm:$0xff]
        %v3300 = vld [vmem:[%s19 + $0x80] sm:$0xff]
        %v3301 = vld [vmem:[%s19 + $0x88] sm:$0xff]
        %v3302 = vld [vmem:[%s19 + $0x90] sm:$0xff]
        %v3303 = vld [vmem:[%s19 + $0x98] sm:$0xff]
        %v3304 = vld [vmem:[%s19 + $0xa0] sm:$0xff]
        %v3305 = vld [vmem:[%s19 + $0xa8] sm:$0xff]
        %v3306 = vld [vmem:[%s19 + $0xb0] sm:$0xff]
        %v3307 = vld [vmem:[%s19 + $0xb8] sm:$0xff]
        %v3308 = vld [vmem:[%s19 + $0xc0] sm:$0xff]
        %v3309 = vld [vmem:[%s19 + $0xc8] sm:$0xff]
        %v3310 = vld [vmem:[%s19 + $0xd0] sm:$0xff]
        %v3311 = vld [vmem:[%s19 + $0xd8] sm:$0xff]
        %v3312 = vld [vmem:[%s19 + $0xe0] sm:$0xff]
        %v3313 = vld [vmem:[%s19 + $0xe8] sm:$0xff]
        %v3314 = vld [vmem:[%s19 + $0xf0] sm:$0xff]
        %v3315 = vld [vmem:[%s19 + $0xf8] sm:$0xff]
        %v3316 = vld [vmem:[%s19 + $0x100] sm:$0xff]
        %v3317 = vld [vmem:[%s19 + $0x108] sm:$0xff]
        %v3318 = vld [vmem:[%s19 + $0x110] sm:$0xff]
        %v3319 = vld [vmem:[%s19 + $0x118] sm:$0xff]
        %v3320 = vld [vmem:[%s19 + $0x120] sm:$0xff]
        %v3321 = vld [vmem:[%s19 + $0x128] sm:$0xff]
        %v3322 = vld [vmem:[%s19 + $0x130] sm:$0xff]
        %v3323 = vld [vmem:[%s19 + $0x138] sm:$0xff]
        %v3324 = vld [vmem:[%s19 + $0x140] sm:$0xff]
        %v3325 = vld [vmem:[%s19 + $0x148] sm:$0xff]
        %v3326 = vld [vmem:[%s19 + $0x150] sm:$0xff]
        %v3327 = vld [vmem:[%s19 + $0x158] sm:$0xff]
        %v3328 = vld [vmem:[%s19 + $0x160] sm:$0xff]
        %v3329 = vld [vmem:[%s19 + $0x168] sm:$0xff]
        %v3330 = vld [vmem:[%s19 + $0x170] sm:$0xff]
        %v3331 = vld [vmem:[%s19 + $0x178] sm:$0xff]
        %v3332 = vsel %vm2496, %v3260, 0.0
        %3333 = vadd.xlane.f32.xlu0 %v3332
        %v3334 = vpop.xlane.xlu0 %3333
        %v3335 = vsel %vm2496, %v3261, 0.0
        %3336 = vadd.xlane.f32.xlu0 %v3335
        %v3337 = vpop.xlane.xlu0 %3336
        %v3338 = vsel %vm2496, %v3262, 0.0
        %3339 = vadd.xlane.f32.xlu0 %v3338
        %v3340 = vpop.xlane.xlu0 %3339
        %v3341 = vsel %vm2496, %v3263, 0.0
        %3342 = vadd.xlane.f32.xlu0 %v3341
        %v3343 = vpop.xlane.xlu0 %3342
        %v3344 = vsel %vm2496, %v3264, 0.0
        %3345 = vadd.xlane.f32.xlu0 %v3344
        %v3346 = vpop.xlane.xlu0 %3345
        %v3347 = vsel %vm2496, %v3265, 0.0
        %3348 = vadd.xlane.f32.xlu0 %v3347
        %v3349 = vpop.xlane.xlu0 %3348
        %v3350 = vsel %vm2496, %v3266, 0.0
        %3351 = vadd.xlane.f32.xlu0 %v3350
        %v3352 = vpop.xlane.xlu0 %3351
        %v3353 = vsel %vm2496, %v3267, 0.0
        %3354 = vadd.xlane.f32.xlu0 %v3353
        %v3355 = vpop.xlane.xlu0 %3354
        %v3356 = vsel %vm2496, %v3268, 0.0
        %3357 = vadd.xlane.f32.xlu0 %v3356
        %v3358 = vpop.xlane.xlu0 %3357
        %v3359 = vsel %vm2496, %v3269, 0.0
        %3360 = vadd.xlane.f32.xlu0 %v3359
        %v3361 = vpop.xlane.xlu0 %3360
        %v3362 = vsel %vm2496, %v3270, 0.0
        %3363 = vadd.xlane.f32.xlu0 %v3362
        %v3364 = vpop.xlane.xlu0 %3363
        %v3365 = vsel %vm2496, %v3271, 0.0
        %3366 = vadd.xlane.f32.xlu0 %v3365
        %v3367 = vpop.xlane.xlu0 %3366
        %v3368 = vsel %vm2496, %v3272, 0.0
        %3369 = vadd.xlane.f32.xlu0 %v3368
        %v3370 = vpop.xlane.xlu0 %3369
        %v3371 = vsel %vm2496, %v3273, 0.0
        %3372 = vadd.xlane.f32.xlu0 %v3371
        %v3373 = vpop.xlane.xlu0 %3372
        %v3374 = vsel %vm2496, %v3274, 0.0
        %3375 = vadd.xlane.f32.xlu0 %v3374
        %v3376 = vpop.xlane.xlu0 %3375
        %v3377 = vsel %vm2496, %v3275, 0.0
        %3378 = vadd.xlane.f32.xlu0 %v3377
        %v3379 = vpop.xlane.xlu0 %3378
        %v3380 = vsel %vm2496, %v3276, 0.0
        %3381 = vadd.xlane.f32.xlu0 %v3380
        %v3382 = vpop.xlane.xlu0 %3381
        %v3383 = vsel %vm2496, %v3277, 0.0
        %3384 = vadd.xlane.f32.xlu0 %v3383
        %v3385 = vpop.xlane.xlu0 %3384
        %v3386 = vsel %vm2496, %v3278, 0.0
        %3387 = vadd.xlane.f32.xlu0 %v3386
        %v3388 = vpop.xlane.xlu0 %3387
        %v3389 = vsel %vm2496, %v3279, 0.0
        %3390 = vadd.xlane.f32.xlu0 %v3389
        %v3391 = vpop.xlane.xlu0 %3390
        %v3392 = vsel %vm2496, %v3280, 0.0
        %3393 = vadd.xlane.f32.xlu0 %v3392
        %v3394 = vpop.xlane.xlu0 %3393
        %v3395 = vsel %vm2496, %v3281, 0.0
        %3396 = vadd.xlane.f32.xlu0 %v3395
        %v3397 = vpop.xlane.xlu0 %3396
        %v3398 = vsel %vm2496, %v3282, 0.0
        %3399 = vadd.xlane.f32.xlu0 %v3398
        %v3400 = vpop.xlane.xlu0 %3399
        %v3401 = vsel %vm2496, %v3283, 0.0
        %3402 = vadd.xlane.f32.xlu0 %v3401
        %v3403 = vpop.xlane.xlu0 %3402
        %vm3404 = vcmask 523264
        %v3406 = vsel %vm3404, %v3285, 0
        %v3409 = vsel %vm3404, %v3287, 0
        %v3412 = vsel %vm3404, %v3289, 0
        %v3415 = vsel %vm3404, %v3291, 0
        %v3418 = vsel %vm3404, %v3293, 0
        %v3421 = vsel %vm3404, %v3295, 0
        %v3424 = vsel %vm3404, %v3297, 0
        %v3427 = vsel %vm3404, %v3299, 0
        %v3430 = vsel %vm3404, %v3301, 0
        %v3433 = vsel %vm3404, %v3303, 0
        %v3436 = vsel %vm3404, %v3305, 0
        %v3439 = vsel %vm3404, %v3307, 0
        %v3442 = vsel %vm3404, %v3309, 0
        %v3445 = vsel %vm3404, %v3311, 0
        %v3448 = vsel %vm3404, %v3313, 0
        %v3451 = vsel %vm3404, %v3315, 0
        %v3454 = vsel %vm3404, %v3317, 0
        %v3457 = vsel %vm3404, %v3319, 0
        %v3460 = vsel %vm3404, %v3321, 0
        %v3463 = vsel %vm3404, %v3323, 0
        %v3466 = vsel %vm3404, %v3325, 0
        %v3469 = vsel %vm3404, %v3327, 0
        %v3472 = vsel %vm3404, %v3329, 0
        %v3475 = vsel %vm3404, %v3331, 0
        %3477 = vmatprep.subr.mxu0 0.0
        %3478 = vmatpush1.msra.mxu0 %v3334
        %3479 = vmatprep.subr.mxu0 0.0
        %3480 = vmatpush1.msra.mxu0 %v3337
        %3481 = vmatprep.subr.mxu0 0.0
        %3482 = vmatpush1.msra.mxu0 %v3340
        %3483 = vmatprep.subr.mxu0 0.0
        %3484 = vmatpush1.msra.mxu0 %v3343
        %3485 = vmatprep.subr.mxu0 0.0
        %3486 = vmatpush1.msra.mxu0 %v3346
        %3487 = vmatprep.subr.mxu0 0.0
        %3488 = vmatpush1.msra.mxu0 %v3349
        %3489 = vmatprep.subr.mxu0 0.0
        %3490 = vmatpush1.msra.mxu0 %v3352
        %3491 = vmatprep.subr.mxu0 0.0
        %3492 = vmatpush1.msra.mxu0 %v3355
        %3493 = vmatprep.subr.mxu0 0.0
        %3494 = vmatpush1.msra.mxu0 %v3358
        %3495 = vmatprep.subr.mxu0 0.0
        %3496 = vmatpush1.msra.mxu0 %v3361
        %3497 = vmatprep.subr.mxu0 0.0
        %3498 = vmatpush1.msra.mxu0 %v3364
        %3499 = vmatprep.subr.mxu0 0.0
        %3500 = vmatpush1.msra.mxu0 %v3367
        %3501 = vmatprep.subr.mxu0 0.0
        %3502 = vmatpush1.msra.mxu0 %v3370
        %3503 = vmatprep.subr.mxu0 0.0
        %3504 = vmatpush1.msra.mxu0 %v3373
        %3505 = vmatprep.subr.mxu0 0.0
        %3506 = vmatpush1.msra.mxu0 %v3376
        %3507 = vmatprep.subr.mxu0 0.0
        %3508 = vmatpush1.msra.mxu0 %v3379
        %3509 = vmatprep.subr.mxu0 0.0
        %3510 = vmatpush1.msra.mxu0 %v3382
        %3511 = vmatprep.subr.mxu0 0.0
        %3512 = vmatpush1.msra.mxu0 %v3385
        %3513 = vmatprep.subr.mxu0 0.0
        %3514 = vmatpush1.msra.mxu0 %v3388
        %3515 = vmatprep.subr.mxu0 0.0
        %3516 = vmatpush1.msra.mxu0 %v3391
        %3517 = vmatprep.subr.mxu0 0.0
        %3518 = vmatpush1.msra.mxu0 %v3394
        %3519 = vmatprep.subr.mxu0 0.0
        %3520 = vmatpush1.msra.mxu0 %v3397
        %3521 = vmatprep.subr.mxu0 0.0
        %3522 = vmatpush1.msra.mxu0 %v3400
        %3523 = vmatprep.subr.mxu0 0.0
        %3524 = vmatpush1.msra.mxu0 %v3403
        %3525 = vmatprep.subr.mxu0 0.0
        %3526 = vmatpush1.msra.mxu0 0.0
        %3527 = vmatprep.subr.mxu0 0.0
        %3528 = vmatpush1.msra.mxu0 0.0
        %3529 = vmatprep.subr.mxu0 0.0
        %3530 = vmatpush1.msra.mxu0 0.0
        %3531 = vmatprep.subr.mxu0 0.0
        %3532 = vmatpush1.msra.mxu0 0.0
        %3533 = vmatprep.subr.mxu0 0.0
        %3534 = vmatpush1.msra.mxu0 0.0
        %3535 = vmatprep.subr.mxu0 0.0
        %3536 = vmatpush1.msra.mxu0 0.0
        %3537 = vmatprep.subr.mxu0 0.0
        %3538 = vmatpush1.msra.mxu0 0.0
        %3539 = vmatprep.subr.mxu0 0.0
        %3540 = vmatpush1.msra.mxu0 0.0
        %3541 = vmatprep.mubr.f32.mxu0 %v3406
        %3542 = vmatmul.mubr.f32.gmra.mrb[0].mxu0 %v3284
        %v3543 = vpop.f32.mrb[0].mxu0
        %v3544 = vadd.f32 0.0, %v3543
        %v3545 = vpop.f32.mrb[0].mxu0
        %3546 = vmatprep.mubr.f32.mxu0 %v3409
        %3547 = vmatmul.mubr.f32.gmra.mrb[0].mxu0 %v3286
        %v3548 = vpop.f32.mrb[0].mxu0
        %v3549 = vadd.f32 0.0, %v3548
        %v3550 = vpop.f32.mrb[0].mxu0
        %3551 = vmatprep.mubr.f32.mxu0 %v3412
        %3552 = vmatmul.mubr.f32.gmra.mrb[0].mxu0 %v3288
        %v3553 = vpop.f32.mrb[0].mxu0
        %v3554 = vadd.f32 0.0, %v3553
        %v3555 = vpop.f32.mrb[0].mxu0
        %3556 = vmatprep.mubr.f32.mxu0 %v3415
        %3557 = vmatmul.mubr.f32.gmra.mrb[0].mxu0 %v3290
        %v3558 = vpop.f32.mrb[0].mxu0
        %v3559 = vadd.f32 0.0, %v3558
        %v3560 = vpop.f32.mrb[0].mxu0
        %3561 = vmatprep.mubr.f32.mxu0 %v3418
        %3562 = vmatmul.mubr.f32.gmra.mrb[0].mxu0 %v3292
        %v3563 = vpop.f32.mrb[0].mxu0
        %v3564 = vadd.f32 0.0, %v3563
        %v3565 = vpop.f32.mrb[0].mxu0
        %3566 = vmatprep.mubr.f32.mxu0 %v3421
        %3567 = vmatmul.mubr.f32.gmra.mrb[0].mxu0 %v3294
        %v3568 = vpop.f32.mrb[0].mxu0
        %v3569 = vadd.f32 0.0, %v3568
        %v3570 = vpop.f32.mrb[0].mxu0
        %3571 = vmatprep.mubr.f32.mxu0 %v3424
        %3572 = vmatmul.mubr.f32.gmra.mrb[0].mxu0 %v3296
        %v3573 = vpop.f32.mrb[0].mxu0
        %v3574 = vadd.f32 0.0, %v3573
        %v3575 = vpop.f32.mrb[0].mxu0
        %3576 = vmatprep.mubr.f32.mxu0 %v3427
        %3577 = vmatmul.mubr.f32.gmra.mrb[0].mxu0 %v3298
        %v3578 = vpop.f32.mrb[0].mxu0
        %v3579 = vadd.f32 0.0, %v3578
        %v3580 = vpop.f32.mrb[0].mxu0
        %3581 = vmatprep.mubr.f32.mxu0 %v3430
        %3582 = vmatmul.mubr.f32.gmra.mrb[0].mxu0 %v3300
        %v3583 = vpop.f32.mrb[0].mxu0
        %v3584 = vadd.f32 0.0, %v3583
        %v3585 = vpop.f32.mrb[0].mxu0
        %3586 = vmatprep.mubr.f32.mxu0 %v3433
        %3587 = vmatmul.mubr.f32.gmra.mrb[0].mxu0 %v3302
        %v3588 = vpop.f32.mrb[0].mxu0
        %v3589 = vadd.f32 0.0, %v3588
        %v3590 = vpop.f32.mrb[0].mxu0
        %3591 = vmatprep.mubr.f32.mxu0 %v3436
        %3592 = vmatmul.mubr.f32.gmra.mrb[0].mxu0 %v3304
        %v3593 = vpop.f32.mrb[0].mxu0
        %v3594 = vadd.f32 0.0, %v3593
        %v3595 = vpop.f32.mrb[0].mxu0
        %3596 = vmatprep.mubr.f32.mxu0 %v3439
        %3597 = vmatmul.mubr.f32.gmra.mrb[0].mxu0 %v3306
        %v3598 = vpop.f32.mrb[0].mxu0
        %v3599 = vadd.f32 0.0, %v3598
        %v3600 = vpop.f32.mrb[0].mxu0
        %3601 = vmatprep.mubr.f32.mxu0 %v3442
        %3602 = vmatmul.mubr.f32.gmra.mrb[0].mxu0 %v3308
        %v3603 = vpop.f32.mrb[0].mxu0
        %v3604 = vadd.f32 0.0, %v3603
        %v3605 = vpop.f32.mrb[0].mxu0
        %3606 = vmatprep.mubr.f32.mxu0 %v3445
        %3607 = vmatmul.mubr.f32.gmra.mrb[0].mxu0 %v3310
        %v3608 = vpop.f32.mrb[0].mxu0
        %v3609 = vadd.f32 0.0, %v3608
        %v3610 = vpop.f32.mrb[0].mxu0
        %3611 = vmatprep.mubr.f32.mxu0 %v3448
        %3612 = vmatmul.mubr.f32.gmra.mrb[0].mxu0 %v3312
        %v3613 = vpop.f32.mrb[0].mxu0
        %v3614 = vadd.f32 0.0, %v3613
        %v3615 = vpop.f32.mrb[0].mxu0
        %3616 = vmatprep.mubr.f32.mxu0 %v3451
        %3617 = vmatmul.mubr.f32.gmra.mrb[0].mxu0 %v3314
        %v3618 = vpop.f32.mrb[0].mxu0
        %v3619 = vadd.f32 0.0, %v3618
        %v3620 = vpop.f32.mrb[0].mxu0
        %3621 = vmatprep.mubr.f32.mxu0 %v3454
        %3622 = vmatmul.mubr.f32.gmra.mrb[0].mxu0 %v3316
        %v3623 = vpop.f32.mrb[0].mxu0
        %v3624 = vadd.f32 0.0, %v3623
        %v3625 = vpop.f32.mrb[0].mxu0
        %3626 = vmatprep.mubr.f32.mxu0 %v3457
        %3627 = vmatmul.mubr.f32.gmra.mrb[0].mxu0 %v3318
        %v3628 = vpop.f32.mrb[0].mxu0
        %v3629 = vadd.f32 0.0, %v3628
        %v3630 = vpop.f32.mrb[0].mxu0
        %3631 = vmatprep.mubr.f32.mxu0 %v3460
        %3632 = vmatmul.mubr.f32.gmra.mrb[0].mxu0 %v3320
        %v3633 = vpop.f32.mrb[0].mxu0
        %v3634 = vadd.f32 0.0, %v3633
        %v3635 = vpop.f32.mrb[0].mxu0
        %3636 = vmatprep.mubr.f32.mxu0 %v3463
        %3637 = vmatmul.mubr.f32.gmra.mrb[0].mxu0 %v3322
        %v3638 = vpop.f32.mrb[0].mxu0
        %v3639 = vadd.f32 0.0, %v3638
        %v3640 = vpop.f32.mrb[0].mxu0
        %3641 = vmatprep.mubr.f32.mxu0 %v3466
        %3642 = vmatmul.mubr.f32.gmra.mrb[0].mxu0 %v3324
        %v3643 = vpop.f32.mrb[0].mxu0
        %v3644 = vadd.f32 0.0, %v3643
        %v3645 = vpop.f32.mrb[0].mxu0
        %3646 = vmatprep.mubr.f32.mxu0 %v3469
        %3647 = vmatmul.mubr.f32.gmra.mrb[0].mxu0 %v3326
        %v3648 = vpop.f32.mrb[0].mxu0
        %v3649 = vadd.f32 0.0, %v3648
        %v3650 = vpop.f32.mrb[0].mxu0
        %3651 = vmatprep.mubr.f32.mxu0 %v3472
        %3652 = vmatmul.mubr.f32.gmra.mrb[0].mxu0 %v3328
        %v3653 = vpop.f32.mrb[0].mxu0
        %v3654 = vadd.f32 0.0, %v3653
        %v3655 = vpop.f32.mrb[0].mxu0
        %3656 = vmatprep.mubr.f32.mxu0 %v3475
        %3657 = vmatmul.mubr.f32.gmra.mrb[0].mxu0 %v3330
        %v3658 = vpop.f32.mrb[0].mxu0
        %v3659 = vadd.f32 0.0, %v3658
        %v3660 = vpop.f32.mrb[0].mxu0
        %3661 = vdwg.mxu0
        %3663 = vset.pattern.permute.xlu0 0
        %3664 = vperm.xlu0 %3663, %v3544
        %v3665 = vpop.permute.xlu0 %3664
        %3668 = vset.pattern.permute.xlu0 0
        %3669 = vperm.xlu0 %3668, %v3549
        %v3670 = vpop.permute.xlu0 %3669
        %3673 = vset.pattern.permute.xlu0 0
        %3674 = vperm.xlu0 %3673, %v3554
        %v3675 = vpop.permute.xlu0 %3674
        %3678 = vset.pattern.permute.xlu0 0
        %3679 = vperm.xlu0 %3678, %v3559
        %v3680 = vpop.permute.xlu0 %3679
        %3683 = vset.pattern.permute.xlu0 0
        %3684 = vperm.xlu0 %3683, %v3564
        %v3685 = vpop.permute.xlu0 %3684
        %3688 = vset.pattern.permute.xlu0 0
        %3689 = vperm.xlu0 %3688, %v3569
        %v3690 = vpop.permute.xlu0 %3689
        %3693 = vset.pattern.permute.xlu0 0
        %3694 = vperm.xlu0 %3693, %v3574
        %v3695 = vpop.permute.xlu0 %3694
        %3698 = vset.pattern.permute.xlu0 0
        %3699 = vperm.xlu0 %3698, %v3579
        %v3700 = vpop.permute.xlu0 %3699
        %3703 = vset.pattern.permute.xlu0 0
        %3704 = vperm.xlu0 %3703, %v3584
        %v3705 = vpop.permute.xlu0 %3704
        %3708 = vset.pattern.permute.xlu0 0
        %3709 = vperm.xlu0 %3708, %v3589
        %v3710 = vpop.permute.xlu0 %3709
        %3713 = vset.pattern.permute.xlu0 0
        %3714 = vperm.xlu0 %3713, %v3594
        %v3715 = vpop.permute.xlu0 %3714
        %3718 = vset.pattern.permute.xlu0 0
        %3719 = vperm.xlu0 %3718, %v3599
        %v3720 = vpop.permute.xlu0 %3719
        %3723 = vset.pattern.permute.xlu0 0
        %3724 = vperm.xlu0 %3723, %v3604
        %v3725 = vpop.permute.xlu0 %3724
        %3728 = vset.pattern.permute.xlu0 0
        %3729 = vperm.xlu0 %3728, %v3609
        %v3730 = vpop.permute.xlu0 %3729
        %3733 = vset.pattern.permute.xlu0 0
        %3734 = vperm.xlu0 %3733, %v3614
        %v3735 = vpop.permute.xlu0 %3734
        %3738 = vset.pattern.permute.xlu0 0
        %3739 = vperm.xlu0 %3738, %v3619
        %v3740 = vpop.permute.xlu0 %3739
        %3743 = vset.pattern.permute.xlu0 0
        %3744 = vperm.xlu0 %3743, %v3624
        %v3745 = vpop.permute.xlu0 %3744
        %3748 = vset.pattern.permute.xlu0 0
        %3749 = vperm.xlu0 %3748, %v3629
        %v3750 = vpop.permute.xlu0 %3749
        %3753 = vset.pattern.permute.xlu0 0
        %3754 = vperm.xlu0 %3753, %v3634
        %v3755 = vpop.permute.xlu0 %3754
        %3758 = vset.pattern.permute.xlu0 0
        %3759 = vperm.xlu0 %3758, %v3639
        %v3760 = vpop.permute.xlu0 %3759
        %3763 = vset.pattern.permute.xlu0 0
        %3764 = vperm.xlu0 %3763, %v3644
        %v3765 = vpop.permute.xlu0 %3764
        %3768 = vset.pattern.permute.xlu0 0
        %3769 = vperm.xlu0 %3768, %v3649
        %v3770 = vpop.permute.xlu0 %3769
        %3773 = vset.pattern.permute.xlu0 0
        %3774 = vperm.xlu0 %3773, %v3654
        %v3775 = vpop.permute.xlu0 %3774
        %3778 = vset.pattern.permute.xlu0 0
        %3779 = vperm.xlu0 %3778, %v3659
        %v3780 = vpop.permute.xlu0 %3779
        %v3782 = vsub.f32 %v3260, %v3665
        %v3783 = vsub.f32 %v3261, %v3670
        %v3784 = vsub.f32 %v3262, %v3675
        %v3785 = vsub.f32 %v3263, %v3680
        %v3786 = vsub.f32 %v3264, %v3685
        %v3787 = vsub.f32 %v3265, %v3690
        %v3788 = vsub.f32 %v3266, %v3695
        %v3789 = vsub.f32 %v3267, %v3700
        %v3790 = vsub.f32 %v3268, %v3705
        %v3791 = vsub.f32 %v3269, %v3710
        %v3792 = vsub.f32 %v3270, %v3715
        %v3793 = vsub.f32 %v3271, %v3720
        %v3794 = vsub.f32 %v3272, %v3725
        %v3795 = vsub.f32 %v3273, %v3730
        %v3796 = vsub.f32 %v3274, %v3735
        %v3797 = vsub.f32 %v3275, %v3740
        %v3798 = vsub.f32 %v3276, %v3745
        %v3799 = vsub.f32 %v3277, %v3750
        %v3800 = vsub.f32 %v3278, %v3755
        %v3801 = vsub.f32 %v3279, %v3760
        %v3802 = vsub.f32 %v3280, %v3765
        %v3803 = vsub.f32 %v3281, %v3770
        %v3804 = vsub.f32 %v3282, %v3775
        %v3805 = vsub.f32 %v3283, %v3780
        %v3806 = vmul.f32 %v3782, %v3782
        %v3807 = vmul.f32 %v3783, %v3783
        %v3808 = vmul.f32 %v3784, %v3784
        %v3809 = vmul.f32 %v3785, %v3785
        %v3810 = vmul.f32 %v3786, %v3786
        %v3811 = vmul.f32 %v3787, %v3787
        %v3812 = vmul.f32 %v3788, %v3788
        %v3813 = vmul.f32 %v3789, %v3789
        %v3814 = vmul.f32 %v3790, %v3790
        %v3815 = vmul.f32 %v3791, %v3791
        %v3816 = vmul.f32 %v3792, %v3792
        %v3817 = vmul.f32 %v3793, %v3793
        %v3818 = vmul.f32 %v3794, %v3794
        %v3819 = vmul.f32 %v3795, %v3795
        %v3820 = vmul.f32 %v3796, %v3796
        %v3821 = vmul.f32 %v3797, %v3797
        %v3822 = vmul.f32 %v3798, %v3798
        %v3823 = vmul.f32 %v3799, %v3799
        %v3824 = vmul.f32 %v3800, %v3800
        %v3825 = vmul.f32 %v3801, %v3801
        %v3826 = vmul.f32 %v3802, %v3802
        %v3827 = vmul.f32 %v3803, %v3803
        %v3828 = vmul.f32 %v3804, %v3804
        %v3829 = vmul.f32 %v3805, %v3805
        %v3830 = vsel %vm2496, %v3806, 0.0
        %3831 = vadd.xlane.f32.xlu0 %v3830
        %v3832 = vpop.xlane.xlu0 %3831
        %v3833 = vsel %vm2496, %v3807, 0.0
        %3834 = vadd.xlane.f32.xlu0 %v3833
        %v3835 = vpop.xlane.xlu0 %3834
        %v3836 = vsel %vm2496, %v3808, 0.0
        %3837 = vadd.xlane.f32.xlu0 %v3836
        %v3838 = vpop.xlane.xlu0 %3837
        %v3839 = vsel %vm2496, %v3809, 0.0
        %3840 = vadd.xlane.f32.xlu0 %v3839
        %v3841 = vpop.xlane.xlu0 %3840
        %v3842 = vsel %vm2496, %v3810, 0.0
        %3843 = vadd.xlane.f32.xlu0 %v3842
        %v3844 = vpop.xlane.xlu0 %3843
        %v3845 = vsel %vm2496, %v3811, 0.0
        %3846 = vadd.xlane.f32.xlu0 %v3845
        %v3847 = vpop.xlane.xlu0 %3846
        %v3848 = vsel %vm2496, %v3812, 0.0
        %3849 = vadd.xlane.f32.xlu0 %v3848
        %v3850 = vpop.xlane.xlu0 %3849
        %v3851 = vsel %vm2496, %v3813, 0.0
        %3852 = vadd.xlane.f32.xlu0 %v3851
        %v3853 = vpop.xlane.xlu0 %3852
        %v3854 = vsel %vm2496, %v3814, 0.0
        %3855 = vadd.xlane.f32.xlu0 %v3854
        %v3856 = vpop.xlane.xlu0 %3855
        %v3857 = vsel %vm2496, %v3815, 0.0
        %3858 = vadd.xlane.f32.xlu0 %v3857
        %v3859 = vpop.xlane.xlu0 %3858
        %v3860 = vsel %vm2496, %v3816, 0.0
        %3861 = vadd.xlane.f32.xlu0 %v3860
        %v3862 = vpop.xlane.xlu0 %3861
        %v3863 = vsel %vm2496, %v3817, 0.0
        %3864 = vadd.xlane.f32.xlu0 %v3863
        %v3865 = vpop.xlane.xlu0 %3864
        %v3866 = vsel %vm2496, %v3818, 0.0
        %3867 = vadd.xlane.f32.xlu0 %v3866
        %v3868 = vpop.xlane.xlu0 %3867
        %v3869 = vsel %vm2496, %v3819, 0.0
        %3870 = vadd.xlane.f32.xlu0 %v3869
        %v3871 = vpop.xlane.xlu0 %3870
        %v3872 = vsel %vm2496, %v3820, 0.0
        %3873 = vadd.xlane.f32.xlu0 %v3872
        %v3874 = vpop.xlane.xlu0 %3873
        %v3875 = vsel %vm2496, %v3821, 0.0
        %3876 = vadd.xlane.f32.xlu0 %v3875
        %v3877 = vpop.xlane.xlu0 %3876
        %v3878 = vsel %vm2496, %v3822, 0.0
        %3879 = vadd.xlane.f32.xlu0 %v3878
        %v3880 = vpop.xlane.xlu0 %3879
        %v3881 = vsel %vm2496, %v3823, 0.0
        %3882 = vadd.xlane.f32.xlu0 %v3881
        %v3883 = vpop.xlane.xlu0 %3882
        %v3884 = vsel %vm2496, %v3824, 0.0
        %3885 = vadd.xlane.f32.xlu0 %v3884
        %v3886 = vpop.xlane.xlu0 %3885
        %v3887 = vsel %vm2496, %v3825, 0.0
        %3888 = vadd.xlane.f32.xlu0 %v3887
        %v3889 = vpop.xlane.xlu0 %3888
        %v3890 = vsel %vm2496, %v3826, 0.0
        %3891 = vadd.xlane.f32.xlu0 %v3890
        %v3892 = vpop.xlane.xlu0 %3891
        %v3893 = vsel %vm2496, %v3827, 0.0
        %3894 = vadd.xlane.f32.xlu0 %v3893
        %v3895 = vpop.xlane.xlu0 %3894
        %v3896 = vsel %vm2496, %v3828, 0.0
        %3897 = vadd.xlane.f32.xlu0 %v3896
        %v3898 = vpop.xlane.xlu0 %3897
        %v3899 = vsel %vm2496, %v3829, 0.0
        %3900 = vadd.xlane.f32.xlu0 %v3899
        %v3901 = vpop.xlane.xlu0 %3900
        %3902 = vmatprep.subr.mxu0 0.0
        %3903 = vmatpush1.msra.mxu0 %v3832
        %3904 = vmatprep.subr.mxu0 0.0
        %3905 = vmatpush1.msra.mxu0 %v3835
        %3906 = vmatprep.subr.mxu0 0.0
        %3907 = vmatpush1.msra.mxu0 %v3838
        %3908 = vmatprep.subr.mxu0 0.0
        %3909 = vmatpush1.msra.mxu0 %v3841
        %3910 = vmatprep.subr.mxu0 0.0
        %3911 = vmatpush1.msra.mxu0 %v3844
        %3912 = vmatprep.subr.mxu0 0.0
        %3913 = vmatpush1.msra.mxu0 %v3847
        %3914 = vmatprep.subr.mxu0 0.0
        %3915 = vmatpush1.msra.mxu0 %v3850
        %3916 = vmatprep.subr.mxu0 0.0
        %3917 = vmatpush1.msra.mxu0 %v3853
        %3918 = vmatprep.subr.mxu0 0.0
        %3919 = vmatpush1.msra.mxu0 %v3856
        %3920 = vmatprep.subr.mxu0 0.0
        %3921 = vmatpush1.msra.mxu0 %v3859
        %3922 = vmatprep.subr.mxu0 0.0
        %3923 = vmatpush1.msra.mxu0 %v3862
        %3924 = vmatprep.subr.mxu0 0.0
        %3925 = vmatpush1.msra.mxu0 %v3865
        %3926 = vmatprep.subr.mxu0 0.0
        %3927 = vmatpush1.msra.mxu0 %v3868
        %3928 = vmatprep.subr.mxu0 0.0
        %3929 = vmatpush1.msra.mxu0 %v3871
        %3930 = vmatprep.subr.mxu0 0.0
        %3931 = vmatpush1.msra.mxu0 %v3874
        %3932 = vmatprep.subr.mxu0 0.0
        %3933 = vmatpush1.msra.mxu0 %v3877
        %3934 = vmatprep.subr.mxu0 0.0
        %3935 = vmatpush1.msra.mxu0 %v3880
        %3936 = vmatprep.subr.mxu0 0.0
        %3937 = vmatpush1.msra.mxu0 %v3883
        %3938 = vmatprep.subr.mxu0 0.0
        %3939 = vmatpush1.msra.mxu0 %v3886
        %3940 = vmatprep.subr.mxu0 0.0
        %3941 = vmatpush1.msra.mxu0 %v3889
        %3942 = vmatprep.subr.mxu0 0.0
        %3943 = vmatpush1.msra.mxu0 %v3892
        %3944 = vmatprep.subr.mxu0 0.0
        %3945 = vmatpush1.msra.mxu0 %v3895
        %3946 = vmatprep.subr.mxu0 0.0
        %3947 = vmatpush1.msra.mxu0 %v3898
        %3948 = vmatprep.subr.mxu0 0.0
        %3949 = vmatpush1.msra.mxu0 %v3901
        %3950 = vmatprep.subr.mxu0 0.0
        %3951 = vmatpush1.msra.mxu0 0.0
        %3952 = vmatprep.subr.mxu0 0.0
        %3953 = vmatpush1.msra.mxu0 0.0
        %3954 = vmatprep.subr.mxu0 0.0
        %3955 = vmatpush1.msra.mxu0 0.0
        %3956 = vmatprep.subr.mxu0 0.0
        %3957 = vmatpush1.msra.mxu0 0.0
        %3958 = vmatprep.subr.mxu0 0.0
        %3959 = vmatpush1.msra.mxu0 0.0
        %3960 = vmatprep.subr.mxu0 0.0
        %3961 = vmatpush1.msra.mxu0 0.0
        %3962 = vmatprep.subr.mxu0 0.0
        %3963 = vmatpush1.msra.mxu0 0.0
        %3964 = vmatprep.subr.mxu0 0.0
        %3965 = vmatpush1.msra.mxu0 0.0
        %3966 = vmatprep.mubr.f32.mxu0 %v3406
        %3967 = vmatmul.mubr.f32.gmra.mrb[0].mxu0 %v3284
        %v3968 = vpop.f32.mrb[0].mxu0
        %v3969 = vadd.f32 1e-05, %v3968
        %v3970 = vpop.f32.mrb[0].mxu0
        %3971 = vmatprep.mubr.f32.mxu0 %v3409
        %3972 = vmatmul.mubr.f32.gmra.mrb[0].mxu0 %v3286
        %v3973 = vpop.f32.mrb[0].mxu0
        %v3974 = vadd.f32 1e-05, %v3973
        %v3975 = vpop.f32.mrb[0].mxu0
        %3976 = vmatprep.mubr.f32.mxu0 %v3412
        %3977 = vmatmul.mubr.f32.gmra.mrb[0].mxu0 %v3288
        %v3978 = vpop.f32.mrb[0].mxu0
        %v3979 = vadd.f32 1e-05, %v3978
        %v3980 = vpop.f32.mrb[0].mxu0
        %3981 = vmatprep.mubr.f32.mxu0 %v3415
        %3982 = vmatmul.mubr.f32.gmra.mrb[0].mxu0 %v3290
        %v3983 = vpop.f32.mrb[0].mxu0
        %v3984 = vadd.f32 1e-05, %v3983
        %v3985 = vpop.f32.mrb[0].mxu0
        %3986 = vmatprep.mubr.f32.mxu0 %v3418
        %3987 = vmatmul.mubr.f32.gmra.mrb[0].mxu0 %v3292
        %v3988 = vpop.f32.mrb[0].mxu0
        %v3989 = vadd.f32 1e-05, %v3988
        %v3990 = vpop.f32.mrb[0].mxu0
        %3991 = vmatprep.mubr.f32.mxu0 %v3421
        %3992 = vmatmul.mubr.f32.gmra.mrb[0].mxu0 %v3294
        %v3993 = vpop.f32.mrb[0].mxu0
        %v3994 = vadd.f32 1e-05, %v3993
        %v3995 = vpop.f32.mrb[0].mxu0
        %3996 = vmatprep.mubr.f32.mxu0 %v3424
        %3997 = vmatmul.mubr.f32.gmra.mrb[0].mxu0 %v3296
        %v3998 = vpop.f32.mrb[0].mxu0
        %v3999 = vadd.f32 1e-05, %v3998
        %v4000 = vpop.f32.mrb[0].mxu0
        %4001 = vmatprep.mubr.f32.mxu0 %v3427
        %4002 = vmatmul.mubr.f32.gmra.mrb[0].mxu0 %v3298
        %v4003 = vpop.f32.mrb[0].mxu0
        %v4004 = vadd.f32 1e-05, %v4003
        %v4005 = vpop.f32.mrb[0].mxu0
        %4006 = vmatprep.mubr.f32.mxu0 %v3430
        %4007 = vmatmul.mubr.f32.gmra.mrb[0].mxu0 %v3300
        %v4008 = vpop.f32.mrb[0].mxu0
        %v4009 = vadd.f32 1e-05, %v4008
        %v4010 = vpop.f32.mrb[0].mxu0
        %4011 = vmatprep.mubr.f32.mxu0 %v3433
        %4012 = vmatmul.mubr.f32.gmra.mrb[0].mxu0 %v3302
        %v4013 = vpop.f32.mrb[0].mxu0
        %v4014 = vadd.f32 1e-05, %v4013
        %v4015 = vpop.f32.mrb[0].mxu0
        %4016 = vmatprep.mubr.f32.mxu0 %v3436
        %4017 = vmatmul.mubr.f32.gmra.mrb[0].mxu0 %v3304
        %v4018 = vpop.f32.mrb[0].mxu0
        %v4019 = vadd.f32 1e-05, %v4018
        %v4020 = vpop.f32.mrb[0].mxu0
        %4021 = vmatprep.mubr.f32.mxu0 %v3439
        %4022 = vmatmul.mubr.f32.gmra.mrb[0].mxu0 %v3306
        %v4023 = vpop.f32.mrb[0].mxu0
        %v4024 = vadd.f32 1e-05, %v4023
        %v4025 = vpop.f32.mrb[0].mxu0
        %4026 = vmatprep.mubr.f32.mxu0 %v3442
        %4027 = vmatmul.mubr.f32.gmra.mrb[0].mxu0 %v3308
        %v4028 = vpop.f32.mrb[0].mxu0
        %v4029 = vadd.f32 1e-05, %v4028
        %v4030 = vpop.f32.mrb[0].mxu0
        %4031 = vmatprep.mubr.f32.mxu0 %v3445
        %4032 = vmatmul.mubr.f32.gmra.mrb[0].mxu0 %v3310
        %v4033 = vpop.f32.mrb[0].mxu0
        %v4034 = vadd.f32 1e-05, %v4033
        %v4035 = vpop.f32.mrb[0].mxu0
        %4036 = vmatprep.mubr.f32.mxu0 %v3448
        %4037 = vmatmul.mubr.f32.gmra.mrb[0].mxu0 %v3312
        %v4038 = vpop.f32.mrb[0].mxu0
        %v4039 = vadd.f32 1e-05, %v4038
        %v4040 = vpop.f32.mrb[0].mxu0
        %4041 = vmatprep.mubr.f32.mxu0 %v3451
        %4042 = vmatmul.mubr.f32.gmra.mrb[0].mxu0 %v3314
        %v4043 = vpop.f32.mrb[0].mxu0
        %v4044 = vadd.f32 1e-05, %v4043
        %v4045 = vpop.f32.mrb[0].mxu0
        %4046 = vmatprep.mubr.f32.mxu0 %v3454
        %4047 = vmatmul.mubr.f32.gmra.mrb[0].mxu0 %v3316
        %v4048 = vpop.f32.mrb[0].mxu0
        %v4049 = vadd.f32 1e-05, %v4048
        %v4050 = vpop.f32.mrb[0].mxu0
        %4051 = vmatprep.mubr.f32.mxu0 %v3457
        %4052 = vmatmul.mubr.f32.gmra.mrb[0].mxu0 %v3318
        %v4053 = vpop.f32.mrb[0].mxu0
        %v4054 = vadd.f32 1e-05, %v4053
        %v4055 = vpop.f32.mrb[0].mxu0
        %4056 = vmatprep.mubr.f32.mxu0 %v3460
        %4057 = vmatmul.mubr.f32.gmra.mrb[0].mxu0 %v3320
        %v4058 = vpop.f32.mrb[0].mxu0
        %v4059 = vadd.f32 1e-05, %v4058
        %v4060 = vpop.f32.mrb[0].mxu0
        %4061 = vmatprep.mubr.f32.mxu0 %v3463
        %4062 = vmatmul.mubr.f32.gmra.mrb[0].mxu0 %v3322
        %v4063 = vpop.f32.mrb[0].mxu0
        %v4064 = vadd.f32 1e-05, %v4063
        %v4065 = vpop.f32.mrb[0].mxu0
        %4066 = vmatprep.mubr.f32.mxu0 %v3466
        %4067 = vmatmul.mubr.f32.gmra.mrb[0].mxu0 %v3324
        %v4068 = vpop.f32.mrb[0].mxu0
        %v4069 = vadd.f32 1e-05, %v4068
        %v4070 = vpop.f32.mrb[0].mxu0
        %4071 = vmatprep.mubr.f32.mxu0 %v3469
        %4072 = vmatmul.mubr.f32.gmra.mrb[0].mxu0 %v3326
        %v4073 = vpop.f32.mrb[0].mxu0
        %v4074 = vadd.f32 1e-05, %v4073
        %v4075 = vpop.f32.mrb[0].mxu0
        %4076 = vmatprep.mubr.f32.mxu0 %v3472
        %4077 = vmatmul.mubr.f32.gmra.mrb[0].mxu0 %v3328
        %v4078 = vpop.f32.mrb[0].mxu0
        %v4079 = vadd.f32 1e-05, %v4078
        %v4080 = vpop.f32.mrb[0].mxu0
        %4081 = vmatprep.mubr.f32.mxu0 %v3475
        %4082 = vmatmul.mubr.f32.gmra.mrb[0].mxu0 %v3330
        %v4083 = vpop.f32.mrb[0].mxu0
        %v4084 = vadd.f32 1e-05, %v4083
        %v4085 = vpop.f32.mrb[0].mxu0
        %4086 = vdwg.mxu0
        %v4087 = vrsqrt.pop %v3969
        %v4088 = vrsqrt.pop %v3974
        %v4089 = vrsqrt.pop %v3979
        %v4090 = vrsqrt.pop %v3984
        %v4091 = vrsqrt.pop %v3989
        %v4092 = vrsqrt.pop %v3994
        %v4093 = vrsqrt.pop %v3999
        %v4094 = vrsqrt.pop %v4004
        %v4095 = vrsqrt.pop %v4009
        %v4096 = vrsqrt.pop %v4014
        %v4097 = vrsqrt.pop %v4019
        %v4098 = vrsqrt.pop %v4024
        %v4099 = vrsqrt.pop %v4029
        %v4100 = vrsqrt.pop %v4034
        %v4101 = vrsqrt.pop %v4039
        %v4102 = vrsqrt.pop %v4044
        %v4103 = vrsqrt.pop %v4049
        %v4104 = vrsqrt.pop %v4054
        %v4105 = vrsqrt.pop %v4059
        %v4106 = vrsqrt.pop %v4064
        %v4107 = vrsqrt.pop %v4069
        %v4108 = vrsqrt.pop %v4074
        %v4109 = vrsqrt.pop %v4079
        %v4110 = vrsqrt.pop %v4084
        %4112 = vset.pattern.permute.xlu0 0
        %4113 = vperm.xlu0 %4112, %v4087
        %v4114 = vpop.permute.xlu0 %4113
        %4117 = vset.pattern.permute.xlu0 0
        %4118 = vperm.xlu0 %4117, %v4088
        %v4119 = vpop.permute.xlu0 %4118
        %4122 = vset.pattern.permute.xlu0 0
        %4123 = vperm.xlu0 %4122, %v4089
        %v4124 = vpop.permute.xlu0 %4123
        %4127 = vset.pattern.permute.xlu0 0
        %4128 = vperm.xlu0 %4127, %v4090
        %v4129 = vpop.permute.xlu0 %4128
        %4132 = vset.pattern.permute.xlu0 0
        %4133 = vperm.xlu0 %4132, %v4091
        %v4134 = vpop.permute.xlu0 %4133
        %4137 = vset.pattern.permute.xlu0 0
        %4138 = vperm.xlu0 %4137, %v4092
        %v4139 = vpop.permute.xlu0 %4138
        %4142 = vset.pattern.permute.xlu0 0
        %4143 = vperm.xlu0 %4142, %v4093
        %v4144 = vpop.permute.xlu0 %4143
        %4147 = vset.pattern.permute.xlu0 0
        %4148 = vperm.xlu0 %4147, %v4094
        %v4149 = vpop.permute.xlu0 %4148
        %4152 = vset.pattern.permute.xlu0 0
        %4153 = vperm.xlu0 %4152, %v4095
        %v4154 = vpop.permute.xlu0 %4153
        %4157 = vset.pattern.permute.xlu0 0
        %4158 = vperm.xlu0 %4157, %v4096
        %v4159 = vpop.permute.xlu0 %4158
        %4162 = vset.pattern.permute.xlu0 0
        %4163 = vperm.xlu0 %4162, %v4097
        %v4164 = vpop.permute.xlu0 %4163
        %4167 = vset.pattern.permute.xlu0 0
        %4168 = vperm.xlu0 %4167, %v4098
        %v4169 = vpop.permute.xlu0 %4168
        %4172 = vset.pattern.permute.xlu0 0
        %4173 = vperm.xlu0 %4172, %v4099
        %v4174 = vpop.permute.xlu0 %4173
        %4177 = vset.pattern.permute.xlu0 0
        %4178 = vperm.xlu0 %4177, %v4100
        %v4179 = vpop.permute.xlu0 %4178
        %4182 = vset.pattern.permute.xlu0 0
        %4183 = vperm.xlu0 %4182, %v4101
        %v4184 = vpop.permute.xlu0 %4183
        %4187 = vset.pattern.permute.xlu0 0
        %4188 = vperm.xlu0 %4187, %v4102
        %v4189 = vpop.permute.xlu0 %4188
        %4192 = vset.pattern.permute.xlu0 0
        %4193 = vperm.xlu0 %4192, %v4103
        %v4194 = vpop.permute.xlu0 %4193
        %4197 = vset.pattern.permute.xlu0 0
        %4198 = vperm.xlu0 %4197, %v4104
        %v4199 = vpop.permute.xlu0 %4198
        %4202 = vset.pattern.permute.xlu0 0
        %4203 = vperm.xlu0 %4202, %v4105
        %v4204 = vpop.permute.xlu0 %4203
        %4207 = vset.pattern.permute.xlu0 0
        %4208 = vperm.xlu0 %4207, %v4106
        %v4209 = vpop.permute.xlu0 %4208
        %4212 = vset.pattern.permute.xlu0 0
        %4213 = vperm.xlu0 %4212, %v4107
        %v4214 = vpop.permute.xlu0 %4213
        %4217 = vset.pattern.permute.xlu0 0
        %4218 = vperm.xlu0 %4217, %v4108
        %v4219 = vpop.permute.xlu0 %4218
        %4222 = vset.pattern.permute.xlu0 0
        %4223 = vperm.xlu0 %4222, %v4109
        %v4224 = vpop.permute.xlu0 %4223
        %4227 = vset.pattern.permute.xlu0 0
        %4228 = vperm.xlu0 %4227, %v4110
        %v4229 = vpop.permute.xlu0 %4228
        %v4231 = vmul.f32 %v3782, %v4114
        %v4232 = vmul.f32 %v3783, %v4119
        %v4233 = vmul.f32 %v3784, %v4124
        %v4234 = vmul.f32 %v3785, %v4129
        %v4235 = vmul.f32 %v3786, %v4134
        %v4236 = vmul.f32 %v3787, %v4139
        %v4237 = vmul.f32 %v3788, %v4144
        %v4238 = vmul.f32 %v3789, %v4149
        %v4239 = vmul.f32 %v3790, %v4154
        %v4240 = vmul.f32 %v3791, %v4159
        %v4241 = vmul.f32 %v3792, %v4164
        %v4242 = vmul.f32 %v3793, %v4169
        %v4243 = vmul.f32 %v3794, %v4174
        %v4244 = vmul.f32 %v3795, %v4179
        %v4245 = vmul.f32 %v3796, %v4184
        %v4246 = vmul.f32 %v3797, %v4189
        %v4247 = vmul.f32 %v3798, %v4194
        %v4248 = vmul.f32 %v3799, %v4199
        %v4249 = vmul.f32 %v3800, %v4204
        %v4250 = vmul.f32 %v3801, %v4209
        %v4251 = vmul.f32 %v3802, %v4214
        %v4252 = vmul.f32 %v3803, %v4219
        %v4253 = vmul.f32 %v3804, %v4224
        %v4254 = vmul.f32 %v3805, %v4229
        %v4255 = vld [vmem:[%s35] sm:$0xff]
        %v4256 = vld [vmem:[%s35 + $0x8] sm:$0xff]
        %v4257 = vld [vmem:[%s35 + $0x10] sm:$0xff]
        %v4258 = vld [vmem:[%s35 + $0x18] sm:$0xff]
        %v4259 = vld [vmem:[%s35 + $0x20] sm:$0xff]
        %v4260 = vld [vmem:[%s35 + $0x28] sm:$0xff]
        %v4261 = vld [vmem:[%s35 + $0x30] sm:$0xff]
        %v4262 = vld [vmem:[%s35 + $0x38] sm:$0xff]
        %v4263 = vld [vmem:[%s35 + $0x40] sm:$0xff]
        %v4264 = vld [vmem:[%s35 + $0x48] sm:$0xff]
        %v4265 = vld [vmem:[%s35 + $0x50] sm:$0xff]
        %v4266 = vld [vmem:[%s35 + $0x58] sm:$0xff]
        %v4267 = vld [vmem:[%s35 + $0x60] sm:$0xff]
        %v4268 = vld [vmem:[%s35 + $0x68] sm:$0xff]
        %v4269 = vld [vmem:[%s35 + $0x70] sm:$0xff]
        %v4270 = vld [vmem:[%s35 + $0x78] sm:$0xff]
        %v4271 = vld [vmem:[%s35 + $0x80] sm:$0xff]
        %v4272 = vld [vmem:[%s35 + $0x88] sm:$0xff]
        %v4273 = vld [vmem:[%s35 + $0x90] sm:$0xff]
        %v4274 = vld [vmem:[%s35 + $0x98] sm:$0xff]
        %v4275 = vld [vmem:[%s35 + $0xa0] sm:$0xff]
        %v4276 = vld [vmem:[%s35 + $0xa8] sm:$0xff]
        %v4277 = vld [vmem:[%s35 + $0xb0] sm:$0xff]
        %v4278 = vld [vmem:[%s35 + $0xb8] sm:$0xff]
        %v4279 = vmul.f32 %v4231, %v4255
        %v4280 = vmul.f32 %v4232, %v4256
        %v4281 = vmul.f32 %v4233, %v4257
        %v4282 = vmul.f32 %v4234, %v4258
        %v4283 = vmul.f32 %v4235, %v4259
        %v4284 = vmul.f32 %v4236, %v4260
        %v4285 = vmul.f32 %v4237, %v4261
        %v4286 = vmul.f32 %v4238, %v4262
        %v4287 = vmul.f32 %v4239, %v4263
        %v4288 = vmul.f32 %v4240, %v4264
        %v4289 = vmul.f32 %v4241, %v4265
        %v4290 = vmul.f32 %v4242, %v4266
        %v4291 = vmul.f32 %v4243, %v4267
        %v4292 = vmul.f32 %v4244, %v4268
        %v4293 = vmul.f32 %v4245, %v4269
        %v4294 = vmul.f32 %v4246, %v4270
        %v4295 = vmul.f32 %v4247, %v4271
        %v4296 = vmul.f32 %v4248, %v4272
        %v4297 = vmul.f32 %v4249, %v4273
        %v4298 = vmul.f32 %v4250, %v4274
        %v4299 = vmul.f32 %v4251, %v4275
        %v4300 = vmul.f32 %v4252, %v4276
        %v4301 = vmul.f32 %v4253, %v4277
        %v4302 = vmul.f32 %v4254, %v4278
        %v4303 = vld [vmem:[%s37] sm:$0xff]
        %v4304 = vld [vmem:[%s37 + $0x8] sm:$0xff]
        %v4305 = vld [vmem:[%s37 + $0x10] sm:$0xff]
        %v4306 = vld [vmem:[%s37 + $0x18] sm:$0xff]
        %v4307 = vld [vmem:[%s37 + $0x20] sm:$0xff]
        %v4308 = vld [vmem:[%s37 + $0x28] sm:$0xff]
        %v4309 = vld [vmem:[%s37 + $0x30] sm:$0xff]
        %v4310 = vld [vmem:[%s37 + $0x38] sm:$0xff]
        %v4311 = vld [vmem:[%s37 + $0x40] sm:$0xff]
        %v4312 = vld [vmem:[%s37 + $0x48] sm:$0xff]
        %v4313 = vld [vmem:[%s37 + $0x50] sm:$0xff]
        %v4314 = vld [vmem:[%s37 + $0x58] sm:$0xff]
        %v4315 = vld [vmem:[%s37 + $0x60] sm:$0xff]
        %v4316 = vld [vmem:[%s37 + $0x68] sm:$0xff]
        %v4317 = vld [vmem:[%s37 + $0x70] sm:$0xff]
        %v4318 = vld [vmem:[%s37 + $0x78] sm:$0xff]
        %v4319 = vld [vmem:[%s37 + $0x80] sm:$0xff]
        %v4320 = vld [vmem:[%s37 + $0x88] sm:$0xff]
        %v4321 = vld [vmem:[%s37 + $0x90] sm:$0xff]
        %v4322 = vld [vmem:[%s37 + $0x98] sm:$0xff]
        %v4323 = vld [vmem:[%s37 + $0xa0] sm:$0xff]
        %v4324 = vld [vmem:[%s37 + $0xa8] sm:$0xff]
        %v4325 = vld [vmem:[%s37 + $0xb0] sm:$0xff]
        %v4326 = vld [vmem:[%s37 + $0xb8] sm:$0xff]
        %v4327 = vadd.f32 %v4279, %v4303
        %v4328 = vadd.f32 %v4280, %v4304
        %v4329 = vadd.f32 %v4281, %v4305
        %v4330 = vadd.f32 %v4282, %v4306
        %v4331 = vadd.f32 %v4283, %v4307
        %v4332 = vadd.f32 %v4284, %v4308
        %v4333 = vadd.f32 %v4285, %v4309
        %v4334 = vadd.f32 %v4286, %v4310
        %v4335 = vadd.f32 %v4287, %v4311
        %v4336 = vadd.f32 %v4288, %v4312
        %v4337 = vadd.f32 %v4289, %v4313
        %v4338 = vadd.f32 %v4290, %v4314
        %v4339 = vadd.f32 %v4291, %v4315
        %v4340 = vadd.f32 %v4292, %v4316
        %v4341 = vadd.f32 %v4293, %v4317
        %v4342 = vadd.f32 %v4294, %v4318
        %v4343 = vadd.f32 %v4295, %v4319
        %v4344 = vadd.f32 %v4296, %v4320
        %v4345 = vadd.f32 %v4297, %v4321
        %v4346 = vadd.f32 %v4298, %v4322
        %v4347 = vadd.f32 %v4299, %v4323
        %v4348 = vadd.f32 %v4300, %v4324
        %v4349 = vadd.f32 %v4301, %v4325
        %v4350 = vadd.f32 %v4302, %v4326
        %v4351 = vpack.c.bf16 %v4328, %v4327
        %v4352 = vpack.c.bf16 %v4330, %v4329
        %v4353 = vpack.c.bf16 %v4332, %v4331
        %v4354 = vpack.c.bf16 %v4334, %v4333
        %v4355 = vpack.c.bf16 %v4336, %v4335
        %v4356 = vpack.c.bf16 %v4338, %v4337
        %v4357 = vpack.c.bf16 %v4340, %v4339
        %v4358 = vpack.c.bf16 %v4342, %v4341
        %v4359 = vpack.c.bf16 %v4344, %v4343
        %v4360 = vpack.c.bf16 %v4346, %v4345
        %v4361 = vpack.c.bf16 %v4348, %v4347
        %v4362 = vpack.c.bf16 %v4350, %v4349
        %v4363 = vld [vmem:[%s39] sm:$0xf]
        %v4364 = vld [vmem:[%s39 + $0x4] sm:$0xf]
        %v4365 = vld [vmem:[%s39 + $0x8] sm:$0xf]
        %v4366 = vld [vmem:[%s39 + $0xc] sm:$0xf]
        %s4367 = scalar_lea.vmem %s39, 16
        %v4368 = vld [vmem:[%s4367] sm:$0xf]
        %v4369 = vld [vmem:[%s4367 + $0x4] sm:$0xf]
        %v4370 = vld [vmem:[%s4367 + $0x8] sm:$0xf]
        %v4371 = vld [vmem:[%s4367 + $0xc] sm:$0xf]
        %v4376 = vunpack.c.l.b16 %v4368
        %v4377 = vunpack.c.l.b16 %v4369
        %v4378 = vunpack.c.l.b16 %v4370
        %v4379 = vunpack.c.l.b16 %v4371
        %v4380 = vpack.c.b16 %v4377, %v4376
        %v4381 = vpack.c.b16 %v4379, %v4378
        %v4385 = vsel %vm2496, %v4352, 0
        %v4388 = vsel %vm2496, %v4353, 0
        %v4391 = vsel %vm2496, %v4354, 0
        %v4394 = vsel %vm2496, %v4355, 0
        %v4397 = vsel %vm2496, %v4356, 0
        %v4400 = vsel %vm2496, %v4357, 0
        %v4403 = vsel %vm2496, %v4358, 0
        %v4406 = vsel %vm2496, %v4359, 0
        %v4409 = vsel %vm2496, %v4360, 0
        %v4412 = vsel %vm2496, %v4361, 0
        %4414 = vmatprep.subr.bf16.mxu0 0
        %4415 = vmatpush1.bf16.msra.mxu0 %v4380
        %4416 = vmatprep.subr.bf16.mxu0 0
        %4417 = vmatpush1.bf16.msra.mxu0 %v4381
        %4418 = vmatprep.subr.bf16.mxu0 0
        %4419 = vmatpush1.bf16.msra.mxu0 0
        %4420 = vmatprep.subr.bf16.mxu0 0
        %4421 = vmatpush1.bf16.msra.mxu0 0
        %4422 = vmatprep.subr.bf16.mxu0 0
        %4423 = vmatpush1.bf16.msra.mxu0 0
        %4424 = vmatprep.subr.bf16.mxu0 0
        %4425 = vmatpush1.bf16.msra.mxu0 0
        %4426 = vmatprep.subr.bf16.mxu0 0
        %4427 = vmatpush1.bf16.msra.mxu0 0
        %4428 = vmatprep.subr.bf16.mxu0 0
        %4429 = vmatpush1.bf16.msra.mxu0 0
        %4430 = vmatprep.subr.bf16.mxu0 0
        %4431 = vmatpush1.bf16.msra.mxu0 0
        %4432 = vmatprep.subr.bf16.mxu0 0
        %4433 = vmatpush1.bf16.msra.mxu0 0
        %4434 = vmatprep.subr.bf16.mxu0 0
        %4435 = vmatpush1.bf16.msra.mxu0 0
        %4436 = vmatprep.subr.bf16.mxu0 0
        %4437 = vmatpush1.bf16.msra.mxu0 0
        %4438 = vmatprep.subr.bf16.mxu0 0
        %4439 = vmatpush1.bf16.msra.mxu0 0
        %4440 = vmatprep.subr.bf16.mxu0 0
        %4441 = vmatpush1.bf16.msra.mxu0 0
        %4442 = vmatprep.subr.bf16.mxu0 0
        %4443 = vmatpush1.bf16.msra.mxu0 0
        %4444 = vmatprep.subr.bf16.mxu0 0
        %4445 = vmatpush1.bf16.msra.mxu0 0
        %4446 = vmatprep.mubr.bf16.mxu0 0
        %4447 = vmatmul.mubr.bf16.gmra.mrb[0].mxu0 %v4385
        %v4448 = vpop.f32.mrb[0].mxu0
        %v4449 = vadd.f32 0.0, %v4448
        %v4450 = vpop.f32.mrb[0].mxu0
        %v4451 = vpop.f32.mrb[0].mxu0
        %v4452 = vadd.f32 0.0, %v4451
        %v4453 = vpop.f32.mrb[0].mxu0
        %4454 = vmatprep.mubr.bf16.mxu0 0
        %4455 = vmatmul.mubr.bf16.gmra.mrb[0].mxu0 %v4388
        %v4456 = vpop.f32.mrb[0].mxu0
        %v4457 = vadd.f32 0.0, %v4456
        %v4458 = vpop.f32.mrb[0].mxu0
        %v4459 = vpop.f32.mrb[0].mxu0
        %v4460 = vadd.f32 0.0, %v4459
        %v4461 = vpop.f32.mrb[0].mxu0
        %4462 = vmatprep.mubr.bf16.mxu0 0
        %4463 = vmatmul.mubr.bf16.gmra.mrb[0].mxu0 %v4391
        %v4464 = vpop.f32.mrb[0].mxu0
        %v4465 = vadd.f32 0.0, %v4464
        %v4466 = vpop.f32.mrb[0].mxu0
        %v4467 = vpop.f32.mrb[0].mxu0
        %v4468 = vadd.f32 0.0, %v4467
        %v4469 = vpop.f32.mrb[0].mxu0
        %4470 = vmatprep.mubr.bf16.mxu0 0
        %4471 = vmatmul.mubr.bf16.gmra.mrb[0].mxu0 %v4394
        %v4472 = vpop.f32.mrb[0].mxu0
        %v4473 = vadd.f32 0.0, %v4472
        %v4474 = vpop.f32.mrb[0].mxu0
        %v4475 = vpop.f32.mrb[0].mxu0
        %v4476 = vadd.f32 0.0, %v4475
        %v4477 = vpop.f32.mrb[0].mxu0
        %4478 = vmatprep.mubr.bf16.mxu0 0
        %4479 = vmatmul.mubr.bf16.gmra.mrb[0].mxu0 %v4397
        %v4480 = vpop.f32.mrb[0].mxu0
        %v4481 = vadd.f32 0.0, %v4480
        %v4482 = vpop.f32.mrb[0].mxu0
        %v4483 = vpop.f32.mrb[0].mxu0
        %v4484 = vadd.f32 0.0, %v4483
        %v4485 = vpop.f32.mrb[0].mxu0
        %4486 = vmatprep.mubr.bf16.mxu0 0
        %4487 = vmatmul.mubr.bf16.gmra.mrb[0].mxu0 %v4400
        %v4488 = vpop.f32.mrb[0].mxu0
        %v4489 = vadd.f32 0.0, %v4488
        %v4490 = vpop.f32.mrb[0].mxu0
        %v4491 = vpop.f32.mrb[0].mxu0
        %v4492 = vadd.f32 0.0, %v4491
        %v4493 = vpop.f32.mrb[0].mxu0
        %4494 = vmatprep.mubr.bf16.mxu0 0
        %4495 = vmatmul.mubr.bf16.gmra.mrb[0].mxu0 %v4403
        %v4496 = vpop.f32.mrb[0].mxu0
        %v4497 = vadd.f32 0.0, %v4496
        %v4498 = vpop.f32.mrb[0].mxu0
        %v4499 = vpop.f32.mrb[0].mxu0
        %v4500 = vadd.f32 0.0, %v4499
        %v4501 = vpop.f32.mrb[0].mxu0
        %4502 = vmatprep.mubr.bf16.mxu0 0
        %4503 = vmatmul.mubr.bf16.gmra.mrb[0].mxu0 %v4406
        %v4504 = vpop.f32.mrb[0].mxu0
        %v4505 = vadd.f32 0.0, %v4504
        %v4506 = vpop.f32.mrb[0].mxu0
        %v4507 = vpop.f32.mrb[0].mxu0
        %v4508 = vadd.f32 0.0, %v4507
        %v4509 = vpop.f32.mrb[0].mxu0
        %4510 = vmatprep.mubr.bf16.mxu0 0
        %4511 = vmatmul.mubr.bf16.gmra.mrb[0].mxu0 %v4409
        %v4512 = vpop.f32.mrb[0].mxu0
        %v4513 = vadd.f32 0.0, %v4512
        %v4514 = vpop.f32.mrb[0].mxu0
        %v4515 = vpop.f32.mrb[0].mxu0
        %v4516 = vadd.f32 0.0, %v4515
        %v4517 = vpop.f32.mrb[0].mxu0
        %4518 = vmatprep.mubr.bf16.mxu0 0
        %4519 = vmatmul.mubr.bf16.gmra.mrb[0].mxu0 %v4412
        %v4520 = vpop.f32.mrb[0].mxu0
        %v4521 = vadd.f32 0.0, %v4520
        %v4522 = vpop.f32.mrb[0].mxu0
        %v4523 = vpop.f32.mrb[0].mxu0
        %v4524 = vadd.f32 0.0, %v4523
        %v4525 = vpop.f32.mrb[0].mxu0
        %4526 = vdwg.mxu0
        %v4531 = vunpack.c.l.b16 %v4363
        %v4532 = vunpack.c.l.b16 %v4364
        %v4533 = vunpack.c.l.b16 %v4365
        %v4534 = vunpack.c.l.b16 %v4366
        %v4535 = vpack.c.b16 %v4532, %v4531
        %v4536 = vpack.c.b16 %v4534, %v4533
        %v4540 = vsel %vm2496, %v4351, 0
        %4542 = vmatprep.subr.bf16.mxu0 0
        %4543 = vmatpush1.bf16.msra.mxu0 %v4535
        %4544 = vmatprep.subr.bf16.mxu0 0
        %4545 = vmatpush1.bf16.msra.mxu0 %v4536
        %4546 = vmatprep.subr.bf16.mxu0 0
        %4547 = vmatpush1.bf16.msra.mxu0 0
        %4548 = vmatprep.subr.bf16.mxu0 0
        %4549 = vmatpush1.bf16.msra.mxu0 0
        %4550 = vmatprep.subr.bf16.mxu0 0
        %4551 = vmatpush1.bf16.msra.mxu0 0
        %4552 = vmatprep.subr.bf16.mxu0 0
        %4553 = vmatpush1.bf16.msra.mxu0 0
        %4554 = vmatprep.subr.bf16.mxu0 0
        %4555 = vmatpush1.bf16.msra.mxu0 0
        %4556 = vmatprep.subr.bf16.mxu0 0
        %4557 = vmatpush1.bf16.msra.mxu0 0
        %4558 = vmatprep.subr.bf16.mxu0 0
        %4559 = vmatpush1.bf16.msra.mxu0 0
        %4560 = vmatprep.subr.bf16.mxu0 0
        %4561 = vmatpush1.bf16.msra.mxu0 0
        %4562 = vmatprep.subr.bf16.mxu0 0
        %4563 = vmatpush1.bf16.msra.mxu0 0
        %4564 = vmatprep.subr.bf16.mxu0 0
        %4565 = vmatpush1.bf16.msra.mxu0 0
        %4566 = vmatprep.subr.bf16.mxu0 0
        %4567 = vmatpush1.bf16.msra.mxu0 0
        %4568 = vmatprep.subr.bf16.mxu0 0
        %4569 = vmatpush1.bf16.msra.mxu0 0
        %4570 = vmatprep.subr.bf16.mxu0 0
        %4571 = vmatpush1.bf16.msra.mxu0 0
        %4572 = vmatprep.subr.bf16.mxu0 0
        %4573 = vmatpush1.bf16.msra.mxu0 0
        %4574 = vmatprep.mubr.bf16.mxu0 0
        %4575 = vmatmul.mubr.bf16.gmra.mrb[0].mxu0 %v4540
        %v4576 = vpop.f32.mrb[0].mxu0
        %v4577 = vadd.f32 %v4449, %v4576
        %v4578 = vpop.f32.mrb[0].mxu0
        %v4579 = vpop.f32.mrb[0].mxu0
        %v4580 = vadd.f32 %v4452, %v4579
        %v4581 = vpop.f32.mrb[0].mxu0
        %4582 = vmatprep.mubr.bf16.mxu0 0
        %4583 = vmatmul.mubr.bf16.gmra.mrb[0].mxu0 %v4385
        %v4584 = vpop.f32.mrb[0].mxu0
        %v4585 = vadd.f32 %v4457, %v4584
        %v4586 = vpop.f32.mrb[0].mxu0
        %v4587 = vpop.f32.mrb[0].mxu0
        %v4588 = vadd.f32 %v4460, %v4587
        %v4589 = vpop.f32.mrb[0].mxu0
        %4590 = vmatprep.mubr.bf16.mxu0 0
        %4591 = vmatmul.mubr.bf16.gmra.mrb[0].mxu0 %v4388
        %v4592 = vpop.f32.mrb[0].mxu0
        %v4593 = vadd.f32 %v4465, %v4592
        %v4594 = vpop.f32.mrb[0].mxu0
        %v4595 = vpop.f32.mrb[0].mxu0
        %v4596 = vadd.f32 %v4468, %v4595
        %v4597 = vpop.f32.mrb[0].mxu0
        %4598 = vmatprep.mubr.bf16.mxu0 0
        %4599 = vmatmul.mubr.bf16.gmra.mrb[0].mxu0 %v4391
        %v4600 = vpop.f32.mrb[0].mxu0
        %v4601 = vadd.f32 %v4473, %v4600
        %v4602 = vpop.f32.mrb[0].mxu0
        %v4603 = vpop.f32.mrb[0].mxu0
        %v4604 = vadd.f32 %v4476, %v4603
        %v4605 = vpop.f32.mrb[0].mxu0
        %4606 = vmatprep.mubr.bf16.mxu0 0
        %4607 = vmatmul.mubr.bf16.gmra.mrb[0].mxu0 %v4394
        %v4608 = vpop.f32.mrb[0].mxu0
        %v4609 = vadd.f32 %v4481, %v4608
        %v4610 = vpop.f32.mrb[0].mxu0
        %v4611 = vpop.f32.mrb[0].mxu0
        %v4612 = vadd.f32 %v4484, %v4611
        %v4613 = vpop.f32.mrb[0].mxu0
        %4614 = vmatprep.mubr.bf16.mxu0 0
        %4615 = vmatmul.mubr.bf16.gmra.mrb[0].mxu0 %v4397
        %v4616 = vpop.f32.mrb[0].mxu0
        %v4617 = vadd.f32 %v4489, %v4616
        %v4618 = vpop.f32.mrb[0].mxu0
        %v4619 = vpop.f32.mrb[0].mxu0
        %v4620 = vadd.f32 %v4492, %v4619
        %v4621 = vpop.f32.mrb[0].mxu0
        %4622 = vmatprep.mubr.bf16.mxu0 0
        %4623 = vmatmul.mubr.bf16.gmra.mrb[0].mxu0 %v4400
        %v4624 = vpop.f32.mrb[0].mxu0
        %v4625 = vadd.f32 %v4497, %v4624
        %v4626 = vpop.f32.mrb[0].mxu0
        %v4627 = vpop.f32.mrb[0].mxu0
        %v4628 = vadd.f32 %v4500, %v4627
        %v4629 = vpop.f32.mrb[0].mxu0
        %4630 = vmatprep.mubr.bf16.mxu0 0
        %4631 = vmatmul.mubr.bf16.gmra.mrb[0].mxu0 %v4403
        %v4632 = vpop.f32.mrb[0].mxu0
        %v4633 = vadd.f32 %v4505, %v4632
        %v4634 = vpop.f32.mrb[0].mxu0
        %v4635 = vpop.f32.mrb[0].mxu0
        %v4636 = vadd.f32 %v4508, %v4635
        %v4637 = vpop.f32.mrb[0].mxu0
        %4638 = vmatprep.mubr.bf16.mxu0 0
        %4639 = vmatmul.mubr.bf16.gmra.mrb[0].mxu0 %v4406
        %v4640 = vpop.f32.mrb[0].mxu0
        %v4641 = vadd.f32 %v4513, %v4640
        %v4642 = vpop.f32.mrb[0].mxu0
        %v4643 = vpop.f32.mrb[0].mxu0
        %v4644 = vadd.f32 %v4516, %v4643
        %v4645 = vpop.f32.mrb[0].mxu0
        %4646 = vmatprep.mubr.bf16.mxu0 0
        %4647 = vmatmul.mubr.bf16.gmra.mrb[0].mxu0 %v4409
        %v4648 = vpop.f32.mrb[0].mxu0
        %v4649 = vadd.f32 %v4521, %v4648
        %v4650 = vpop.f32.mrb[0].mxu0
        %v4651 = vpop.f32.mrb[0].mxu0
        %v4652 = vadd.f32 %v4524, %v4651
        %v4653 = vpop.f32.mrb[0].mxu0
        %4654 = vdwg.mxu0
        %s4655 = scalar_lea.vmem %s39, 32
        %v4656 = vld [vmem:[%s4655] sm:$0xf]
        %v4657 = vld [vmem:[%s4655 + $0x4] sm:$0xf]
        %v4658 = vld [vmem:[%s4655 + $0x8] sm:$0xf]
        %v4659 = vld [vmem:[%s4655 + $0xc] sm:$0xf]
        %v4664 = vunpack.c.l.b16 %v4656
        %v4665 = vunpack.c.l.b16 %v4657
        %v4666 = vunpack.c.l.b16 %v4658
        %v4667 = vunpack.c.l.b16 %v4659
        %v4668 = vpack.c.b16 %v4665, %v4664
        %v4669 = vpack.c.b16 %v4667, %v4666
        %v4673 = vsel %vm2496, %v4362, 0
        %4675 = vmatprep.subr.bf16.mxu0 0
        %4676 = vmatpush1.bf16.msra.mxu0 %v4668
        %4677 = vmatprep.subr.bf16.mxu0 0
        %4678 = vmatpush1.bf16.msra.mxu0 %v4669
        %4679 = vmatprep.subr.bf16.mxu0 0
        %4680 = vmatpush1.bf16.msra.mxu0 0
        %4681 = vmatprep.subr.bf16.mxu0 0
        %4682 = vmatpush1.bf16.msra.mxu0 0
        %4683 = vmatprep.subr.bf16.mxu0 0
        %4684 = vmatpush1.bf16.msra.mxu0 0
        %4685 = vmatprep.subr.bf16.mxu0 0
        %4686 = vmatpush1.bf16.msra.mxu0 0
        %4687 = vmatprep.subr.bf16.mxu0 0
        %4688 = vmatpush1.bf16.msra.mxu0 0
        %4689 = vmatprep.subr.bf16.mxu0 0
        %4690 = vmatpush1.bf16.msra.mxu0 0
        %4691 = vmatprep.subr.bf16.mxu0 0
        %4692 = vmatpush1.bf16.msra.mxu0 0
        %4693 = vmatprep.subr.bf16.mxu0 0
        %4694 = vmatpush1.bf16.msra.mxu0 0
        %4695 = vmatprep.subr.bf16.mxu0 0
        %4696 = vmatpush1.bf16.msra.mxu0 0
        %4697 = vmatprep.subr.bf16.mxu0 0
        %4698 = vmatpush1.bf16.msra.mxu0 0
        %4699 = vmatprep.subr.bf16.mxu0 0
        %4700 = vmatpush1.bf16.msra.mxu0 0
        %4701 = vmatprep.subr.bf16.mxu0 0
        %4702 = vmatpush1.bf16.msra.mxu0 0
        %4703 = vmatprep.subr.bf16.mxu0 0
        %4704 = vmatpush1.bf16.msra.mxu0 0
        %4705 = vmatprep.subr.bf16.mxu0 0
        %4706 = vmatpush1.bf16.msra.mxu0 0
        %4707 = vmatprep.mubr.bf16.mxu0 0
        %4708 = vmatmul.mubr.bf16.gmra.mrb[0].mxu0 %v4388
        %v4709 = vpop.f32.mrb[0].mxu0
        %v4710 = vadd.f32 0.0, %v4709
        %v4711 = vpop.f32.mrb[0].mxu0
        %v4712 = vpop.f32.mrb[0].mxu0
        %v4713 = vadd.f32 0.0, %v4712
        %v4714 = vpop.f32.mrb[0].mxu0
        %4715 = vmatprep.mubr.bf16.mxu0 0
        %4716 = vmatmul.mubr.bf16.gmra.mrb[0].mxu0 %v4391
        %v4717 = vpop.f32.mrb[0].mxu0
        %v4718 = vadd.f32 0.0, %v4717
        %v4719 = vpop.f32.mrb[0].mxu0
        %v4720 = vpop.f32.mrb[0].mxu0
        %v4721 = vadd.f32 0.0, %v4720
        %v4722 = vpop.f32.mrb[0].mxu0
        %4723 = vmatprep.mubr.bf16.mxu0 0
        %4724 = vmatmul.mubr.bf16.gmra.mrb[0].mxu0 %v4394
        %v4725 = vpop.f32.mrb[0].mxu0
        %v4726 = vadd.f32 0.0, %v4725
        %v4727 = vpop.f32.mrb[0].mxu0
        %v4728 = vpop.f32.mrb[0].mxu0
        %v4729 = vadd.f32 0.0, %v4728
        %v4730 = vpop.f32.mrb[0].mxu0
        %4731 = vmatprep.mubr.bf16.mxu0 0
        %4732 = vmatmul.mubr.bf16.gmra.mrb[0].mxu0 %v4397
        %v4733 = vpop.f32.mrb[0].mxu0
        %v4734 = vadd.f32 0.0, %v4733
        %v4735 = vpop.f32.mrb[0].mxu0
        %v4736 = vpop.f32.mrb[0].mxu0
        %v4737 = vadd.f32 0.0, %v4736
        %v4738 = vpop.f32.mrb[0].mxu0
        %4739 = vmatprep.mubr.bf16.mxu0 0
        %4740 = vmatmul.mubr.bf16.gmra.mrb[0].mxu0 %v4400
        %v4741 = vpop.f32.mrb[0].mxu0
        %v4742 = vadd.f32 0.0, %v4741
        %v4743 = vpop.f32.mrb[0].mxu0
        %v4744 = vpop.f32.mrb[0].mxu0
        %v4745 = vadd.f32 0.0, %v4744
        %v4746 = vpop.f32.mrb[0].mxu0
        %4747 = vmatprep.mubr.bf16.mxu0 0
        %4748 = vmatmul.mubr.bf16.gmra.mrb[0].mxu0 %v4403
        %v4749 = vpop.f32.mrb[0].mxu0
        %v4750 = vadd.f32 0.0, %v4749
        %v4751 = vpop.f32.mrb[0].mxu0
        %v4752 = vpop.f32.mrb[0].mxu0
        %v4753 = vadd.f32 0.0, %v4752
        %v4754 = vpop.f32.mrb[0].mxu0
        %4755 = vmatprep.mubr.bf16.mxu0 0
        %4756 = vmatmul.mubr.bf16.gmra.mrb[0].mxu0 %v4406
        %v4757 = vpop.f32.mrb[0].mxu0
        %v4758 = vadd.f32 0.0, %v4757
        %v4759 = vpop.f32.mrb[0].mxu0
        %v4760 = vpop.f32.mrb[0].mxu0
        %v4761 = vadd.f32 0.0, %v4760
        %v4762 = vpop.f32.mrb[0].mxu0
        %4763 = vmatprep.mubr.bf16.mxu0 0
        %4764 = vmatmul.mubr.bf16.gmra.mrb[0].mxu0 %v4409
        %v4765 = vpop.f32.mrb[0].mxu0
        %v4766 = vadd.f32 0.0, %v4765
        %v4767 = vpop.f32.mrb[0].mxu0
        %v4768 = vpop.f32.mrb[0].mxu0
        %v4769 = vadd.f32 0.0, %v4768
        %v4770 = vpop.f32.mrb[0].mxu0
        %4771 = vmatprep.mubr.bf16.mxu0 0
        %4772 = vmatmul.mubr.bf16.gmra.mrb[0].mxu0 %v4412
        %v4773 = vpop.f32.mrb[0].mxu0
        %v4774 = vadd.f32 0.0, %v4773
        %v4775 = vpop.f32.mrb[0].mxu0
        %v4776 = vpop.f32.mrb[0].mxu0
        %v4777 = vadd.f32 0.0, %v4776
        %v4778 = vpop.f32.mrb[0].mxu0
        %4779 = vmatprep.mubr.bf16.mxu0 0
        %4780 = vmatmul.mubr.bf16.gmra.mrb[0].mxu0 %v4673
        %v4781 = vpop.f32.mrb[0].mxu0
        %v4782 = vadd.f32 0.0, %v4781
        %v4783 = vpop.f32.mrb[0].mxu0
        %v4784 = vpop.f32.mrb[0].mxu0
        %v4785 = vadd.f32 0.0, %v4784
        %v4786 = vpop.f32.mrb[0].mxu0
        %4787 = vdwg.mxu0
        %v4788 = vadd.f32 %v4577, %v4710
        %v4789 = vadd.f32 %v4580, %v4713
        %v4790 = vadd.f32 %v4585, %v4718
        %v4791 = vadd.f32 %v4588, %v4721
        %v4792 = vadd.f32 %v4593, %v4726
        %v4793 = vadd.f32 %v4596, %v4729
        %v4794 = vadd.f32 %v4601, %v4734
        %v4795 = vadd.f32 %v4604, %v4737
        %v4796 = vadd.f32 %v4609, %v4742
        %v4797 = vadd.f32 %v4612, %v4745
        %v4798 = vadd.f32 %v4617, %v4750
        %v4799 = vadd.f32 %v4620, %v4753
        %v4800 = vadd.f32 %v4625, %v4758
        %v4801 = vadd.f32 %v4628, %v4761
        %v4802 = vadd.f32 %v4633, %v4766
        %v4803 = vadd.f32 %v4636, %v4769
        %v4804 = vadd.f32 %v4641, %v4774
        %v4805 = vadd.f32 %v4644, %v4777
        %v4806 = vadd.f32 %v4649, %v4782
        %v4807 = vadd.f32 %v4652, %v4785
        %v4808 = vld [vmem:[%s41] sm:$0x1]
        %v4810 = vlaneseq
        %v4811 = vshrl.u32 %v4810, 7
        %v4812 = vsub.s32 0, %v4811
        %v4813 = vrot.slane %v4808, %v4812
        %v4815 = vadd.f32 %v4788, %v4813
        %v4816 = vadd.f32 %v4789, %v4813
        %v4817 = vadd.f32 %v4790, %v4813
        %v4818 = vadd.f32 %v4791, %v4813
        %v4819 = vadd.f32 %v4792, %v4813
        %v4820 = vadd.f32 %v4793, %v4813
        %v4821 = vadd.f32 %v4794, %v4813
        %v4822 = vadd.f32 %v4795, %v4813
        %v4823 = vadd.f32 %v4796, %v4813
        %v4824 = vadd.f32 %v4797, %v4813
        %v4825 = vadd.f32 %v4798, %v4813
        %v4826 = vadd.f32 %v4799, %v4813
        %v4827 = vadd.f32 %v4800, %v4813
        %v4828 = vadd.f32 %v4801, %v4813
        %v4829 = vadd.f32 %v4802, %v4813
        %v4830 = vadd.f32 %v4803, %v4813
        %v4831 = vadd.f32 %v4804, %v4813
        %v4832 = vadd.f32 %v4805, %v4813
        %v4833 = vadd.f32 %v4806, %v4813
        %v4834 = vadd.f32 %v4807, %v4813
        %v4835 = vmax.f32 %v4815, 0.0
        %v4836 = vmax.f32 %v4816, 0.0
        %v4837 = vmax.f32 %v4817, 0.0
        %v4838 = vmax.f32 %v4818, 0.0
        %v4839 = vmax.f32 %v4819, 0.0
        %v4840 = vmax.f32 %v4820, 0.0
        %v4841 = vmax.f32 %v4821, 0.0
        %v4842 = vmax.f32 %v4822, 0.0
        %v4843 = vmax.f32 %v4823, 0.0
        %v4844 = vmax.f32 %v4824, 0.0
        %v4845 = vmax.f32 %v4825, 0.0
        %v4846 = vmax.f32 %v4826, 0.0
        %v4847 = vmax.f32 %v4827, 0.0
        %v4848 = vmax.f32 %v4828, 0.0
        %v4849 = vmax.f32 %v4829, 0.0
        %v4850 = vmax.f32 %v4830, 0.0
        %v4851 = vmax.f32 %v4831, 0.0
        %v4852 = vmax.f32 %v4832, 0.0
        %v4853 = vmax.f32 %v4833, 0.0
        %v4854 = vmax.f32 %v4834, 0.0
        %v4855 = vld [vmem:[%s7] sm:$0xff]
        %v4856 = vld [vmem:[%s7 + $0x8] sm:$0xff]
        %v4857 = vld [vmem:[%s7 + $0x10] sm:$0xff]
        %v4858 = vld [vmem:[%s7 + $0x18] sm:$0xff]
        %v4859 = vld [vmem:[%s7 + $0x20] sm:$0xff]
        %v4860 = vld [vmem:[%s7 + $0x28] sm:$0xff]
        %v4861 = vld [vmem:[%s7 + $0x30] sm:$0xff]
        %v4862 = vld [vmem:[%s7 + $0x38] sm:$0xff]
        %v4863 = vld [vmem:[%s7 + $0x40] sm:$0xff]
        %v4864 = vld [vmem:[%s7 + $0x48] sm:$0xff]
        %v4865 = vld [vmem:[%s7 + $0x50] sm:$0xff]
        %v4866 = vld [vmem:[%s7 + $0x58] sm:$0xff]
        %v4867 = vld [vmem:[%s7 + $0x60] sm:$0xff]
        %v4868 = vld [vmem:[%s7 + $0x68] sm:$0xff]
        %v4869 = vld [vmem:[%s7 + $0x70] sm:$0xff]
        %v4870 = vld [vmem:[%s7 + $0x78] sm:$0xff]
        %v4871 = vld [vmem:[%s7 + $0x80] sm:$0xff]
        %v4872 = vld [vmem:[%s7 + $0x88] sm:$0xff]
        %v4873 = vld [vmem:[%s7 + $0x90] sm:$0xff]
        %v4874 = vld [vmem:[%s7 + $0x98] sm:$0xff]
        %v4875 = vpack.c.bf16 %v4836, %v4835
        %v4876 = vpack.c.bf16 %v4838, %v4837
        %v4877 = vpack.c.bf16 %v4840, %v4839
        %v4878 = vpack.c.bf16 %v4842, %v4841
        %v4879 = vpack.c.bf16 %v4844, %v4843
        %v4880 = vpack.c.bf16 %v4846, %v4845
        %v4881 = vpack.c.bf16 %v4848, %v4847
        %v4882 = vpack.c.bf16 %v4850, %v4849
        %v4883 = vpack.c.bf16 %v4852, %v4851
        %v4884 = vpack.c.bf16 %v4854, %v4853
        %v4905 = vunpack.c.l.b16 %v4855
        %v4906 = vunpack.c.h.b16 %v4855
        %v4907 = vunpack.c.l.b16 %v4856
        %v4908 = vunpack.c.h.b16 %v4856
        %v4909 = vunpack.c.l.b16 %v4857
        %v4910 = vunpack.c.h.b16 %v4857
        %v4911 = vunpack.c.l.b16 %v4858
        %v4912 = vunpack.c.h.b16 %v4858
        %v4913 = vunpack.c.l.b16 %v4859
        %v4914 = vunpack.c.h.b16 %v4859
        %v4915 = vunpack.c.l.b16 %v4860
        %v4916 = vunpack.c.h.b16 %v4860
        %v4917 = vunpack.c.l.b16 %v4861
        %v4918 = vunpack.c.h.b16 %v4861
        %v4919 = vunpack.c.l.b16 %v4862
        %v4920 = vunpack.c.h.b16 %v4862
        %v4921 = vunpack.c.l.b16 %v4863
        %v4922 = vunpack.c.h.b16 %v4863
        %v4923 = vunpack.c.l.b16 %v4864
        %v4924 = vunpack.c.h.b16 %v4864
        %v4925 = vunpack.c.l.b16 %v4865
        %v4926 = vunpack.c.h.b16 %v4865
        %v4927 = vunpack.c.l.b16 %v4866
        %v4928 = vunpack.c.h.b16 %v4866
        %v4929 = vunpack.c.l.b16 %v4867
        %v4930 = vunpack.c.h.b16 %v4867
        %v4931 = vunpack.c.l.b16 %v4868
        %v4932 = vunpack.c.h.b16 %v4868
        %v4933 = vunpack.c.l.b16 %v4869
        %v4934 = vunpack.c.h.b16 %v4869
        %v4935 = vunpack.c.l.b16 %v4870
        %v4936 = vunpack.c.h.b16 %v4870
        %v4937 = vunpack.c.l.b16 %v4871
        %v4938 = vunpack.c.h.b16 %v4871
        %v4939 = vunpack.c.l.b16 %v4872
        %v4940 = vunpack.c.h.b16 %v4872
        %v4941 = vunpack.c.l.b16 %v4873
        %v4942 = vunpack.c.h.b16 %v4873
        %v4943 = vunpack.c.l.b16 %v4874
        %v4944 = vunpack.c.h.b16 %v4874
        %v4945 = vpack.c.b16 %v4907, %v4905
        %v4946 = vpack.c.b16 %v4908, %v4906
        %v4947 = vpack.c.b16 %v4911, %v4909
        %v4948 = vpack.c.b16 %v4912, %v4910
        %v4949 = vpack.c.b16 %v4915, %v4913
        %v4950 = vpack.c.b16 %v4916, %v4914
        %v4951 = vpack.c.b16 %v4919, %v4917
        %v4952 = vpack.c.b16 %v4920, %v4918
        %v4953 = vpack.c.b16 %v4923, %v4921
        %v4954 = vpack.c.b16 %v4924, %v4922
        %v4955 = vpack.c.b16 %v4927, %v4925
        %v4956 = vpack.c.b16 %v4928, %v4926
        %v4957 = vpack.c.b16 %v4931, %v4929
        %v4958 = vpack.c.b16 %v4932, %v4930
        %v4959 = vpack.c.b16 %v4935, %v4933
        %v4960 = vpack.c.b16 %v4936, %v4934
        %v4961 = vpack.c.b16 %v4939, %v4937
        %v4962 = vpack.c.b16 %v4940, %v4938
        %v4963 = vpack.c.b16 %v4943, %v4941
        %v4964 = vpack.c.b16 %v4944, %v4942
        %v4976 = vsel %vm2496, %v4946, 0
        %v4979 = vsel %vm2496, %v4948, 0
        %v4982 = vsel %vm2496, %v4950, 0
        %v4985 = vsel %vm2496, %v4952, 0
        %v4988 = vsel %vm2496, %v4954, 0
        %v4991 = vsel %vm2496, %v4956, 0
        %v4994 = vsel %vm2496, %v4958, 0
        %v4997 = vsel %vm2496, %v4960, 0
        %v5000 = vsel %vm2496, %v4962, 0
        %v5003 = vsel %vm2496, %v4964, 0
        %5005 = vmatprep.subr.bf16.mxu0 0
        %5006 = vmatpush1.bf16.msra.mxu0 %v4875
        %5007 = vmatprep.subr.bf16.mxu0 0
        %5008 = vmatpush1.bf16.msra.mxu0 %v4876
        %5009 = vmatprep.subr.bf16.mxu0 0
        %5010 = vmatpush1.bf16.msra.mxu0 %v4877
        %5011 = vmatprep.subr.bf16.mxu0 0
        %5012 = vmatpush1.bf16.msra.mxu0 %v4878
        %5013 = vmatprep.subr.bf16.mxu0 0
        %5014 = vmatpush1.bf16.msra.mxu0 %v4879
        %5015 = vmatprep.subr.bf16.mxu0 0
        %5016 = vmatpush1.bf16.msra.mxu0 %v4880
        %5017 = vmatprep.subr.bf16.mxu0 0
        %5018 = vmatpush1.bf16.msra.mxu0 %v4881
        %5019 = vmatprep.subr.bf16.mxu0 0
        %5020 = vmatpush1.bf16.msra.mxu0 %v4882
        %5021 = vmatprep.subr.bf16.mxu0 0
        %5022 = vmatpush1.bf16.msra.mxu0 %v4883
        %5023 = vmatprep.subr.bf16.mxu0 0
        %5024 = vmatpush1.bf16.msra.mxu0 %v4884
        %5025 = vmatprep.subr.bf16.mxu0 0
        %5026 = vmatpush1.bf16.msra.mxu0 0
        %5027 = vmatprep.subr.bf16.mxu0 0
        %5028 = vmatpush1.bf16.msra.mxu0 0
        %5029 = vmatprep.subr.bf16.mxu0 0
        %5030 = vmatpush1.bf16.msra.mxu0 0
        %5031 = vmatprep.subr.bf16.mxu0 0
        %5032 = vmatpush1.bf16.msra.mxu0 0
        %5033 = vmatprep.subr.bf16.mxu0 0
        %5034 = vmatpush1.bf16.msra.mxu0 0
        %5035 = vmatprep.subr.bf16.mxu0 0
        %5036 = vmatpush1.bf16.msra.mxu0 0
        %5037 = vmatprep.mubr.bf16.mxu0 %v4976
        %5038 = vmatmul.mubr.bf16.gmra.mrb[0].mxu0 %v4945
        %v5039 = vpop.f32.mrb[0].mxu0
        %v5040 = vadd.f32 0.0, %v5039
        %v5041 = vpop.f32.mrb[0].mxu0
        %v5042 = vpop.f32.mrb[0].mxu0
        %v5043 = vadd.f32 0.0, %v5042
        %v5044 = vpop.f32.mrb[0].mxu0
        %5045 = vmatprep.mubr.bf16.mxu0 %v4979
        %5046 = vmatmul.mubr.bf16.gmra.mrb[0].mxu0 %v4947
        %v5047 = vpop.f32.mrb[0].mxu0
        %v5048 = vadd.f32 0.0, %v5047
        %v5049 = vpop.f32.mrb[0].mxu0
        %v5050 = vpop.f32.mrb[0].mxu0
        %v5051 = vadd.f32 0.0, %v5050
        %v5052 = vpop.f32.mrb[0].mxu0
        %5053 = vmatprep.mubr.bf16.mxu0 %v4982
        %5054 = vmatmul.mubr.bf16.gmra.mrb[0].mxu0 %v4949
        %v5055 = vpop.f32.mrb[0].mxu0
        %v5056 = vadd.f32 0.0, %v5055
        %v5057 = vpop.f32.mrb[0].mxu0
        %v5058 = vpop.f32.mrb[0].mxu0
        %v5059 = vadd.f32 0.0, %v5058
        %v5060 = vpop.f32.mrb[0].mxu0
        %5061 = vmatprep.mubr.bf16.mxu0 %v4985
        %5062 = vmatmul.mubr.bf16.gmra.mrb[0].mxu0 %v4951
        %v5063 = vpop.f32.mrb[0].mxu0
        %v5064 = vadd.f32 0.0, %v5063
        %v5065 = vpop.f32.mrb[0].mxu0
        %v5066 = vpop.f32.mrb[0].mxu0
        %v5067 = vadd.f32 0.0, %v5066
        %v5068 = vpop.f32.mrb[0].mxu0
        %5069 = vmatprep.mubr.bf16.mxu0 %v4988
        %5070 = vmatmul.mubr.bf16.gmra.mrb[0].mxu0 %v4953
        %v5071 = vpop.f32.mrb[0].mxu0
        %v5072 = vadd.f32 0.0, %v5071
        %v5073 = vpop.f32.mrb[0].mxu0
        %v5074 = vpop.f32.mrb[0].mxu0
        %v5075 = vadd.f32 0.0, %v5074
        %v5076 = vpop.f32.mrb[0].mxu0
        %5077 = vmatprep.mubr.bf16.mxu0 %v4991
        %5078 = vmatmul.mubr.bf16.gmra.mrb[0].mxu0 %v4955
        %v5079 = vpop.f32.mrb[0].mxu0
        %v5080 = vadd.f32 0.0, %v5079
        %v5081 = vpop.f32.mrb[0].mxu0
        %v5082 = vpop.f32.mrb[0].mxu0
        %v5083 = vadd.f32 0.0, %v5082
        %v5084 = vpop.f32.mrb[0].mxu0
        %5085 = vmatprep.mubr.bf16.mxu0 %v4994
        %5086 = vmatmul.mubr.bf16.gmra.mrb[0].mxu0 %v4957
        %v5087 = vpop.f32.mrb[0].mxu0
        %v5088 = vadd.f32 0.0, %v5087
        %v5089 = vpop.f32.mrb[0].mxu0
        %v5090 = vpop.f32.mrb[0].mxu0
        %v5091 = vadd.f32 0.0, %v5090
        %v5092 = vpop.f32.mrb[0].mxu0
        %5093 = vmatprep.mubr.bf16.mxu0 %v4997
        %5094 = vmatmul.mubr.bf16.gmra.mrb[0].mxu0 %v4959
        %v5095 = vpop.f32.mrb[0].mxu0
        %v5096 = vadd.f32 0.0, %v5095
        %v5097 = vpop.f32.mrb[0].mxu0
        %v5098 = vpop.f32.mrb[0].mxu0
        %v5099 = vadd.f32 0.0, %v5098
        %v5100 = vpop.f32.mrb[0].mxu0
        %5101 = vmatprep.mubr.bf16.mxu0 %v5000
        %5102 = vmatmul.mubr.bf16.gmra.mrb[0].mxu0 %v4961
        %v5103 = vpop.f32.mrb[0].mxu0
        %v5104 = vadd.f32 0.0, %v5103
        %v5105 = vpop.f32.mrb[0].mxu0
        %v5106 = vpop.f32.mrb[0].mxu0
        %v5107 = vadd.f32 0.0, %v5106
        %v5108 = vpop.f32.mrb[0].mxu0
        %5109 = vmatprep.mubr.bf16.mxu0 %v5003
        %5110 = vmatmul.mubr.bf16.gmra.mrb[0].mxu0 %v4963
        %v5111 = vpop.f32.mrb[0].mxu0
        %v5112 = vadd.f32 0.0, %v5111
        %v5113 = vpop.f32.mrb[0].mxu0
        %v5114 = vpop.f32.mrb[0].mxu0
        %v5115 = vadd.f32 0.0, %v5114
        %v5116 = vpop.f32.mrb[0].mxu0
        %5117 = vdwg.mxu0
        %v5118 = vld [vmem:[%s43] sm:$0xf]
        %v5119 = vld [vmem:[%s43 + $0x4] sm:$0xf]
        %v5120 = vld [vmem:[%s43 + $0x8] sm:$0xf]
        %v5121 = vld [vmem:[%s43 + $0xc] sm:$0xf]
        %v5122 = vpack.c.bf16 %v5043, %v5040
        %v5123 = vpack.c.bf16 %v5051, %v5048
        %v5124 = vpack.c.bf16 %v5059, %v5056
        %v5125 = vpack.c.bf16 %v5067, %v5064
        %v5126 = vpack.c.bf16 %v5075, %v5072
        %v5127 = vpack.c.bf16 %v5083, %v5080
        %v5128 = vpack.c.bf16 %v5091, %v5088
        %v5129 = vpack.c.bf16 %v5099, %v5096
        %v5130 = vpack.c.bf16 %v5107, %v5104
        %v5131 = vpack.c.bf16 %v5115, %v5112
        %v5132 = vld [vmem:[%s45] sm:$0x1]
        %v5134 = vlaneseq
        %v5135 = vshrl.u32 %v5134, 7
        %v5136 = vsub.s32 0, %v5135
        %v5137 = vrot.slane %v5132, %v5136
        %v5143 = vunpack.c.l.b16 %v5118
        %v5144 = vunpack.c.l.b16 %v5119
        %v5145 = vunpack.c.l.b16 %v5120
        %v5146 = vunpack.c.l.b16 %v5121
        %v5147 = vpack.c.b16 %v5144, %v5143
        %v5148 = vpack.c.b16 %v5146, %v5145
        %v5152 = vsel %vm2496, %v5122, 0
        %v5155 = vsel %vm2496, %v5123, 0
        %v5158 = vsel %vm2496, %v5124, 0
        %v5161 = vsel %vm2496, %v5125, 0
        %v5164 = vsel %vm2496, %v5126, 0
        %v5167 = vsel %vm2496, %v5127, 0
        %v5170 = vsel %vm2496, %v5128, 0
        %v5173 = vsel %vm2496, %v5129, 0
        %v5176 = vsel %vm2496, %v5130, 0
        %v5179 = vsel %vm2496, %v5131, 0
        %5181 = vmatprep.subr.bf16.mxu0 0
        %5182 = vmatpush1.bf16.msra.mxu0 %v5147
        %5183 = vmatprep.subr.bf16.mxu0 0
        %5184 = vmatpush1.bf16.msra.mxu0 %v5148
        %5185 = vmatprep.subr.bf16.mxu0 0
        %5186 = vmatpush1.bf16.msra.mxu0 0
        %5187 = vmatprep.subr.bf16.mxu0 0
        %5188 = vmatpush1.bf16.msra.mxu0 0
        %5189 = vmatprep.subr.bf16.mxu0 0
        %5190 = vmatpush1.bf16.msra.mxu0 0
        %5191 = vmatprep.subr.bf16.mxu0 0
        %5192 = vmatpush1.bf16.msra.mxu0 0
        %5193 = vmatprep.subr.bf16.mxu0 0
        %5194 = vmatpush1.bf16.msra.mxu0 0
        %5195 = vmatprep.subr.bf16.mxu0 0
        %5196 = vmatpush1.bf16.msra.mxu0 0
        %5197 = vmatprep.subr.bf16.mxu0 0
        %5198 = vmatpush1.bf16.msra.mxu0 0
        %5199 = vmatprep.subr.bf16.mxu0 0
        %5200 = vmatpush1.bf16.msra.mxu0 0
        %5201 = vmatprep.subr.bf16.mxu0 0
        %5202 = vmatpush1.bf16.msra.mxu0 0
        %5203 = vmatprep.subr.bf16.mxu0 0
        %5204 = vmatpush1.bf16.msra.mxu0 0
        %5205 = vmatprep.subr.bf16.mxu0 0
        %5206 = vmatpush1.bf16.msra.mxu0 0
        %5207 = vmatprep.subr.bf16.mxu0 0
        %5208 = vmatpush1.bf16.msra.mxu0 0
        %5209 = vmatprep.subr.bf16.mxu0 0
        %5210 = vmatpush1.bf16.msra.mxu0 0
        %5211 = vmatprep.subr.bf16.mxu0 0
        %5212 = vmatpush1.bf16.msra.mxu0 0
        %5213 = vmatprep.mubr.bf16.mxu0 0
        %5214 = vmatmul.mubr.bf16.gmra.mrb[0].mxu0 %v5152
        %v5215 = vpop.f32.mrb[0].mxu0
        %v5216 = vadd.f32 %v5137, %v5215
        %v5217 = vpop.f32.mrb[0].mxu0
        %v5218 = vpop.f32.mrb[0].mxu0
        %v5219 = vadd.f32 %v5137, %v5218
        %v5220 = vpop.f32.mrb[0].mxu0
        %5221 = vmatprep.mubr.bf16.mxu0 0
        %5222 = vmatmul.mubr.bf16.gmra.mrb[0].mxu0 %v5155
        %v5223 = vpop.f32.mrb[0].mxu0
        %v5224 = vadd.f32 %v5137, %v5223
        %v5225 = vpop.f32.mrb[0].mxu0
        %v5226 = vpop.f32.mrb[0].mxu0
        %v5227 = vadd.f32 %v5137, %v5226
        %v5228 = vpop.f32.mrb[0].mxu0
        %5229 = vmatprep.mubr.bf16.mxu0 0
        %5230 = vmatmul.mubr.bf16.gmra.mrb[0].mxu0 %v5158
        %v5231 = vpop.f32.mrb[0].mxu0
        %v5232 = vadd.f32 %v5137, %v5231
        %v5233 = vpop.f32.mrb[0].mxu0
        %v5234 = vpop.f32.mrb[0].mxu0
        %v5235 = vadd.f32 %v5137, %v5234
        %v5236 = vpop.f32.mrb[0].mxu0
        %5237 = vmatprep.mubr.bf16.mxu0 0
        %5238 = vmatmul.mubr.bf16.gmra.mrb[0].mxu0 %v5161
        %v5239 = vpop.f32.mrb[0].mxu0
        %v5240 = vadd.f32 %v5137, %v5239
        %v5241 = vpop.f32.mrb[0].mxu0
        %v5242 = vpop.f32.mrb[0].mxu0
        %v5243 = vadd.f32 %v5137, %v5242
        %v5244 = vpop.f32.mrb[0].mxu0
        %5245 = vmatprep.mubr.bf16.mxu0 0
        %5246 = vmatmul.mubr.bf16.gmra.mrb[0].mxu0 %v5164
        %v5247 = vpop.f32.mrb[0].mxu0
        %v5248 = vadd.f32 %v5137, %v5247
        %v5249 = vpop.f32.mrb[0].mxu0
        %v5250 = vpop.f32.mrb[0].mxu0
        %v5251 = vadd.f32 %v5137, %v5250
        %v5252 = vpop.f32.mrb[0].mxu0
        %5253 = vmatprep.mubr.bf16.mxu0 0
        %5254 = vmatmul.mubr.bf16.gmra.mrb[0].mxu0 %v5167
        %v5255 = vpop.f32.mrb[0].mxu0
        %v5256 = vadd.f32 %v5137, %v5255
        %v5257 = vpop.f32.mrb[0].mxu0
        %v5258 = vpop.f32.mrb[0].mxu0
        %v5259 = vadd.f32 %v5137, %v5258
        %v5260 = vpop.f32.mrb[0].mxu0
        %5261 = vmatprep.mubr.bf16.mxu0 0
        %5262 = vmatmul.mubr.bf16.gmra.mrb[0].mxu0 %v5170
        %v5263 = vpop.f32.mrb[0].mxu0
        %v5264 = vadd.f32 %v5137, %v5263
        %v5265 = vpop.f32.mrb[0].mxu0
        %v5266 = vpop.f32.mrb[0].mxu0
        %v5267 = vadd.f32 %v5137, %v5266
        %v5268 = vpop.f32.mrb[0].mxu0
        %5269 = vmatprep.mubr.bf16.mxu0 0
        %5270 = vmatmul.mubr.bf16.gmra.mrb[0].mxu0 %v5173
        %v5271 = vpop.f32.mrb[0].mxu0
        %v5272 = vadd.f32 %v5137, %v5271
        %v5273 = vpop.f32.mrb[0].mxu0
        %v5274 = vpop.f32.mrb[0].mxu0
        %v5275 = vadd.f32 %v5137, %v5274
        %v5276 = vpop.f32.mrb[0].mxu0
        %5277 = vmatprep.mubr.bf16.mxu0 0
        %5278 = vmatmul.mubr.bf16.gmra.mrb[0].mxu0 %v5176
        %v5279 = vpop.f32.mrb[0].mxu0
        %v5280 = vadd.f32 %v5137, %v5279
        %v5281 = vpop.f32.mrb[0].mxu0
        %v5282 = vpop.f32.mrb[0].mxu0
        %v5283 = vadd.f32 %v5137, %v5282
        %v5284 = vpop.f32.mrb[0].mxu0
        %5285 = vmatprep.mubr.bf16.mxu0 0
        %5286 = vmatmul.mubr.bf16.gmra.mrb[0].mxu0 %v5179
        %v5287 = vpop.f32.mrb[0].mxu0
        %v5288 = vadd.f32 %v5137, %v5287
        %v5289 = vpop.f32.mrb[0].mxu0
        %v5290 = vpop.f32.mrb[0].mxu0
        %v5291 = vadd.f32 %v5137, %v5290
        %v5292 = vpop.f32.mrb[0].mxu0
        %5293 = vdwg.mxu0
        %v5294 = vmax.f32 %v5216, 0.0
        %v5295 = vmax.f32 %v5219, 0.0
        %v5296 = vmax.f32 %v5224, 0.0
        %v5297 = vmax.f32 %v5227, 0.0
        %v5298 = vmax.f32 %v5232, 0.0
        %v5299 = vmax.f32 %v5235, 0.0
        %v5300 = vmax.f32 %v5240, 0.0
        %v5301 = vmax.f32 %v5243, 0.0
        %v5302 = vmax.f32 %v5248, 0.0
        %v5303 = vmax.f32 %v5251, 0.0
        %v5304 = vmax.f32 %v5256, 0.0
        %v5305 = vmax.f32 %v5259, 0.0
        %v5306 = vmax.f32 %v5264, 0.0
        %v5307 = vmax.f32 %v5267, 0.0
        %v5308 = vmax.f32 %v5272, 0.0
        %v5309 = vmax.f32 %v5275, 0.0
        %v5310 = vmax.f32 %v5280, 0.0
        %v5311 = vmax.f32 %v5283, 0.0
        %v5312 = vmax.f32 %v5288, 0.0
        %v5313 = vmax.f32 %v5291, 0.0
        %v5314 = vpack.c.bf16 %v5295, %v5294
        %v5315 = vpack.c.bf16 %v5297, %v5296
        %v5316 = vpack.c.bf16 %v5299, %v5298
        %v5317 = vpack.c.bf16 %v5301, %v5300
        %v5318 = vpack.c.bf16 %v5303, %v5302
        %v5319 = vpack.c.bf16 %v5305, %v5304
        %v5320 = vpack.c.bf16 %v5307, %v5306
        %v5321 = vpack.c.bf16 %v5309, %v5308
        %v5322 = vpack.c.bf16 %v5311, %v5310
        %v5323 = vpack.c.bf16 %v5313, %v5312
        %v5324 = vld [vmem:[%s47] sm:$0xf]
        %v5325 = vld [vmem:[%s47 + $0x4] sm:$0xf]
        %v5326 = vld [vmem:[%s47 + $0x8] sm:$0xf]
        %v5327 = vld [vmem:[%s47 + $0xc] sm:$0xf]
        %s5328 = scalar_lea.vmem %s47, 16
        %v5329 = vld [vmem:[%s5328] sm:$0xf]
        %v5330 = vld [vmem:[%s5328 + $0x4] sm:$0xf]
        %v5331 = vld [vmem:[%s5328 + $0x8] sm:$0xf]
        %v5332 = vld [vmem:[%s5328 + $0xc] sm:$0xf]
        %v5337 = vunpack.c.l.b16 %v5329
        %v5338 = vunpack.c.l.b16 %v5330
        %v5339 = vunpack.c.l.b16 %v5331
        %v5340 = vunpack.c.l.b16 %v5332
        %v5341 = vpack.c.b16 %v5338, %v5337
        %v5342 = vpack.c.b16 %v5340, %v5339
        %v5346 = vsel %vm2496, %v5315, 0
        %v5349 = vsel %vm2496, %v5316, 0
        %v5352 = vsel %vm2496, %v5317, 0
        %v5355 = vsel %vm2496, %v5318, 0
        %v5358 = vsel %vm2496, %v5319, 0
        %v5361 = vsel %vm2496, %v5320, 0
        %v5364 = vsel %vm2496, %v5321, 0
        %v5367 = vsel %vm2496, %v5322, 0
        %5369 = vmatprep.subr.bf16.mxu0 0
        %5370 = vmatpush1.bf16.msra.mxu0 %v5341
        %5371 = vmatprep.subr.bf16.mxu0 0
        %5372 = vmatpush1.bf16.msra.mxu0 %v5342
        %5373 = vmatprep.subr.bf16.mxu0 0
        %5374 = vmatpush1.bf16.msra.mxu0 0
        %5375 = vmatprep.subr.bf16.mxu0 0
        %5376 = vmatpush1.bf16.msra.mxu0 0
        %5377 = vmatprep.subr.bf16.mxu0 0
        %5378 = vmatpush1.bf16.msra.mxu0 0
        %5379 = vmatprep.subr.bf16.mxu0 0
        %5380 = vmatpush1.bf16.msra.mxu0 0
        %5381 = vmatprep.subr.bf16.mxu0 0
        %5382 = vmatpush1.bf16.msra.mxu0 0
        %5383 = vmatprep.subr.bf16.mxu0 0
        %5384 = vmatpush1.bf16.msra.mxu0 0
        %5385 = vmatprep.subr.bf16.mxu0 0
        %5386 = vmatpush1.bf16.msra.mxu0 0
        %5387 = vmatprep.subr.bf16.mxu0 0
        %5388 = vmatpush1.bf16.msra.mxu0 0
        %5389 = vmatprep.subr.bf16.mxu0 0
        %5390 = vmatpush1.bf16.msra.mxu0 0
        %5391 = vmatprep.subr.bf16.mxu0 0
        %5392 = vmatpush1.bf16.msra.mxu0 0
        %5393 = vmatprep.subr.bf16.mxu0 0
        %5394 = vmatpush1.bf16.msra.mxu0 0
        %5395 = vmatprep.subr.bf16.mxu0 0
        %5396 = vmatpush1.bf16.msra.mxu0 0
        %5397 = vmatprep.subr.bf16.mxu0 0
        %5398 = vmatpush1.bf16.msra.mxu0 0
        %5399 = vmatprep.subr.bf16.mxu0 0
        %5400 = vmatpush1.bf16.msra.mxu0 0
        %5401 = vmatprep.mubr.bf16.mxu0 0
        %5402 = vmatmul.mubr.bf16.gmra.mrb[0].mxu0 %v5346
        %v5403 = vpop.f32.mrb[0].mxu0
        %v5404 = vadd.f32 0.0, %v5403
        %v5405 = vpop.f32.mrb[0].mxu0
        %v5406 = vpop.f32.mrb[0].mxu0
        %v5407 = vadd.f32 0.0, %v5406
        %v5408 = vpop.f32.mrb[0].mxu0
        %5409 = vmatprep.mubr.bf16.mxu0 0
        %5410 = vmatmul.mubr.bf16.gmra.mrb[0].mxu0 %v5349
        %v5411 = vpop.f32.mrb[0].mxu0
        %v5412 = vadd.f32 0.0, %v5411
        %v5413 = vpop.f32.mrb[0].mxu0
        %v5414 = vpop.f32.mrb[0].mxu0
        %v5415 = vadd.f32 0.0, %v5414
        %v5416 = vpop.f32.mrb[0].mxu0
        %5417 = vmatprep.mubr.bf16.mxu0 0
        %5418 = vmatmul.mubr.bf16.gmra.mrb[0].mxu0 %v5352
        %v5419 = vpop.f32.mrb[0].mxu0
        %v5420 = vadd.f32 0.0, %v5419
        %v5421 = vpop.f32.mrb[0].mxu0
        %v5422 = vpop.f32.mrb[0].mxu0
        %v5423 = vadd.f32 0.0, %v5422
        %v5424 = vpop.f32.mrb[0].mxu0
        %5425 = vmatprep.mubr.bf16.mxu0 0
        %5426 = vmatmul.mubr.bf16.gmra.mrb[0].mxu0 %v5355
        %v5427 = vpop.f32.mrb[0].mxu0
        %v5428 = vadd.f32 0.0, %v5427
        %v5429 = vpop.f32.mrb[0].mxu0
        %v5430 = vpop.f32.mrb[0].mxu0
        %v5431 = vadd.f32 0.0, %v5430
        %v5432 = vpop.f32.mrb[0].mxu0
        %5433 = vmatprep.mubr.bf16.mxu0 0
        %5434 = vmatmul.mubr.bf16.gmra.mrb[0].mxu0 %v5358
        %v5435 = vpop.f32.mrb[0].mxu0
        %v5436 = vadd.f32 0.0, %v5435
        %v5437 = vpop.f32.mrb[0].mxu0
        %v5438 = vpop.f32.mrb[0].mxu0
        %v5439 = vadd.f32 0.0, %v5438
        %v5440 = vpop.f32.mrb[0].mxu0
        %5441 = vmatprep.mubr.bf16.mxu0 0
        %5442 = vmatmul.mubr.bf16.gmra.mrb[0].mxu0 %v5361
        %v5443 = vpop.f32.mrb[0].mxu0
        %v5444 = vadd.f32 0.0, %v5443
        %v5445 = vpop.f32.mrb[0].mxu0
        %v5446 = vpop.f32.mrb[0].mxu0
        %v5447 = vadd.f32 0.0, %v5446
        %v5448 = vpop.f32.mrb[0].mxu0
        %5449 = vmatprep.mubr.bf16.mxu0 0
        %5450 = vmatmul.mubr.bf16.gmra.mrb[0].mxu0 %v5364
        %v5451 = vpop.f32.mrb[0].mxu0
        %v5452 = vadd.f32 0.0, %v5451
        %v5453 = vpop.f32.mrb[0].mxu0
        %v5454 = vpop.f32.mrb[0].mxu0
        %v5455 = vadd.f32 0.0, %v5454
        %v5456 = vpop.f32.mrb[0].mxu0
        %5457 = vmatprep.mubr.bf16.mxu0 0
        %5458 = vmatmul.mubr.bf16.gmra.mrb[0].mxu0 %v5367
        %v5459 = vpop.f32.mrb[0].mxu0
        %v5460 = vadd.f32 0.0, %v5459
        %v5461 = vpop.f32.mrb[0].mxu0
        %v5462 = vpop.f32.mrb[0].mxu0
        %v5463 = vadd.f32 0.0, %v5462
        %v5464 = vpop.f32.mrb[0].mxu0
        %5465 = vdwg.mxu0
        %v5470 = vunpack.c.l.b16 %v5324
        %v5471 = vunpack.c.l.b16 %v5325
        %v5472 = vunpack.c.l.b16 %v5326
        %v5473 = vunpack.c.l.b16 %v5327
        %v5474 = vpack.c.b16 %v5471, %v5470
        %v5475 = vpack.c.b16 %v5473, %v5472
        %v5479 = vsel %vm2496, %v5314, 0
        %5481 = vmatprep.subr.bf16.mxu0 0
        %5482 = vmatpush1.bf16.msra.mxu0 %v5474
        %5483 = vmatprep.subr.bf16.mxu0 0
        %5484 = vmatpush1.bf16.msra.mxu0 %v5475
        %5485 = vmatprep.subr.bf16.mxu0 0
        %5486 = vmatpush1.bf16.msra.mxu0 0
        %5487 = vmatprep.subr.bf16.mxu0 0
        %5488 = vmatpush1.bf16.msra.mxu0 0
        %5489 = vmatprep.subr.bf16.mxu0 0
        %5490 = vmatpush1.bf16.msra.mxu0 0
        %5491 = vmatprep.subr.bf16.mxu0 0
        %5492 = vmatpush1.bf16.msra.mxu0 0
        %5493 = vmatprep.subr.bf16.mxu0 0
        %5494 = vmatpush1.bf16.msra.mxu0 0
        %5495 = vmatprep.subr.bf16.mxu0 0
        %5496 = vmatpush1.bf16.msra.mxu0 0
        %5497 = vmatprep.subr.bf16.mxu0 0
        %5498 = vmatpush1.bf16.msra.mxu0 0
        %5499 = vmatprep.subr.bf16.mxu0 0
        %5500 = vmatpush1.bf16.msra.mxu0 0
        %5501 = vmatprep.subr.bf16.mxu0 0
        %5502 = vmatpush1.bf16.msra.mxu0 0
        %5503 = vmatprep.subr.bf16.mxu0 0
        %5504 = vmatpush1.bf16.msra.mxu0 0
        %5505 = vmatprep.subr.bf16.mxu0 0
        %5506 = vmatpush1.bf16.msra.mxu0 0
        %5507 = vmatprep.subr.bf16.mxu0 0
        %5508 = vmatpush1.bf16.msra.mxu0 0
        %5509 = vmatprep.subr.bf16.mxu0 0
        %5510 = vmatpush1.bf16.msra.mxu0 0
        %5511 = vmatprep.subr.bf16.mxu0 0
        %5512 = vmatpush1.bf16.msra.mxu0 0
        %5513 = vmatprep.mubr.bf16.mxu0 0
        %5514 = vmatmul.mubr.bf16.gmra.mrb[0].mxu0 %v5479
        %v5515 = vpop.f32.mrb[0].mxu0
        %v5516 = vadd.f32 %v5404, %v5515
        %v5517 = vpop.f32.mrb[0].mxu0
        %v5518 = vpop.f32.mrb[0].mxu0
        %v5519 = vadd.f32 %v5407, %v5518
        %v5520 = vpop.f32.mrb[0].mxu0
        %5521 = vmatprep.mubr.bf16.mxu0 0
        %5522 = vmatmul.mubr.bf16.gmra.mrb[0].mxu0 %v5346
        %v5523 = vpop.f32.mrb[0].mxu0
        %v5524 = vadd.f32 %v5412, %v5523
        %v5525 = vpop.f32.mrb[0].mxu0
        %v5526 = vpop.f32.mrb[0].mxu0
        %v5527 = vadd.f32 %v5415, %v5526
        %v5528 = vpop.f32.mrb[0].mxu0
        %5529 = vmatprep.mubr.bf16.mxu0 0
        %5530 = vmatmul.mubr.bf16.gmra.mrb[0].mxu0 %v5349
        %v5531 = vpop.f32.mrb[0].mxu0
        %v5532 = vadd.f32 %v5420, %v5531
        %v5533 = vpop.f32.mrb[0].mxu0
        %v5534 = vpop.f32.mrb[0].mxu0
        %v5535 = vadd.f32 %v5423, %v5534
        %v5536 = vpop.f32.mrb[0].mxu0
        %5537 = vmatprep.mubr.bf16.mxu0 0
        %5538 = vmatmul.mubr.bf16.gmra.mrb[0].mxu0 %v5352
        %v5539 = vpop.f32.mrb[0].mxu0
        %v5540 = vadd.f32 %v5428, %v5539
        %v5541 = vpop.f32.mrb[0].mxu0
        %v5542 = vpop.f32.mrb[0].mxu0
        %v5543 = vadd.f32 %v5431, %v5542
        %v5544 = vpop.f32.mrb[0].mxu0
        %5545 = vmatprep.mubr.bf16.mxu0 0
        %5546 = vmatmul.mubr.bf16.gmra.mrb[0].mxu0 %v5355
        %v5547 = vpop.f32.mrb[0].mxu0
        %v5548 = vadd.f32 %v5436, %v5547
        %v5549 = vpop.f32.mrb[0].mxu0
        %v5550 = vpop.f32.mrb[0].mxu0
        %v5551 = vadd.f32 %v5439, %v5550
        %v5552 = vpop.f32.mrb[0].mxu0
        %5553 = vmatprep.mubr.bf16.mxu0 0
        %5554 = vmatmul.mubr.bf16.gmra.mrb[0].mxu0 %v5358
        %v5555 = vpop.f32.mrb[0].mxu0
        %v5556 = vadd.f32 %v5444, %v5555
        %v5557 = vpop.f32.mrb[0].mxu0
        %v5558 = vpop.f32.mrb[0].mxu0
        %v5559 = vadd.f32 %v5447, %v5558
        %v5560 = vpop.f32.mrb[0].mxu0
        %5561 = vmatprep.mubr.bf16.mxu0 0
        %5562 = vmatmul.mubr.bf16.gmra.mrb[0].mxu0 %v5361
        %v5563 = vpop.f32.mrb[0].mxu0
        %v5564 = vadd.f32 %v5452, %v5563
        %v5565 = vpop.f32.mrb[0].mxu0
        %v5566 = vpop.f32.mrb[0].mxu0
        %v5567 = vadd.f32 %v5455, %v5566
        %v5568 = vpop.f32.mrb[0].mxu0
        %5569 = vmatprep.mubr.bf16.mxu0 0
        %5570 = vmatmul.mubr.bf16.gmra.mrb[0].mxu0 %v5364
        %v5571 = vpop.f32.mrb[0].mxu0
        %v5572 = vadd.f32 %v5460, %v5571
        %v5573 = vpop.f32.mrb[0].mxu0
        %v5574 = vpop.f32.mrb[0].mxu0
        %v5575 = vadd.f32 %v5463, %v5574
        %v5576 = vpop.f32.mrb[0].mxu0
        %5577 = vdwg.mxu0
        %s5578 = scalar_lea.vmem %s47, 32
        %v5579 = vld [vmem:[%s5578] sm:$0xf]
        %v5580 = vld [vmem:[%s5578 + $0x4] sm:$0xf]
        %v5581 = vld [vmem:[%s5578 + $0x8] sm:$0xf]
        %v5582 = vld [vmem:[%s5578 + $0xc] sm:$0xf]
        %v5587 = vunpack.c.l.b16 %v5579
        %v5588 = vunpack.c.l.b16 %v5580
        %v5589 = vunpack.c.l.b16 %v5581
        %v5590 = vunpack.c.l.b16 %v5582
        %v5591 = vpack.c.b16 %v5588, %v5587
        %v5592 = vpack.c.b16 %v5590, %v5589
        %v5596 = vsel %vm2496, %v5323, 0
        %5598 = vmatprep.subr.bf16.mxu0 0
        %5599 = vmatpush1.bf16.msra.mxu0 %v5591
        %5600 = vmatprep.subr.bf16.mxu0 0
        %5601 = vmatpush1.bf16.msra.mxu0 %v5592
        %5602 = vmatprep.subr.bf16.mxu0 0
        %5603 = vmatpush1.bf16.msra.mxu0 0
        %5604 = vmatprep.subr.bf16.mxu0 0
        %5605 = vmatpush1.bf16.msra.mxu0 0
        %5606 = vmatprep.subr.bf16.mxu0 0
        %5607 = vmatpush1.bf16.msra.mxu0 0
        %5608 = vmatprep.subr.bf16.mxu0 0
        %5609 = vmatpush1.bf16.msra.mxu0 0
        %5610 = vmatprep.subr.bf16.mxu0 0
        %5611 = vmatpush1.bf16.msra.mxu0 0
        %5612 = vmatprep.subr.bf16.mxu0 0
        %5613 = vmatpush1.bf16.msra.mxu0 0
        %5614 = vmatprep.subr.bf16.mxu0 0
        %5615 = vmatpush1.bf16.msra.mxu0 0
        %5616 = vmatprep.subr.bf16.mxu0 0
        %5617 = vmatpush1.bf16.msra.mxu0 0
        %5618 = vmatprep.subr.bf16.mxu0 0
        %5619 = vmatpush1.bf16.msra.mxu0 0
        %5620 = vmatprep.subr.bf16.mxu0 0
        %5621 = vmatpush1.bf16.msra.mxu0 0
        %5622 = vmatprep.subr.bf16.mxu0 0
        %5623 = vmatpush1.bf16.msra.mxu0 0
        %5624 = vmatprep.subr.bf16.mxu0 0
        %5625 = vmatpush1.bf16.msra.mxu0 0
        %5626 = vmatprep.subr.bf16.mxu0 0
        %5627 = vmatpush1.bf16.msra.mxu0 0
        %5628 = vmatprep.subr.bf16.mxu0 0
        %5629 = vmatpush1.bf16.msra.mxu0 0
        %5630 = vmatprep.mubr.bf16.mxu0 0
        %5631 = vmatmul.mubr.bf16.gmra.mrb[0].mxu0 %v5349
        %v5632 = vpop.f32.mrb[0].mxu0
        %v5633 = vadd.f32 0.0, %v5632
        %v5634 = vpop.f32.mrb[0].mxu0
        %v5635 = vpop.f32.mrb[0].mxu0
        %v5636 = vadd.f32 0.0, %v5635
        %v5637 = vpop.f32.mrb[0].mxu0
        %5638 = vmatprep.mubr.bf16.mxu0 0
        %5639 = vmatmul.mubr.bf16.gmra.mrb[0].mxu0 %v5352
        %v5640 = vpop.f32.mrb[0].mxu0
        %v5641 = vadd.f32 0.0, %v5640
        %v5642 = vpop.f32.mrb[0].mxu0
        %v5643 = vpop.f32.mrb[0].mxu0
        %v5644 = vadd.f32 0.0, %v5643
        %v5645 = vpop.f32.mrb[0].mxu0
        %5646 = vmatprep.mubr.bf16.mxu0 0
        %5647 = vmatmul.mubr.bf16.gmra.mrb[0].mxu0 %v5355
        %v5648 = vpop.f32.mrb[0].mxu0
        %v5649 = vadd.f32 0.0, %v5648
        %v5650 = vpop.f32.mrb[0].mxu0
        %v5651 = vpop.f32.mrb[0].mxu0
        %v5652 = vadd.f32 0.0, %v5651
        %v5653 = vpop.f32.mrb[0].mxu0
        %5654 = vmatprep.mubr.bf16.mxu0 0
        %5655 = vmatmul.mubr.bf16.gmra.mrb[0].mxu0 %v5358
        %v5656 = vpop.f32.mrb[0].mxu0
        %v5657 = vadd.f32 0.0, %v5656
        %v5658 = vpop.f32.mrb[0].mxu0
        %v5659 = vpop.f32.mrb[0].mxu0
        %v5660 = vadd.f32 0.0, %v5659
        %v5661 = vpop.f32.mrb[0].mxu0
        %5662 = vmatprep.mubr.bf16.mxu0 0
        %5663 = vmatmul.mubr.bf16.gmra.mrb[0].mxu0 %v5361
        %v5664 = vpop.f32.mrb[0].mxu0
        %v5665 = vadd.f32 0.0, %v5664
        %v5666 = vpop.f32.mrb[0].mxu0
        %v5667 = vpop.f32.mrb[0].mxu0
        %v5668 = vadd.f32 0.0, %v5667
        %v5669 = vpop.f32.mrb[0].mxu0
        %5670 = vmatprep.mubr.bf16.mxu0 0
        %5671 = vmatmul.mubr.bf16.gmra.mrb[0].mxu0 %v5364
        %v5672 = vpop.f32.mrb[0].mxu0
        %v5673 = vadd.f32 0.0, %v5672
        %v5674 = vpop.f32.mrb[0].mxu0
        %v5675 = vpop.f32.mrb[0].mxu0
        %v5676 = vadd.f32 0.0, %v5675
        %v5677 = vpop.f32.mrb[0].mxu0
        %5678 = vmatprep.mubr.bf16.mxu0 0
        %5679 = vmatmul.mubr.bf16.gmra.mrb[0].mxu0 %v5367
        %v5680 = vpop.f32.mrb[0].mxu0
        %v5681 = vadd.f32 0.0, %v5680
        %v5682 = vpop.f32.mrb[0].mxu0
        %v5683 = vpop.f32.mrb[0].mxu0
        %v5684 = vadd.f32 0.0, %v5683
        %v5685 = vpop.f32.mrb[0].mxu0
        %5686 = vmatprep.mubr.bf16.mxu0 0
        %5687 = vmatmul.mubr.bf16.gmra.mrb[0].mxu0 %v5596
        %v5688 = vpop.f32.mrb[0].mxu0
        %v5689 = vadd.f32 0.0, %v5688
        %v5690 = vpop.f32.mrb[0].mxu0
        %v5691 = vpop.f32.mrb[0].mxu0
        %v5692 = vadd.f32 0.0, %v5691
        %v5693 = vpop.f32.mrb[0].mxu0
        %5694 = vdwg.mxu0
        %v5695 = vadd.f32 %v5516, %v5633
        %v5696 = vadd.f32 %v5519, %v5636
        %v5697 = vadd.f32 %v5524, %v5641
        %v5698 = vadd.f32 %v5527, %v5644
        %v5699 = vadd.f32 %v5532, %v5649
        %v5700 = vadd.f32 %v5535, %v5652
        %v5701 = vadd.f32 %v5540, %v5657
        %v5702 = vadd.f32 %v5543, %v5660
        %v5703 = vadd.f32 %v5548, %v5665
        %v5704 = vadd.f32 %v5551, %v5668
        %v5705 = vadd.f32 %v5556, %v5673
        %v5706 = vadd.f32 %v5559, %v5676
        %v5707 = vadd.f32 %v5564, %v5681
        %v5708 = vadd.f32 %v5567, %v5684
        %v5709 = vadd.f32 %v5572, %v5689
        %v5710 = vadd.f32 %v5575, %v5692
        %v5711 = vld [vmem:[%s49] sm:$0x1]
        %v5713 = vlaneseq
        %v5714 = vshrl.u32 %v5713, 7
        %v5715 = vsub.s32 0, %v5714
        %v5716 = vrot.slane %v5711, %v5715
        %v5718 = vadd.f32 %v5695, %v5716
        %v5719 = vadd.f32 %v5696, %v5716
        %v5720 = vadd.f32 %v5697, %v5716
        %v5721 = vadd.f32 %v5698, %v5716
        %v5722 = vadd.f32 %v5699, %v5716
        %v5723 = vadd.f32 %v5700, %v5716
        %v5724 = vadd.f32 %v5701, %v5716
        %v5725 = vadd.f32 %v5702, %v5716
        %v5726 = vadd.f32 %v5703, %v5716
        %v5727 = vadd.f32 %v5704, %v5716
        %v5728 = vadd.f32 %v5705, %v5716
        %v5729 = vadd.f32 %v5706, %v5716
        %v5730 = vadd.f32 %v5707, %v5716
        %v5731 = vadd.f32 %v5708, %v5716
        %v5732 = vadd.f32 %v5709, %v5716
        %v5733 = vadd.f32 %v5710, %v5716
        %v5734 = vmax.f32 %v5718, 0.0
        %v5735 = vmax.f32 %v5719, 0.0
        %v5736 = vmax.f32 %v5720, 0.0
        %v5737 = vmax.f32 %v5721, 0.0
        %v5738 = vmax.f32 %v5722, 0.0
        %v5739 = vmax.f32 %v5723, 0.0
        %v5740 = vmax.f32 %v5724, 0.0
        %v5741 = vmax.f32 %v5725, 0.0
        %v5742 = vmax.f32 %v5726, 0.0
        %v5743 = vmax.f32 %v5727, 0.0
        %v5744 = vmax.f32 %v5728, 0.0
        %v5745 = vmax.f32 %v5729, 0.0
        %v5746 = vmax.f32 %v5730, 0.0
        %v5747 = vmax.f32 %v5731, 0.0
        %v5748 = vmax.f32 %v5732, 0.0
        %v5749 = vmax.f32 %v5733, 0.0
        %v5750 = vld [vmem:[%s21] sm:$0xff]
        %v5751 = vld [vmem:[%s21 + $0x8] sm:$0xff]
        %v5752 = vld [vmem:[%s21 + $0x10] sm:$0xff]
        %v5753 = vld [vmem:[%s21 + $0x18] sm:$0xff]
        %v5754 = vld [vmem:[%s21 + $0x20] sm:$0xff]
        %v5755 = vld [vmem:[%s21 + $0x28] sm:$0xff]
        %v5756 = vld [vmem:[%s21 + $0x30] sm:$0xff]
        %v5757 = vld [vmem:[%s21 + $0x38] sm:$0xff]
        %v5758 = vld [vmem:[%s21 + $0x40] sm:$0xff]
        %v5759 = vld [vmem:[%s21 + $0x48] sm:$0xff]
        %v5760 = vld [vmem:[%s21 + $0x50] sm:$0xff]
        %v5761 = vld [vmem:[%s21 + $0x58] sm:$0xff]
        %v5762 = vld [vmem:[%s21 + $0x60] sm:$0xff]
        %v5763 = vld [vmem:[%s21 + $0x68] sm:$0xff]
        %v5764 = vld [vmem:[%s21 + $0x70] sm:$0xff]
        %v5765 = vld [vmem:[%s21 + $0x78] sm:$0xff]
        %v5766 = vsel %vm2496, %v5734, 0.0
        %5767 = vadd.xlane.f32.xlu0 %v5766
        %v5768 = vpop.xlane.xlu0 %5767
        %v5769 = vsel %vm2496, %v5735, 0.0
        %5770 = vadd.xlane.f32.xlu0 %v5769
        %v5771 = vpop.xlane.xlu0 %5770
        %v5772 = vsel %vm2496, %v5736, 0.0
        %5773 = vadd.xlane.f32.xlu0 %v5772
        %v5774 = vpop.xlane.xlu0 %5773
        %v5775 = vsel %vm2496, %v5737, 0.0
        %5776 = vadd.xlane.f32.xlu0 %v5775
        %v5777 = vpop.xlane.xlu0 %5776
        %v5778 = vsel %vm2496, %v5738, 0.0
        %5779 = vadd.xlane.f32.xlu0 %v5778
        %v5780 = vpop.xlane.xlu0 %5779
        %v5781 = vsel %vm2496, %v5739, 0.0
        %5782 = vadd.xlane.f32.xlu0 %v5781
        %v5783 = vpop.xlane.xlu0 %5782
        %v5784 = vsel %vm2496, %v5740, 0.0
        %5785 = vadd.xlane.f32.xlu0 %v5784
        %v5786 = vpop.xlane.xlu0 %5785
        %v5787 = vsel %vm2496, %v5741, 0.0
        %5788 = vadd.xlane.f32.xlu0 %v5787
        %v5789 = vpop.xlane.xlu0 %5788
        %v5790 = vsel %vm2496, %v5742, 0.0
        %5791 = vadd.xlane.f32.xlu0 %v5790
        %v5792 = vpop.xlane.xlu0 %5791
        %v5793 = vsel %vm2496, %v5743, 0.0
        %5794 = vadd.xlane.f32.xlu0 %v5793
        %v5795 = vpop.xlane.xlu0 %5794
        %v5796 = vsel %vm2496, %v5744, 0.0
        %5797 = vadd.xlane.f32.xlu0 %v5796
        %v5798 = vpop.xlane.xlu0 %5797
        %v5799 = vsel %vm2496, %v5745, 0.0
        %5800 = vadd.xlane.f32.xlu0 %v5799
        %v5801 = vpop.xlane.xlu0 %5800
        %v5802 = vsel %vm2496, %v5746, 0.0
        %5803 = vadd.xlane.f32.xlu0 %v5802
        %v5804 = vpop.xlane.xlu0 %5803
        %v5805 = vsel %vm2496, %v5747, 0.0
        %5806 = vadd.xlane.f32.xlu0 %v5805
        %v5807 = vpop.xlane.xlu0 %5806
        %v5808 = vsel %vm2496, %v5748, 0.0
        %5809 = vadd.xlane.f32.xlu0 %v5808
        %v5810 = vpop.xlane.xlu0 %5809
        %v5811 = vsel %vm2496, %v5749, 0.0
        %5812 = vadd.xlane.f32.xlu0 %v5811
        %v5813 = vpop.xlane.xlu0 %5812
        %5814 = vmatprep.subr.mxu0 0.0
        %5815 = vmatpush1.msra.mxu0 %v5768
        %5816 = vmatprep.subr.mxu0 0.0
        %5817 = vmatpush1.msra.mxu0 %v5771
        %5818 = vmatprep.subr.mxu0 0.0
        %5819 = vmatpush1.msra.mxu0 %v5774
        %5820 = vmatprep.subr.mxu0 0.0
        %5821 = vmatpush1.msra.mxu0 %v5777
        %5822 = vmatprep.subr.mxu0 0.0
        %5823 = vmatpush1.msra.mxu0 %v5780
        %5824 = vmatprep.subr.mxu0 0.0
        %5825 = vmatpush1.msra.mxu0 %v5783
        %5826 = vmatprep.subr.mxu0 0.0
        %5827 = vmatpush1.msra.mxu0 %v5786
        %5828 = vmatprep.subr.mxu0 0.0
        %5829 = vmatpush1.msra.mxu0 %v5789
        %5830 = vmatprep.subr.mxu0 0.0
        %5831 = vmatpush1.msra.mxu0 %v5792
        %5832 = vmatprep.subr.mxu0 0.0
        %5833 = vmatpush1.msra.mxu0 %v5795
        %5834 = vmatprep.subr.mxu0 0.0
        %5835 = vmatpush1.msra.mxu0 %v5798
        %5836 = vmatprep.subr.mxu0 0.0
        %5837 = vmatpush1.msra.mxu0 %v5801
        %5838 = vmatprep.subr.mxu0 0.0
        %5839 = vmatpush1.msra.mxu0 %v5804
        %5840 = vmatprep.subr.mxu0 0.0
        %5841 = vmatpush1.msra.mxu0 %v5807
        %5842 = vmatprep.subr.mxu0 0.0
        %5843 = vmatpush1.msra.mxu0 %v5810
        %5844 = vmatprep.subr.mxu0 0.0
        %5845 = vmatpush1.msra.mxu0 %v5813
        %5846 = vmatprep.subr.mxu0 0.0
        %5847 = vmatpush1.msra.mxu0 0.0
        %5848 = vmatprep.subr.mxu0 0.0
        %5849 = vmatpush1.msra.mxu0 0.0
        %5850 = vmatprep.subr.mxu0 0.0
        %5851 = vmatpush1.msra.mxu0 0.0
        %5852 = vmatprep.subr.mxu0 0.0
        %5853 = vmatpush1.msra.mxu0 0.0
        %5854 = vmatprep.subr.mxu0 0.0
        %5855 = vmatpush1.msra.mxu0 0.0
        %5856 = vmatprep.subr.mxu0 0.0
        %5857 = vmatpush1.msra.mxu0 0.0
        %5858 = vmatprep.subr.mxu0 0.0
        %5859 = vmatpush1.msra.mxu0 0.0
        %5860 = vmatprep.subr.mxu0 0.0
        %5861 = vmatpush1.msra.mxu0 0.0
        %5862 = vmatprep.subr.mxu0 0.0
        %5863 = vmatpush1.msra.mxu0 0.0
        %5864 = vmatprep.subr.mxu0 0.0
        %5865 = vmatpush1.msra.mxu0 0.0
        %5866 = vmatprep.subr.mxu0 0.0
        %5867 = vmatpush1.msra.mxu0 0.0
        %5868 = vmatprep.subr.mxu0 0.0
        %5869 = vmatpush1.msra.mxu0 0.0
        %5870 = vmatprep.subr.mxu0 0.0
        %5871 = vmatpush1.msra.mxu0 0.0
        %5872 = vmatprep.subr.mxu0 0.0
        %5873 = vmatpush1.msra.mxu0 0.0
        %5874 = vmatprep.subr.mxu0 0.0
        %5875 = vmatpush1.msra.mxu0 0.0
        %5876 = vmatprep.subr.mxu0 0.0
        %5877 = vmatpush1.msra.mxu0 0.0
        %5878 = vmatprep.mubr.f32.mxu0 0.0
        %5879 = vmatmul.mubr.f32.gmra.mrb[0].mxu0 %v5750
        %v5880 = vpop.f32.mrb[0].mxu0
        %v5881 = vadd.f32 0.0, %v5880
        %v5882 = vpop.f32.mrb[0].mxu0
        %5883 = vmatprep.mubr.f32.mxu0 0.0
        %5884 = vmatmul.mubr.f32.gmra.mrb[0].mxu0 %v5751
        %v5885 = vpop.f32.mrb[0].mxu0
        %v5886 = vadd.f32 0.0, %v5885
        %v5887 = vpop.f32.mrb[0].mxu0
        %5888 = vmatprep.mubr.f32.mxu0 0.0
        %5889 = vmatmul.mubr.f32.gmra.mrb[0].mxu0 %v5752
        %v5890 = vpop.f32.mrb[0].mxu0
        %v5891 = vadd.f32 0.0, %v5890
        %v5892 = vpop.f32.mrb[0].mxu0
        %5893 = vmatprep.mubr.f32.mxu0 0.0
        %5894 = vmatmul.mubr.f32.gmra.mrb[0].mxu0 %v5753
        %v5895 = vpop.f32.mrb[0].mxu0
        %v5896 = vadd.f32 0.0, %v5895
        %v5897 = vpop.f32.mrb[0].mxu0
        %5898 = vmatprep.mubr.f32.mxu0 0.0
        %5899 = vmatmul.mubr.f32.gmra.mrb[0].mxu0 %v5754
        %v5900 = vpop.f32.mrb[0].mxu0
        %v5901 = vadd.f32 0.0, %v5900
        %v5902 = vpop.f32.mrb[0].mxu0
        %5903 = vmatprep.mubr.f32.mxu0 0.0
        %5904 = vmatmul.mubr.f32.gmra.mrb[0].mxu0 %v5755
        %v5905 = vpop.f32.mrb[0].mxu0
        %v5906 = vadd.f32 0.0, %v5905
        %v5907 = vpop.f32.mrb[0].mxu0
        %5908 = vmatprep.mubr.f32.mxu0 0.0
        %5909 = vmatmul.mubr.f32.gmra.mrb[0].mxu0 %v5756
        %v5910 = vpop.f32.mrb[0].mxu0
        %v5911 = vadd.f32 0.0, %v5910
        %v5912 = vpop.f32.mrb[0].mxu0
        %5913 = vmatprep.mubr.f32.mxu0 0.0
        %5914 = vmatmul.mubr.f32.gmra.mrb[0].mxu0 %v5757
        %v5915 = vpop.f32.mrb[0].mxu0
        %v5916 = vadd.f32 0.0, %v5915
        %v5917 = vpop.f32.mrb[0].mxu0
        %5918 = vmatprep.mubr.f32.mxu0 0.0
        %5919 = vmatmul.mubr.f32.gmra.mrb[0].mxu0 %v5758
        %v5920 = vpop.f32.mrb[0].mxu0
        %v5921 = vadd.f32 0.0, %v5920
        %v5922 = vpop.f32.mrb[0].mxu0
        %5923 = vmatprep.mubr.f32.mxu0 0.0
        %5924 = vmatmul.mubr.f32.gmra.mrb[0].mxu0 %v5759
        %v5925 = vpop.f32.mrb[0].mxu0
        %v5926 = vadd.f32 0.0, %v5925
        %v5927 = vpop.f32.mrb[0].mxu0
        %5928 = vmatprep.mubr.f32.mxu0 0.0
        %5929 = vmatmul.mubr.f32.gmra.mrb[0].mxu0 %v5760
        %v5930 = vpop.f32.mrb[0].mxu0
        %v5931 = vadd.f32 0.0, %v5930
        %v5932 = vpop.f32.mrb[0].mxu0
        %5933 = vmatprep.mubr.f32.mxu0 0.0
        %5934 = vmatmul.mubr.f32.gmra.mrb[0].mxu0 %v5761
        %v5935 = vpop.f32.mrb[0].mxu0
        %v5936 = vadd.f32 0.0, %v5935
        %v5937 = vpop.f32.mrb[0].mxu0
        %5938 = vmatprep.mubr.f32.mxu0 0.0
        %5939 = vmatmul.mubr.f32.gmra.mrb[0].mxu0 %v5762
        %v5940 = vpop.f32.mrb[0].mxu0
        %v5941 = vadd.f32 0.0, %v5940
        %v5942 = vpop.f32.mrb[0].mxu0
        %5943 = vmatprep.mubr.f32.mxu0 0.0
        %5944 = vmatmul.mubr.f32.gmra.mrb[0].mxu0 %v5763
        %v5945 = vpop.f32.mrb[0].mxu0
        %v5946 = vadd.f32 0.0, %v5945
        %v5947 = vpop.f32.mrb[0].mxu0
        %5948 = vmatprep.mubr.f32.mxu0 0.0
        %5949 = vmatmul.mubr.f32.gmra.mrb[0].mxu0 %v5764
        %v5950 = vpop.f32.mrb[0].mxu0
        %v5951 = vadd.f32 0.0, %v5950
        %v5952 = vpop.f32.mrb[0].mxu0
        %5953 = vmatprep.mubr.f32.mxu0 0.0
        %5954 = vmatmul.mubr.f32.gmra.mrb[0].mxu0 %v5765
        %v5955 = vpop.f32.mrb[0].mxu0
        %v5956 = vadd.f32 0.0, %v5955
        %v5957 = vpop.f32.mrb[0].mxu0
        %5958 = vdwg.mxu0
        %5960 = vset.pattern.permute.xlu0 0
        %5961 = vperm.xlu0 %5960, %v5881
        %v5962 = vpop.permute.xlu0 %5961
        %5965 = vset.pattern.permute.xlu0 0
        %5966 = vperm.xlu0 %5965, %v5886
        %v5967 = vpop.permute.xlu0 %5966
        %5970 = vset.pattern.permute.xlu0 0
        %5971 = vperm.xlu0 %5970, %v5891
        %v5972 = vpop.permute.xlu0 %5971
        %5975 = vset.pattern.permute.xlu0 0
        %5976 = vperm.xlu0 %5975, %v5896
        %v5977 = vpop.permute.xlu0 %5976
        %5980 = vset.pattern.permute.xlu0 0
        %5981 = vperm.xlu0 %5980, %v5901
        %v5982 = vpop.permute.xlu0 %5981
        %5985 = vset.pattern.permute.xlu0 0
        %5986 = vperm.xlu0 %5985, %v5906
        %v5987 = vpop.permute.xlu0 %5986
        %5990 = vset.pattern.permute.xlu0 0
        %5991 = vperm.xlu0 %5990, %v5911
        %v5992 = vpop.permute.xlu0 %5991
        %5995 = vset.pattern.permute.xlu0 0
        %5996 = vperm.xlu0 %5995, %v5916
        %v5997 = vpop.permute.xlu0 %5996
        %6000 = vset.pattern.permute.xlu0 0
        %6001 = vperm.xlu0 %6000, %v5921
        %v6002 = vpop.permute.xlu0 %6001
        %6005 = vset.pattern.permute.xlu0 0
        %6006 = vperm.xlu0 %6005, %v5926
        %v6007 = vpop.permute.xlu0 %6006
        %6010 = vset.pattern.permute.xlu0 0
        %6011 = vperm.xlu0 %6010, %v5931
        %v6012 = vpop.permute.xlu0 %6011
        %6015 = vset.pattern.permute.xlu0 0
        %6016 = vperm.xlu0 %6015, %v5936
        %v6017 = vpop.permute.xlu0 %6016
        %6020 = vset.pattern.permute.xlu0 0
        %6021 = vperm.xlu0 %6020, %v5941
        %v6022 = vpop.permute.xlu0 %6021
        %6025 = vset.pattern.permute.xlu0 0
        %6026 = vperm.xlu0 %6025, %v5946
        %v6027 = vpop.permute.xlu0 %6026
        %6030 = vset.pattern.permute.xlu0 0
        %6031 = vperm.xlu0 %6030, %v5951
        %v6032 = vpop.permute.xlu0 %6031
        %6035 = vset.pattern.permute.xlu0 0
        %6036 = vperm.xlu0 %6035, %v5956
        %v6037 = vpop.permute.xlu0 %6036
        %v6039 = vsub.f32 %v5734, %v5962
        %v6040 = vsub.f32 %v5735, %v5967
        %v6041 = vsub.f32 %v5736, %v5972
        %v6042 = vsub.f32 %v5737, %v5977
        %v6043 = vsub.f32 %v5738, %v5982
        %v6044 = vsub.f32 %v5739, %v5987
        %v6045 = vsub.f32 %v5740, %v5992
        %v6046 = vsub.f32 %v5741, %v5997
        %v6047 = vsub.f32 %v5742, %v6002
        %v6048 = vsub.f32 %v5743, %v6007
        %v6049 = vsub.f32 %v5744, %v6012
        %v6050 = vsub.f32 %v5745, %v6017
        %v6051 = vsub.f32 %v5746, %v6022
        %v6052 = vsub.f32 %v5747, %v6027
        %v6053 = vsub.f32 %v5748, %v6032
        %v6054 = vsub.f32 %v5749, %v6037
        %v6055 = vmul.f32 %v6039, %v6039
        %v6056 = vmul.f32 %v6040, %v6040
        %v6057 = vmul.f32 %v6041, %v6041
        %v6058 = vmul.f32 %v6042, %v6042
        %v6059 = vmul.f32 %v6043, %v6043
        %v6060 = vmul.f32 %v6044, %v6044
        %v6061 = vmul.f32 %v6045, %v6045
        %v6062 = vmul.f32 %v6046, %v6046
        %v6063 = vmul.f32 %v6047, %v6047
        %v6064 = vmul.f32 %v6048, %v6048
        %v6065 = vmul.f32 %v6049, %v6049
        %v6066 = vmul.f32 %v6050, %v6050
        %v6067 = vmul.f32 %v6051, %v6051
        %v6068 = vmul.f32 %v6052, %v6052
        %v6069 = vmul.f32 %v6053, %v6053
        %v6070 = vmul.f32 %v6054, %v6054
        %v6071 = vsel %vm2496, %v6055, 0.0
        %6072 = vadd.xlane.f32.xlu0 %v6071
        %v6073 = vpop.xlane.xlu0 %6072
        %v6074 = vsel %vm2496, %v6056, 0.0
        %6075 = vadd.xlane.f32.xlu0 %v6074
        %v6076 = vpop.xlane.xlu0 %6075
        %v6077 = vsel %vm2496, %v6057, 0.0
        %6078 = vadd.xlane.f32.xlu0 %v6077
        %v6079 = vpop.xlane.xlu0 %6078
        %v6080 = vsel %vm2496, %v6058, 0.0
        %6081 = vadd.xlane.f32.xlu0 %v6080
        %v6082 = vpop.xlane.xlu0 %6081
        %v6083 = vsel %vm2496, %v6059, 0.0
        %6084 = vadd.xlane.f32.xlu0 %v6083
        %v6085 = vpop.xlane.xlu0 %6084
        %v6086 = vsel %vm2496, %v6060, 0.0
        %6087 = vadd.xlane.f32.xlu0 %v6086
        %v6088 = vpop.xlane.xlu0 %6087
        %v6089 = vsel %vm2496, %v6061, 0.0
        %6090 = vadd.xlane.f32.xlu0 %v6089
        %v6091 = vpop.xlane.xlu0 %6090
        %v6092 = vsel %vm2496, %v6062, 0.0
        %6093 = vadd.xlane.f32.xlu0 %v6092
        %v6094 = vpop.xlane.xlu0 %6093
        %v6095 = vsel %vm2496, %v6063, 0.0
        %6096 = vadd.xlane.f32.xlu0 %v6095
        %v6097 = vpop.xlane.xlu0 %6096
        %v6098 = vsel %vm2496, %v6064, 0.0
        %6099 = vadd.xlane.f32.xlu0 %v6098
        %v6100 = vpop.xlane.xlu0 %6099
        %v6101 = vsel %vm2496, %v6065, 0.0
        %6102 = vadd.xlane.f32.xlu0 %v6101
        %v6103 = vpop.xlane.xlu0 %6102
        %v6104 = vsel %vm2496, %v6066, 0.0
        %6105 = vadd.xlane.f32.xlu0 %v6104
        %v6106 = vpop.xlane.xlu0 %6105
        %v6107 = vsel %vm2496, %v6067, 0.0
        %6108 = vadd.xlane.f32.xlu0 %v6107
        %v6109 = vpop.xlane.xlu0 %6108
        %v6110 = vsel %vm2496, %v6068, 0.0
        %6111 = vadd.xlane.f32.xlu0 %v6110
        %v6112 = vpop.xlane.xlu0 %6111
        %v6113 = vsel %vm2496, %v6069, 0.0
        %6114 = vadd.xlane.f32.xlu0 %v6113
        %v6115 = vpop.xlane.xlu0 %6114
        %v6116 = vsel %vm2496, %v6070, 0.0
        %6117 = vadd.xlane.f32.xlu0 %v6116
        %v6118 = vpop.xlane.xlu0 %6117
        %6119 = vmatprep.subr.mxu0 0.0
        %6120 = vmatpush1.msra.mxu0 %v6073
        %6121 = vmatprep.subr.mxu0 0.0
        %6122 = vmatpush1.msra.mxu0 %v6076
        %6123 = vmatprep.subr.mxu0 0.0
        %6124 = vmatpush1.msra.mxu0 %v6079
        %6125 = vmatprep.subr.mxu0 0.0
        %6126 = vmatpush1.msra.mxu0 %v6082
        %6127 = vmatprep.subr.mxu0 0.0
        %6128 = vmatpush1.msra.mxu0 %v6085
        %6129 = vmatprep.subr.mxu0 0.0
        %6130 = vmatpush1.msra.mxu0 %v6088
        %6131 = vmatprep.subr.mxu0 0.0
        %6132 = vmatpush1.msra.mxu0 %v6091
        %6133 = vmatprep.subr.mxu0 0.0
        %6134 = vmatpush1.msra.mxu0 %v6094
        %6135 = vmatprep.subr.mxu0 0.0
        %6136 = vmatpush1.msra.mxu0 %v6097
        %6137 = vmatprep.subr.mxu0 0.0
        %6138 = vmatpush1.msra.mxu0 %v6100
        %6139 = vmatprep.subr.mxu0 0.0
        %6140 = vmatpush1.msra.mxu0 %v6103
        %6141 = vmatprep.subr.mxu0 0.0
        %6142 = vmatpush1.msra.mxu0 %v6106
        %6143 = vmatprep.subr.mxu0 0.0
        %6144 = vmatpush1.msra.mxu0 %v6109
        %6145 = vmatprep.subr.mxu0 0.0
        %6146 = vmatpush1.msra.mxu0 %v6112
        %6147 = vmatprep.subr.mxu0 0.0
        %6148 = vmatpush1.msra.mxu0 %v6115
        %6149 = vmatprep.subr.mxu0 0.0
        %6150 = vmatpush1.msra.mxu0 %v6118
        %6151 = vmatprep.subr.mxu0 0.0
        %6152 = vmatpush1.msra.mxu0 0.0
        %6153 = vmatprep.subr.mxu0 0.0
        %6154 = vmatpush1.msra.mxu0 0.0
        %6155 = vmatprep.subr.mxu0 0.0
        %6156 = vmatpush1.msra.mxu0 0.0
        %6157 = vmatprep.subr.mxu0 0.0
        %6158 = vmatpush1.msra.mxu0 0.0
        %6159 = vmatprep.subr.mxu0 0.0
        %6160 = vmatpush1.msra.mxu0 0.0
        %6161 = vmatprep.subr.mxu0 0.0
        %6162 = vmatpush1.msra.mxu0 0.0
        %6163 = vmatprep.subr.mxu0 0.0
        %6164 = vmatpush1.msra.mxu0 0.0
        %6165 = vmatprep.subr.mxu0 0.0
        %6166 = vmatpush1.msra.mxu0 0.0
        %6167 = vmatprep.subr.mxu0 0.0
        %6168 = vmatpush1.msra.mxu0 0.0
        %6169 = vmatprep.subr.mxu0 0.0
        %6170 = vmatpush1.msra.mxu0 0.0
        %6171 = vmatprep.subr.mxu0 0.0
        %6172 = vmatpush1.msra.mxu0 0.0
        %6173 = vmatprep.subr.mxu0 0.0
        %6174 = vmatpush1.msra.mxu0 0.0
        %6175 = vmatprep.subr.mxu0 0.0
        %6176 = vmatpush1.msra.mxu0 0.0
        %6177 = vmatprep.subr.mxu0 0.0
        %6178 = vmatpush1.msra.mxu0 0.0
        %6179 = vmatprep.subr.mxu0 0.0
        %6180 = vmatpush1.msra.mxu0 0.0
        %6181 = vmatprep.subr.mxu0 0.0
        %6182 = vmatpush1.msra.mxu0 0.0
        %6183 = vmatprep.mubr.f32.mxu0 0.0
        %6184 = vmatmul.mubr.f32.gmra.mrb[0].mxu0 %v5750
        %v6185 = vpop.f32.mrb[0].mxu0
        %v6186 = vadd.f32 1e-05, %v6185
        %v6187 = vpop.f32.mrb[0].mxu0
        %6188 = vmatprep.mubr.f32.mxu0 0.0
        %6189 = vmatmul.mubr.f32.gmra.mrb[0].mxu0 %v5751
        %v6190 = vpop.f32.mrb[0].mxu0
        %v6191 = vadd.f32 1e-05, %v6190
        %v6192 = vpop.f32.mrb[0].mxu0
        %6193 = vmatprep.mubr.f32.mxu0 0.0
        %6194 = vmatmul.mubr.f32.gmra.mrb[0].mxu0 %v5752
        %v6195 = vpop.f32.mrb[0].mxu0
        %v6196 = vadd.f32 1e-05, %v6195
        %v6197 = vpop.f32.mrb[0].mxu0
        %6198 = vmatprep.mubr.f32.mxu0 0.0
        %6199 = vmatmul.mubr.f32.gmra.mrb[0].mxu0 %v5753
        %v6200 = vpop.f32.mrb[0].mxu0
        %v6201 = vadd.f32 1e-05, %v6200
        %v6202 = vpop.f32.mrb[0].mxu0
        %6203 = vmatprep.mubr.f32.mxu0 0.0
        %6204 = vmatmul.mubr.f32.gmra.mrb[0].mxu0 %v5754
        %v6205 = vpop.f32.mrb[0].mxu0
        %v6206 = vadd.f32 1e-05, %v6205
        %v6207 = vpop.f32.mrb[0].mxu0
        %6208 = vmatprep.mubr.f32.mxu0 0.0
        %6209 = vmatmul.mubr.f32.gmra.mrb[0].mxu0 %v5755
        %v6210 = vpop.f32.mrb[0].mxu0
        %v6211 = vadd.f32 1e-05, %v6210
        %v6212 = vpop.f32.mrb[0].mxu0
        %6213 = vmatprep.mubr.f32.mxu0 0.0
        %6214 = vmatmul.mubr.f32.gmra.mrb[0].mxu0 %v5756
        %v6215 = vpop.f32.mrb[0].mxu0
        %v6216 = vadd.f32 1e-05, %v6215
        %v6217 = vpop.f32.mrb[0].mxu0
        %6218 = vmatprep.mubr.f32.mxu0 0.0
        %6219 = vmatmul.mubr.f32.gmra.mrb[0].mxu0 %v5757
        %v6220 = vpop.f32.mrb[0].mxu0
        %v6221 = vadd.f32 1e-05, %v6220
        %v6222 = vpop.f32.mrb[0].mxu0
        %6223 = vmatprep.mubr.f32.mxu0 0.0
        %6224 = vmatmul.mubr.f32.gmra.mrb[0].mxu0 %v5758
        %v6225 = vpop.f32.mrb[0].mxu0
        %v6226 = vadd.f32 1e-05, %v6225
        %v6227 = vpop.f32.mrb[0].mxu0
        %6228 = vmatprep.mubr.f32.mxu0 0.0
        %6229 = vmatmul.mubr.f32.gmra.mrb[0].mxu0 %v5759
        %v6230 = vpop.f32.mrb[0].mxu0
        %v6231 = vadd.f32 1e-05, %v6230
        %v6232 = vpop.f32.mrb[0].mxu0
        %6233 = vmatprep.mubr.f32.mxu0 0.0
        %6234 = vmatmul.mubr.f32.gmra.mrb[0].mxu0 %v5760
        %v6235 = vpop.f32.mrb[0].mxu0
        %v6236 = vadd.f32 1e-05, %v6235
        %v6237 = vpop.f32.mrb[0].mxu0
        %6238 = vmatprep.mubr.f32.mxu0 0.0
        %6239 = vmatmul.mubr.f32.gmra.mrb[0].mxu0 %v5761
        %v6240 = vpop.f32.mrb[0].mxu0
        %v6241 = vadd.f32 1e-05, %v6240
        %v6242 = vpop.f32.mrb[0].mxu0
        %6243 = vmatprep.mubr.f32.mxu0 0.0
        %6244 = vmatmul.mubr.f32.gmra.mrb[0].mxu0 %v5762
        %v6245 = vpop.f32.mrb[0].mxu0
        %v6246 = vadd.f32 1e-05, %v6245
        %v6247 = vpop.f32.mrb[0].mxu0
        %6248 = vmatprep.mubr.f32.mxu0 0.0
        %6249 = vmatmul.mubr.f32.gmra.mrb[0].mxu0 %v5763
        %v6250 = vpop.f32.mrb[0].mxu0
        %v6251 = vadd.f32 1e-05, %v6250
        %v6252 = vpop.f32.mrb[0].mxu0
        %6253 = vmatprep.mubr.f32.mxu0 0.0
        %6254 = vmatmul.mubr.f32.gmra.mrb[0].mxu0 %v5764
        %v6255 = vpop.f32.mrb[0].mxu0
        %v6256 = vadd.f32 1e-05, %v6255
        %v6257 = vpop.f32.mrb[0].mxu0
        %6258 = vmatprep.mubr.f32.mxu0 0.0
        %6259 = vmatmul.mubr.f32.gmra.mrb[0].mxu0 %v5765
        %v6260 = vpop.f32.mrb[0].mxu0
        %v6261 = vadd.f32 1e-05, %v6260
        %v6262 = vpop.f32.mrb[0].mxu0
        %6263 = vdwg.mxu0
        %v6264 = vrsqrt.pop %v6186
        %v6265 = vrsqrt.pop %v6191
        %v6266 = vrsqrt.pop %v6196
        %v6267 = vrsqrt.pop %v6201
        %v6268 = vrsqrt.pop %v6206
        %v6269 = vrsqrt.pop %v6211
        %v6270 = vrsqrt.pop %v6216
        %v6271 = vrsqrt.pop %v6221
        %v6272 = vrsqrt.pop %v6226
        %v6273 = vrsqrt.pop %v6231
        %v6274 = vrsqrt.pop %v6236
        %v6275 = vrsqrt.pop %v6241
        %v6276 = vrsqrt.pop %v6246
        %v6277 = vrsqrt.pop %v6251
        %v6278 = vrsqrt.pop %v6256
        %v6279 = vrsqrt.pop %v6261
        %6281 = vset.pattern.permute.xlu0 0
        %6282 = vperm.xlu0 %6281, %v6264
        %v6283 = vpop.permute.xlu0 %6282
        %6286 = vset.pattern.permute.xlu0 0
        %6287 = vperm.xlu0 %6286, %v6265
        %v6288 = vpop.permute.xlu0 %6287
        %6291 = vset.pattern.permute.xlu0 0
        %6292 = vperm.xlu0 %6291, %v6266
        %v6293 = vpop.permute.xlu0 %6292
        %6296 = vset.pattern.permute.xlu0 0
        %6297 = vperm.xlu0 %6296, %v6267
        %v6298 = vpop.permute.xlu0 %6297
        %6301 = vset.pattern.permute.xlu0 0
        %6302 = vperm.xlu0 %6301, %v6268
        %v6303 = vpop.permute.xlu0 %6302
        %6306 = vset.pattern.permute.xlu0 0
        %6307 = vperm.xlu0 %6306, %v6269
        %v6308 = vpop.permute.xlu0 %6307
        %6311 = vset.pattern.permute.xlu0 0
        %6312 = vperm.xlu0 %6311, %v6270
        %v6313 = vpop.permute.xlu0 %6312
        %6316 = vset.pattern.permute.xlu0 0
        %6317 = vperm.xlu0 %6316, %v6271
        %v6318 = vpop.permute.xlu0 %6317
        %6321 = vset.pattern.permute.xlu0 0
        %6322 = vperm.xlu0 %6321, %v6272
        %v6323 = vpop.permute.xlu0 %6322
        %6326 = vset.pattern.permute.xlu0 0
        %6327 = vperm.xlu0 %6326, %v6273
        %v6328 = vpop.permute.xlu0 %6327
        %6331 = vset.pattern.permute.xlu0 0
        %6332 = vperm.xlu0 %6331, %v6274
        %v6333 = vpop.permute.xlu0 %6332
        %6336 = vset.pattern.permute.xlu0 0
        %6337 = vperm.xlu0 %6336, %v6275
        %v6338 = vpop.permute.xlu0 %6337
        %6341 = vset.pattern.permute.xlu0 0
        %6342 = vperm.xlu0 %6341, %v6276
        %v6343 = vpop.permute.xlu0 %6342
        %6346 = vset.pattern.permute.xlu0 0
        %6347 = vperm.xlu0 %6346, %v6277
        %v6348 = vpop.permute.xlu0 %6347
        %6351 = vset.pattern.permute.xlu0 0
        %6352 = vperm.xlu0 %6351, %v6278
        %v6353 = vpop.permute.xlu0 %6352
        %6356 = vset.pattern.permute.xlu0 0
        %6357 = vperm.xlu0 %6356, %v6279
        %v6358 = vpop.permute.xlu0 %6357
        %v6360 = vmul.f32 %v6039, %v6283
        %v6361 = vmul.f32 %v6040, %v6288
        %v6362 = vmul.f32 %v6041, %v6293
        %v6363 = vmul.f32 %v6042, %v6298
        %v6364 = vmul.f32 %v6043, %v6303
        %v6365 = vmul.f32 %v6044, %v6308
        %v6366 = vmul.f32 %v6045, %v6313
        %v6367 = vmul.f32 %v6046, %v6318
        %v6368 = vmul.f32 %v6047, %v6323
        %v6369 = vmul.f32 %v6048, %v6328
        %v6370 = vmul.f32 %v6049, %v6333
        %v6371 = vmul.f32 %v6050, %v6338
        %v6372 = vmul.f32 %v6051, %v6343
        %v6373 = vmul.f32 %v6052, %v6348
        %v6374 = vmul.f32 %v6053, %v6353
        %v6375 = vmul.f32 %v6054, %v6358
        %v6376 = vld [vmem:[%s51] sm:$0xff]
        %v6377 = vld [vmem:[%s51 + $0x8] sm:$0xff]
        %v6378 = vld [vmem:[%s51 + $0x10] sm:$0xff]
        %v6379 = vld [vmem:[%s51 + $0x18] sm:$0xff]
        %v6380 = vld [vmem:[%s51 + $0x20] sm:$0xff]
        %v6381 = vld [vmem:[%s51 + $0x28] sm:$0xff]
        %v6382 = vld [vmem:[%s51 + $0x30] sm:$0xff]
        %v6383 = vld [vmem:[%s51 + $0x38] sm:$0xff]
        %v6384 = vld [vmem:[%s51 + $0x40] sm:$0xff]
        %v6385 = vld [vmem:[%s51 + $0x48] sm:$0xff]
        %v6386 = vld [vmem:[%s51 + $0x50] sm:$0xff]
        %v6387 = vld [vmem:[%s51 + $0x58] sm:$0xff]
        %v6388 = vld [vmem:[%s51 + $0x60] sm:$0xff]
        %v6389 = vld [vmem:[%s51 + $0x68] sm:$0xff]
        %v6390 = vld [vmem:[%s51 + $0x70] sm:$0xff]
        %v6391 = vld [vmem:[%s51 + $0x78] sm:$0xff]
        %v6392 = vmul.f32 %v6360, %v6376
        %v6393 = vmul.f32 %v6361, %v6377
        %v6394 = vmul.f32 %v6362, %v6378
        %v6395 = vmul.f32 %v6363, %v6379
        %v6396 = vmul.f32 %v6364, %v6380
        %v6397 = vmul.f32 %v6365, %v6381
        %v6398 = vmul.f32 %v6366, %v6382
        %v6399 = vmul.f32 %v6367, %v6383
        %v6400 = vmul.f32 %v6368, %v6384
        %v6401 = vmul.f32 %v6369, %v6385
        %v6402 = vmul.f32 %v6370, %v6386
        %v6403 = vmul.f32 %v6371, %v6387
        %v6404 = vmul.f32 %v6372, %v6388
        %v6405 = vmul.f32 %v6373, %v6389
        %v6406 = vmul.f32 %v6374, %v6390
        %v6407 = vmul.f32 %v6375, %v6391
        %v6408 = vld [vmem:[%s53] sm:$0xff]
        %v6409 = vld [vmem:[%s53 + $0x8] sm:$0xff]
        %v6410 = vld [vmem:[%s53 + $0x10] sm:$0xff]
        %v6411 = vld [vmem:[%s53 + $0x18] sm:$0xff]
        %v6412 = vld [vmem:[%s53 + $0x20] sm:$0xff]
        %v6413 = vld [vmem:[%s53 + $0x28] sm:$0xff]
        %v6414 = vld [vmem:[%s53 + $0x30] sm:$0xff]
        %v6415 = vld [vmem:[%s53 + $0x38] sm:$0xff]
        %v6416 = vld [vmem:[%s53 + $0x40] sm:$0xff]
        %v6417 = vld [vmem:[%s53 + $0x48] sm:$0xff]
        %v6418 = vld [vmem:[%s53 + $0x50] sm:$0xff]
        %v6419 = vld [vmem:[%s53 + $0x58] sm:$0xff]
        %v6420 = vld [vmem:[%s53 + $0x60] sm:$0xff]
        %v6421 = vld [vmem:[%s53 + $0x68] sm:$0xff]
        %v6422 = vld [vmem:[%s53 + $0x70] sm:$0xff]
        %v6423 = vld [vmem:[%s53 + $0x78] sm:$0xff]
        %v6424 = vadd.f32 %v6392, %v6408
        %v6425 = vadd.f32 %v6393, %v6409
        %v6426 = vadd.f32 %v6394, %v6410
        %v6427 = vadd.f32 %v6395, %v6411
        %v6428 = vadd.f32 %v6396, %v6412
        %v6429 = vadd.f32 %v6397, %v6413
        %v6430 = vadd.f32 %v6398, %v6414
        %v6431 = vadd.f32 %v6399, %v6415
        %v6432 = vadd.f32 %v6400, %v6416
        %v6433 = vadd.f32 %v6401, %v6417
        %v6434 = vadd.f32 %v6402, %v6418
        %v6435 = vadd.f32 %v6403, %v6419
        %v6436 = vadd.f32 %v6404, %v6420
        %v6437 = vadd.f32 %v6405, %v6421
        %v6438 = vadd.f32 %v6406, %v6422
        %v6439 = vadd.f32 %v6407, %v6423
        %v6440 = vpack.c.bf16 %v6425, %v6424
        %v6441 = vpack.c.bf16 %v6427, %v6426
        %v6442 = vpack.c.bf16 %v6429, %v6428
        %v6443 = vpack.c.bf16 %v6431, %v6430
        %v6444 = vpack.c.bf16 %v6433, %v6432
        %v6445 = vpack.c.bf16 %v6435, %v6434
        %v6446 = vpack.c.bf16 %v6437, %v6436
        %v6447 = vpack.c.bf16 %v6439, %v6438
        %v6448 = vpack.c.bf16 %v2088, %v2087
        %v6449 = vpack.c.bf16 %v2090, %v2089
        %v6450 = vpack.c.bf16 %v2092, %v2091
        %v6451 = vpack.c.bf16 %v2094, %v2093
        %v6452 = vpack.c.bf16 %v2096, %v2095
        %v6453 = vpack.c.bf16 %v2098, %v2097
        %v6454 = vpack.c.bf16 %v2100, %v2099
        %v6455 = vpack.c.bf16 %v2102, %v2101
        %v6456 = vld [vmem:[%s67] sm:$0xf]
        %v6457 = vld [vmem:[%s67 + $0x4] sm:$0xf]
        %v6458 = vld [vmem:[%s67 + $0x8] sm:$0xf]
        %v6459 = vld [vmem:[%s67 + $0xc] sm:$0xf]
        %v6464 = vunpack.c.l.b16 %v6456
        %v6465 = vunpack.c.l.b16 %v6457
        %v6466 = vunpack.c.l.b16 %v6458
        %v6467 = vunpack.c.l.b16 %v6459
        %v6468 = vpack.c.b16 %v6465, %v6464
        %v6469 = vpack.c.b16 %v6467, %v6466
        %v6473 = vsel %vm2496, %v6440, 0
        %v6476 = vsel %vm2496, %v6441, 0
        %v6479 = vsel %vm2496, %v6442, 0
        %v6482 = vsel %vm2496, %v6443, 0
        %v6485 = vsel %vm2496, %v6444, 0
        %v6488 = vsel %vm2496, %v6445, 0
        %v6491 = vsel %vm2496, %v6446, 0
        %v6494 = vsel %vm2496, %v6447, 0
        %6496 = vmatprep.subr.bf16.mxu0 0
        %6497 = vmatpush1.bf16.msra.mxu0 %v6468
        %6498 = vmatprep.subr.bf16.mxu0 0
        %6499 = vmatpush1.bf16.msra.mxu0 %v6469
        %6500 = vmatprep.subr.bf16.mxu0 0
        %6501 = vmatpush1.bf16.msra.mxu0 0
        %6502 = vmatprep.subr.bf16.mxu0 0
        %6503 = vmatpush1.bf16.msra.mxu0 0
        %6504 = vmatprep.subr.bf16.mxu0 0
        %6505 = vmatpush1.bf16.msra.mxu0 0
        %6506 = vmatprep.subr.bf16.mxu0 0
        %6507 = vmatpush1.bf16.msra.mxu0 0
        %6508 = vmatprep.subr.bf16.mxu0 0
        %6509 = vmatpush1.bf16.msra.mxu0 0
        %6510 = vmatprep.subr.bf16.mxu0 0
        %6511 = vmatpush1.bf16.msra.mxu0 0
        %6512 = vmatprep.subr.bf16.mxu0 0
        %6513 = vmatpush1.bf16.msra.mxu0 0
        %6514 = vmatprep.subr.bf16.mxu0 0
        %6515 = vmatpush1.bf16.msra.mxu0 0
        %6516 = vmatprep.subr.bf16.mxu0 0
        %6517 = vmatpush1.bf16.msra.mxu0 0
        %6518 = vmatprep.subr.bf16.mxu0 0
        %6519 = vmatpush1.bf16.msra.mxu0 0
        %6520 = vmatprep.subr.bf16.mxu0 0
        %6521 = vmatpush1.bf16.msra.mxu0 0
        %6522 = vmatprep.subr.bf16.mxu0 0
        %6523 = vmatpush1.bf16.msra.mxu0 0
        %6524 = vmatprep.subr.bf16.mxu0 0
        %6525 = vmatpush1.bf16.msra.mxu0 0
        %6526 = vmatprep.subr.bf16.mxu0 0
        %6527 = vmatpush1.bf16.msra.mxu0 0
        %6528 = vmatprep.mubr.bf16.mxu0 0
        %6529 = vmatmul.mubr.bf16.gmra.mrb[0].mxu0 %v6473
        %v6530 = vpop.f32.mrb[0].mxu0
        %v6531 = vadd.f32 0.0, %v6530
        %v6532 = vpop.f32.mrb[0].mxu0
        %v6533 = vpop.f32.mrb[0].mxu0
        %v6534 = vadd.f32 0.0, %v6533
        %v6535 = vpop.f32.mrb[0].mxu0
        %6536 = vmatprep.mubr.bf16.mxu0 0
        %6537 = vmatmul.mubr.bf16.gmra.mrb[0].mxu0 %v6476
        %v6538 = vpop.f32.mrb[0].mxu0
        %v6539 = vadd.f32 0.0, %v6538
        %v6540 = vpop.f32.mrb[0].mxu0
        %v6541 = vpop.f32.mrb[0].mxu0
        %v6542 = vadd.f32 0.0, %v6541
        %v6543 = vpop.f32.mrb[0].mxu0
        %6544 = vmatprep.mubr.bf16.mxu0 0
        %6545 = vmatmul.mubr.bf16.gmra.mrb[0].mxu0 %v6479
        %v6546 = vpop.f32.mrb[0].mxu0
        %v6547 = vadd.f32 0.0, %v6546
        %v6548 = vpop.f32.mrb[0].mxu0
        %v6549 = vpop.f32.mrb[0].mxu0
        %v6550 = vadd.f32 0.0, %v6549
        %v6551 = vpop.f32.mrb[0].mxu0
        %6552 = vmatprep.mubr.bf16.mxu0 0
        %6553 = vmatmul.mubr.bf16.gmra.mrb[0].mxu0 %v6482
        %v6554 = vpop.f32.mrb[0].mxu0
        %v6555 = vadd.f32 0.0, %v6554
        %v6556 = vpop.f32.mrb[0].mxu0
        %v6557 = vpop.f32.mrb[0].mxu0
        %v6558 = vadd.f32 0.0, %v6557
        %v6559 = vpop.f32.mrb[0].mxu0
        %6560 = vmatprep.mubr.bf16.mxu0 0
        %6561 = vmatmul.mubr.bf16.gmra.mrb[0].mxu0 %v6485
        %v6562 = vpop.f32.mrb[0].mxu0
        %v6563 = vadd.f32 0.0, %v6562
        %v6564 = vpop.f32.mrb[0].mxu0
        %v6565 = vpop.f32.mrb[0].mxu0
        %v6566 = vadd.f32 0.0, %v6565
        %v6567 = vpop.f32.mrb[0].mxu0
        %6568 = vmatprep.mubr.bf16.mxu0 0
        %6569 = vmatmul.mubr.bf16.gmra.mrb[0].mxu0 %v6488
        %v6570 = vpop.f32.mrb[0].mxu0
        %v6571 = vadd.f32 0.0, %v6570
        %v6572 = vpop.f32.mrb[0].mxu0
        %v6573 = vpop.f32.mrb[0].mxu0
        %v6574 = vadd.f32 0.0, %v6573
        %v6575 = vpop.f32.mrb[0].mxu0
        %6576 = vmatprep.mubr.bf16.mxu0 0
        %6577 = vmatmul.mubr.bf16.gmra.mrb[0].mxu0 %v6491
        %v6578 = vpop.f32.mrb[0].mxu0
        %v6579 = vadd.f32 0.0, %v6578
        %v6580 = vpop.f32.mrb[0].mxu0
        %v6581 = vpop.f32.mrb[0].mxu0
        %v6582 = vadd.f32 0.0, %v6581
        %v6583 = vpop.f32.mrb[0].mxu0
        %6584 = vmatprep.mubr.bf16.mxu0 0
        %6585 = vmatmul.mubr.bf16.gmra.mrb[0].mxu0 %v6494
        %v6586 = vpop.f32.mrb[0].mxu0
        %v6587 = vadd.f32 0.0, %v6586
        %v6588 = vpop.f32.mrb[0].mxu0
        %v6589 = vpop.f32.mrb[0].mxu0
        %v6590 = vadd.f32 0.0, %v6589
        %v6591 = vpop.f32.mrb[0].mxu0
        %6592 = vdwg.mxu0
        %v6593 = vld [vmem:[%s69] sm:$0xf]
        %v6594 = vld [vmem:[%s69 + $0x4] sm:$0xf]
        %v6595 = vld [vmem:[%s69 + $0x8] sm:$0xf]
        %v6596 = vld [vmem:[%s69 + $0xc] sm:$0xf]
        %v6601 = vunpack.c.l.b16 %v6593
        %v6602 = vunpack.c.l.b16 %v6594
        %v6603 = vunpack.c.l.b16 %v6595
        %v6604 = vunpack.c.l.b16 %v6596
        %v6605 = vpack.c.b16 %v6602, %v6601
        %v6606 = vpack.c.b16 %v6604, %v6603
        %6609 = vmatprep.subr.bf16.mxu0 0
        %6610 = vmatpush1.bf16.msra.mxu0 %v6605
        %6611 = vmatprep.subr.bf16.mxu0 0
        %6612 = vmatpush1.bf16.msra.mxu0 %v6606
        %6613 = vmatprep.subr.bf16.mxu0 0
        %6614 = vmatpush1.bf16.msra.mxu0 0
        %6615 = vmatprep.subr.bf16.mxu0 0
        %6616 = vmatpush1.bf16.msra.mxu0 0
        %6617 = vmatprep.subr.bf16.mxu0 0
        %6618 = vmatpush1.bf16.msra.mxu0 0
        %6619 = vmatprep.subr.bf16.mxu0 0
        %6620 = vmatpush1.bf16.msra.mxu0 0
        %6621 = vmatprep.subr.bf16.mxu0 0
        %6622 = vmatpush1.bf16.msra.mxu0 0
        %6623 = vmatprep.subr.bf16.mxu0 0
        %6624 = vmatpush1.bf16.msra.mxu0 0
        %6625 = vmatprep.subr.bf16.mxu0 0
        %6626 = vmatpush1.bf16.msra.mxu0 0
        %6627 = vmatprep.subr.bf16.mxu0 0
        %6628 = vmatpush1.bf16.msra.mxu0 0
        %6629 = vmatprep.subr.bf16.mxu0 0
        %6630 = vmatpush1.bf16.msra.mxu0 0
        %6631 = vmatprep.subr.bf16.mxu0 0
        %6632 = vmatpush1.bf16.msra.mxu0 0
        %6633 = vmatprep.subr.bf16.mxu0 0
        %6634 = vmatpush1.bf16.msra.mxu0 0
        %6635 = vmatprep.subr.bf16.mxu0 0
        %6636 = vmatpush1.bf16.msra.mxu0 0
        %6637 = vmatprep.subr.bf16.mxu0 0
        %6638 = vmatpush1.bf16.msra.mxu0 0
        %6639 = vmatprep.subr.bf16.mxu0 0
        %6640 = vmatpush1.bf16.msra.mxu0 0
        %6641 = vmatprep.mubr.bf16.mxu0 0
        %6642 = vmatmul.mubr.bf16.gmra.mrb[0].mxu0 %v6473
        %v6643 = vpop.f32.mrb[0].mxu0
        %v6644 = vadd.f32 0.0, %v6643
        %v6645 = vpop.f32.mrb[0].mxu0
        %v6646 = vpop.f32.mrb[0].mxu0
        %v6647 = vadd.f32 0.0, %v6646
        %v6648 = vpop.f32.mrb[0].mxu0
        %6649 = vmatprep.mubr.bf16.mxu0 0
        %6650 = vmatmul.mubr.bf16.gmra.mrb[0].mxu0 %v6476
        %v6651 = vpop.f32.mrb[0].mxu0
        %v6652 = vadd.f32 0.0, %v6651
        %v6653 = vpop.f32.mrb[0].mxu0
        %v6654 = vpop.f32.mrb[0].mxu0
        %v6655 = vadd.f32 0.0, %v6654
        %v6656 = vpop.f32.mrb[0].mxu0
        %6657 = vmatprep.mubr.bf16.mxu0 0
        %6658 = vmatmul.mubr.bf16.gmra.mrb[0].mxu0 %v6479
        %v6659 = vpop.f32.mrb[0].mxu0
        %v6660 = vadd.f32 0.0, %v6659
        %v6661 = vpop.f32.mrb[0].mxu0
        %v6662 = vpop.f32.mrb[0].mxu0
        %v6663 = vadd.f32 0.0, %v6662
        %v6664 = vpop.f32.mrb[0].mxu0
        %6665 = vmatprep.mubr.bf16.mxu0 0
        %6666 = vmatmul.mubr.bf16.gmra.mrb[0].mxu0 %v6482
        %v6667 = vpop.f32.mrb[0].mxu0
        %v6668 = vadd.f32 0.0, %v6667
        %v6669 = vpop.f32.mrb[0].mxu0
        %v6670 = vpop.f32.mrb[0].mxu0
        %v6671 = vadd.f32 0.0, %v6670
        %v6672 = vpop.f32.mrb[0].mxu0
        %6673 = vmatprep.mubr.bf16.mxu0 0
        %6674 = vmatmul.mubr.bf16.gmra.mrb[0].mxu0 %v6485
        %v6675 = vpop.f32.mrb[0].mxu0
        %v6676 = vadd.f32 0.0, %v6675
        %v6677 = vpop.f32.mrb[0].mxu0
        %v6678 = vpop.f32.mrb[0].mxu0
        %v6679 = vadd.f32 0.0, %v6678
        %v6680 = vpop.f32.mrb[0].mxu0
        %6681 = vmatprep.mubr.bf16.mxu0 0
        %6682 = vmatmul.mubr.bf16.gmra.mrb[0].mxu0 %v6488
        %v6683 = vpop.f32.mrb[0].mxu0
        %v6684 = vadd.f32 0.0, %v6683
        %v6685 = vpop.f32.mrb[0].mxu0
        %v6686 = vpop.f32.mrb[0].mxu0
        %v6687 = vadd.f32 0.0, %v6686
        %v6688 = vpop.f32.mrb[0].mxu0
        %6689 = vmatprep.mubr.bf16.mxu0 0
        %6690 = vmatmul.mubr.bf16.gmra.mrb[0].mxu0 %v6491
        %v6691 = vpop.f32.mrb[0].mxu0
        %v6692 = vadd.f32 0.0, %v6691
        %v6693 = vpop.f32.mrb[0].mxu0
        %v6694 = vpop.f32.mrb[0].mxu0
        %v6695 = vadd.f32 0.0, %v6694
        %v6696 = vpop.f32.mrb[0].mxu0
        %6697 = vmatprep.mubr.bf16.mxu0 0
        %6698 = vmatmul.mubr.bf16.gmra.mrb[0].mxu0 %v6494
        %v6699 = vpop.f32.mrb[0].mxu0
        %v6700 = vadd.f32 0.0, %v6699
        %v6701 = vpop.f32.mrb[0].mxu0
        %v6702 = vpop.f32.mrb[0].mxu0
        %v6703 = vadd.f32 0.0, %v6702
        %v6704 = vpop.f32.mrb[0].mxu0
        %6705 = vdwg.mxu0
        %v6707 = vsel %vm2496, %v6448, 0
        %v6710 = vsel %vm2496, %v6449, 0
        %v6713 = vsel %vm2496, %v6450, 0
        %v6716 = vsel %vm2496, %v6451, 0
        %v6719 = vsel %vm2496, %v6452, 0
        %v6722 = vsel %vm2496, %v6453, 0
        %v6725 = vsel %vm2496, %v6454, 0
        %v6728 = vsel %vm2496, %v6455, 0
        %6730 = vmatprep.subr.bf16.mxu0 0
        %6731 = vmatpush1.bf16.msra.mxu0 %v6468
        %6732 = vmatprep.subr.bf16.mxu0 0
        %6733 = vmatpush1.bf16.msra.mxu0 %v6469
        %6734 = vmatprep.subr.bf16.mxu0 0
        %6735 = vmatpush1.bf16.msra.mxu0 0
        %6736 = vmatprep.subr.bf16.mxu0 0
        %6737 = vmatpush1.bf16.msra.mxu0 0
        %6738 = vmatprep.subr.bf16.mxu0 0
        %6739 = vmatpush1.bf16.msra.mxu0 0
        %6740 = vmatprep.subr.bf16.mxu0 0
        %6741 = vmatpush1.bf16.msra.mxu0 0
        %6742 = vmatprep.subr.bf16.mxu0 0
        %6743 = vmatpush1.bf16.msra.mxu0 0
        %6744 = vmatprep.subr.bf16.mxu0 0
        %6745 = vmatpush1.bf16.msra.mxu0 0
        %6746 = vmatprep.subr.bf16.mxu0 0
        %6747 = vmatpush1.bf16.msra.mxu0 0
        %6748 = vmatprep.subr.bf16.mxu0 0
        %6749 = vmatpush1.bf16.msra.mxu0 0
        %6750 = vmatprep.subr.bf16.mxu0 0
        %6751 = vmatpush1.bf16.msra.mxu0 0
        %6752 = vmatprep.subr.bf16.mxu0 0
        %6753 = vmatpush1.bf16.msra.mxu0 0
        %6754 = vmatprep.subr.bf16.mxu0 0
        %6755 = vmatpush1.bf16.msra.mxu0 0
        %6756 = vmatprep.subr.bf16.mxu0 0
        %6757 = vmatpush1.bf16.msra.mxu0 0
        %6758 = vmatprep.subr.bf16.mxu0 0
        %6759 = vmatpush1.bf16.msra.mxu0 0
        %6760 = vmatprep.subr.bf16.mxu0 0
        %6761 = vmatpush1.bf16.msra.mxu0 0
        %6762 = vmatprep.mubr.bf16.mxu0 0
        %6763 = vmatmul.mubr.bf16.gmra.mrb[0].mxu0 %v6707
        %v6764 = vpop.f32.mrb[0].mxu0
        %v6765 = vadd.f32 0.0, %v6764
        %v6766 = vpop.f32.mrb[0].mxu0
        %v6767 = vpop.f32.mrb[0].mxu0
        %v6768 = vadd.f32 0.0, %v6767
        %v6769 = vpop.f32.mrb[0].mxu0
        %6770 = vmatprep.mubr.bf16.mxu0 0
        %6771 = vmatmul.mubr.bf16.gmra.mrb[0].mxu0 %v6710
        %v6772 = vpop.f32.mrb[0].mxu0
        %v6773 = vadd.f32 0.0, %v6772
        %v6774 = vpop.f32.mrb[0].mxu0
        %v6775 = vpop.f32.mrb[0].mxu0
        %v6776 = vadd.f32 0.0, %v6775
        %v6777 = vpop.f32.mrb[0].mxu0
        %6778 = vmatprep.mubr.bf16.mxu0 0
        %6779 = vmatmul.mubr.bf16.gmra.mrb[0].mxu0 %v6713
        %v6780 = vpop.f32.mrb[0].mxu0
        %v6781 = vadd.f32 0.0, %v6780
        %v6782 = vpop.f32.mrb[0].mxu0
        %v6783 = vpop.f32.mrb[0].mxu0
        %v6784 = vadd.f32 0.0, %v6783
        %v6785 = vpop.f32.mrb[0].mxu0
        %6786 = vmatprep.mubr.bf16.mxu0 0
        %6787 = vmatmul.mubr.bf16.gmra.mrb[0].mxu0 %v6716
        %v6788 = vpop.f32.mrb[0].mxu0
        %v6789 = vadd.f32 0.0, %v6788
        %v6790 = vpop.f32.mrb[0].mxu0
        %v6791 = vpop.f32.mrb[0].mxu0
        %v6792 = vadd.f32 0.0, %v6791
        %v6793 = vpop.f32.mrb[0].mxu0
        %6794 = vmatprep.mubr.bf16.mxu0 0
        %6795 = vmatmul.mubr.bf16.gmra.mrb[0].mxu0 %v6719
        %v6796 = vpop.f32.mrb[0].mxu0
        %v6797 = vadd.f32 0.0, %v6796
        %v6798 = vpop.f32.mrb[0].mxu0
        %v6799 = vpop.f32.mrb[0].mxu0
        %v6800 = vadd.f32 0.0, %v6799
        %v6801 = vpop.f32.mrb[0].mxu0
        %6802 = vmatprep.mubr.bf16.mxu0 0
        %6803 = vmatmul.mubr.bf16.gmra.mrb[0].mxu0 %v6722
        %v6804 = vpop.f32.mrb[0].mxu0
        %v6805 = vadd.f32 0.0, %v6804
        %v6806 = vpop.f32.mrb[0].mxu0
        %v6807 = vpop.f32.mrb[0].mxu0
        %v6808 = vadd.f32 0.0, %v6807
        %v6809 = vpop.f32.mrb[0].mxu0
        %6810 = vmatprep.mubr.bf16.mxu0 0
        %6811 = vmatmul.mubr.bf16.gmra.mrb[0].mxu0 %v6725
        %v6812 = vpop.f32.mrb[0].mxu0
        %v6813 = vadd.f32 0.0, %v6812
        %v6814 = vpop.f32.mrb[0].mxu0
        %v6815 = vpop.f32.mrb[0].mxu0
        %v6816 = vadd.f32 0.0, %v6815
        %v6817 = vpop.f32.mrb[0].mxu0
        %6818 = vmatprep.mubr.bf16.mxu0 0
        %6819 = vmatmul.mubr.bf16.gmra.mrb[0].mxu0 %v6728
        %v6820 = vpop.f32.mrb[0].mxu0
        %v6821 = vadd.f32 0.0, %v6820
        %v6822 = vpop.f32.mrb[0].mxu0
        %v6823 = vpop.f32.mrb[0].mxu0
        %v6824 = vadd.f32 0.0, %v6823
        %v6825 = vpop.f32.mrb[0].mxu0
        %6826 = vdwg.mxu0
        %6827 = vmatprep.subr.bf16.mxu0 0
        %6828 = vmatpush1.bf16.msra.mxu0 %v6605
        %6829 = vmatprep.subr.bf16.mxu0 0
        %6830 = vmatpush1.bf16.msra.mxu0 %v6606
        %6831 = vmatprep.subr.bf16.mxu0 0
        %6832 = vmatpush1.bf16.msra.mxu0 0
        %6833 = vmatprep.subr.bf16.mxu0 0
        %6834 = vmatpush1.bf16.msra.mxu0 0
        %6835 = vmatprep.subr.bf16.mxu0 0
        %6836 = vmatpush1.bf16.msra.mxu0 0
        %6837 = vmatprep.subr.bf16.mxu0 0
        %6838 = vmatpush1.bf16.msra.mxu0 0
        %6839 = vmatprep.subr.bf16.mxu0 0
        %6840 = vmatpush1.bf16.msra.mxu0 0
        %6841 = vmatprep.subr.bf16.mxu0 0
        %6842 = vmatpush1.bf16.msra.mxu0 0
        %6843 = vmatprep.subr.bf16.mxu0 0
        %6844 = vmatpush1.bf16.msra.mxu0 0
        %6845 = vmatprep.subr.bf16.mxu0 0
        %6846 = vmatpush1.bf16.msra.mxu0 0
        %6847 = vmatprep.subr.bf16.mxu0 0
        %6848 = vmatpush1.bf16.msra.mxu0 0
        %6849 = vmatprep.subr.bf16.mxu0 0
        %6850 = vmatpush1.bf16.msra.mxu0 0
        %6851 = vmatprep.subr.bf16.mxu0 0
        %6852 = vmatpush1.bf16.msra.mxu0 0
        %6853 = vmatprep.subr.bf16.mxu0 0
        %6854 = vmatpush1.bf16.msra.mxu0 0
        %6855 = vmatprep.subr.bf16.mxu0 0
        %6856 = vmatpush1.bf16.msra.mxu0 0
        %6857 = vmatprep.subr.bf16.mxu0 0
        %6858 = vmatpush1.bf16.msra.mxu0 0
        %6859 = vmatprep.mubr.bf16.mxu0 0
        %6860 = vmatmul.mubr.bf16.gmra.mrb[0].mxu0 %v6707
        %v6861 = vpop.f32.mrb[0].mxu0
        %v6862 = vadd.f32 0.0, %v6861
        %v6863 = vpop.f32.mrb[0].mxu0
        %v6864 = vpop.f32.mrb[0].mxu0
        %v6865 = vadd.f32 0.0, %v6864
        %v6866 = vpop.f32.mrb[0].mxu0
        %6867 = vmatprep.mubr.bf16.mxu0 0
        %6868 = vmatmul.mubr.bf16.gmra.mrb[0].mxu0 %v6710
        %v6869 = vpop.f32.mrb[0].mxu0
        %v6870 = vadd.f32 0.0, %v6869
        %v6871 = vpop.f32.mrb[0].mxu0
        %v6872 = vpop.f32.mrb[0].mxu0
        %v6873 = vadd.f32 0.0, %v6872
        %v6874 = vpop.f32.mrb[0].mxu0
        %6875 = vmatprep.mubr.bf16.mxu0 0
        %6876 = vmatmul.mubr.bf16.gmra.mrb[0].mxu0 %v6713
        %v6877 = vpop.f32.mrb[0].mxu0
        %v6878 = vadd.f32 0.0, %v6877
        %v6879 = vpop.f32.mrb[0].mxu0
        %v6880 = vpop.f32.mrb[0].mxu0
        %v6881 = vadd.f32 0.0, %v6880
        %v6882 = vpop.f32.mrb[0].mxu0
        %6883 = vmatprep.mubr.bf16.mxu0 0
        %6884 = vmatmul.mubr.bf16.gmra.mrb[0].mxu0 %v6716
        %v6885 = vpop.f32.mrb[0].mxu0
        %v6886 = vadd.f32 0.0, %v6885
        %v6887 = vpop.f32.mrb[0].mxu0
        %v6888 = vpop.f32.mrb[0].mxu0
        %v6889 = vadd.f32 0.0, %v6888
        %v6890 = vpop.f32.mrb[0].mxu0
        %6891 = vmatprep.mubr.bf16.mxu0 0
        %6892 = vmatmul.mubr.bf16.gmra.mrb[0].mxu0 %v6719
        %v6893 = vpop.f32.mrb[0].mxu0
        %v6894 = vadd.f32 0.0, %v6893
        %v6895 = vpop.f32.mrb[0].mxu0
        %v6896 = vpop.f32.mrb[0].mxu0
        %v6897 = vadd.f32 0.0, %v6896
        %v6898 = vpop.f32.mrb[0].mxu0
        %6899 = vmatprep.mubr.bf16.mxu0 0
        %6900 = vmatmul.mubr.bf16.gmra.mrb[0].mxu0 %v6722
        %v6901 = vpop.f32.mrb[0].mxu0
        %v6902 = vadd.f32 0.0, %v6901
        %v6903 = vpop.f32.mrb[0].mxu0
        %v6904 = vpop.f32.mrb[0].mxu0
        %v6905 = vadd.f32 0.0, %v6904
        %v6906 = vpop.f32.mrb[0].mxu0
        %6907 = vmatprep.mubr.bf16.mxu0 0
        %6908 = vmatmul.mubr.bf16.gmra.mrb[0].mxu0 %v6725
        %v6909 = vpop.f32.mrb[0].mxu0
        %v6910 = vadd.f32 0.0, %v6909
        %v6911 = vpop.f32.mrb[0].mxu0
        %v6912 = vpop.f32.mrb[0].mxu0
        %v6913 = vadd.f32 0.0, %v6912
        %v6914 = vpop.f32.mrb[0].mxu0
        %6915 = vmatprep.mubr.bf16.mxu0 0
        %6916 = vmatmul.mubr.bf16.gmra.mrb[0].mxu0 %v6728
        %v6917 = vpop.f32.mrb[0].mxu0
        %v6918 = vadd.f32 0.0, %v6917
        %v6919 = vpop.f32.mrb[0].mxu0
        %v6920 = vpop.f32.mrb[0].mxu0
        %v6921 = vadd.f32 0.0, %v6920
        %v6922 = vpop.f32.mrb[0].mxu0
        %6923 = vdwg.mxu0
        %v6924 = vld [vmem:[%s11] sm:$0xf]
        %v6925 = vld [vmem:[%s11 + $0x4] sm:$0xf]
        %v6926 = vld [vmem:[%s11 + $0x8] sm:$0xf]
        %v6927 = vld [vmem:[%s11 + $0xc] sm:$0xf]
        %v6928 = vld [vmem:[%s11 + $0x10] sm:$0xf]
        %v6929 = vld [vmem:[%s11 + $0x14] sm:$0xf]
        %v6930 = vld [vmem:[%s11 + $0x18] sm:$0xf]
        %v6931 = vld [vmem:[%s11 + $0x1c] sm:$0xf]
        %v6932 = vld [vmem:[%s11 + $0x20] sm:$0xf]
        %v6933 = vld [vmem:[%s11 + $0x24] sm:$0xf]
        %v6934 = vld [vmem:[%s11 + $0x28] sm:$0xf]
        %v6935 = vld [vmem:[%s11 + $0x2c] sm:$0xf]
        %v6936 = vld [vmem:[%s11 + $0x30] sm:$0xf]
        %v6937 = vld [vmem:[%s11 + $0x34] sm:$0xf]
        %v6938 = vld [vmem:[%s11 + $0x38] sm:$0xf]
        %v6939 = vld [vmem:[%s11 + $0x3c] sm:$0xf]
        %v6940 = vpack.c.bf16 %v6534, %v6531
        %v6941 = vpack.c.bf16 %v6542, %v6539
        %v6942 = vpack.c.bf16 %v6550, %v6547
        %v6943 = vpack.c.bf16 %v6558, %v6555
        %v6944 = vpack.c.bf16 %v6566, %v6563
        %v6945 = vpack.c.bf16 %v6574, %v6571
        %v6946 = vpack.c.bf16 %v6582, %v6579
        %v6947 = vpack.c.bf16 %v6590, %v6587
        %v6948 = vld [vmem:[%s13] sm:$0xf]
        %v6949 = vld [vmem:[%s13 + $0x4] sm:$0xf]
        %v6950 = vld [vmem:[%s13 + $0x8] sm:$0xf]
        %v6951 = vld [vmem:[%s13 + $0xc] sm:$0xf]
        %v6952 = vld [vmem:[%s13 + $0x10] sm:$0xf]
        %v6953 = vld [vmem:[%s13 + $0x14] sm:$0xf]
        %v6954 = vld [vmem:[%s13 + $0x18] sm:$0xf]
        %v6955 = vld [vmem:[%s13 + $0x1c] sm:$0xf]
        %v6956 = vld [vmem:[%s13 + $0x20] sm:$0xf]
        %v6957 = vld [vmem:[%s13 + $0x24] sm:$0xf]
        %v6958 = vld [vmem:[%s13 + $0x28] sm:$0xf]
        %v6959 = vld [vmem:[%s13 + $0x2c] sm:$0xf]
        %v6960 = vld [vmem:[%s13 + $0x30] sm:$0xf]
        %v6961 = vld [vmem:[%s13 + $0x34] sm:$0xf]
        %v6962 = vld [vmem:[%s13 + $0x38] sm:$0xf]
        %v6963 = vld [vmem:[%s13 + $0x3c] sm:$0xf]
        %v6964 = vpack.c.bf16 %v6647, %v6644
        %v6965 = vpack.c.bf16 %v6655, %v6652
        %v6966 = vpack.c.bf16 %v6663, %v6660
        %v6967 = vpack.c.bf16 %v6671, %v6668
        %v6968 = vpack.c.bf16 %v6679, %v6676
        %v6969 = vpack.c.bf16 %v6687, %v6684
        %v6970 = vpack.c.bf16 %v6695, %v6692
        %v6971 = vpack.c.bf16 %v6703, %v6700
        %v6988 = vunpack.c.l.b16 %v6948
        %v6989 = vunpack.c.l.b16 %v6949
        %v6990 = vunpack.c.l.b16 %v6950
        %v6991 = vunpack.c.l.b16 %v6951
        %v6992 = vunpack.c.l.b16 %v6952
        %v6993 = vunpack.c.l.b16 %v6953
        %v6994 = vunpack.c.l.b16 %v6954
        %v6995 = vunpack.c.l.b16 %v6955
        %v6996 = vunpack.c.l.b16 %v6956
        %v6997 = vunpack.c.l.b16 %v6957
        %v6998 = vunpack.c.l.b16 %v6958
        %v6999 = vunpack.c.l.b16 %v6959
        %v7000 = vunpack.c.l.b16 %v6960
        %v7001 = vunpack.c.l.b16 %v6961
        %v7002 = vunpack.c.l.b16 %v6962
        %v7003 = vunpack.c.l.b16 %v6963
        %v7004 = vpack.c.b16 %v6989, %v6988
        %v7005 = vpack.c.b16 %v6991, %v6990
        %v7006 = vpack.c.b16 %v6993, %v6992
        %v7007 = vpack.c.b16 %v6995, %v6994
        %v7008 = vpack.c.b16 %v6997, %v6996
        %v7009 = vpack.c.b16 %v6999, %v6998
        %v7010 = vpack.c.b16 %v7001, %v7000
        %v7011 = vpack.c.b16 %v7003, %v7002
        %7020 = vmatprep.subr.bf16.mxu0 0
        %7021 = vmatpush1.bf16.msra.mxu0 %v6964
        %7022 = vmatprep.subr.bf16.mxu0 0
        %7023 = vmatpush1.bf16.msra.mxu0 %v6965
        %7024 = vmatprep.subr.bf16.mxu0 0
        %7025 = vmatpush1.bf16.msra.mxu0 %v6966
        %7026 = vmatprep.subr.bf16.mxu0 0
        %7027 = vmatpush1.bf16.msra.mxu0 %v6967
        %7028 = vmatprep.subr.bf16.mxu0 0
        %7029 = vmatpush1.bf16.msra.mxu0 %v6968
        %7030 = vmatprep.subr.bf16.mxu0 0
        %7031 = vmatpush1.bf16.msra.mxu0 %v6969
        %7032 = vmatprep.subr.bf16.mxu0 0
        %7033 = vmatpush1.bf16.msra.mxu0 %v6970
        %7034 = vmatprep.subr.bf16.mxu0 0
        %7035 = vmatpush1.bf16.msra.mxu0 %v6971
        %7036 = vmatprep.subr.bf16.mxu0 0
        %7037 = vmatpush1.bf16.msra.mxu0 0
        %7038 = vmatprep.subr.bf16.mxu0 0
        %7039 = vmatpush1.bf16.msra.mxu0 0
        %7040 = vmatprep.subr.bf16.mxu0 0
        %7041 = vmatpush1.bf16.msra.mxu0 0
        %7042 = vmatprep.subr.bf16.mxu0 0
        %7043 = vmatpush1.bf16.msra.mxu0 0
        %7044 = vmatprep.subr.bf16.mxu0 0
        %7045 = vmatpush1.bf16.msra.mxu0 0
        %7046 = vmatprep.subr.bf16.mxu0 0
        %7047 = vmatpush1.bf16.msra.mxu0 0
        %7048 = vmatprep.subr.bf16.mxu0 0
        %7049 = vmatpush1.bf16.msra.mxu0 0
        %7050 = vmatprep.subr.bf16.mxu0 0
        %7051 = vmatpush1.bf16.msra.mxu0 0
        %7052 = vmatprep.mubr.bf16.mxu0 0
        %7053 = vmatmul.mubr.bf16.gmra.mrb[0].mxu0 %v7004
        %v7054 = vpop.f32.mrb[0].mxu0
        %v7055 = vadd.f32 0.0, %v7054
        %v7056 = vpop.f32.mrb[0].mxu0
        %v7057 = vpop.f32.mrb[0].mxu0
        %v7058 = vadd.f32 0.0, %v7057
        %v7059 = vpop.f32.mrb[0].mxu0
        %7060 = vmatprep.mubr.bf16.mxu0 0
        %7061 = vmatmul.mubr.bf16.gmra.mrb[0].mxu0 %v7005
        %v7062 = vpop.f32.mrb[0].mxu0
        %v7063 = vadd.f32 0.0, %v7062
        %v7064 = vpop.f32.mrb[0].mxu0
        %v7065 = vpop.f32.mrb[0].mxu0
        %v7066 = vadd.f32 0.0, %v7065
        %v7067 = vpop.f32.mrb[0].mxu0
        %7068 = vmatprep.mubr.bf16.mxu0 0
        %7069 = vmatmul.mubr.bf16.gmra.mrb[0].mxu0 %v7006
        %v7070 = vpop.f32.mrb[0].mxu0
        %v7071 = vadd.f32 0.0, %v7070
        %v7072 = vpop.f32.mrb[0].mxu0
        %v7073 = vpop.f32.mrb[0].mxu0
        %v7074 = vadd.f32 0.0, %v7073
        %v7075 = vpop.f32.mrb[0].mxu0
        %7076 = vmatprep.mubr.bf16.mxu0 0
        %7077 = vmatmul.mubr.bf16.gmra.mrb[0].mxu0 %v7007
        %v7078 = vpop.f32.mrb[0].mxu0
        %v7079 = vadd.f32 0.0, %v7078
        %v7080 = vpop.f32.mrb[0].mxu0
        %v7081 = vpop.f32.mrb[0].mxu0
        %v7082 = vadd.f32 0.0, %v7081
        %v7083 = vpop.f32.mrb[0].mxu0
        %7084 = vmatprep.mubr.bf16.mxu0 0
        %7085 = vmatmul.mubr.bf16.gmra.mrb[0].mxu0 %v7008
        %v7086 = vpop.f32.mrb[0].mxu0
        %v7087 = vadd.f32 0.0, %v7086
        %v7088 = vpop.f32.mrb[0].mxu0
        %v7089 = vpop.f32.mrb[0].mxu0
        %v7090 = vadd.f32 0.0, %v7089
        %v7091 = vpop.f32.mrb[0].mxu0
        %7092 = vmatprep.mubr.bf16.mxu0 0
        %7093 = vmatmul.mubr.bf16.gmra.mrb[0].mxu0 %v7009
        %v7094 = vpop.f32.mrb[0].mxu0
        %v7095 = vadd.f32 0.0, %v7094
        %v7096 = vpop.f32.mrb[0].mxu0
        %v7097 = vpop.f32.mrb[0].mxu0
        %v7098 = vadd.f32 0.0, %v7097
        %v7099 = vpop.f32.mrb[0].mxu0
        %7100 = vmatprep.mubr.bf16.mxu0 0
        %7101 = vmatmul.mubr.bf16.gmra.mrb[0].mxu0 %v7010
        %v7102 = vpop.f32.mrb[0].mxu0
        %v7103 = vadd.f32 0.0, %v7102
        %v7104 = vpop.f32.mrb[0].mxu0
        %v7105 = vpop.f32.mrb[0].mxu0
        %v7106 = vadd.f32 0.0, %v7105
        %v7107 = vpop.f32.mrb[0].mxu0
        %7108 = vmatprep.mubr.bf16.mxu0 0
        %7109 = vmatmul.mubr.bf16.gmra.mrb[0].mxu0 %v7011
        %v7110 = vpop.f32.mrb[0].mxu0
        %v7111 = vadd.f32 0.0, %v7110
        %v7112 = vpop.f32.mrb[0].mxu0
        %v7113 = vpop.f32.mrb[0].mxu0
        %v7114 = vadd.f32 0.0, %v7113
        %v7115 = vpop.f32.mrb[0].mxu0
        %7116 = vdwg.mxu0
        %v7133 = vunpack.c.l.b16 %v6924
        %v7134 = vunpack.c.l.b16 %v6925
        %v7135 = vunpack.c.l.b16 %v6926
        %v7136 = vunpack.c.l.b16 %v6927
        %v7137 = vunpack.c.l.b16 %v6928
        %v7138 = vunpack.c.l.b16 %v6929
        %v7139 = vunpack.c.l.b16 %v6930
        %v7140 = vunpack.c.l.b16 %v6931
        %v7141 = vunpack.c.l.b16 %v6932
        %v7142 = vunpack.c.l.b16 %v6933
        %v7143 = vunpack.c.l.b16 %v6934
        %v7144 = vunpack.c.l.b16 %v6935
        %v7145 = vunpack.c.l.b16 %v6936
        %v7146 = vunpack.c.l.b16 %v6937
        %v7147 = vunpack.c.l.b16 %v6938
        %v7148 = vunpack.c.l.b16 %v6939
        %v7149 = vpack.c.b16 %v7134, %v7133
        %v7150 = vpack.c.b16 %v7136, %v7135
        %v7151 = vpack.c.b16 %v7138, %v7137
        %v7152 = vpack.c.b16 %v7140, %v7139
        %v7153 = vpack.c.b16 %v7142, %v7141
        %v7154 = vpack.c.b16 %v7144, %v7143
        %v7155 = vpack.c.b16 %v7146, %v7145
        %v7156 = vpack.c.b16 %v7148, %v7147
        %7165 = vmatprep.subr.bf16.mxu0 0
        %7166 = vmatpush1.bf16.msra.mxu0 %v6940
        %7167 = vmatprep.subr.bf16.mxu0 0
        %7168 = vmatpush1.bf16.msra.mxu0 %v6941
        %7169 = vmatprep.subr.bf16.mxu0 0
        %7170 = vmatpush1.bf16.msra.mxu0 %v6942
        %7171 = vmatprep.subr.bf16.mxu0 0
        %7172 = vmatpush1.bf16.msra.mxu0 %v6943
        %7173 = vmatprep.subr.bf16.mxu0 0
        %7174 = vmatpush1.bf16.msra.mxu0 %v6944
        %7175 = vmatprep.subr.bf16.mxu0 0
        %7176 = vmatpush1.bf16.msra.mxu0 %v6945
        %7177 = vmatprep.subr.bf16.mxu0 0
        %7178 = vmatpush1.bf16.msra.mxu0 %v6946
        %7179 = vmatprep.subr.bf16.mxu0 0
        %7180 = vmatpush1.bf16.msra.mxu0 %v6947
        %7181 = vmatprep.subr.bf16.mxu0 0
        %7182 = vmatpush1.bf16.msra.mxu0 0
        %7183 = vmatprep.subr.bf16.mxu0 0
        %7184 = vmatpush1.bf16.msra.mxu0 0
        %7185 = vmatprep.subr.bf16.mxu0 0
        %7186 = vmatpush1.bf16.msra.mxu0 0
        %7187 = vmatprep.subr.bf16.mxu0 0
        %7188 = vmatpush1.bf16.msra.mxu0 0
        %7189 = vmatprep.subr.bf16.mxu0 0
        %7190 = vmatpush1.bf16.msra.mxu0 0
        %7191 = vmatprep.subr.bf16.mxu0 0
        %7192 = vmatpush1.bf16.msra.mxu0 0
        %7193 = vmatprep.subr.bf16.mxu0 0
        %7194 = vmatpush1.bf16.msra.mxu0 0
        %7195 = vmatprep.subr.bf16.mxu0 0
        %7196 = vmatpush1.bf16.msra.mxu0 0
        %7197 = vmatprep.mubr.bf16.mxu0 0
        %7198 = vmatmul.mubr.bf16.gmra.mrb[0].mxu0 %v7149
        %v7199 = vpop.f32.mrb[0].mxu0
        %v7200 = vadd.f32 %v7055, %v7199
        %v7201 = vpop.f32.mrb[0].mxu0
        %v7202 = vpop.f32.mrb[0].mxu0
        %v7203 = vadd.f32 %v7058, %v7202
        %v7204 = vpop.f32.mrb[0].mxu0
        %7205 = vmatprep.mubr.bf16.mxu0 0
        %7206 = vmatmul.mubr.bf16.gmra.mrb[0].mxu0 %v7150
        %v7207 = vpop.f32.mrb[0].mxu0
        %v7208 = vadd.f32 %v7063, %v7207
        %v7209 = vpop.f32.mrb[0].mxu0
        %v7210 = vpop.f32.mrb[0].mxu0
        %v7211 = vadd.f32 %v7066, %v7210
        %v7212 = vpop.f32.mrb[0].mxu0
        %7213 = vmatprep.mubr.bf16.mxu0 0
        %7214 = vmatmul.mubr.bf16.gmra.mrb[0].mxu0 %v7151
        %v7215 = vpop.f32.mrb[0].mxu0
        %v7216 = vadd.f32 %v7071, %v7215
        %v7217 = vpop.f32.mrb[0].mxu0
        %v7218 = vpop.f32.mrb[0].mxu0
        %v7219 = vadd.f32 %v7074, %v7218
        %v7220 = vpop.f32.mrb[0].mxu0
        %7221 = vmatprep.mubr.bf16.mxu0 0
        %7222 = vmatmul.mubr.bf16.gmra.mrb[0].mxu0 %v7152
        %v7223 = vpop.f32.mrb[0].mxu0
        %v7224 = vadd.f32 %v7079, %v7223
        %v7225 = vpop.f32.mrb[0].mxu0
        %v7226 = vpop.f32.mrb[0].mxu0
        %v7227 = vadd.f32 %v7082, %v7226
        %v7228 = vpop.f32.mrb[0].mxu0
        %7229 = vmatprep.mubr.bf16.mxu0 0
        %7230 = vmatmul.mubr.bf16.gmra.mrb[0].mxu0 %v7153
        %v7231 = vpop.f32.mrb[0].mxu0
        %v7232 = vadd.f32 %v7087, %v7231
        %v7233 = vpop.f32.mrb[0].mxu0
        %v7234 = vpop.f32.mrb[0].mxu0
        %v7235 = vadd.f32 %v7090, %v7234
        %v7236 = vpop.f32.mrb[0].mxu0
        %7237 = vmatprep.mubr.bf16.mxu0 0
        %7238 = vmatmul.mubr.bf16.gmra.mrb[0].mxu0 %v7154
        %v7239 = vpop.f32.mrb[0].mxu0
        %v7240 = vadd.f32 %v7095, %v7239
        %v7241 = vpop.f32.mrb[0].mxu0
        %v7242 = vpop.f32.mrb[0].mxu0
        %v7243 = vadd.f32 %v7098, %v7242
        %v7244 = vpop.f32.mrb[0].mxu0
        %7245 = vmatprep.mubr.bf16.mxu0 0
        %7246 = vmatmul.mubr.bf16.gmra.mrb[0].mxu0 %v7155
        %v7247 = vpop.f32.mrb[0].mxu0
        %v7248 = vadd.f32 %v7103, %v7247
        %v7249 = vpop.f32.mrb[0].mxu0
        %v7250 = vpop.f32.mrb[0].mxu0
        %v7251 = vadd.f32 %v7106, %v7250
        %v7252 = vpop.f32.mrb[0].mxu0
        %7253 = vmatprep.mubr.bf16.mxu0 0
        %7254 = vmatmul.mubr.bf16.gmra.mrb[0].mxu0 %v7156
        %v7255 = vpop.f32.mrb[0].mxu0
        %v7256 = vadd.f32 %v7111, %v7255
        %v7257 = vpop.f32.mrb[0].mxu0
        %v7258 = vpop.f32.mrb[0].mxu0
        %v7259 = vadd.f32 %v7114, %v7258
        %v7260 = vpop.f32.mrb[0].mxu0
        %7261 = vdwg.mxu0
        %v7262 = vld [vmem:[%s15] sm:$0xf]
        %v7263 = vld [vmem:[%s15 + $0x4] sm:$0xf]
        %v7264 = vld [vmem:[%s15 + $0x8] sm:$0xf]
        %v7265 = vld [vmem:[%s15 + $0xc] sm:$0xf]
        %v7266 = vld [vmem:[%s15 + $0x10] sm:$0xf]
        %v7267 = vld [vmem:[%s15 + $0x14] sm:$0xf]
        %v7268 = vld [vmem:[%s15 + $0x18] sm:$0xf]
        %v7269 = vld [vmem:[%s15 + $0x1c] sm:$0xf]
        %v7270 = vld [vmem:[%s15 + $0x20] sm:$0xf]
        %v7271 = vld [vmem:[%s15 + $0x24] sm:$0xf]
        %v7272 = vld [vmem:[%s15 + $0x28] sm:$0xf]
        %v7273 = vld [vmem:[%s15 + $0x2c] sm:$0xf]
        %v7274 = vld [vmem:[%s15 + $0x30] sm:$0xf]
        %v7275 = vld [vmem:[%s15 + $0x34] sm:$0xf]
        %v7276 = vld [vmem:[%s15 + $0x38] sm:$0xf]
        %v7277 = vld [vmem:[%s15 + $0x3c] sm:$0xf]
        %v7278 = vpack.c.bf16 %v6768, %v6765
        %v7279 = vpack.c.bf16 %v6776, %v6773
        %v7280 = vpack.c.bf16 %v6784, %v6781
        %v7281 = vpack.c.bf16 %v6792, %v6789
        %v7282 = vpack.c.bf16 %v6800, %v6797
        %v7283 = vpack.c.bf16 %v6808, %v6805
        %v7284 = vpack.c.bf16 %v6816, %v6813
        %v7285 = vpack.c.bf16 %v6824, %v6821
        %v7302 = vunpack.c.l.b16 %v7262
        %v7303 = vunpack.c.l.b16 %v7263
        %v7304 = vunpack.c.l.b16 %v7264
        %v7305 = vunpack.c.l.b16 %v7265
        %v7306 = vunpack.c.l.b16 %v7266
        %v7307 = vunpack.c.l.b16 %v7267
        %v7308 = vunpack.c.l.b16 %v7268
        %v7309 = vunpack.c.l.b16 %v7269
        %v7310 = vunpack.c.l.b16 %v7270
        %v7311 = vunpack.c.l.b16 %v7271
        %v7312 = vunpack.c.l.b16 %v7272
        %v7313 = vunpack.c.l.b16 %v7273
        %v7314 = vunpack.c.l.b16 %v7274
        %v7315 = vunpack.c.l.b16 %v7275
        %v7316 = vunpack.c.l.b16 %v7276
        %v7317 = vunpack.c.l.b16 %v7277
        %v7318 = vpack.c.b16 %v7303, %v7302
        %v7319 = vpack.c.b16 %v7305, %v7304
        %v7320 = vpack.c.b16 %v7307, %v7306
        %v7321 = vpack.c.b16 %v7309, %v7308
        %v7322 = vpack.c.b16 %v7311, %v7310
        %v7323 = vpack.c.b16 %v7313, %v7312
        %v7324 = vpack.c.b16 %v7315, %v7314
        %v7325 = vpack.c.b16 %v7317, %v7316
        %7334 = vmatprep.subr.bf16.mxu0 0
        %7335 = vmatpush1.bf16.msra.mxu0 %v7278
        %7336 = vmatprep.subr.bf16.mxu0 0
        %7337 = vmatpush1.bf16.msra.mxu0 %v7279
        %7338 = vmatprep.subr.bf16.mxu0 0
        %7339 = vmatpush1.bf16.msra.mxu0 %v7280
        %7340 = vmatprep.subr.bf16.mxu0 0
        %7341 = vmatpush1.bf16.msra.mxu0 %v7281
        %7342 = vmatprep.subr.bf16.mxu0 0
        %7343 = vmatpush1.bf16.msra.mxu0 %v7282
        %7344 = vmatprep.subr.bf16.mxu0 0
        %7345 = vmatpush1.bf16.msra.mxu0 %v7283
        %7346 = vmatprep.subr.bf16.mxu0 0
        %7347 = vmatpush1.bf16.msra.mxu0 %v7284
        %7348 = vmatprep.subr.bf16.mxu0 0
        %7349 = vmatpush1.bf16.msra.mxu0 %v7285
        %7350 = vmatprep.subr.bf16.mxu0 0
        %7351 = vmatpush1.bf16.msra.mxu0 0
        %7352 = vmatprep.subr.bf16.mxu0 0
        %7353 = vmatpush1.bf16.msra.mxu0 0
        %7354 = vmatprep.subr.bf16.mxu0 0
        %7355 = vmatpush1.bf16.msra.mxu0 0
        %7356 = vmatprep.subr.bf16.mxu0 0
        %7357 = vmatpush1.bf16.msra.mxu0 0
        %7358 = vmatprep.subr.bf16.mxu0 0
        %7359 = vmatpush1.bf16.msra.mxu0 0
        %7360 = vmatprep.subr.bf16.mxu0 0
        %7361 = vmatpush1.bf16.msra.mxu0 0
        %7362 = vmatprep.subr.bf16.mxu0 0
        %7363 = vmatpush1.bf16.msra.mxu0 0
        %7364 = vmatprep.subr.bf16.mxu0 0
        %7365 = vmatpush1.bf16.msra.mxu0 0
        %7366 = vmatprep.mubr.bf16.mxu0 0
        %7367 = vmatmul.mubr.bf16.gmra.mrb[0].mxu0 %v7318
        %v7368 = vpop.f32.mrb[0].mxu0
        %v7369 = vadd.f32 0.0, %v7368
        %v7370 = vpop.f32.mrb[0].mxu0
        %v7371 = vpop.f32.mrb[0].mxu0
        %v7372 = vadd.f32 0.0, %v7371
        %v7373 = vpop.f32.mrb[0].mxu0
        %7374 = vmatprep.mubr.bf16.mxu0 0
        %7375 = vmatmul.mubr.bf16.gmra.mrb[0].mxu0 %v7319
        %v7376 = vpop.f32.mrb[0].mxu0
        %v7377 = vadd.f32 0.0, %v7376
        %v7378 = vpop.f32.mrb[0].mxu0
        %v7379 = vpop.f32.mrb[0].mxu0
        %v7380 = vadd.f32 0.0, %v7379
        %v7381 = vpop.f32.mrb[0].mxu0
        %7382 = vmatprep.mubr.bf16.mxu0 0
        %7383 = vmatmul.mubr.bf16.gmra.mrb[0].mxu0 %v7320
        %v7384 = vpop.f32.mrb[0].mxu0
        %v7385 = vadd.f32 0.0, %v7384
        %v7386 = vpop.f32.mrb[0].mxu0
        %v7387 = vpop.f32.mrb[0].mxu0
        %v7388 = vadd.f32 0.0, %v7387
        %v7389 = vpop.f32.mrb[0].mxu0
        %7390 = vmatprep.mubr.bf16.mxu0 0
        %7391 = vmatmul.mubr.bf16.gmra.mrb[0].mxu0 %v7321
        %v7392 = vpop.f32.mrb[0].mxu0
        %v7393 = vadd.f32 0.0, %v7392
        %v7394 = vpop.f32.mrb[0].mxu0
        %v7395 = vpop.f32.mrb[0].mxu0
        %v7396 = vadd.f32 0.0, %v7395
        %v7397 = vpop.f32.mrb[0].mxu0
        %7398 = vmatprep.mubr.bf16.mxu0 0
        %7399 = vmatmul.mubr.bf16.gmra.mrb[0].mxu0 %v7322
        %v7400 = vpop.f32.mrb[0].mxu0
        %v7401 = vadd.f32 0.0, %v7400
        %v7402 = vpop.f32.mrb[0].mxu0
        %v7403 = vpop.f32.mrb[0].mxu0
        %v7404 = vadd.f32 0.0, %v7403
        %v7405 = vpop.f32.mrb[0].mxu0
        %7406 = vmatprep.mubr.bf16.mxu0 0
        %7407 = vmatmul.mubr.bf16.gmra.mrb[0].mxu0 %v7323
        %v7408 = vpop.f32.mrb[0].mxu0
        %v7409 = vadd.f32 0.0, %v7408
        %v7410 = vpop.f32.mrb[0].mxu0
        %v7411 = vpop.f32.mrb[0].mxu0
        %v7412 = vadd.f32 0.0, %v7411
        %v7413 = vpop.f32.mrb[0].mxu0
        %7414 = vmatprep.mubr.bf16.mxu0 0
        %7415 = vmatmul.mubr.bf16.gmra.mrb[0].mxu0 %v7324
        %v7416 = vpop.f32.mrb[0].mxu0
        %v7417 = vadd.f32 0.0, %v7416
        %v7418 = vpop.f32.mrb[0].mxu0
        %v7419 = vpop.f32.mrb[0].mxu0
        %v7420 = vadd.f32 0.0, %v7419
        %v7421 = vpop.f32.mrb[0].mxu0
        %7422 = vmatprep.mubr.bf16.mxu0 0
        %7423 = vmatmul.mubr.bf16.gmra.mrb[0].mxu0 %v7325
        %v7424 = vpop.f32.mrb[0].mxu0
        %v7425 = vadd.f32 0.0, %v7424
        %v7426 = vpop.f32.mrb[0].mxu0
        %v7427 = vpop.f32.mrb[0].mxu0
        %v7428 = vadd.f32 0.0, %v7427
        %v7429 = vpop.f32.mrb[0].mxu0
        %7430 = vdwg.mxu0
        %v7431 = vadd.f32 %v7200, %v7369
        %v7432 = vadd.f32 %v7203, %v7372
        %v7433 = vadd.f32 %v7208, %v7377
        %v7434 = vadd.f32 %v7211, %v7380
        %v7435 = vadd.f32 %v7216, %v7385
        %v7436 = vadd.f32 %v7219, %v7388
        %v7437 = vadd.f32 %v7224, %v7393
        %v7438 = vadd.f32 %v7227, %v7396
        %v7439 = vadd.f32 %v7232, %v7401
        %v7440 = vadd.f32 %v7235, %v7404
        %v7441 = vadd.f32 %v7240, %v7409
        %v7442 = vadd.f32 %v7243, %v7412
        %v7443 = vadd.f32 %v7248, %v7417
        %v7444 = vadd.f32 %v7251, %v7420
        %v7445 = vadd.f32 %v7256, %v7425
        %v7446 = vadd.f32 %v7259, %v7428
        %v7447 = vld [vmem:[%s17] sm:$0xf]
        %v7448 = vld [vmem:[%s17 + $0x4] sm:$0xf]
        %v7449 = vld [vmem:[%s17 + $0x8] sm:$0xf]
        %v7450 = vld [vmem:[%s17 + $0xc] sm:$0xf]
        %v7451 = vld [vmem:[%s17 + $0x10] sm:$0xf]
        %v7452 = vld [vmem:[%s17 + $0x14] sm:$0xf]
        %v7453 = vld [vmem:[%s17 + $0x18] sm:$0xf]
        %v7454 = vld [vmem:[%s17 + $0x1c] sm:$0xf]
        %v7455 = vld [vmem:[%s17 + $0x20] sm:$0xf]
        %v7456 = vld [vmem:[%s17 + $0x24] sm:$0xf]
        %v7457 = vld [vmem:[%s17 + $0x28] sm:$0xf]
        %v7458 = vld [vmem:[%s17 + $0x2c] sm:$0xf]
        %v7459 = vld [vmem:[%s17 + $0x30] sm:$0xf]
        %v7460 = vld [vmem:[%s17 + $0x34] sm:$0xf]
        %v7461 = vld [vmem:[%s17 + $0x38] sm:$0xf]
        %v7462 = vld [vmem:[%s17 + $0x3c] sm:$0xf]
        %v7463 = vpack.c.bf16 %v6865, %v6862
        %v7464 = vpack.c.bf16 %v6873, %v6870
        %v7465 = vpack.c.bf16 %v6881, %v6878
        %v7466 = vpack.c.bf16 %v6889, %v6886
        %v7467 = vpack.c.bf16 %v6897, %v6894
        %v7468 = vpack.c.bf16 %v6905, %v6902
        %v7469 = vpack.c.bf16 %v6913, %v6910
        %v7470 = vpack.c.bf16 %v6921, %v6918
        %v7487 = vunpack.c.l.b16 %v7447
        %v7488 = vunpack.c.l.b16 %v7448
        %v7489 = vunpack.c.l.b16 %v7449
        %v7490 = vunpack.c.l.b16 %v7450
        %v7491 = vunpack.c.l.b16 %v7451
        %v7492 = vunpack.c.l.b16 %v7452
        %v7493 = vunpack.c.l.b16 %v7453
        %v7494 = vunpack.c.l.b16 %v7454
        %v7495 = vunpack.c.l.b16 %v7455
        %v7496 = vunpack.c.l.b16 %v7456
        %v7497 = vunpack.c.l.b16 %v7457
        %v7498 = vunpack.c.l.b16 %v7458
        %v7499 = vunpack.c.l.b16 %v7459
        %v7500 = vunpack.c.l.b16 %v7460
        %v7501 = vunpack.c.l.b16 %v7461
        %v7502 = vunpack.c.l.b16 %v7462
        %v7503 = vpack.c.b16 %v7488, %v7487
        %v7504 = vpack.c.b16 %v7490, %v7489
        %v7505 = vpack.c.b16 %v7492, %v7491
        %v7506 = vpack.c.b16 %v7494, %v7493
        %v7507 = vpack.c.b16 %v7496, %v7495
        %v7508 = vpack.c.b16 %v7498, %v7497
        %v7509 = vpack.c.b16 %v7500, %v7499
        %v7510 = vpack.c.b16 %v7502, %v7501
        %7519 = vmatprep.subr.bf16.mxu0 0
        %7520 = vmatpush1.bf16.msra.mxu0 %v7463
        %7521 = vmatprep.subr.bf16.mxu0 0
        %7522 = vmatpush1.bf16.msra.mxu0 %v7464
        %7523 = vmatprep.subr.bf16.mxu0 0
        %7524 = vmatpush1.bf16.msra.mxu0 %v7465
        %7525 = vmatprep.subr.bf16.mxu0 0
        %7526 = vmatpush1.bf16.msra.mxu0 %v7466
        %7527 = vmatprep.subr.bf16.mxu0 0
        %7528 = vmatpush1.bf16.msra.mxu0 %v7467
        %7529 = vmatprep.subr.bf16.mxu0 0
        %7530 = vmatpush1.bf16.msra.mxu0 %v7468
        %7531 = vmatprep.subr.bf16.mxu0 0
        %7532 = vmatpush1.bf16.msra.mxu0 %v7469
        %7533 = vmatprep.subr.bf16.mxu0 0
        %7534 = vmatpush1.bf16.msra.mxu0 %v7470
        %7535 = vmatprep.subr.bf16.mxu0 0
        %7536 = vmatpush1.bf16.msra.mxu0 0
        %7537 = vmatprep.subr.bf16.mxu0 0
        %7538 = vmatpush1.bf16.msra.mxu0 0
        %7539 = vmatprep.subr.bf16.mxu0 0
        %7540 = vmatpush1.bf16.msra.mxu0 0
        %7541 = vmatprep.subr.bf16.mxu0 0
        %7542 = vmatpush1.bf16.msra.mxu0 0
        %7543 = vmatprep.subr.bf16.mxu0 0
        %7544 = vmatpush1.bf16.msra.mxu0 0
        %7545 = vmatprep.subr.bf16.mxu0 0
        %7546 = vmatpush1.bf16.msra.mxu0 0
        %7547 = vmatprep.subr.bf16.mxu0 0
        %7548 = vmatpush1.bf16.msra.mxu0 0
        %7549 = vmatprep.subr.bf16.mxu0 0
        %7550 = vmatpush1.bf16.msra.mxu0 0
        %7551 = vmatprep.mubr.bf16.mxu0 0
        %7552 = vmatmul.mubr.bf16.gmra.mrb[0].mxu0 %v7503
        %v7553 = vpop.f32.mrb[0].mxu0
        %v7554 = vadd.f32 0.0, %v7553
        %v7555 = vpop.f32.mrb[0].mxu0
        %v7556 = vpop.f32.mrb[0].mxu0
        %v7557 = vadd.f32 0.0, %v7556
        %v7558 = vpop.f32.mrb[0].mxu0
        %7559 = vmatprep.mubr.bf16.mxu0 0
        %7560 = vmatmul.mubr.bf16.gmra.mrb[0].mxu0 %v7504
        %v7561 = vpop.f32.mrb[0].mxu0
        %v7562 = vadd.f32 0.0, %v7561
        %v7563 = vpop.f32.mrb[0].mxu0
        %v7564 = vpop.f32.mrb[0].mxu0
        %v7565 = vadd.f32 0.0, %v7564
        %v7566 = vpop.f32.mrb[0].mxu0
        %7567 = vmatprep.mubr.bf16.mxu0 0
        %7568 = vmatmul.mubr.bf16.gmra.mrb[0].mxu0 %v7505
        %v7569 = vpop.f32.mrb[0].mxu0
        %v7570 = vadd.f32 0.0, %v7569
        %v7571 = vpop.f32.mrb[0].mxu0
        %v7572 = vpop.f32.mrb[0].mxu0
        %v7573 = vadd.f32 0.0, %v7572
        %v7574 = vpop.f32.mrb[0].mxu0
        %7575 = vmatprep.mubr.bf16.mxu0 0
        %7576 = vmatmul.mubr.bf16.gmra.mrb[0].mxu0 %v7506
        %v7577 = vpop.f32.mrb[0].mxu0
        %v7578 = vadd.f32 0.0, %v7577
        %v7579 = vpop.f32.mrb[0].mxu0
        %v7580 = vpop.f32.mrb[0].mxu0
        %v7581 = vadd.f32 0.0, %v7580
        %v7582 = vpop.f32.mrb[0].mxu0
        %7583 = vmatprep.mubr.bf16.mxu0 0
        %7584 = vmatmul.mubr.bf16.gmra.mrb[0].mxu0 %v7507
        %v7585 = vpop.f32.mrb[0].mxu0
        %v7586 = vadd.f32 0.0, %v7585
        %v7587 = vpop.f32.mrb[0].mxu0
        %v7588 = vpop.f32.mrb[0].mxu0
        %v7589 = vadd.f32 0.0, %v7588
        %v7590 = vpop.f32.mrb[0].mxu0
        %7591 = vmatprep.mubr.bf16.mxu0 0
        %7592 = vmatmul.mubr.bf16.gmra.mrb[0].mxu0 %v7508
        %v7593 = vpop.f32.mrb[0].mxu0
        %v7594 = vadd.f32 0.0, %v7593
        %v7595 = vpop.f32.mrb[0].mxu0
        %v7596 = vpop.f32.mrb[0].mxu0
        %v7597 = vadd.f32 0.0, %v7596
        %v7598 = vpop.f32.mrb[0].mxu0
        %7599 = vmatprep.mubr.bf16.mxu0 0
        %7600 = vmatmul.mubr.bf16.gmra.mrb[0].mxu0 %v7509
        %v7601 = vpop.f32.mrb[0].mxu0
        %v7602 = vadd.f32 0.0, %v7601
        %v7603 = vpop.f32.mrb[0].mxu0
        %v7604 = vpop.f32.mrb[0].mxu0
        %v7605 = vadd.f32 0.0, %v7604
        %v7606 = vpop.f32.mrb[0].mxu0
        %7607 = vmatprep.mubr.bf16.mxu0 0
        %7608 = vmatmul.mubr.bf16.gmra.mrb[0].mxu0 %v7510
        %v7609 = vpop.f32.mrb[0].mxu0
        %v7610 = vadd.f32 0.0, %v7609
        %v7611 = vpop.f32.mrb[0].mxu0
        %v7612 = vpop.f32.mrb[0].mxu0
        %v7613 = vadd.f32 0.0, %v7612
        %v7614 = vpop.f32.mrb[0].mxu0
        %7615 = vdwg.mxu0
        %v7616 = vadd.f32 %v7431, %v7554
        %v7617 = vadd.f32 %v7432, %v7557
        %v7618 = vadd.f32 %v7433, %v7562
        %v7619 = vadd.f32 %v7434, %v7565
        %v7620 = vadd.f32 %v7435, %v7570
        %v7621 = vadd.f32 %v7436, %v7573
        %v7622 = vadd.f32 %v7437, %v7578
        %v7623 = vadd.f32 %v7438, %v7581
        %v7624 = vadd.f32 %v7439, %v7586
        %v7625 = vadd.f32 %v7440, %v7589
        %v7626 = vadd.f32 %v7441, %v7594
        %v7627 = vadd.f32 %v7442, %v7597
        %v7628 = vadd.f32 %v7443, %v7602
        %v7629 = vadd.f32 %v7444, %v7605
        %v7630 = vadd.f32 %v7445, %v7610
        %v7631 = vadd.f32 %v7446, %v7613
        %v7632 = vld [vmem:[#allocation6] sm:$0x1]
        %v7634 = vlaneseq
        %v7635 = vshrl.u32 %v7634, 7
        %v7636 = vsub.s32 0, %v7635
        %v7637 = vrot.slane %v7632, %v7636
        %v7639 = vadd.f32 %v7616, %v7637
        %v7640 = vadd.f32 %v7617, %v7637
        %v7641 = vadd.f32 %v7618, %v7637
        %v7642 = vadd.f32 %v7619, %v7637
        %v7643 = vadd.f32 %v7620, %v7637
        %v7644 = vadd.f32 %v7621, %v7637
        %v7645 = vadd.f32 %v7622, %v7637
        %v7646 = vadd.f32 %v7623, %v7637
        %v7647 = vadd.f32 %v7624, %v7637
        %v7648 = vadd.f32 %v7625, %v7637
        %v7649 = vadd.f32 %v7626, %v7637
        %v7650 = vadd.f32 %v7627, %v7637
        %v7651 = vadd.f32 %v7628, %v7637
        %v7652 = vadd.f32 %v7629, %v7637
        %v7653 = vadd.f32 %v7630, %v7637
        %v7654 = vadd.f32 %v7631, %v7637
        %v7655 = vld [vmem:[%s9] sm:$0xf]
        %v7656 = vld [vmem:[%s9 + $0x4] sm:$0xf]
        %v7657 = vld [vmem:[%s9 + $0x8] sm:$0xf]
        %v7658 = vld [vmem:[%s9 + $0xc] sm:$0xf]
        %v7659 = vld [vmem:[%s9 + $0x10] sm:$0xf]
        %v7660 = vld [vmem:[%s9 + $0x14] sm:$0xf]
        %v7661 = vld [vmem:[%s9 + $0x18] sm:$0xf]
        %v7662 = vld [vmem:[%s9 + $0x1c] sm:$0xf]
        %v7663 = vld [vmem:[%s9 + $0x20] sm:$0xf]
        %v7664 = vld [vmem:[%s9 + $0x24] sm:$0xf]
        %v7665 = vld [vmem:[%s9 + $0x28] sm:$0xf]
        %v7666 = vld [vmem:[%s9 + $0x2c] sm:$0xf]
        %v7667 = vld [vmem:[%s9 + $0x30] sm:$0xf]
        %v7668 = vld [vmem:[%s9 + $0x34] sm:$0xf]
        %v7669 = vld [vmem:[%s9 + $0x38] sm:$0xf]
        %v7670 = vld [vmem:[%s9 + $0x3c] sm:$0xf]
        %v7671 = vpack.c.bf16 %v7640, %v7639
        %v7672 = vpack.c.bf16 %v7642, %v7641
        %v7673 = vpack.c.bf16 %v7644, %v7643
        %v7674 = vpack.c.bf16 %v7646, %v7645
        %v7675 = vpack.c.bf16 %v7648, %v7647
        %v7676 = vpack.c.bf16 %v7650, %v7649
        %v7677 = vpack.c.bf16 %v7652, %v7651
        %v7678 = vpack.c.bf16 %v7654, %v7653
        %v7695 = vunpack.c.l.b16 %v7655
        %v7696 = vunpack.c.l.b16 %v7656
        %v7697 = vunpack.c.l.b16 %v7657
        %v7698 = vunpack.c.l.b16 %v7658
        %v7699 = vunpack.c.l.b16 %v7659
        %v7700 = vunpack.c.l.b16 %v7660
        %v7701 = vunpack.c.l.b16 %v7661
        %v7702 = vunpack.c.l.b16 %v7662
        %v7703 = vunpack.c.l.b16 %v7663
        %v7704 = vunpack.c.l.b16 %v7664
        %v7705 = vunpack.c.l.b16 %v7665
        %v7706 = vunpack.c.l.b16 %v7666
        %v7707 = vunpack.c.l.b16 %v7667
        %v7708 = vunpack.c.l.b16 %v7668
        %v7709 = vunpack.c.l.b16 %v7669
        %v7710 = vunpack.c.l.b16 %v7670
        %v7711 = vpack.c.b16 %v7696, %v7695
        %v7712 = vpack.c.b16 %v7698, %v7697
        %v7713 = vpack.c.b16 %v7700, %v7699
        %v7714 = vpack.c.b16 %v7702, %v7701
        %v7715 = vpack.c.b16 %v7704, %v7703
        %v7716 = vpack.c.b16 %v7706, %v7705
        %v7717 = vpack.c.b16 %v7708, %v7707
        %v7718 = vpack.c.b16 %v7710, %v7709
        %7727 = vmatprep.subr.bf16.mxu0 0
        %7728 = vmatpush1.bf16.msra.mxu0 %v7671
        %7729 = vmatprep.subr.bf16.mxu0 0
        %7730 = vmatpush1.bf16.msra.mxu0 %v7672
        %7731 = vmatprep.subr.bf16.mxu0 0
        %7732 = vmatpush1.bf16.msra.mxu0 %v7673
        %7733 = vmatprep.subr.bf16.mxu0 0
        %7734 = vmatpush1.bf16.msra.mxu0 %v7674
        %7735 = vmatprep.subr.bf16.mxu0 0
        %7736 = vmatpush1.bf16.msra.mxu0 %v7675
        %7737 = vmatprep.subr.bf16.mxu0 0
        %7738 = vmatpush1.bf16.msra.mxu0 %v7676
        %7739 = vmatprep.subr.bf16.mxu0 0
        %7740 = vmatpush1.bf16.msra.mxu0 %v7677
        %7741 = vmatprep.subr.bf16.mxu0 0
        %7742 = vmatpush1.bf16.msra.mxu0 %v7678
        %7743 = vmatprep.subr.bf16.mxu0 0
        %7744 = vmatpush1.bf16.msra.mxu0 0
        %7745 = vmatprep.subr.bf16.mxu0 0
        %7746 = vmatpush1.bf16.msra.mxu0 0
        %7747 = vmatprep.subr.bf16.mxu0 0
        %7748 = vmatpush1.bf16.msra.mxu0 0
        %7749 = vmatprep.subr.bf16.mxu0 0
        %7750 = vmatpush1.bf16.msra.mxu0 0
        %7751 = vmatprep.subr.bf16.mxu0 0
        %7752 = vmatpush1.bf16.msra.mxu0 0
        %7753 = vmatprep.subr.bf16.mxu0 0
        %7754 = vmatpush1.bf16.msra.mxu0 0
        %7755 = vmatprep.subr.bf16.mxu0 0
        %7756 = vmatpush1.bf16.msra.mxu0 0
        %7757 = vmatprep.subr.bf16.mxu0 0
        %7758 = vmatpush1.bf16.msra.mxu0 0
        %7759 = vmatprep.mubr.bf16.mxu0 0
        %7760 = vmatmul.mubr.bf16.gmra.mrb[0].mxu0 %v7711
        %v7761 = vpop.f32.mrb[0].mxu0
        %v7762 = vadd.f32 0.0, %v7761
        %v7763 = vpop.f32.mrb[0].mxu0
        %v7764 = vpop.f32.mrb[0].mxu0
        %v7765 = vadd.f32 0.0, %v7764
        %v7766 = vpop.f32.mrb[0].mxu0
        %7767 = vmatprep.mubr.bf16.mxu0 0
        %7768 = vmatmul.mubr.bf16.gmra.mrb[0].mxu0 %v7712
        %v7769 = vpop.f32.mrb[0].mxu0
        %v7770 = vadd.f32 0.0, %v7769
        %v7771 = vpop.f32.mrb[0].mxu0
        %v7772 = vpop.f32.mrb[0].mxu0
        %v7773 = vadd.f32 0.0, %v7772
        %v7774 = vpop.f32.mrb[0].mxu0
        %7775 = vmatprep.mubr.bf16.mxu0 0
        %7776 = vmatmul.mubr.bf16.gmra.mrb[0].mxu0 %v7713
        %v7777 = vpop.f32.mrb[0].mxu0
        %v7778 = vadd.f32 0.0, %v7777
        %v7779 = vpop.f32.mrb[0].mxu0
        %v7780 = vpop.f32.mrb[0].mxu0
        %v7781 = vadd.f32 0.0, %v7780
        %v7782 = vpop.f32.mrb[0].mxu0
        %7783 = vmatprep.mubr.bf16.mxu0 0
        %7784 = vmatmul.mubr.bf16.gmra.mrb[0].mxu0 %v7714
        %v7785 = vpop.f32.mrb[0].mxu0
        %v7786 = vadd.f32 0.0, %v7785
        %v7787 = vpop.f32.mrb[0].mxu0
        %v7788 = vpop.f32.mrb[0].mxu0
        %v7789 = vadd.f32 0.0, %v7788
        %v7790 = vpop.f32.mrb[0].mxu0
        %7791 = vmatprep.mubr.bf16.mxu0 0
        %7792 = vmatmul.mubr.bf16.gmra.mrb[0].mxu0 %v7715
        %v7793 = vpop.f32.mrb[0].mxu0
        %v7794 = vadd.f32 0.0, %v7793
        %v7795 = vpop.f32.mrb[0].mxu0
        %v7796 = vpop.f32.mrb[0].mxu0
        %v7797 = vadd.f32 0.0, %v7796
        %v7798 = vpop.f32.mrb[0].mxu0
        %7799 = vmatprep.mubr.bf16.mxu0 0
        %7800 = vmatmul.mubr.bf16.gmra.mrb[0].mxu0 %v7716
        %v7801 = vpop.f32.mrb[0].mxu0
        %v7802 = vadd.f32 0.0, %v7801
        %v7803 = vpop.f32.mrb[0].mxu0
        %v7804 = vpop.f32.mrb[0].mxu0
        %v7805 = vadd.f32 0.0, %v7804
        %v7806 = vpop.f32.mrb[0].mxu0
        %7807 = vmatprep.mubr.bf16.mxu0 0
        %7808 = vmatmul.mubr.bf16.gmra.mrb[0].mxu0 %v7717
        %v7809 = vpop.f32.mrb[0].mxu0
        %v7810 = vadd.f32 0.0, %v7809
        %v7811 = vpop.f32.mrb[0].mxu0
        %v7812 = vpop.f32.mrb[0].mxu0
        %v7813 = vadd.f32 0.0, %v7812
        %v7814 = vpop.f32.mrb[0].mxu0
        %7815 = vmatprep.mubr.bf16.mxu0 0
        %7816 = vmatmul.mubr.bf16.gmra.mrb[0].mxu0 %v7718
        %v7817 = vpop.f32.mrb[0].mxu0
        %v7818 = vadd.f32 0.0, %v7817
        %v7819 = vpop.f32.mrb[0].mxu0
        %v7820 = vpop.f32.mrb[0].mxu0
        %v7821 = vadd.f32 0.0, %v7820
        %v7822 = vpop.f32.mrb[0].mxu0
        %7823 = vdwg.mxu0
        %v7824 = vld [vmem:[%s59] sm:$0xf]
        %v7825 = vld [vmem:[%s59 + $0x4] sm:$0xf]
        %v7826 = vld [vmem:[%s59 + $0x8] sm:$0xf]
        %v7827 = vld [vmem:[%s59 + $0xc] sm:$0xf]
        %v7828 = vpack.c.bf16 %v7765, %v7762
        %v7829 = vpack.c.bf16 %v7773, %v7770
        %v7830 = vpack.c.bf16 %v7781, %v7778
        %v7831 = vpack.c.bf16 %v7789, %v7786
        %v7832 = vpack.c.bf16 %v7797, %v7794
        %v7833 = vpack.c.bf16 %v7805, %v7802
        %v7834 = vpack.c.bf16 %v7813, %v7810
        %v7835 = vpack.c.bf16 %v7821, %v7818
        %v7836 = vld [vmem:[#allocation3] sm:$0x1]
        %v7838 = vlaneseq
        %v7839 = vshrl.u32 %v7838, 7
        %v7840 = vsub.s32 0, %v7839
        %v7841 = vrot.slane %v7836, %v7840
        %v7847 = vunpack.c.l.b16 %v7824
        %v7848 = vunpack.c.l.b16 %v7825
        %v7849 = vunpack.c.l.b16 %v7826
        %v7850 = vunpack.c.l.b16 %v7827
        %v7851 = vpack.c.b16 %v7848, %v7847
        %v7852 = vpack.c.b16 %v7850, %v7849
        %v7856 = vsel %vm2496, %v7828, 0
        %v7859 = vsel %vm2496, %v7829, 0
        %v7862 = vsel %vm2496, %v7830, 0
        %v7865 = vsel %vm2496, %v7831, 0
        %v7868 = vsel %vm2496, %v7832, 0
        %v7871 = vsel %vm2496, %v7833, 0
        %v7874 = vsel %vm2496, %v7834, 0
        %v7877 = vsel %vm2496, %v7835, 0
        %7879 = vmatprep.subr.bf16.mxu0 0
        %7880 = vmatpush1.bf16.msra.mxu0 %v7851
        %7881 = vmatprep.subr.bf16.mxu0 0
        %7882 = vmatpush1.bf16.msra.mxu0 %v7852
        %7883 = vmatprep.subr.bf16.mxu0 0
        %7884 = vmatpush1.bf16.msra.mxu0 0
        %7885 = vmatprep.subr.bf16.mxu0 0
        %7886 = vmatpush1.bf16.msra.mxu0 0
        %7887 = vmatprep.subr.bf16.mxu0 0
        %7888 = vmatpush1.bf16.msra.mxu0 0
        %7889 = vmatprep.subr.bf16.mxu0 0
        %7890 = vmatpush1.bf16.msra.mxu0 0
        %7891 = vmatprep.subr.bf16.mxu0 0
        %7892 = vmatpush1.bf16.msra.mxu0 0
        %7893 = vmatprep.subr.bf16.mxu0 0
        %7894 = vmatpush1.bf16.msra.mxu0 0
        %7895 = vmatprep.subr.bf16.mxu0 0
        %7896 = vmatpush1.bf16.msra.mxu0 0
        %7897 = vmatprep.subr.bf16.mxu0 0
        %7898 = vmatpush1.bf16.msra.mxu0 0
        %7899 = vmatprep.subr.bf16.mxu0 0
        %7900 = vmatpush1.bf16.msra.mxu0 0
        %7901 = vmatprep.subr.bf16.mxu0 0
        %7902 = vmatpush1.bf16.msra.mxu0 0
        %7903 = vmatprep.subr.bf16.mxu0 0
        %7904 = vmatpush1.bf16.msra.mxu0 0
        %7905 = vmatprep.subr.bf16.mxu0 0
        %7906 = vmatpush1.bf16.msra.mxu0 0
        %7907 = vmatprep.subr.bf16.mxu0 0
        %7908 = vmatpush1.bf16.msra.mxu0 0
        %7909 = vmatprep.subr.bf16.mxu0 0
        %7910 = vmatpush1.bf16.msra.mxu0 0
        %7911 = vmatprep.mubr.bf16.mxu0 0
        %7912 = vmatmul.mubr.bf16.gmra.mrb[0].mxu0 %v7856
        %v7913 = vpop.f32.mrb[0].mxu0
        %v7914 = vadd.f32 %v7841, %v7913
        %v7915 = vpop.f32.mrb[0].mxu0
        %v7916 = vpop.f32.mrb[0].mxu0
        %v7917 = vadd.f32 %v7841, %v7916
        %v7918 = vpop.f32.mrb[0].mxu0
        %7919 = vmatprep.mubr.bf16.mxu0 0
        %7920 = vmatmul.mubr.bf16.gmra.mrb[0].mxu0 %v7859
        %v7921 = vpop.f32.mrb[0].mxu0
        %v7922 = vadd.f32 %v7841, %v7921
        %v7923 = vpop.f32.mrb[0].mxu0
        %v7924 = vpop.f32.mrb[0].mxu0
        %v7925 = vadd.f32 %v7841, %v7924
        %v7926 = vpop.f32.mrb[0].mxu0
        %7927 = vmatprep.mubr.bf16.mxu0 0
        %7928 = vmatmul.mubr.bf16.gmra.mrb[0].mxu0 %v7862
        %v7929 = vpop.f32.mrb[0].mxu0
        %v7930 = vadd.f32 %v7841, %v7929
        %v7931 = vpop.f32.mrb[0].mxu0
        %v7932 = vpop.f32.mrb[0].mxu0
        %v7933 = vadd.f32 %v7841, %v7932
        %v7934 = vpop.f32.mrb[0].mxu0
        %7935 = vmatprep.mubr.bf16.mxu0 0
        %7936 = vmatmul.mubr.bf16.gmra.mrb[0].mxu0 %v7865
        %v7937 = vpop.f32.mrb[0].mxu0
        %v7938 = vadd.f32 %v7841, %v7937
        %v7939 = vpop.f32.mrb[0].mxu0
        %v7940 = vpop.f32.mrb[0].mxu0
        %v7941 = vadd.f32 %v7841, %v7940
        %v7942 = vpop.f32.mrb[0].mxu0
        %7943 = vmatprep.mubr.bf16.mxu0 0
        %7944 = vmatmul.mubr.bf16.gmra.mrb[0].mxu0 %v7868
        %v7945 = vpop.f32.mrb[0].mxu0
        %v7946 = vadd.f32 %v7841, %v7945
        %v7947 = vpop.f32.mrb[0].mxu0
        %v7948 = vpop.f32.mrb[0].mxu0
        %v7949 = vadd.f32 %v7841, %v7948
        %v7950 = vpop.f32.mrb[0].mxu0
        %7951 = vmatprep.mubr.bf16.mxu0 0
        %7952 = vmatmul.mubr.bf16.gmra.mrb[0].mxu0 %v7871
        %v7953 = vpop.f32.mrb[0].mxu0
        %v7954 = vadd.f32 %v7841, %v7953
        %v7955 = vpop.f32.mrb[0].mxu0
        %v7956 = vpop.f32.mrb[0].mxu0
        %v7957 = vadd.f32 %v7841, %v7956
        %v7958 = vpop.f32.mrb[0].mxu0
        %7959 = vmatprep.mubr.bf16.mxu0 0
        %7960 = vmatmul.mubr.bf16.gmra.mrb[0].mxu0 %v7874
        %v7961 = vpop.f32.mrb[0].mxu0
        %v7962 = vadd.f32 %v7841, %v7961
        %v7963 = vpop.f32.mrb[0].mxu0
        %v7964 = vpop.f32.mrb[0].mxu0
        %v7965 = vadd.f32 %v7841, %v7964
        %v7966 = vpop.f32.mrb[0].mxu0
        %7967 = vmatprep.mubr.bf16.mxu0 0
        %7968 = vmatmul.mubr.bf16.gmra.mrb[0].mxu0 %v7877
        %v7969 = vpop.f32.mrb[0].mxu0
        %v7970 = vadd.f32 %v7841, %v7969
        %v7971 = vpop.f32.mrb[0].mxu0
        %v7972 = vpop.f32.mrb[0].mxu0
        %v7973 = vadd.f32 %v7841, %v7972
        %v7974 = vpop.f32.mrb[0].mxu0
        %7975 = vdwg.mxu0
        %v7976 = vmax.f32 %v7914, 0.0
        %v7977 = vmax.f32 %v7917, 0.0
        %v7978 = vmax.f32 %v7922, 0.0
        %v7979 = vmax.f32 %v7925, 0.0
        %v7980 = vmax.f32 %v7930, 0.0
        %v7981 = vmax.f32 %v7933, 0.0
        %v7982 = vmax.f32 %v7938, 0.0
        %v7983 = vmax.f32 %v7941, 0.0
        %v7984 = vmax.f32 %v7946, 0.0
        %v7985 = vmax.f32 %v7949, 0.0
        %v7986 = vmax.f32 %v7954, 0.0
        %v7987 = vmax.f32 %v7957, 0.0
        %v7988 = vmax.f32 %v7962, 0.0
        %v7989 = vmax.f32 %v7965, 0.0
        %v7990 = vmax.f32 %v7970, 0.0
        %v7991 = vmax.f32 %v7973, 0.0
        %v7992 = vsel %vm2496, %v7976, 0.0
        %7993 = vadd.xlane.f32.xlu0 %v7992
        %v7994 = vpop.xlane.xlu0 %7993
        %v7995 = vsel %vm2496, %v7977, 0.0
        %7996 = vadd.xlane.f32.xlu0 %v7995
        %v7997 = vpop.xlane.xlu0 %7996
        %v7998 = vsel %vm2496, %v7978, 0.0
        %7999 = vadd.xlane.f32.xlu0 %v7998
        %v8000 = vpop.xlane.xlu0 %7999
        %v8001 = vsel %vm2496, %v7979, 0.0
        %8002 = vadd.xlane.f32.xlu0 %v8001
        %v8003 = vpop.xlane.xlu0 %8002
        %v8004 = vsel %vm2496, %v7980, 0.0
        %8005 = vadd.xlane.f32.xlu0 %v8004
        %v8006 = vpop.xlane.xlu0 %8005
        %v8007 = vsel %vm2496, %v7981, 0.0
        %8008 = vadd.xlane.f32.xlu0 %v8007
        %v8009 = vpop.xlane.xlu0 %8008
        %v8010 = vsel %vm2496, %v7982, 0.0
        %8011 = vadd.xlane.f32.xlu0 %v8010
        %v8012 = vpop.xlane.xlu0 %8011
        %v8013 = vsel %vm2496, %v7983, 0.0
        %8014 = vadd.xlane.f32.xlu0 %v8013
        %v8015 = vpop.xlane.xlu0 %8014
        %v8016 = vsel %vm2496, %v7984, 0.0
        %8017 = vadd.xlane.f32.xlu0 %v8016
        %v8018 = vpop.xlane.xlu0 %8017
        %v8019 = vsel %vm2496, %v7985, 0.0
        %8020 = vadd.xlane.f32.xlu0 %v8019
        %v8021 = vpop.xlane.xlu0 %8020
        %v8022 = vsel %vm2496, %v7986, 0.0
        %8023 = vadd.xlane.f32.xlu0 %v8022
        %v8024 = vpop.xlane.xlu0 %8023
        %v8025 = vsel %vm2496, %v7987, 0.0
        %8026 = vadd.xlane.f32.xlu0 %v8025
        %v8027 = vpop.xlane.xlu0 %8026
        %v8028 = vsel %vm2496, %v7988, 0.0
        %8029 = vadd.xlane.f32.xlu0 %v8028
        %v8030 = vpop.xlane.xlu0 %8029
        %v8031 = vsel %vm2496, %v7989, 0.0
        %8032 = vadd.xlane.f32.xlu0 %v8031
        %v8033 = vpop.xlane.xlu0 %8032
        %v8034 = vsel %vm2496, %v7990, 0.0
        %8035 = vadd.xlane.f32.xlu0 %v8034
        %v8036 = vpop.xlane.xlu0 %8035
        %v8037 = vsel %vm2496, %v7991, 0.0
        %8038 = vadd.xlane.f32.xlu0 %v8037
        %v8039 = vpop.xlane.xlu0 %8038
        %8040 = vmatprep.subr.mxu0 0.0
        %8041 = vmatpush1.msra.mxu0 %v7994
        %8042 = vmatprep.subr.mxu0 0.0
        %8043 = vmatpush1.msra.mxu0 %v7997
        %8044 = vmatprep.subr.mxu0 0.0
        %8045 = vmatpush1.msra.mxu0 %v8000
        %8046 = vmatprep.subr.mxu0 0.0
        %8047 = vmatpush1.msra.mxu0 %v8003
        %8048 = vmatprep.subr.mxu0 0.0
        %8049 = vmatpush1.msra.mxu0 %v8006
        %8050 = vmatprep.subr.mxu0 0.0
        %8051 = vmatpush1.msra.mxu0 %v8009
        %8052 = vmatprep.subr.mxu0 0.0
        %8053 = vmatpush1.msra.mxu0 %v8012
        %8054 = vmatprep.subr.mxu0 0.0
        %8055 = vmatpush1.msra.mxu0 %v8015
        %8056 = vmatprep.subr.mxu0 0.0
        %8057 = vmatpush1.msra.mxu0 %v8018
        %8058 = vmatprep.subr.mxu0 0.0
        %8059 = vmatpush1.msra.mxu0 %v8021
        %8060 = vmatprep.subr.mxu0 0.0
        %8061 = vmatpush1.msra.mxu0 %v8024
        %8062 = vmatprep.subr.mxu0 0.0
        %8063 = vmatpush1.msra.mxu0 %v8027
        %8064 = vmatprep.subr.mxu0 0.0
        %8065 = vmatpush1.msra.mxu0 %v8030
        %8066 = vmatprep.subr.mxu0 0.0
        %8067 = vmatpush1.msra.mxu0 %v8033
        %8068 = vmatprep.subr.mxu0 0.0
        %8069 = vmatpush1.msra.mxu0 %v8036
        %8070 = vmatprep.subr.mxu0 0.0
        %8071 = vmatpush1.msra.mxu0 %v8039
        %8072 = vmatprep.subr.mxu0 0.0
        %8073 = vmatpush1.msra.mxu0 0.0
        %8074 = vmatprep.subr.mxu0 0.0
        %8075 = vmatpush1.msra.mxu0 0.0
        %8076 = vmatprep.subr.mxu0 0.0
        %8077 = vmatpush1.msra.mxu0 0.0
        %8078 = vmatprep.subr.mxu0 0.0
        %8079 = vmatpush1.msra.mxu0 0.0
        %8080 = vmatprep.subr.mxu0 0.0
        %8081 = vmatpush1.msra.mxu0 0.0
        %8082 = vmatprep.subr.mxu0 0.0
        %8083 = vmatpush1.msra.mxu0 0.0
        %8084 = vmatprep.subr.mxu0 0.0
        %8085 = vmatpush1.msra.mxu0 0.0
        %8086 = vmatprep.subr.mxu0 0.0
        %8087 = vmatpush1.msra.mxu0 0.0
        %8088 = vmatprep.subr.mxu0 0.0
        %8089 = vmatpush1.msra.mxu0 0.0
        %8090 = vmatprep.subr.mxu0 0.0
        %8091 = vmatpush1.msra.mxu0 0.0
        %8092 = vmatprep.subr.mxu0 0.0
        %8093 = vmatpush1.msra.mxu0 0.0
        %8094 = vmatprep.subr.mxu0 0.0
        %8095 = vmatpush1.msra.mxu0 0.0
        %8096 = vmatprep.subr.mxu0 0.0
        %8097 = vmatpush1.msra.mxu0 0.0
        %8098 = vmatprep.subr.mxu0 0.0
        %8099 = vmatpush1.msra.mxu0 0.0
        %8100 = vmatprep.subr.mxu0 0.0
        %8101 = vmatpush1.msra.mxu0 0.0
        %8102 = vmatprep.subr.mxu0 0.0
        %8103 = vmatpush1.msra.mxu0 0.0
        %8104 = vmatprep.mubr.f32.mxu0 0.0
        %8105 = vmatmul.mubr.f32.gmra.mrb[0].mxu0 %v5750
        %v8106 = vpop.f32.mrb[0].mxu0
        %v8107 = vadd.f32 0.0, %v8106
        %v8108 = vpop.f32.mrb[0].mxu0
        %8109 = vmatprep.mubr.f32.mxu0 0.0
        %8110 = vmatmul.mubr.f32.gmra.mrb[0].mxu0 %v5751
        %v8111 = vpop.f32.mrb[0].mxu0
        %v8112 = vadd.f32 0.0, %v8111
        %v8113 = vpop.f32.mrb[0].mxu0
        %8114 = vmatprep.mubr.f32.mxu0 0.0
        %8115 = vmatmul.mubr.f32.gmra.mrb[0].mxu0 %v5752
        %v8116 = vpop.f32.mrb[0].mxu0
        %v8117 = vadd.f32 0.0, %v8116
        %v8118 = vpop.f32.mrb[0].mxu0
        %8119 = vmatprep.mubr.f32.mxu0 0.0
        %8120 = vmatmul.mubr.f32.gmra.mrb[0].mxu0 %v5753
        %v8121 = vpop.f32.mrb[0].mxu0
        %v8122 = vadd.f32 0.0, %v8121
        %v8123 = vpop.f32.mrb[0].mxu0
        %8124 = vmatprep.mubr.f32.mxu0 0.0
        %8125 = vmatmul.mubr.f32.gmra.mrb[0].mxu0 %v5754
        %v8126 = vpop.f32.mrb[0].mxu0
        %v8127 = vadd.f32 0.0, %v8126
        %v8128 = vpop.f32.mrb[0].mxu0
        %8129 = vmatprep.mubr.f32.mxu0 0.0
        %8130 = vmatmul.mubr.f32.gmra.mrb[0].mxu0 %v5755
        %v8131 = vpop.f32.mrb[0].mxu0
        %v8132 = vadd.f32 0.0, %v8131
        %v8133 = vpop.f32.mrb[0].mxu0
        %8134 = vmatprep.mubr.f32.mxu0 0.0
        %8135 = vmatmul.mubr.f32.gmra.mrb[0].mxu0 %v5756
        %v8136 = vpop.f32.mrb[0].mxu0
        %v8137 = vadd.f32 0.0, %v8136
        %v8138 = vpop.f32.mrb[0].mxu0
        %8139 = vmatprep.mubr.f32.mxu0 0.0
        %8140 = vmatmul.mubr.f32.gmra.mrb[0].mxu0 %v5757
        %v8141 = vpop.f32.mrb[0].mxu0
        %v8142 = vadd.f32 0.0, %v8141
        %v8143 = vpop.f32.mrb[0].mxu0
        %8144 = vmatprep.mubr.f32.mxu0 0.0
        %8145 = vmatmul.mubr.f32.gmra.mrb[0].mxu0 %v5758
        %v8146 = vpop.f32.mrb[0].mxu0
        %v8147 = vadd.f32 0.0, %v8146
        %v8148 = vpop.f32.mrb[0].mxu0
        %8149 = vmatprep.mubr.f32.mxu0 0.0
        %8150 = vmatmul.mubr.f32.gmra.mrb[0].mxu0 %v5759
        %v8151 = vpop.f32.mrb[0].mxu0
        %v8152 = vadd.f32 0.0, %v8151
        %v8153 = vpop.f32.mrb[0].mxu0
        %8154 = vmatprep.mubr.f32.mxu0 0.0
        %8155 = vmatmul.mubr.f32.gmra.mrb[0].mxu0 %v5760
        %v8156 = vpop.f32.mrb[0].mxu0
        %v8157 = vadd.f32 0.0, %v8156
        %v8158 = vpop.f32.mrb[0].mxu0
        %8159 = vmatprep.mubr.f32.mxu0 0.0
        %8160 = vmatmul.mubr.f32.gmra.mrb[0].mxu0 %v5761
        %v8161 = vpop.f32.mrb[0].mxu0
        %v8162 = vadd.f32 0.0, %v8161
        %v8163 = vpop.f32.mrb[0].mxu0
        %8164 = vmatprep.mubr.f32.mxu0 0.0
        %8165 = vmatmul.mubr.f32.gmra.mrb[0].mxu0 %v5762
        %v8166 = vpop.f32.mrb[0].mxu0
        %v8167 = vadd.f32 0.0, %v8166
        %v8168 = vpop.f32.mrb[0].mxu0
        %8169 = vmatprep.mubr.f32.mxu0 0.0
        %8170 = vmatmul.mubr.f32.gmra.mrb[0].mxu0 %v5763
        %v8171 = vpop.f32.mrb[0].mxu0
        %v8172 = vadd.f32 0.0, %v8171
        %v8173 = vpop.f32.mrb[0].mxu0
        %8174 = vmatprep.mubr.f32.mxu0 0.0
        %8175 = vmatmul.mubr.f32.gmra.mrb[0].mxu0 %v5764
        %v8176 = vpop.f32.mrb[0].mxu0
        %v8177 = vadd.f32 0.0, %v8176
        %v8178 = vpop.f32.mrb[0].mxu0
        %8179 = vmatprep.mubr.f32.mxu0 0.0
        %8180 = vmatmul.mubr.f32.gmra.mrb[0].mxu0 %v5765
        %v8181 = vpop.f32.mrb[0].mxu0
        %v8182 = vadd.f32 0.0, %v8181
        %v8183 = vpop.f32.mrb[0].mxu0
        %8184 = vdwg.mxu0
        %8186 = vset.pattern.permute.xlu0 0
        %8187 = vperm.xlu0 %8186, %v8107
        %v8188 = vpop.permute.xlu0 %8187
        %8191 = vset.pattern.permute.xlu0 0
        %8192 = vperm.xlu0 %8191, %v8112
        %v8193 = vpop.permute.xlu0 %8192
        %8196 = vset.pattern.permute.xlu0 0
        %8197 = vperm.xlu0 %8196, %v8117
        %v8198 = vpop.permute.xlu0 %8197
        %8201 = vset.pattern.permute.xlu0 0
        %8202 = vperm.xlu0 %8201, %v8122
        %v8203 = vpop.permute.xlu0 %8202
        %8206 = vset.pattern.permute.xlu0 0
        %8207 = vperm.xlu0 %8206, %v8127
        %v8208 = vpop.permute.xlu0 %8207
        %8211 = vset.pattern.permute.xlu0 0
        %8212 = vperm.xlu0 %8211, %v8132
        %v8213 = vpop.permute.xlu0 %8212
        %8216 = vset.pattern.permute.xlu0 0
        %8217 = vperm.xlu0 %8216, %v8137
        %v8218 = vpop.permute.xlu0 %8217
        %8221 = vset.pattern.permute.xlu0 0
        %8222 = vperm.xlu0 %8221, %v8142
        %v8223 = vpop.permute.xlu0 %8222
        %8226 = vset.pattern.permute.xlu0 0
        %8227 = vperm.xlu0 %8226, %v8147
        %v8228 = vpop.permute.xlu0 %8227
        %8231 = vset.pattern.permute.xlu0 0
        %8232 = vperm.xlu0 %8231, %v8152
        %v8233 = vpop.permute.xlu0 %8232
        %8236 = vset.pattern.permute.xlu0 0
        %8237 = vperm.xlu0 %8236, %v8157
        %v8238 = vpop.permute.xlu0 %8237
        %8241 = vset.pattern.permute.xlu0 0
        %8242 = vperm.xlu0 %8241, %v8162
        %v8243 = vpop.permute.xlu0 %8242
        %8246 = vset.pattern.permute.xlu0 0
        %8247 = vperm.xlu0 %8246, %v8167
        %v8248 = vpop.permute.xlu0 %8247
        %8251 = vset.pattern.permute.xlu0 0
        %8252 = vperm.xlu0 %8251, %v8172
        %v8253 = vpop.permute.xlu0 %8252
        %8256 = vset.pattern.permute.xlu0 0
        %8257 = vperm.xlu0 %8256, %v8177
        %v8258 = vpop.permute.xlu0 %8257
        %8261 = vset.pattern.permute.xlu0 0
        %8262 = vperm.xlu0 %8261, %v8182
        %v8263 = vpop.permute.xlu0 %8262
        %v8265 = vsub.f32 %v7976, %v8188
        %v8266 = vsub.f32 %v7977, %v8193
        %v8267 = vsub.f32 %v7978, %v8198
        %v8268 = vsub.f32 %v7979, %v8203
        %v8269 = vsub.f32 %v7980, %v8208
        %v8270 = vsub.f32 %v7981, %v8213
        %v8271 = vsub.f32 %v7982, %v8218
        %v8272 = vsub.f32 %v7983, %v8223
        %v8273 = vsub.f32 %v7984, %v8228
        %v8274 = vsub.f32 %v7985, %v8233
        %v8275 = vsub.f32 %v7986, %v8238
        %v8276 = vsub.f32 %v7987, %v8243
        %v8277 = vsub.f32 %v7988, %v8248
        %v8278 = vsub.f32 %v7989, %v8253
        %v8279 = vsub.f32 %v7990, %v8258
        %v8280 = vsub.f32 %v7991, %v8263
        %v8281 = vmul.f32 %v8265, %v8265
        %v8282 = vmul.f32 %v8266, %v8266
        %v8283 = vmul.f32 %v8267, %v8267
        %v8284 = vmul.f32 %v8268, %v8268
        %v8285 = vmul.f32 %v8269, %v8269
        %v8286 = vmul.f32 %v8270, %v8270
        %v8287 = vmul.f32 %v8271, %v8271
        %v8288 = vmul.f32 %v8272, %v8272
        %v8289 = vmul.f32 %v8273, %v8273
        %v8290 = vmul.f32 %v8274, %v8274
        %v8291 = vmul.f32 %v8275, %v8275
        %v8292 = vmul.f32 %v8276, %v8276
        %v8293 = vmul.f32 %v8277, %v8277
        %v8294 = vmul.f32 %v8278, %v8278
        %v8295 = vmul.f32 %v8279, %v8279
        %v8296 = vmul.f32 %v8280, %v8280
        %v8297 = vsel %vm2496, %v8281, 0.0
        %8298 = vadd.xlane.f32.xlu0 %v8297
        %v8299 = vpop.xlane.xlu0 %8298
        %v8300 = vsel %vm2496, %v8282, 0.0
        %8301 = vadd.xlane.f32.xlu0 %v8300
        %v8302 = vpop.xlane.xlu0 %8301
        %v8303 = vsel %vm2496, %v8283, 0.0
        %8304 = vadd.xlane.f32.xlu0 %v8303
        %v8305 = vpop.xlane.xlu0 %8304
        %v8306 = vsel %vm2496, %v8284, 0.0
        %8307 = vadd.xlane.f32.xlu0 %v8306
        %v8308 = vpop.xlane.xlu0 %8307
        %v8309 = vsel %vm2496, %v8285, 0.0
        %8310 = vadd.xlane.f32.xlu0 %v8309
        %v8311 = vpop.xlane.xlu0 %8310
        %v8312 = vsel %vm2496, %v8286, 0.0
        %8313 = vadd.xlane.f32.xlu0 %v8312
        %v8314 = vpop.xlane.xlu0 %8313
        %v8315 = vsel %vm2496, %v8287, 0.0
        %8316 = vadd.xlane.f32.xlu0 %v8315
        %v8317 = vpop.xlane.xlu0 %8316
        %v8318 = vsel %vm2496, %v8288, 0.0
        %8319 = vadd.xlane.f32.xlu0 %v8318
        %v8320 = vpop.xlane.xlu0 %8319
        %v8321 = vsel %vm2496, %v8289, 0.0
        %8322 = vadd.xlane.f32.xlu0 %v8321
        %v8323 = vpop.xlane.xlu0 %8322
        %v8324 = vsel %vm2496, %v8290, 0.0
        %8325 = vadd.xlane.f32.xlu0 %v8324
        %v8326 = vpop.xlane.xlu0 %8325
        %v8327 = vsel %vm2496, %v8291, 0.0
        %8328 = vadd.xlane.f32.xlu0 %v8327
        %v8329 = vpop.xlane.xlu0 %8328
        %v8330 = vsel %vm2496, %v8292, 0.0
        %8331 = vadd.xlane.f32.xlu0 %v8330
        %v8332 = vpop.xlane.xlu0 %8331
        %v8333 = vsel %vm2496, %v8293, 0.0
        %8334 = vadd.xlane.f32.xlu0 %v8333
        %v8335 = vpop.xlane.xlu0 %8334
        %v8336 = vsel %vm2496, %v8294, 0.0
        %8337 = vadd.xlane.f32.xlu0 %v8336
        %v8338 = vpop.xlane.xlu0 %8337
        %v8339 = vsel %vm2496, %v8295, 0.0
        %8340 = vadd.xlane.f32.xlu0 %v8339
        %v8341 = vpop.xlane.xlu0 %8340
        %v8342 = vsel %vm2496, %v8296, 0.0
        %8343 = vadd.xlane.f32.xlu0 %v8342
        %v8344 = vpop.xlane.xlu0 %8343
        %8345 = vmatprep.subr.mxu0 0.0
        %8346 = vmatpush1.msra.mxu0 %v8299
        %8347 = vmatprep.subr.mxu0 0.0
        %8348 = vmatpush1.msra.mxu0 %v8302
        %8349 = vmatprep.subr.mxu0 0.0
        %8350 = vmatpush1.msra.mxu0 %v8305
        %8351 = vmatprep.subr.mxu0 0.0
        %8352 = vmatpush1.msra.mxu0 %v8308
        %8353 = vmatprep.subr.mxu0 0.0
        %8354 = vmatpush1.msra.mxu0 %v8311
        %8355 = vmatprep.subr.mxu0 0.0
        %8356 = vmatpush1.msra.mxu0 %v8314
        %8357 = vmatprep.subr.mxu0 0.0
        %8358 = vmatpush1.msra.mxu0 %v8317
        %8359 = vmatprep.subr.mxu0 0.0
        %8360 = vmatpush1.msra.mxu0 %v8320
        %8361 = vmatprep.subr.mxu0 0.0
        %8362 = vmatpush1.msra.mxu0 %v8323
        %8363 = vmatprep.subr.mxu0 0.0
        %8364 = vmatpush1.msra.mxu0 %v8326
        %8365 = vmatprep.subr.mxu0 0.0
        %8366 = vmatpush1.msra.mxu0 %v8329
        %8367 = vmatprep.subr.mxu0 0.0
        %8368 = vmatpush1.msra.mxu0 %v8332
        %8369 = vmatprep.subr.mxu0 0.0
        %8370 = vmatpush1.msra.mxu0 %v8335
        %8371 = vmatprep.subr.mxu0 0.0
        %8372 = vmatpush1.msra.mxu0 %v8338
        %8373 = vmatprep.subr.mxu0 0.0
        %8374 = vmatpush1.msra.mxu0 %v8341
        %8375 = vmatprep.subr.mxu0 0.0
        %8376 = vmatpush1.msra.mxu0 %v8344
        %8377 = vmatprep.subr.mxu0 0.0
        %8378 = vmatpush1.msra.mxu0 0.0
        %8379 = vmatprep.subr.mxu0 0.0
        %8380 = vmatpush1.msra.mxu0 0.0
        %8381 = vmatprep.subr.mxu0 0.0
        %8382 = vmatpush1.msra.mxu0 0.0
        %8383 = vmatprep.subr.mxu0 0.0
        %8384 = vmatpush1.msra.mxu0 0.0
        %8385 = vmatprep.subr.mxu0 0.0
        %8386 = vmatpush1.msra.mxu0 0.0
        %8387 = vmatprep.subr.mxu0 0.0
        %8388 = vmatpush1.msra.mxu0 0.0
        %8389 = vmatprep.subr.mxu0 0.0
        %8390 = vmatpush1.msra.mxu0 0.0
        %8391 = vmatprep.subr.mxu0 0.0
        %8392 = vmatpush1.msra.mxu0 0.0
        %8393 = vmatprep.subr.mxu0 0.0
        %8394 = vmatpush1.msra.mxu0 0.0
        %8395 = vmatprep.subr.mxu0 0.0
        %8396 = vmatpush1.msra.mxu0 0.0
        %8397 = vmatprep.subr.mxu0 0.0
        %8398 = vmatpush1.msra.mxu0 0.0
        %8399 = vmatprep.subr.mxu0 0.0
        %8400 = vmatpush1.msra.mxu0 0.0
        %8401 = vmatprep.subr.mxu0 0.0
        %8402 = vmatpush1.msra.mxu0 0.0
        %8403 = vmatprep.subr.mxu0 0.0
        %8404 = vmatpush1.msra.mxu0 0.0
        %8405 = vmatprep.subr.mxu0 0.0
        %8406 = vmatpush1.msra.mxu0 0.0
        %8407 = vmatprep.subr.mxu0 0.0
        %8408 = vmatpush1.msra.mxu0 0.0
        %8409 = vmatprep.mubr.f32.mxu0 0.0
        %8410 = vmatmul.mubr.f32.gmra.mrb[0].mxu0 %v5750
        %v8411 = vpop.f32.mrb[0].mxu0
        %v8412 = vadd.f32 1e-05, %v8411
        %v8413 = vpop.f32.mrb[0].mxu0
        %8414 = vmatprep.mubr.f32.mxu0 0.0
        %8415 = vmatmul.mubr.f32.gmra.mrb[0].mxu0 %v5751
        %v8416 = vpop.f32.mrb[0].mxu0
        %v8417 = vadd.f32 1e-05, %v8416
        %v8418 = vpop.f32.mrb[0].mxu0
        %8419 = vmatprep.mubr.f32.mxu0 0.0
        %8420 = vmatmul.mubr.f32.gmra.mrb[0].mxu0 %v5752
        %v8421 = vpop.f32.mrb[0].mxu0
        %v8422 = vadd.f32 1e-05, %v8421
        %v8423 = vpop.f32.mrb[0].mxu0
        %8424 = vmatprep.mubr.f32.mxu0 0.0
        %8425 = vmatmul.mubr.f32.gmra.mrb[0].mxu0 %v5753
        %v8426 = vpop.f32.mrb[0].mxu0
        %v8427 = vadd.f32 1e-05, %v8426
        %v8428 = vpop.f32.mrb[0].mxu0
        %8429 = vmatprep.mubr.f32.mxu0 0.0
        %8430 = vmatmul.mubr.f32.gmra.mrb[0].mxu0 %v5754
        %v8431 = vpop.f32.mrb[0].mxu0
        %v8432 = vadd.f32 1e-05, %v8431
        %v8433 = vpop.f32.mrb[0].mxu0
        %8434 = vmatprep.mubr.f32.mxu0 0.0
        %8435 = vmatmul.mubr.f32.gmra.mrb[0].mxu0 %v5755
        %v8436 = vpop.f32.mrb[0].mxu0
        %v8437 = vadd.f32 1e-05, %v8436
        %v8438 = vpop.f32.mrb[0].mxu0
        %8439 = vmatprep.mubr.f32.mxu0 0.0
        %8440 = vmatmul.mubr.f32.gmra.mrb[0].mxu0 %v5756
        %v8441 = vpop.f32.mrb[0].mxu0
        %v8442 = vadd.f32 1e-05, %v8441
        %v8443 = vpop.f32.mrb[0].mxu0
        %8444 = vmatprep.mubr.f32.mxu0 0.0
        %8445 = vmatmul.mubr.f32.gmra.mrb[0].mxu0 %v5757
        %v8446 = vpop.f32.mrb[0].mxu0
        %v8447 = vadd.f32 1e-05, %v8446
        %v8448 = vpop.f32.mrb[0].mxu0
        %8449 = vmatprep.mubr.f32.mxu0 0.0
        %8450 = vmatmul.mubr.f32.gmra.mrb[0].mxu0 %v5758
        %v8451 = vpop.f32.mrb[0].mxu0
        %v8452 = vadd.f32 1e-05, %v8451
        %v8453 = vpop.f32.mrb[0].mxu0
        %8454 = vmatprep.mubr.f32.mxu0 0.0
        %8455 = vmatmul.mubr.f32.gmra.mrb[0].mxu0 %v5759
        %v8456 = vpop.f32.mrb[0].mxu0
        %v8457 = vadd.f32 1e-05, %v8456
        %v8458 = vpop.f32.mrb[0].mxu0
        %8459 = vmatprep.mubr.f32.mxu0 0.0
        %8460 = vmatmul.mubr.f32.gmra.mrb[0].mxu0 %v5760
        %v8461 = vpop.f32.mrb[0].mxu0
        %v8462 = vadd.f32 1e-05, %v8461
        %v8463 = vpop.f32.mrb[0].mxu0
        %8464 = vmatprep.mubr.f32.mxu0 0.0
        %8465 = vmatmul.mubr.f32.gmra.mrb[0].mxu0 %v5761
        %v8466 = vpop.f32.mrb[0].mxu0
        %v8467 = vadd.f32 1e-05, %v8466
        %v8468 = vpop.f32.mrb[0].mxu0
        %8469 = vmatprep.mubr.f32.mxu0 0.0
        %8470 = vmatmul.mubr.f32.gmra.mrb[0].mxu0 %v5762
        %v8471 = vpop.f32.mrb[0].mxu0
        %v8472 = vadd.f32 1e-05, %v8471
        %v8473 = vpop.f32.mrb[0].mxu0
        %8474 = vmatprep.mubr.f32.mxu0 0.0
        %8475 = vmatmul.mubr.f32.gmra.mrb[0].mxu0 %v5763
        %v8476 = vpop.f32.mrb[0].mxu0
        %v8477 = vadd.f32 1e-05, %v8476
        %v8478 = vpop.f32.mrb[0].mxu0
        %8479 = vmatprep.mubr.f32.mxu0 0.0
        %8480 = vmatmul.mubr.f32.gmra.mrb[0].mxu0 %v5764
        %v8481 = vpop.f32.mrb[0].mxu0
        %v8482 = vadd.f32 1e-05, %v8481
        %v8483 = vpop.f32.mrb[0].mxu0
        %8484 = vmatprep.mubr.f32.mxu0 0.0
        %8485 = vmatmul.mubr.f32.gmra.mrb[0].mxu0 %v5765
        %v8486 = vpop.f32.mrb[0].mxu0
        %v8487 = vadd.f32 1e-05, %v8486
        %v8488 = vpop.f32.mrb[0].mxu0
        %8489 = vdwg.mxu0
        %v8490 = vrsqrt.pop %v8412
        %v8491 = vrsqrt.pop %v8417
        %v8492 = vrsqrt.pop %v8422
        %v8493 = vrsqrt.pop %v8427
        %v8494 = vrsqrt.pop %v8432
        %v8495 = vrsqrt.pop %v8437
        %v8496 = vrsqrt.pop %v8442
        %v8497 = vrsqrt.pop %v8447
        %v8498 = vrsqrt.pop %v8452
        %v8499 = vrsqrt.pop %v8457
        %v8500 = vrsqrt.pop %v8462
        %v8501 = vrsqrt.pop %v8467
        %v8502 = vrsqrt.pop %v8472
        %v8503 = vrsqrt.pop %v8477
        %v8504 = vrsqrt.pop %v8482
        %v8505 = vrsqrt.pop %v8487
        %8507 = vset.pattern.permute.xlu0 0
        %8508 = vperm.xlu0 %8507, %v8490
        %v8509 = vpop.permute.xlu0 %8508
        %8512 = vset.pattern.permute.xlu0 0
        %8513 = vperm.xlu0 %8512, %v8491
        %v8514 = vpop.permute.xlu0 %8513
        %8517 = vset.pattern.permute.xlu0 0
        %8518 = vperm.xlu0 %8517, %v8492
        %v8519 = vpop.permute.xlu0 %8518
        %8522 = vset.pattern.permute.xlu0 0
        %8523 = vperm.xlu0 %8522, %v8493
        %v8524 = vpop.permute.xlu0 %8523
        %8527 = vset.pattern.permute.xlu0 0
        %8528 = vperm.xlu0 %8527, %v8494
        %v8529 = vpop.permute.xlu0 %8528
        %8532 = vset.pattern.permute.xlu0 0
        %8533 = vperm.xlu0 %8532, %v8495
        %v8534 = vpop.permute.xlu0 %8533
        %8537 = vset.pattern.permute.xlu0 0
        %8538 = vperm.xlu0 %8537, %v8496
        %v8539 = vpop.permute.xlu0 %8538
        %8542 = vset.pattern.permute.xlu0 0
        %8543 = vperm.xlu0 %8542, %v8497
        %v8544 = vpop.permute.xlu0 %8543
        %8547 = vset.pattern.permute.xlu0 0
        %8548 = vperm.xlu0 %8547, %v8498
        %v8549 = vpop.permute.xlu0 %8548
        %8552 = vset.pattern.permute.xlu0 0
        %8553 = vperm.xlu0 %8552, %v8499
        %v8554 = vpop.permute.xlu0 %8553
        %8557 = vset.pattern.permute.xlu0 0
        %8558 = vperm.xlu0 %8557, %v8500
        %v8559 = vpop.permute.xlu0 %8558
        %8562 = vset.pattern.permute.xlu0 0
        %8563 = vperm.xlu0 %8562, %v8501
        %v8564 = vpop.permute.xlu0 %8563
        %8567 = vset.pattern.permute.xlu0 0
        %8568 = vperm.xlu0 %8567, %v8502
        %v8569 = vpop.permute.xlu0 %8568
        %8572 = vset.pattern.permute.xlu0 0
        %8573 = vperm.xlu0 %8572, %v8503
        %v8574 = vpop.permute.xlu0 %8573
        %8577 = vset.pattern.permute.xlu0 0
        %8578 = vperm.xlu0 %8577, %v8504
        %v8579 = vpop.permute.xlu0 %8578
        %8582 = vset.pattern.permute.xlu0 0
        %8583 = vperm.xlu0 %8582, %v8505
        %v8584 = vpop.permute.xlu0 %8583
        %v8586 = vmul.f32 %v8265, %v8509
        %v8587 = vmul.f32 %v8266, %v8514
        %v8588 = vmul.f32 %v8267, %v8519
        %v8589 = vmul.f32 %v8268, %v8524
        %v8590 = vmul.f32 %v8269, %v8529
        %v8591 = vmul.f32 %v8270, %v8534
        %v8592 = vmul.f32 %v8271, %v8539
        %v8593 = vmul.f32 %v8272, %v8544
        %v8594 = vmul.f32 %v8273, %v8549
        %v8595 = vmul.f32 %v8274, %v8554
        %v8596 = vmul.f32 %v8275, %v8559
        %v8597 = vmul.f32 %v8276, %v8564
        %v8598 = vmul.f32 %v8277, %v8569
        %v8599 = vmul.f32 %v8278, %v8574
        %v8600 = vmul.f32 %v8279, %v8579
        %v8601 = vmul.f32 %v8280, %v8584
        %v8602 = vld [vmem:[%s63] sm:$0xff]
        %v8603 = vld [vmem:[%s63 + $0x8] sm:$0xff]
        %v8604 = vld [vmem:[%s63 + $0x10] sm:$0xff]
        %v8605 = vld [vmem:[%s63 + $0x18] sm:$0xff]
        %v8606 = vld [vmem:[%s63 + $0x20] sm:$0xff]
        %v8607 = vld [vmem:[%s63 + $0x28] sm:$0xff]
        %v8608 = vld [vmem:[%s63 + $0x30] sm:$0xff]
        %v8609 = vld [vmem:[%s63 + $0x38] sm:$0xff]
        %v8610 = vld [vmem:[%s63 + $0x40] sm:$0xff]
        %v8611 = vld [vmem:[%s63 + $0x48] sm:$0xff]
        %v8612 = vld [vmem:[%s63 + $0x50] sm:$0xff]
        %v8613 = vld [vmem:[%s63 + $0x58] sm:$0xff]
        %v8614 = vld [vmem:[%s63 + $0x60] sm:$0xff]
        %v8615 = vld [vmem:[%s63 + $0x68] sm:$0xff]
        %v8616 = vld [vmem:[%s63 + $0x70] sm:$0xff]
        %v8617 = vld [vmem:[%s63 + $0x78] sm:$0xff]
        %v8618 = vmul.f32 %v8586, %v8602
        %v8619 = vmul.f32 %v8587, %v8603
        %v8620 = vmul.f32 %v8588, %v8604
        %v8621 = vmul.f32 %v8589, %v8605
        %v8622 = vmul.f32 %v8590, %v8606
        %v8623 = vmul.f32 %v8591, %v8607
        %v8624 = vmul.f32 %v8592, %v8608
        %v8625 = vmul.f32 %v8593, %v8609
        %v8626 = vmul.f32 %v8594, %v8610
        %v8627 = vmul.f32 %v8595, %v8611
        %v8628 = vmul.f32 %v8596, %v8612
        %v8629 = vmul.f32 %v8597, %v8613
        %v8630 = vmul.f32 %v8598, %v8614
        %v8631 = vmul.f32 %v8599, %v8615
        %v8632 = vmul.f32 %v8600, %v8616
        %v8633 = vmul.f32 %v8601, %v8617
        %v8634 = vld [vmem:[%s65] sm:$0xff]
        %v8635 = vld [vmem:[%s65 + $0x8] sm:$0xff]
        %v8636 = vld [vmem:[%s65 + $0x10] sm:$0xff]
        %v8637 = vld [vmem:[%s65 + $0x18] sm:$0xff]
        %v8638 = vld [vmem:[%s65 + $0x20] sm:$0xff]
        %v8639 = vld [vmem:[%s65 + $0x28] sm:$0xff]
        %v8640 = vld [vmem:[%s65 + $0x30] sm:$0xff]
        %v8641 = vld [vmem:[%s65 + $0x38] sm:$0xff]
        %v8642 = vld [vmem:[%s65 + $0x40] sm:$0xff]
        %v8643 = vld [vmem:[%s65 + $0x48] sm:$0xff]
        %v8644 = vld [vmem:[%s65 + $0x50] sm:$0xff]
        %v8645 = vld [vmem:[%s65 + $0x58] sm:$0xff]
        %v8646 = vld [vmem:[%s65 + $0x60] sm:$0xff]
        %v8647 = vld [vmem:[%s65 + $0x68] sm:$0xff]
        %v8648 = vld [vmem:[%s65 + $0x70] sm:$0xff]
        %v8649 = vld [vmem:[%s65 + $0x78] sm:$0xff]
        %v8650 = vadd.f32 %v8618, %v8634
        %v8651 = vadd.f32 %v8619, %v8635
        %v8652 = vadd.f32 %v8620, %v8636
        %v8653 = vadd.f32 %v8621, %v8637
        %v8654 = vadd.f32 %v8622, %v8638
        %v8655 = vadd.f32 %v8623, %v8639
        %v8656 = vadd.f32 %v8624, %v8640
        %v8657 = vadd.f32 %v8625, %v8641
        %v8658 = vadd.f32 %v8626, %v8642
        %v8659 = vadd.f32 %v8627, %v8643
        %v8660 = vadd.f32 %v8628, %v8644
        %v8661 = vadd.f32 %v8629, %v8645
        %v8662 = vadd.f32 %v8630, %v8646
        %v8663 = vadd.f32 %v8631, %v8647
        %v8664 = vadd.f32 %v8632, %v8648
        %v8665 = vadd.f32 %v8633, %v8649
        %v8666 = vpack.c.bf16 %v8651, %v8650
        %v8667 = vpack.c.bf16 %v8653, %v8652
        %v8668 = vpack.c.bf16 %v8655, %v8654
        %v8669 = vpack.c.bf16 %v8657, %v8656
        %v8670 = vpack.c.bf16 %v8659, %v8658
        %v8671 = vpack.c.bf16 %v8661, %v8660
        %v8672 = vpack.c.bf16 %v8663, %v8662
        %v8673 = vpack.c.bf16 %v8665, %v8664
        %v8674 = vld [vmem:[%s73] sm:$0xf]
        %v8675 = vld [vmem:[%s73 + $0x4] sm:$0xf]
        %v8676 = vld [vmem:[%s73 + $0x8] sm:$0xf]
        %v8677 = vld [vmem:[%s73 + $0xc] sm:$0xf]
        %v8682 = vunpack.c.l.b16 %v8674
        %v8683 = vunpack.c.l.b16 %v8675
        %v8684 = vunpack.c.l.b16 %v8676
        %v8685 = vunpack.c.l.b16 %v8677
        %v8686 = vpack.c.b16 %v8683, %v8682
        %v8687 = vpack.c.b16 %v8685, %v8684
        %v8691 = vsel %vm2496, %v8666, 0
        %v8694 = vsel %vm2496, %v8667, 0
        %v8697 = vsel %vm2496, %v8668, 0
        %v8700 = vsel %vm2496, %v8669, 0
        %v8703 = vsel %vm2496, %v8670, 0
        %v8706 = vsel %vm2496, %v8671, 0
        %v8709 = vsel %vm2496, %v8672, 0
        %v8712 = vsel %vm2496, %v8673, 0
        %8714 = vmatprep.subr.bf16.mxu0 0
        %8715 = vmatpush1.bf16.msra.mxu0 %v8686
        %8716 = vmatprep.subr.bf16.mxu0 0
        %8717 = vmatpush1.bf16.msra.mxu0 %v8687
        %8718 = vmatprep.subr.bf16.mxu0 0
        %8719 = vmatpush1.bf16.msra.mxu0 0
        %8720 = vmatprep.subr.bf16.mxu0 0
        %8721 = vmatpush1.bf16.msra.mxu0 0
        %8722 = vmatprep.subr.bf16.mxu0 0
        %8723 = vmatpush1.bf16.msra.mxu0 0
        %8724 = vmatprep.subr.bf16.mxu0 0
        %8725 = vmatpush1.bf16.msra.mxu0 0
        %8726 = vmatprep.subr.bf16.mxu0 0
        %8727 = vmatpush1.bf16.msra.mxu0 0
        %8728 = vmatprep.subr.bf16.mxu0 0
        %8729 = vmatpush1.bf16.msra.mxu0 0
        %8730 = vmatprep.subr.bf16.mxu0 0
        %8731 = vmatpush1.bf16.msra.mxu0 0
        %8732 = vmatprep.subr.bf16.mxu0 0
        %8733 = vmatpush1.bf16.msra.mxu0 0
        %8734 = vmatprep.subr.bf16.mxu0 0
        %8735 = vmatpush1.bf16.msra.mxu0 0
        %8736 = vmatprep.subr.bf16.mxu0 0
        %8737 = vmatpush1.bf16.msra.mxu0 0
        %8738 = vmatprep.subr.bf16.mxu0 0
        %8739 = vmatpush1.bf16.msra.mxu0 0
        %8740 = vmatprep.subr.bf16.mxu0 0
        %8741 = vmatpush1.bf16.msra.mxu0 0
        %8742 = vmatprep.subr.bf16.mxu0 0
        %8743 = vmatpush1.bf16.msra.mxu0 0
        %8744 = vmatprep.subr.bf16.mxu0 0
        %8745 = vmatpush1.bf16.msra.mxu0 0
        %8746 = vmatprep.mubr.bf16.mxu0 0
        %8747 = vmatmul.mubr.bf16.gmra.mrb[0].mxu0 %v8691
        %v8748 = vpop.f32.mrb[0].mxu0
        %v8749 = vadd.f32 0.0, %v8748
        %v8750 = vpop.f32.mrb[0].mxu0
        %v8751 = vpop.f32.mrb[0].mxu0
        %v8752 = vadd.f32 0.0, %v8751
        %v8753 = vpop.f32.mrb[0].mxu0
        %8754 = vmatprep.mubr.bf16.mxu0 0
        %8755 = vmatmul.mubr.bf16.gmra.mrb[0].mxu0 %v8694
        %v8756 = vpop.f32.mrb[0].mxu0
        %v8757 = vadd.f32 0.0, %v8756
        %v8758 = vpop.f32.mrb[0].mxu0
        %v8759 = vpop.f32.mrb[0].mxu0
        %v8760 = vadd.f32 0.0, %v8759
        %v8761 = vpop.f32.mrb[0].mxu0
        %8762 = vmatprep.mubr.bf16.mxu0 0
        %8763 = vmatmul.mubr.bf16.gmra.mrb[0].mxu0 %v8697
        %v8764 = vpop.f32.mrb[0].mxu0
        %v8765 = vadd.f32 0.0, %v8764
        %v8766 = vpop.f32.mrb[0].mxu0
        %v8767 = vpop.f32.mrb[0].mxu0
        %v8768 = vadd.f32 0.0, %v8767
        %v8769 = vpop.f32.mrb[0].mxu0
        %8770 = vmatprep.mubr.bf16.mxu0 0
        %8771 = vmatmul.mubr.bf16.gmra.mrb[0].mxu0 %v8700
        %v8772 = vpop.f32.mrb[0].mxu0
        %v8773 = vadd.f32 0.0, %v8772
        %v8774 = vpop.f32.mrb[0].mxu0
        %v8775 = vpop.f32.mrb[0].mxu0
        %v8776 = vadd.f32 0.0, %v8775
        %v8777 = vpop.f32.mrb[0].mxu0
        %8778 = vmatprep.mubr.bf16.mxu0 0
        %8779 = vmatmul.mubr.bf16.gmra.mrb[0].mxu0 %v8703
        %v8780 = vpop.f32.mrb[0].mxu0
        %v8781 = vadd.f32 0.0, %v8780
        %v8782 = vpop.f32.mrb[0].mxu0
        %v8783 = vpop.f32.mrb[0].mxu0
        %v8784 = vadd.f32 0.0, %v8783
        %v8785 = vpop.f32.mrb[0].mxu0
        %8786 = vmatprep.mubr.bf16.mxu0 0
        %8787 = vmatmul.mubr.bf16.gmra.mrb[0].mxu0 %v8706
        %v8788 = vpop.f32.mrb[0].mxu0
        %v8789 = vadd.f32 0.0, %v8788
        %v8790 = vpop.f32.mrb[0].mxu0
        %v8791 = vpop.f32.mrb[0].mxu0
        %v8792 = vadd.f32 0.0, %v8791
        %v8793 = vpop.f32.mrb[0].mxu0
        %8794 = vmatprep.mubr.bf16.mxu0 0
        %8795 = vmatmul.mubr.bf16.gmra.mrb[0].mxu0 %v8709
        %v8796 = vpop.f32.mrb[0].mxu0
        %v8797 = vadd.f32 0.0, %v8796
        %v8798 = vpop.f32.mrb[0].mxu0
        %v8799 = vpop.f32.mrb[0].mxu0
        %v8800 = vadd.f32 0.0, %v8799
        %v8801 = vpop.f32.mrb[0].mxu0
        %8802 = vmatprep.mubr.bf16.mxu0 0
        %8803 = vmatmul.mubr.bf16.gmra.mrb[0].mxu0 %v8712
        %v8804 = vpop.f32.mrb[0].mxu0
        %v8805 = vadd.f32 0.0, %v8804
        %v8806 = vpop.f32.mrb[0].mxu0
        %v8807 = vpop.f32.mrb[0].mxu0
        %v8808 = vadd.f32 0.0, %v8807
        %v8809 = vpop.f32.mrb[0].mxu0
        %8810 = vdwg.mxu0
        %v8811 = vld [vmem:[%s75] sm:$0xf]
        %v8812 = vld [vmem:[%s75 + $0x4] sm:$0xf]
        %v8813 = vld [vmem:[%s75 + $0x8] sm:$0xf]
        %v8814 = vld [vmem:[%s75 + $0xc] sm:$0xf]
        %v8819 = vunpack.c.l.b16 %v8811
        %v8820 = vunpack.c.l.b16 %v8812
        %v8821 = vunpack.c.l.b16 %v8813
        %v8822 = vunpack.c.l.b16 %v8814
        %v8823 = vpack.c.b16 %v8820, %v8819
        %v8824 = vpack.c.b16 %v8822, %v8821
        %8827 = vmatprep.subr.bf16.mxu0 0
        %8828 = vmatpush1.bf16.msra.mxu0 %v8823
        %8829 = vmatprep.subr.bf16.mxu0 0
        %8830 = vmatpush1.bf16.msra.mxu0 %v8824
        %8831 = vmatprep.subr.bf16.mxu0 0
        %8832 = vmatpush1.bf16.msra.mxu0 0
        %8833 = vmatprep.subr.bf16.mxu0 0
        %8834 = vmatpush1.bf16.msra.mxu0 0
        %8835 = vmatprep.subr.bf16.mxu0 0
        %8836 = vmatpush1.bf16.msra.mxu0 0
        %8837 = vmatprep.subr.bf16.mxu0 0
        %8838 = vmatpush1.bf16.msra.mxu0 0
        %8839 = vmatprep.subr.bf16.mxu0 0
        %8840 = vmatpush1.bf16.msra.mxu0 0
        %8841 = vmatprep.subr.bf16.mxu0 0
        %8842 = vmatpush1.bf16.msra.mxu0 0
        %8843 = vmatprep.subr.bf16.mxu0 0
        %8844 = vmatpush1.bf16.msra.mxu0 0
        %8845 = vmatprep.subr.bf16.mxu0 0
        %8846 = vmatpush1.bf16.msra.mxu0 0
        %8847 = vmatprep.subr.bf16.mxu0 0
        %8848 = vmatpush1.bf16.msra.mxu0 0
        %8849 = vmatprep.subr.bf16.mxu0 0
        %8850 = vmatpush1.bf16.msra.mxu0 0
        %8851 = vmatprep.subr.bf16.mxu0 0
        %8852 = vmatpush1.bf16.msra.mxu0 0
        %8853 = vmatprep.subr.bf16.mxu0 0
        %8854 = vmatpush1.bf16.msra.mxu0 0
        %8855 = vmatprep.subr.bf16.mxu0 0
        %8856 = vmatpush1.bf16.msra.mxu0 0
        %8857 = vmatprep.subr.bf16.mxu0 0
        %8858 = vmatpush1.bf16.msra.mxu0 0
        %8859 = vmatprep.mubr.bf16.mxu0 0
        %8860 = vmatmul.mubr.bf16.gmra.mrb[0].mxu0 %v8691
        %v8861 = vpop.f32.mrb[0].mxu0
        %v8862 = vadd.f32 0.0, %v8861
        %v8863 = vpop.f32.mrb[0].mxu0
        %v8864 = vpop.f32.mrb[0].mxu0
        %v8865 = vadd.f32 0.0, %v8864
        %v8866 = vpop.f32.mrb[0].mxu0
        %8867 = vmatprep.mubr.bf16.mxu0 0
        %8868 = vmatmul.mubr.bf16.gmra.mrb[0].mxu0 %v8694
        %v8869 = vpop.f32.mrb[0].mxu0
        %v8870 = vadd.f32 0.0, %v8869
        %v8871 = vpop.f32.mrb[0].mxu0
        %v8872 = vpop.f32.mrb[0].mxu0
        %v8873 = vadd.f32 0.0, %v8872
        %v8874 = vpop.f32.mrb[0].mxu0
        %8875 = vmatprep.mubr.bf16.mxu0 0
        %8876 = vmatmul.mubr.bf16.gmra.mrb[0].mxu0 %v8697
        %v8877 = vpop.f32.mrb[0].mxu0
        %v8878 = vadd.f32 0.0, %v8877
        %v8879 = vpop.f32.mrb[0].mxu0
        %v8880 = vpop.f32.mrb[0].mxu0
        %v8881 = vadd.f32 0.0, %v8880
        %v8882 = vpop.f32.mrb[0].mxu0
        %8883 = vmatprep.mubr.bf16.mxu0 0
        %8884 = vmatmul.mubr.bf16.gmra.mrb[0].mxu0 %v8700
        %v8885 = vpop.f32.mrb[0].mxu0
        %v8886 = vadd.f32 0.0, %v8885
        %v8887 = vpop.f32.mrb[0].mxu0
        %v8888 = vpop.f32.mrb[0].mxu0
        %v8889 = vadd.f32 0.0, %v8888
        %v8890 = vpop.f32.mrb[0].mxu0
        %8891 = vmatprep.mubr.bf16.mxu0 0
        %8892 = vmatmul.mubr.bf16.gmra.mrb[0].mxu0 %v8703
        %v8893 = vpop.f32.mrb[0].mxu0
        %v8894 = vadd.f32 0.0, %v8893
        %v8895 = vpop.f32.mrb[0].mxu0
        %v8896 = vpop.f32.mrb[0].mxu0
        %v8897 = vadd.f32 0.0, %v8896
        %v8898 = vpop.f32.mrb[0].mxu0
        %8899 = vmatprep.mubr.bf16.mxu0 0
        %8900 = vmatmul.mubr.bf16.gmra.mrb[0].mxu0 %v8706
        %v8901 = vpop.f32.mrb[0].mxu0
        %v8902 = vadd.f32 0.0, %v8901
        %v8903 = vpop.f32.mrb[0].mxu0
        %v8904 = vpop.f32.mrb[0].mxu0
        %v8905 = vadd.f32 0.0, %v8904
        %v8906 = vpop.f32.mrb[0].mxu0
        %8907 = vmatprep.mubr.bf16.mxu0 0
        %8908 = vmatmul.mubr.bf16.gmra.mrb[0].mxu0 %v8709
        %v8909 = vpop.f32.mrb[0].mxu0
        %v8910 = vadd.f32 0.0, %v8909
        %v8911 = vpop.f32.mrb[0].mxu0
        %v8912 = vpop.f32.mrb[0].mxu0
        %v8913 = vadd.f32 0.0, %v8912
        %v8914 = vpop.f32.mrb[0].mxu0
        %8915 = vmatprep.mubr.bf16.mxu0 0
        %8916 = vmatmul.mubr.bf16.gmra.mrb[0].mxu0 %v8712
        %v8917 = vpop.f32.mrb[0].mxu0
        %v8918 = vadd.f32 0.0, %v8917
        %v8919 = vpop.f32.mrb[0].mxu0
        %v8920 = vpop.f32.mrb[0].mxu0
        %v8921 = vadd.f32 0.0, %v8920
        %v8922 = vpop.f32.mrb[0].mxu0
        %8923 = vdwg.mxu0
        %8924 = vmatprep.subr.bf16.mxu0 0
        %8925 = vmatpush1.bf16.msra.mxu0 %v8686
        %8926 = vmatprep.subr.bf16.mxu0 0
        %8927 = vmatpush1.bf16.msra.mxu0 %v8687
        %8928 = vmatprep.subr.bf16.mxu0 0
        %8929 = vmatpush1.bf16.msra.mxu0 0
        %8930 = vmatprep.subr.bf16.mxu0 0
        %8931 = vmatpush1.bf16.msra.mxu0 0
        %8932 = vmatprep.subr.bf16.mxu0 0
        %8933 = vmatpush1.bf16.msra.mxu0 0
        %8934 = vmatprep.subr.bf16.mxu0 0
        %8935 = vmatpush1.bf16.msra.mxu0 0
        %8936 = vmatprep.subr.bf16.mxu0 0
        %8937 = vmatpush1.bf16.msra.mxu0 0
        %8938 = vmatprep.subr.bf16.mxu0 0
        %8939 = vmatpush1.bf16.msra.mxu0 0
        %8940 = vmatprep.subr.bf16.mxu0 0
        %8941 = vmatpush1.bf16.msra.mxu0 0
        %8942 = vmatprep.subr.bf16.mxu0 0
        %8943 = vmatpush1.bf16.msra.mxu0 0
        %8944 = vmatprep.subr.bf16.mxu0 0
        %8945 = vmatpush1.bf16.msra.mxu0 0
        %8946 = vmatprep.subr.bf16.mxu0 0
        %8947 = vmatpush1.bf16.msra.mxu0 0
        %8948 = vmatprep.subr.bf16.mxu0 0
        %8949 = vmatpush1.bf16.msra.mxu0 0
        %8950 = vmatprep.subr.bf16.mxu0 0
        %8951 = vmatpush1.bf16.msra.mxu0 0
        %8952 = vmatprep.subr.bf16.mxu0 0
        %8953 = vmatpush1.bf16.msra.mxu0 0
        %8954 = vmatprep.subr.bf16.mxu0 0
        %8955 = vmatpush1.bf16.msra.mxu0 0
        %8956 = vmatprep.mubr.bf16.mxu0 0
        %8957 = vmatmul.mubr.bf16.gmra.mrb[0].mxu0 %v6473
        %v8958 = vpop.f32.mrb[0].mxu0
        %v8959 = vadd.f32 0.0, %v8958
        %v8960 = vpop.f32.mrb[0].mxu0
        %v8961 = vpop.f32.mrb[0].mxu0
        %v8962 = vadd.f32 0.0, %v8961
        %v8963 = vpop.f32.mrb[0].mxu0
        %8964 = vmatprep.mubr.bf16.mxu0 0
        %8965 = vmatmul.mubr.bf16.gmra.mrb[0].mxu0 %v6476
        %v8966 = vpop.f32.mrb[0].mxu0
        %v8967 = vadd.f32 0.0, %v8966
        %v8968 = vpop.f32.mrb[0].mxu0
        %v8969 = vpop.f32.mrb[0].mxu0
        %v8970 = vadd.f32 0.0, %v8969
        %v8971 = vpop.f32.mrb[0].mxu0
        %8972 = vmatprep.mubr.bf16.mxu0 0
        %8973 = vmatmul.mubr.bf16.gmra.mrb[0].mxu0 %v6479
        %v8974 = vpop.f32.mrb[0].mxu0
        %v8975 = vadd.f32 0.0, %v8974
        %v8976 = vpop.f32.mrb[0].mxu0
        %v8977 = vpop.f32.mrb[0].mxu0
        %v8978 = vadd.f32 0.0, %v8977
        %v8979 = vpop.f32.mrb[0].mxu0
        %8980 = vmatprep.mubr.bf16.mxu0 0
        %8981 = vmatmul.mubr.bf16.gmra.mrb[0].mxu0 %v6482
        %v8982 = vpop.f32.mrb[0].mxu0
        %v8983 = vadd.f32 0.0, %v8982
        %v8984 = vpop.f32.mrb[0].mxu0
        %v8985 = vpop.f32.mrb[0].mxu0
        %v8986 = vadd.f32 0.0, %v8985
        %v8987 = vpop.f32.mrb[0].mxu0
        %8988 = vmatprep.mubr.bf16.mxu0 0
        %8989 = vmatmul.mubr.bf16.gmra.mrb[0].mxu0 %v6485
        %v8990 = vpop.f32.mrb[0].mxu0
        %v8991 = vadd.f32 0.0, %v8990
        %v8992 = vpop.f32.mrb[0].mxu0
        %v8993 = vpop.f32.mrb[0].mxu0
        %v8994 = vadd.f32 0.0, %v8993
        %v8995 = vpop.f32.mrb[0].mxu0
        %8996 = vmatprep.mubr.bf16.mxu0 0
        %8997 = vmatmul.mubr.bf16.gmra.mrb[0].mxu0 %v6488
        %v8998 = vpop.f32.mrb[0].mxu0
        %v8999 = vadd.f32 0.0, %v8998
        %v9000 = vpop.f32.mrb[0].mxu0
        %v9001 = vpop.f32.mrb[0].mxu0
        %v9002 = vadd.f32 0.0, %v9001
        %v9003 = vpop.f32.mrb[0].mxu0
        %9004 = vmatprep.mubr.bf16.mxu0 0
        %9005 = vmatmul.mubr.bf16.gmra.mrb[0].mxu0 %v6491
        %v9006 = vpop.f32.mrb[0].mxu0
        %v9007 = vadd.f32 0.0, %v9006
        %v9008 = vpop.f32.mrb[0].mxu0
        %v9009 = vpop.f32.mrb[0].mxu0
        %v9010 = vadd.f32 0.0, %v9009
        %v9011 = vpop.f32.mrb[0].mxu0
        %9012 = vmatprep.mubr.bf16.mxu0 0
        %9013 = vmatmul.mubr.bf16.gmra.mrb[0].mxu0 %v6494
        %v9014 = vpop.f32.mrb[0].mxu0
        %v9015 = vadd.f32 0.0, %v9014
        %v9016 = vpop.f32.mrb[0].mxu0
        %v9017 = vpop.f32.mrb[0].mxu0
        %v9018 = vadd.f32 0.0, %v9017
        %v9019 = vpop.f32.mrb[0].mxu0
        %9020 = vdwg.mxu0
        %9021 = vmatprep.subr.bf16.mxu0 0
        %9022 = vmatpush1.bf16.msra.mxu0 %v8823
        %9023 = vmatprep.subr.bf16.mxu0 0
        %9024 = vmatpush1.bf16.msra.mxu0 %v8824
        %9025 = vmatprep.subr.bf16.mxu0 0
        %9026 = vmatpush1.bf16.msra.mxu0 0
        %9027 = vmatprep.subr.bf16.mxu0 0
        %9028 = vmatpush1.bf16.msra.mxu0 0
        %9029 = vmatprep.subr.bf16.mxu0 0
        %9030 = vmatpush1.bf16.msra.mxu0 0
        %9031 = vmatprep.subr.bf16.mxu0 0
        %9032 = vmatpush1.bf16.msra.mxu0 0
        %9033 = vmatprep.subr.bf16.mxu0 0
        %9034 = vmatpush1.bf16.msra.mxu0 0
        %9035 = vmatprep.subr.bf16.mxu0 0
        %9036 = vmatpush1.bf16.msra.mxu0 0
        %9037 = vmatprep.subr.bf16.mxu0 0
        %9038 = vmatpush1.bf16.msra.mxu0 0
        %9039 = vmatprep.subr.bf16.mxu0 0
        %9040 = vmatpush1.bf16.msra.mxu0 0
        %9041 = vmatprep.subr.bf16.mxu0 0
        %9042 = vmatpush1.bf16.msra.mxu0 0
        %9043 = vmatprep.subr.bf16.mxu0 0
        %9044 = vmatpush1.bf16.msra.mxu0 0
        %9045 = vmatprep.subr.bf16.mxu0 0
        %9046 = vmatpush1.bf16.msra.mxu0 0
        %9047 = vmatprep.subr.bf16.mxu0 0
        %9048 = vmatpush1.bf16.msra.mxu0 0
        %9049 = vmatprep.subr.bf16.mxu0 0
        %9050 = vmatpush1.bf16.msra.mxu0 0
        %9051 = vmatprep.subr.bf16.mxu0 0
        %9052 = vmatpush1.bf16.msra.mxu0 0
        %9053 = vmatprep.mubr.bf16.mxu0 0
        %9054 = vmatmul.mubr.bf16.gmra.mrb[0].mxu0 %v6473
        %v9055 = vpop.f32.mrb[0].mxu0
        %v9056 = vadd.f32 0.0, %v9055
        %v9057 = vpop.f32.mrb[0].mxu0
        %v9058 = vpop.f32.mrb[0].mxu0
        %v9059 = vadd.f32 0.0, %v9058
        %v9060 = vpop.f32.mrb[0].mxu0
        %9061 = vmatprep.mubr.bf16.mxu0 0
        %9062 = vmatmul.mubr.bf16.gmra.mrb[0].mxu0 %v6476
        %v9063 = vpop.f32.mrb[0].mxu0
        %v9064 = vadd.f32 0.0, %v9063
        %v9065 = vpop.f32.mrb[0].mxu0
        %v9066 = vpop.f32.mrb[0].mxu0
        %v9067 = vadd.f32 0.0, %v9066
        %v9068 = vpop.f32.mrb[0].mxu0
        %9069 = vmatprep.mubr.bf16.mxu0 0
        %9070 = vmatmul.mubr.bf16.gmra.mrb[0].mxu0 %v6479
        %v9071 = vpop.f32.mrb[0].mxu0
        %v9072 = vadd.f32 0.0, %v9071
        %v9073 = vpop.f32.mrb[0].mxu0
        %v9074 = vpop.f32.mrb[0].mxu0
        %v9075 = vadd.f32 0.0, %v9074
        %v9076 = vpop.f32.mrb[0].mxu0
        %9077 = vmatprep.mubr.bf16.mxu0 0
        %9078 = vmatmul.mubr.bf16.gmra.mrb[0].mxu0 %v6482
        %v9079 = vpop.f32.mrb[0].mxu0
        %v9080 = vadd.f32 0.0, %v9079
        %v9081 = vpop.f32.mrb[0].mxu0
        %v9082 = vpop.f32.mrb[0].mxu0
        %v9083 = vadd.f32 0.0, %v9082
        %v9084 = vpop.f32.mrb[0].mxu0
        %9085 = vmatprep.mubr.bf16.mxu0 0
        %9086 = vmatmul.mubr.bf16.gmra.mrb[0].mxu0 %v6485
        %v9087 = vpop.f32.mrb[0].mxu0
        %v9088 = vadd.f32 0.0, %v9087
        %v9089 = vpop.f32.mrb[0].mxu0
        %v9090 = vpop.f32.mrb[0].mxu0
        %v9091 = vadd.f32 0.0, %v9090
        %v9092 = vpop.f32.mrb[0].mxu0
        %9093 = vmatprep.mubr.bf16.mxu0 0
        %9094 = vmatmul.mubr.bf16.gmra.mrb[0].mxu0 %v6488
        %v9095 = vpop.f32.mrb[0].mxu0
        %v9096 = vadd.f32 0.0, %v9095
        %v9097 = vpop.f32.mrb[0].mxu0
        %v9098 = vpop.f32.mrb[0].mxu0
        %v9099 = vadd.f32 0.0, %v9098
        %v9100 = vpop.f32.mrb[0].mxu0
        %9101 = vmatprep.mubr.bf16.mxu0 0
        %9102 = vmatmul.mubr.bf16.gmra.mrb[0].mxu0 %v6491
        %v9103 = vpop.f32.mrb[0].mxu0
        %v9104 = vadd.f32 0.0, %v9103
        %v9105 = vpop.f32.mrb[0].mxu0
        %v9106 = vpop.f32.mrb[0].mxu0
        %v9107 = vadd.f32 0.0, %v9106
        %v9108 = vpop.f32.mrb[0].mxu0
        %9109 = vmatprep.mubr.bf16.mxu0 0
        %9110 = vmatmul.mubr.bf16.gmra.mrb[0].mxu0 %v6494
        %v9111 = vpop.f32.mrb[0].mxu0
        %v9112 = vadd.f32 0.0, %v9111
        %v9113 = vpop.f32.mrb[0].mxu0
        %v9114 = vpop.f32.mrb[0].mxu0
        %v9115 = vadd.f32 0.0, %v9114
        %v9116 = vpop.f32.mrb[0].mxu0
        %9117 = vdwg.mxu0
        %v9118 = vpack.c.bf16 %v8752, %v8749
        %v9119 = vpack.c.bf16 %v8760, %v8757
        %v9120 = vpack.c.bf16 %v8768, %v8765
        %v9121 = vpack.c.bf16 %v8776, %v8773
        %v9122 = vpack.c.bf16 %v8784, %v8781
        %v9123 = vpack.c.bf16 %v8792, %v8789
        %v9124 = vpack.c.bf16 %v8800, %v8797
        %v9125 = vpack.c.bf16 %v8808, %v8805
        %v9126 = vpack.c.bf16 %v8865, %v8862
        %v9127 = vpack.c.bf16 %v8873, %v8870
        %v9128 = vpack.c.bf16 %v8881, %v8878
        %v9129 = vpack.c.bf16 %v8889, %v8886
        %v9130 = vpack.c.bf16 %v8897, %v8894
        %v9131 = vpack.c.bf16 %v8905, %v8902
        %v9132 = vpack.c.bf16 %v8913, %v8910
        %v9133 = vpack.c.bf16 %v8921, %v8918
        %9134 = vmatprep.subr.bf16.mxu0 0
        %9135 = vmatpush1.bf16.msra.mxu0 %v9126
        %9136 = vmatprep.subr.bf16.mxu0 0
        %9137 = vmatpush1.bf16.msra.mxu0 %v9127
        %9138 = vmatprep.subr.bf16.mxu0 0
        %9139 = vmatpush1.bf16.msra.mxu0 %v9128
        %9140 = vmatprep.subr.bf16.mxu0 0
        %9141 = vmatpush1.bf16.msra.mxu0 %v9129
        %9142 = vmatprep.subr.bf16.mxu0 0
        %9143 = vmatpush1.bf16.msra.mxu0 %v9130
        %9144 = vmatprep.subr.bf16.mxu0 0
        %9145 = vmatpush1.bf16.msra.mxu0 %v9131
        %9146 = vmatprep.subr.bf16.mxu0 0
        %9147 = vmatpush1.bf16.msra.mxu0 %v9132
        %9148 = vmatprep.subr.bf16.mxu0 0
        %9149 = vmatpush1.bf16.msra.mxu0 %v9133
        %9150 = vmatprep.subr.bf16.mxu0 0
        %9151 = vmatpush1.bf16.msra.mxu0 0
        %9152 = vmatprep.subr.bf16.mxu0 0
        %9153 = vmatpush1.bf16.msra.mxu0 0
        %9154 = vmatprep.subr.bf16.mxu0 0
        %9155 = vmatpush1.bf16.msra.mxu0 0
        %9156 = vmatprep.subr.bf16.mxu0 0
        %9157 = vmatpush1.bf16.msra.mxu0 0
        %9158 = vmatprep.subr.bf16.mxu0 0
        %9159 = vmatpush1.bf16.msra.mxu0 0
        %9160 = vmatprep.subr.bf16.mxu0 0
        %9161 = vmatpush1.bf16.msra.mxu0 0
        %9162 = vmatprep.subr.bf16.mxu0 0
        %9163 = vmatpush1.bf16.msra.mxu0 0
        %9164 = vmatprep.subr.bf16.mxu0 0
        %9165 = vmatpush1.bf16.msra.mxu0 0
        %9166 = vmatprep.mubr.bf16.mxu0 0
        %9167 = vmatmul.mubr.bf16.gmra.mrb[0].mxu0 %v7004
        %v9168 = vpop.f32.mrb[0].mxu0
        %v9169 = vadd.f32 0.0, %v9168
        %v9170 = vpop.f32.mrb[0].mxu0
        %v9171 = vpop.f32.mrb[0].mxu0
        %v9172 = vadd.f32 0.0, %v9171
        %v9173 = vpop.f32.mrb[0].mxu0
        %9174 = vmatprep.mubr.bf16.mxu0 0
        %9175 = vmatmul.mubr.bf16.gmra.mrb[0].mxu0 %v7005
        %v9176 = vpop.f32.mrb[0].mxu0
        %v9177 = vadd.f32 0.0, %v9176
        %v9178 = vpop.f32.mrb[0].mxu0
        %v9179 = vpop.f32.mrb[0].mxu0
        %v9180 = vadd.f32 0.0, %v9179
        %v9181 = vpop.f32.mrb[0].mxu0
        %9182 = vmatprep.mubr.bf16.mxu0 0
        %9183 = vmatmul.mubr.bf16.gmra.mrb[0].mxu0 %v7006
        %v9184 = vpop.f32.mrb[0].mxu0
        %v9185 = vadd.f32 0.0, %v9184
        %v9186 = vpop.f32.mrb[0].mxu0
        %v9187 = vpop.f32.mrb[0].mxu0
        %v9188 = vadd.f32 0.0, %v9187
        %v9189 = vpop.f32.mrb[0].mxu0
        %9190 = vmatprep.mubr.bf16.mxu0 0
        %9191 = vmatmul.mubr.bf16.gmra.mrb[0].mxu0 %v7007
        %v9192 = vpop.f32.mrb[0].mxu0
        %v9193 = vadd.f32 0.0, %v9192
        %v9194 = vpop.f32.mrb[0].mxu0
        %v9195 = vpop.f32.mrb[0].mxu0
        %v9196 = vadd.f32 0.0, %v9195
        %v9197 = vpop.f32.mrb[0].mxu0
        %9198 = vmatprep.mubr.bf16.mxu0 0
        %9199 = vmatmul.mubr.bf16.gmra.mrb[0].mxu0 %v7008
        %v9200 = vpop.f32.mrb[0].mxu0
        %v9201 = vadd.f32 0.0, %v9200
        %v9202 = vpop.f32.mrb[0].mxu0
        %v9203 = vpop.f32.mrb[0].mxu0
        %v9204 = vadd.f32 0.0, %v9203
        %v9205 = vpop.f32.mrb[0].mxu0
        %9206 = vmatprep.mubr.bf16.mxu0 0
        %9207 = vmatmul.mubr.bf16.gmra.mrb[0].mxu0 %v7009
        %v9208 = vpop.f32.mrb[0].mxu0
        %v9209 = vadd.f32 0.0, %v9208
        %v9210 = vpop.f32.mrb[0].mxu0
        %v9211 = vpop.f32.mrb[0].mxu0
        %v9212 = vadd.f32 0.0, %v9211
        %v9213 = vpop.f32.mrb[0].mxu0
        %9214 = vmatprep.mubr.bf16.mxu0 0
        %9215 = vmatmul.mubr.bf16.gmra.mrb[0].mxu0 %v7010
        %v9216 = vpop.f32.mrb[0].mxu0
        %v9217 = vadd.f32 0.0, %v9216
        %v9218 = vpop.f32.mrb[0].mxu0
        %v9219 = vpop.f32.mrb[0].mxu0
        %v9220 = vadd.f32 0.0, %v9219
        %v9221 = vpop.f32.mrb[0].mxu0
        %9222 = vmatprep.mubr.bf16.mxu0 0
        %9223 = vmatmul.mubr.bf16.gmra.mrb[0].mxu0 %v7011
        %v9224 = vpop.f32.mrb[0].mxu0
        %v9225 = vadd.f32 0.0, %v9224
        %v9226 = vpop.f32.mrb[0].mxu0
        %v9227 = vpop.f32.mrb[0].mxu0
        %v9228 = vadd.f32 0.0, %v9227
        %v9229 = vpop.f32.mrb[0].mxu0
        %9230 = vdwg.mxu0
        %9231 = vmatprep.subr.bf16.mxu0 0
        %9232 = vmatpush1.bf16.msra.mxu0 %v9118
        %9233 = vmatprep.subr.bf16.mxu0 0
        %9234 = vmatpush1.bf16.msra.mxu0 %v9119
        %9235 = vmatprep.subr.bf16.mxu0 0
        %9236 = vmatpush1.bf16.msra.mxu0 %v9120
        %9237 = vmatprep.subr.bf16.mxu0 0
        %9238 = vmatpush1.bf16.msra.mxu0 %v9121
        %9239 = vmatprep.subr.bf16.mxu0 0
        %9240 = vmatpush1.bf16.msra.mxu0 %v9122
        %9241 = vmatprep.subr.bf16.mxu0 0
        %9242 = vmatpush1.bf16.msra.mxu0 %v9123
        %9243 = vmatprep.subr.bf16.mxu0 0
        %9244 = vmatpush1.bf16.msra.mxu0 %v9124
        %9245 = vmatprep.subr.bf16.mxu0 0
        %9246 = vmatpush1.bf16.msra.mxu0 %v9125
        %9247 = vmatprep.subr.bf16.mxu0 0
        %9248 = vmatpush1.bf16.msra.mxu0 0
        %9249 = vmatprep.subr.bf16.mxu0 0
        %9250 = vmatpush1.bf16.msra.mxu0 0
        %9251 = vmatprep.subr.bf16.mxu0 0
        %9252 = vmatpush1.bf16.msra.mxu0 0
        %9253 = vmatprep.subr.bf16.mxu0 0
        %9254 = vmatpush1.bf16.msra.mxu0 0
        %9255 = vmatprep.subr.bf16.mxu0 0
        %9256 = vmatpush1.bf16.msra.mxu0 0
        %9257 = vmatprep.subr.bf16.mxu0 0
        %9258 = vmatpush1.bf16.msra.mxu0 0
        %9259 = vmatprep.subr.bf16.mxu0 0
        %9260 = vmatpush1.bf16.msra.mxu0 0
        %9261 = vmatprep.subr.bf16.mxu0 0
        %9262 = vmatpush1.bf16.msra.mxu0 0
        %9263 = vmatprep.mubr.bf16.mxu0 0
        %9264 = vmatmul.mubr.bf16.gmra.mrb[0].mxu0 %v7149
        %v9265 = vpop.f32.mrb[0].mxu0
        %v9266 = vadd.f32 %v9169, %v9265
        %v9267 = vpop.f32.mrb[0].mxu0
        %v9268 = vpop.f32.mrb[0].mxu0
        %v9269 = vadd.f32 %v9172, %v9268
        %v9270 = vpop.f32.mrb[0].mxu0
        %9271 = vmatprep.mubr.bf16.mxu0 0
        %9272 = vmatmul.mubr.bf16.gmra.mrb[0].mxu0 %v7150
        %v9273 = vpop.f32.mrb[0].mxu0
        %v9274 = vadd.f32 %v9177, %v9273
        %v9275 = vpop.f32.mrb[0].mxu0
        %v9276 = vpop.f32.mrb[0].mxu0
        %v9277 = vadd.f32 %v9180, %v9276
        %v9278 = vpop.f32.mrb[0].mxu0
        %9279 = vmatprep.mubr.bf16.mxu0 0
        %9280 = vmatmul.mubr.bf16.gmra.mrb[0].mxu0 %v7151
        %v9281 = vpop.f32.mrb[0].mxu0
        %v9282 = vadd.f32 %v9185, %v9281
        %v9283 = vpop.f32.mrb[0].mxu0
        %v9284 = vpop.f32.mrb[0].mxu0
        %v9285 = vadd.f32 %v9188, %v9284
        %v9286 = vpop.f32.mrb[0].mxu0
        %9287 = vmatprep.mubr.bf16.mxu0 0
        %9288 = vmatmul.mubr.bf16.gmra.mrb[0].mxu0 %v7152
        %v9289 = vpop.f32.mrb[0].mxu0
        %v9290 = vadd.f32 %v9193, %v9289
        %v9291 = vpop.f32.mrb[0].mxu0
        %v9292 = vpop.f32.mrb[0].mxu0
        %v9293 = vadd.f32 %v9196, %v9292
        %v9294 = vpop.f32.mrb[0].mxu0
        %9295 = vmatprep.mubr.bf16.mxu0 0
        %9296 = vmatmul.mubr.bf16.gmra.mrb[0].mxu0 %v7153
        %v9297 = vpop.f32.mrb[0].mxu0
        %v9298 = vadd.f32 %v9201, %v9297
        %v9299 = vpop.f32.mrb[0].mxu0
        %v9300 = vpop.f32.mrb[0].mxu0
        %v9301 = vadd.f32 %v9204, %v9300
        %v9302 = vpop.f32.mrb[0].mxu0
        %9303 = vmatprep.mubr.bf16.mxu0 0
        %9304 = vmatmul.mubr.bf16.gmra.mrb[0].mxu0 %v7154
        %v9305 = vpop.f32.mrb[0].mxu0
        %v9306 = vadd.f32 %v9209, %v9305
        %v9307 = vpop.f32.mrb[0].mxu0
        %v9308 = vpop.f32.mrb[0].mxu0
        %v9309 = vadd.f32 %v9212, %v9308
        %v9310 = vpop.f32.mrb[0].mxu0
        %9311 = vmatprep.mubr.bf16.mxu0 0
        %9312 = vmatmul.mubr.bf16.gmra.mrb[0].mxu0 %v7155
        %v9313 = vpop.f32.mrb[0].mxu0
        %v9314 = vadd.f32 %v9217, %v9313
        %v9315 = vpop.f32.mrb[0].mxu0
        %v9316 = vpop.f32.mrb[0].mxu0
        %v9317 = vadd.f32 %v9220, %v9316
        %v9318 = vpop.f32.mrb[0].mxu0
        %9319 = vmatprep.mubr.bf16.mxu0 0
        %9320 = vmatmul.mubr.bf16.gmra.mrb[0].mxu0 %v7156
        %v9321 = vpop.f32.mrb[0].mxu0
        %v9322 = vadd.f32 %v9225, %v9321
        %v9323 = vpop.f32.mrb[0].mxu0
        %v9324 = vpop.f32.mrb[0].mxu0
        %v9325 = vadd.f32 %v9228, %v9324
        %v9326 = vpop.f32.mrb[0].mxu0
        %9327 = vdwg.mxu0
        %v9328 = vpack.c.bf16 %v8962, %v8959
        %v9329 = vpack.c.bf16 %v8970, %v8967
        %v9330 = vpack.c.bf16 %v8978, %v8975
        %v9331 = vpack.c.bf16 %v8986, %v8983
        %v9332 = vpack.c.bf16 %v8994, %v8991
        %v9333 = vpack.c.bf16 %v9002, %v8999
        %v9334 = vpack.c.bf16 %v9010, %v9007
        %v9335 = vpack.c.bf16 %v9018, %v9015
        %9336 = vmatprep.subr.bf16.mxu0 0
        %9337 = vmatpush1.bf16.msra.mxu0 %v9328
        %9338 = vmatprep.subr.bf16.mxu0 0
        %9339 = vmatpush1.bf16.msra.mxu0 %v9329
        %9340 = vmatprep.subr.bf16.mxu0 0
        %9341 = vmatpush1.bf16.msra.mxu0 %v9330
        %9342 = vmatprep.subr.bf16.mxu0 0
        %9343 = vmatpush1.bf16.msra.mxu0 %v9331
        %9344 = vmatprep.subr.bf16.mxu0 0
        %9345 = vmatpush1.bf16.msra.mxu0 %v9332
        %9346 = vmatprep.subr.bf16.mxu0 0
        %9347 = vmatpush1.bf16.msra.mxu0 %v9333
        %9348 = vmatprep.subr.bf16.mxu0 0
        %9349 = vmatpush1.bf16.msra.mxu0 %v9334
        %9350 = vmatprep.subr.bf16.mxu0 0
        %9351 = vmatpush1.bf16.msra.mxu0 %v9335
        %9352 = vmatprep.subr.bf16.mxu0 0
        %9353 = vmatpush1.bf16.msra.mxu0 0
        %9354 = vmatprep.subr.bf16.mxu0 0
        %9355 = vmatpush1.bf16.msra.mxu0 0
        %9356 = vmatprep.subr.bf16.mxu0 0
        %9357 = vmatpush1.bf16.msra.mxu0 0
        %9358 = vmatprep.subr.bf16.mxu0 0
        %9359 = vmatpush1.bf16.msra.mxu0 0
        %9360 = vmatprep.subr.bf16.mxu0 0
        %9361 = vmatpush1.bf16.msra.mxu0 0
        %9362 = vmatprep.subr.bf16.mxu0 0
        %9363 = vmatpush1.bf16.msra.mxu0 0
        %9364 = vmatprep.subr.bf16.mxu0 0
        %9365 = vmatpush1.bf16.msra.mxu0 0
        %9366 = vmatprep.subr.bf16.mxu0 0
        %9367 = vmatpush1.bf16.msra.mxu0 0
        %9368 = vmatprep.mubr.bf16.mxu0 0
        %9369 = vmatmul.mubr.bf16.gmra.mrb[0].mxu0 %v7318
        %v9370 = vpop.f32.mrb[0].mxu0
        %v9371 = vadd.f32 0.0, %v9370
        %v9372 = vpop.f32.mrb[0].mxu0
        %v9373 = vpop.f32.mrb[0].mxu0
        %v9374 = vadd.f32 0.0, %v9373
        %v9375 = vpop.f32.mrb[0].mxu0
        %9376 = vmatprep.mubr.bf16.mxu0 0
        %9377 = vmatmul.mubr.bf16.gmra.mrb[0].mxu0 %v7319
        %v9378 = vpop.f32.mrb[0].mxu0
        %v9379 = vadd.f32 0.0, %v9378
        %v9380 = vpop.f32.mrb[0].mxu0
        %v9381 = vpop.f32.mrb[0].mxu0
        %v9382 = vadd.f32 0.0, %v9381
        %v9383 = vpop.f32.mrb[0].mxu0
        %9384 = vmatprep.mubr.bf16.mxu0 0
        %9385 = vmatmul.mubr.bf16.gmra.mrb[0].mxu0 %v7320
        %v9386 = vpop.f32.mrb[0].mxu0
        %v9387 = vadd.f32 0.0, %v9386
        %v9388 = vpop.f32.mrb[0].mxu0
        %v9389 = vpop.f32.mrb[0].mxu0
        %v9390 = vadd.f32 0.0, %v9389
        %v9391 = vpop.f32.mrb[0].mxu0
        %9392 = vmatprep.mubr.bf16.mxu0 0
        %9393 = vmatmul.mubr.bf16.gmra.mrb[0].mxu0 %v7321
        %v9394 = vpop.f32.mrb[0].mxu0
        %v9395 = vadd.f32 0.0, %v9394
        %v9396 = vpop.f32.mrb[0].mxu0
        %v9397 = vpop.f32.mrb[0].mxu0
        %v9398 = vadd.f32 0.0, %v9397
        %v9399 = vpop.f32.mrb[0].mxu0
        %9400 = vmatprep.mubr.bf16.mxu0 0
        %9401 = vmatmul.mubr.bf16.gmra.mrb[0].mxu0 %v7322
        %v9402 = vpop.f32.mrb[0].mxu0
        %v9403 = vadd.f32 0.0, %v9402
        %v9404 = vpop.f32.mrb[0].mxu0
        %v9405 = vpop.f32.mrb[0].mxu0
        %v9406 = vadd.f32 0.0, %v9405
        %v9407 = vpop.f32.mrb[0].mxu0
        %9408 = vmatprep.mubr.bf16.mxu0 0
        %9409 = vmatmul.mubr.bf16.gmra.mrb[0].mxu0 %v7323
        %v9410 = vpop.f32.mrb[0].mxu0
        %v9411 = vadd.f32 0.0, %v9410
        %v9412 = vpop.f32.mrb[0].mxu0
        %v9413 = vpop.f32.mrb[0].mxu0
        %v9414 = vadd.f32 0.0, %v9413
        %v9415 = vpop.f32.mrb[0].mxu0
        %9416 = vmatprep.mubr.bf16.mxu0 0
        %9417 = vmatmul.mubr.bf16.gmra.mrb[0].mxu0 %v7324
        %v9418 = vpop.f32.mrb[0].mxu0
        %v9419 = vadd.f32 0.0, %v9418
        %v9420 = vpop.f32.mrb[0].mxu0
        %v9421 = vpop.f32.mrb[0].mxu0
        %v9422 = vadd.f32 0.0, %v9421
        %v9423 = vpop.f32.mrb[0].mxu0
        %9424 = vmatprep.mubr.bf16.mxu0 0
        %9425 = vmatmul.mubr.bf16.gmra.mrb[0].mxu0 %v7325
        %v9426 = vpop.f32.mrb[0].mxu0
        %v9427 = vadd.f32 0.0, %v9426
        %v9428 = vpop.f32.mrb[0].mxu0
        %v9429 = vpop.f32.mrb[0].mxu0
        %v9430 = vadd.f32 0.0, %v9429
        %v9431 = vpop.f32.mrb[0].mxu0
        %9432 = vdwg.mxu0
        %v9433 = vadd.f32 %v9266, %v9371
        %v9434 = vadd.f32 %v9269, %v9374
        %v9435 = vadd.f32 %v9274, %v9379
        %v9436 = vadd.f32 %v9277, %v9382
        %v9437 = vadd.f32 %v9282, %v9387
        %v9438 = vadd.f32 %v9285, %v9390
        %v9439 = vadd.f32 %v9290, %v9395
        %v9440 = vadd.f32 %v9293, %v9398
        %v9441 = vadd.f32 %v9298, %v9403
        %v9442 = vadd.f32 %v9301, %v9406
        %v9443 = vadd.f32 %v9306, %v9411
        %v9444 = vadd.f32 %v9309, %v9414
        %v9445 = vadd.f32 %v9314, %v9419
        %v9446 = vadd.f32 %v9317, %v9422
        %v9447 = vadd.f32 %v9322, %v9427
        %v9448 = vadd.f32 %v9325, %v9430
        %v9449 = vpack.c.bf16 %v9059, %v9056
        %v9450 = vpack.c.bf16 %v9067, %v9064
        %v9451 = vpack.c.bf16 %v9075, %v9072
        %v9452 = vpack.c.bf16 %v9083, %v9080
        %v9453 = vpack.c.bf16 %v9091, %v9088
        %v9454 = vpack.c.bf16 %v9099, %v9096
        %v9455 = vpack.c.bf16 %v9107, %v9104
        %v9456 = vpack.c.bf16 %v9115, %v9112
        %9457 = vmatprep.subr.bf16.mxu0 0
        %9458 = vmatpush1.bf16.msra.mxu0 %v9449
        %9459 = vmatprep.subr.bf16.mxu0 0
        %9460 = vmatpush1.bf16.msra.mxu0 %v9450
        %9461 = vmatprep.subr.bf16.mxu0 0
        %9462 = vmatpush1.bf16.msra.mxu0 %v9451
        %9463 = vmatprep.subr.bf16.mxu0 0
        %9464 = vmatpush1.bf16.msra.mxu0 %v9452
        %9465 = vmatprep.subr.bf16.mxu0 0
        %9466 = vmatpush1.bf16.msra.mxu0 %v9453
        %9467 = vmatprep.subr.bf16.mxu0 0
        %9468 = vmatpush1.bf16.msra.mxu0 %v9454
        %9469 = vmatprep.subr.bf16.mxu0 0
        %9470 = vmatpush1.bf16.msra.mxu0 %v9455
        %9471 = vmatprep.subr.bf16.mxu0 0
        %9472 = vmatpush1.bf16.msra.mxu0 %v9456
        %9473 = vmatprep.subr.bf16.mxu0 0
        %9474 = vmatpush1.bf16.msra.mxu0 0
        %9475 = vmatprep.subr.bf16.mxu0 0
        %9476 = vmatpush1.bf16.msra.mxu0 0
        %9477 = vmatprep.subr.bf16.mxu0 0
        %9478 = vmatpush1.bf16.msra.mxu0 0
        %9479 = vmatprep.subr.bf16.mxu0 0
        %9480 = vmatpush1.bf16.msra.mxu0 0
        %9481 = vmatprep.subr.bf16.mxu0 0
        %9482 = vmatpush1.bf16.msra.mxu0 0
        %9483 = vmatprep.subr.bf16.mxu0 0
        %9484 = vmatpush1.bf16.msra.mxu0 0
        %9485 = vmatprep.subr.bf16.mxu0 0
        %9486 = vmatpush1.bf16.msra.mxu0 0
        %9487 = vmatprep.subr.bf16.mxu0 0
        %9488 = vmatpush1.bf16.msra.mxu0 0
        %9489 = vmatprep.mubr.bf16.mxu0 0
        %9490 = vmatmul.mubr.bf16.gmra.mrb[0].mxu0 %v7503
        %v9491 = vpop.f32.mrb[0].mxu0
        %v9492 = vadd.f32 0.0, %v9491
        %v9493 = vpop.f32.mrb[0].mxu0
        %v9494 = vpop.f32.mrb[0].mxu0
        %v9495 = vadd.f32 0.0, %v9494
        %v9496 = vpop.f32.mrb[0].mxu0
        %9497 = vmatprep.mubr.bf16.mxu0 0
        %9498 = vmatmul.mubr.bf16.gmra.mrb[0].mxu0 %v7504
        %v9499 = vpop.f32.mrb[0].mxu0
        %v9500 = vadd.f32 0.0, %v9499
        %v9501 = vpop.f32.mrb[0].mxu0
        %v9502 = vpop.f32.mrb[0].mxu0
        %v9503 = vadd.f32 0.0, %v9502
        %v9504 = vpop.f32.mrb[0].mxu0
        %9505 = vmatprep.mubr.bf16.mxu0 0
        %9506 = vmatmul.mubr.bf16.gmra.mrb[0].mxu0 %v7505
        %v9507 = vpop.f32.mrb[0].mxu0
        %v9508 = vadd.f32 0.0, %v9507
        %v9509 = vpop.f32.mrb[0].mxu0
        %v9510 = vpop.f32.mrb[0].mxu0
        %v9511 = vadd.f32 0.0, %v9510
        %v9512 = vpop.f32.mrb[0].mxu0
        %9513 = vmatprep.mubr.bf16.mxu0 0
        %9514 = vmatmul.mubr.bf16.gmra.mrb[0].mxu0 %v7506
        %v9515 = vpop.f32.mrb[0].mxu0
        %v9516 = vadd.f32 0.0, %v9515
        %v9517 = vpop.f32.mrb[0].mxu0
        %v9518 = vpop.f32.mrb[0].mxu0
        %v9519 = vadd.f32 0.0, %v9518
        %v9520 = vpop.f32.mrb[0].mxu0
        %9521 = vmatprep.mubr.bf16.mxu0 0
        %9522 = vmatmul.mubr.bf16.gmra.mrb[0].mxu0 %v7507
        %v9523 = vpop.f32.mrb[0].mxu0
        %v9524 = vadd.f32 0.0, %v9523
        %v9525 = vpop.f32.mrb[0].mxu0
        %v9526 = vpop.f32.mrb[0].mxu0
        %v9527 = vadd.f32 0.0, %v9526
        %v9528 = vpop.f32.mrb[0].mxu0
        %9529 = vmatprep.mubr.bf16.mxu0 0
        %9530 = vmatmul.mubr.bf16.gmra.mrb[0].mxu0 %v7508
        %v9531 = vpop.f32.mrb[0].mxu0
        %v9532 = vadd.f32 0.0, %v9531
        %v9533 = vpop.f32.mrb[0].mxu0
        %v9534 = vpop.f32.mrb[0].mxu0
        %v9535 = vadd.f32 0.0, %v9534
        %v9536 = vpop.f32.mrb[0].mxu0
        %9537 = vmatprep.mubr.bf16.mxu0 0
        %9538 = vmatmul.mubr.bf16.gmra.mrb[0].mxu0 %v7509
        %v9539 = vpop.f32.mrb[0].mxu0
        %v9540 = vadd.f32 0.0, %v9539
        %v9541 = vpop.f32.mrb[0].mxu0
        %v9542 = vpop.f32.mrb[0].mxu0
        %v9543 = vadd.f32 0.0, %v9542
        %v9544 = vpop.f32.mrb[0].mxu0
        %9545 = vmatprep.mubr.bf16.mxu0 0
        %9546 = vmatmul.mubr.bf16.gmra.mrb[0].mxu0 %v7510
        %v9547 = vpop.f32.mrb[0].mxu0
        %v9548 = vadd.f32 0.0, %v9547
        %v9549 = vpop.f32.mrb[0].mxu0
        %v9550 = vpop.f32.mrb[0].mxu0
        %v9551 = vadd.f32 0.0, %v9550
        %v9552 = vpop.f32.mrb[0].mxu0
        %9553 = vdwg.mxu0
        %v9554 = vadd.f32 %v9433, %v9492
        %v9555 = vadd.f32 %v9434, %v9495
        %v9556 = vadd.f32 %v9435, %v9500
        %v9557 = vadd.f32 %v9436, %v9503
        %v9558 = vadd.f32 %v9437, %v9508
        %v9559 = vadd.f32 %v9438, %v9511
        %v9560 = vadd.f32 %v9439, %v9516
        %v9561 = vadd.f32 %v9440, %v9519
        %v9562 = vadd.f32 %v9441, %v9524
        %v9563 = vadd.f32 %v9442, %v9527
        %v9564 = vadd.f32 %v9443, %v9532
        %v9565 = vadd.f32 %v9444, %v9535
        %v9566 = vadd.f32 %v9445, %v9540
        %v9567 = vadd.f32 %v9446, %v9543
        %v9568 = vadd.f32 %v9447, %v9548
        %v9569 = vadd.f32 %v9448, %v9551
        %v9570 = vld [vmem:[#allocation8] sm:$0x1]
        %v9572 = vlaneseq
        %v9573 = vshrl.u32 %v9572, 7
        %v9574 = vsub.s32 0, %v9573
        %v9575 = vrot.slane %v9570, %v9574
        %v9577 = vadd.f32 %v9554, %v9575
        %v9578 = vadd.f32 %v9555, %v9575
        %v9579 = vadd.f32 %v9556, %v9575
        %v9580 = vadd.f32 %v9557, %v9575
        %v9581 = vadd.f32 %v9558, %v9575
        %v9582 = vadd.f32 %v9559, %v9575
        %v9583 = vadd.f32 %v9560, %v9575
        %v9584 = vadd.f32 %v9561, %v9575
        %v9585 = vadd.f32 %v9562, %v9575
        %v9586 = vadd.f32 %v9563, %v9575
        %v9587 = vadd.f32 %v9564, %v9575
        %v9588 = vadd.f32 %v9565, %v9575
        %v9589 = vadd.f32 %v9566, %v9575
        %v9590 = vadd.f32 %v9567, %v9575
        %v9591 = vadd.f32 %v9568, %v9575
        %v9592 = vadd.f32 %v9569, %v9575
        %v9593 = vpack.c.bf16 %v9578, %v9577
        %v9594 = vpack.c.bf16 %v9580, %v9579
        %v9595 = vpack.c.bf16 %v9582, %v9581
        %v9596 = vpack.c.bf16 %v9584, %v9583
        %v9597 = vpack.c.bf16 %v9586, %v9585
        %v9598 = vpack.c.bf16 %v9588, %v9587
        %v9599 = vpack.c.bf16 %v9590, %v9589
        %v9600 = vpack.c.bf16 %v9592, %v9591
        %v9601 = vld [vmem:[%s79] sm:$0xf]
        %v9602 = vld [vmem:[%s79 + $0x4] sm:$0xf]
        %v9603 = vld [vmem:[%s79 + $0x8] sm:$0xf]
        %v9604 = vld [vmem:[%s79 + $0xc] sm:$0xf]
        %s9605 = scalar_lea.vmem %s79, 16
        %v9606 = vld [vmem:[%s9605] sm:$0xf]
        %v9607 = vld [vmem:[%s9605 + $0x4] sm:$0xf]
        %v9608 = vld [vmem:[%s9605 + $0x8] sm:$0xf]
        %v9609 = vld [vmem:[%s9605 + $0xc] sm:$0xf]
        %v9614 = vunpack.c.l.b16 %v9606
        %v9615 = vunpack.c.l.b16 %v9607
        %v9616 = vunpack.c.l.b16 %v9608
        %v9617 = vunpack.c.l.b16 %v9609
        %v9618 = vpack.c.b16 %v9615, %v9614
        %v9619 = vpack.c.b16 %v9617, %v9616
        %v9623 = vsel %vm2496, %v9594, 0
        %9625 = vmatprep.subr.bf16.mxu0 0
        %9626 = vmatpush1.bf16.msra.mxu0 %v9618
        %9627 = vmatprep.subr.bf16.mxu0 0
        %9628 = vmatpush1.bf16.msra.mxu0 %v9619
        %9629 = vmatprep.subr.bf16.mxu0 0
        %9630 = vmatpush1.bf16.msra.mxu0 0
        %9631 = vmatprep.subr.bf16.mxu0 0
        %9632 = vmatpush1.bf16.msra.mxu0 0
        %9633 = vmatprep.subr.bf16.mxu0 0
        %9634 = vmatpush1.bf16.msra.mxu0 0
        %9635 = vmatprep.subr.bf16.mxu0 0
        %9636 = vmatpush1.bf16.msra.mxu0 0
        %9637 = vmatprep.subr.bf16.mxu0 0
        %9638 = vmatpush1.bf16.msra.mxu0 0
        %9639 = vmatprep.subr.bf16.mxu0 0
        %9640 = vmatpush1.bf16.msra.mxu0 0
        %9641 = vmatprep.subr.bf16.mxu0 0
        %9642 = vmatpush1.bf16.msra.mxu0 0
        %9643 = vmatprep.subr.bf16.mxu0 0
        %9644 = vmatpush1.bf16.msra.mxu0 0
        %9645 = vmatprep.subr.bf16.mxu0 0
        %9646 = vmatpush1.bf16.msra.mxu0 0
        %9647 = vmatprep.subr.bf16.mxu0 0
        %9648 = vmatpush1.bf16.msra.mxu0 0
        %9649 = vmatprep.subr.bf16.mxu0 0
        %9650 = vmatpush1.bf16.msra.mxu0 0
        %9651 = vmatprep.subr.bf16.mxu0 0
        %9652 = vmatpush1.bf16.msra.mxu0 0
        %9653 = vmatprep.subr.bf16.mxu0 0
        %9654 = vmatpush1.bf16.msra.mxu0 0
        %9655 = vmatprep.subr.bf16.mxu0 0
        %9656 = vmatpush1.bf16.msra.mxu0 0
        %9657 = vmatprep.mubr.bf16.mxu0 0
        %9658 = vmatmul.mubr.bf16.gmra.mrb[0].mxu0 %v9623
        %v9659 = vpop.f32.mrb[0].mxu0
        %v9660 = vadd.f32 0.0, %v9659
        %v9661 = vpop.f32.mrb[0].mxu0
        %v9662 = vpop.f32.mrb[0].mxu0
        %v9663 = vadd.f32 0.0, %v9662
        %v9664 = vpop.f32.mrb[0].mxu0
        %9665 = vdwg.mxu0
        %v9670 = vunpack.c.l.b16 %v9601
        %v9671 = vunpack.c.l.b16 %v9602
        %v9672 = vunpack.c.l.b16 %v9603
        %v9673 = vunpack.c.l.b16 %v9604
        %v9674 = vpack.c.b16 %v9671, %v9670
        %v9675 = vpack.c.b16 %v9673, %v9672
        %v9679 = vsel %vm2496, %v9593, 0
        %9681 = vmatprep.subr.bf16.mxu0 0
        %9682 = vmatpush1.bf16.msra.mxu0 %v9674
        %9683 = vmatprep.subr.bf16.mxu0 0
        %9684 = vmatpush1.bf16.msra.mxu0 %v9675
        %9685 = vmatprep.subr.bf16.mxu0 0
        %9686 = vmatpush1.bf16.msra.mxu0 0
        %9687 = vmatprep.subr.bf16.mxu0 0
        %9688 = vmatpush1.bf16.msra.mxu0 0
        %9689 = vmatprep.subr.bf16.mxu0 0
        %9690 = vmatpush1.bf16.msra.mxu0 0
        %9691 = vmatprep.subr.bf16.mxu0 0
        %9692 = vmatpush1.bf16.msra.mxu0 0
        %9693 = vmatprep.subr.bf16.mxu0 0
        %9694 = vmatpush1.bf16.msra.mxu0 0
        %9695 = vmatprep.subr.bf16.mxu0 0
        %9696 = vmatpush1.bf16.msra.mxu0 0
        %9697 = vmatprep.subr.bf16.mxu0 0
        %9698 = vmatpush1.bf16.msra.mxu0 0
        %9699 = vmatprep.subr.bf16.mxu0 0
        %9700 = vmatpush1.bf16.msra.mxu0 0
        %9701 = vmatprep.subr.bf16.mxu0 0
        %9702 = vmatpush1.bf16.msra.mxu0 0
        %9703 = vmatprep.subr.bf16.mxu0 0
        %9704 = vmatpush1.bf16.msra.mxu0 0
        %9705 = vmatprep.subr.bf16.mxu0 0
        %9706 = vmatpush1.bf16.msra.mxu0 0
        %9707 = vmatprep.subr.bf16.mxu0 0
        %9708 = vmatpush1.bf16.msra.mxu0 0
        %9709 = vmatprep.subr.bf16.mxu0 0
        %9710 = vmatpush1.bf16.msra.mxu0 0
        %9711 = vmatprep.subr.bf16.mxu0 0
        %9712 = vmatpush1.bf16.msra.mxu0 0
        %9713 = vmatprep.mubr.bf16.mxu0 0
        %9714 = vmatmul.mubr.bf16.gmra.mrb[0].mxu0 %v9679
        %v9715 = vpop.f32.mrb[0].mxu0
        %v9716 = vadd.f32 %v9660, %v9715
        %v9717 = vpop.f32.mrb[0].mxu0
        %v9718 = vpop.f32.mrb[0].mxu0
        %v9719 = vadd.f32 %v9663, %v9718
        %v9720 = vpop.f32.mrb[0].mxu0
        %9721 = vdwg.mxu0
        %s9722 = scalar_lea.vmem %s79, 32
        %v9723 = vld [vmem:[%s9722] sm:$0xf]
        %v9724 = vld [vmem:[%s9722 + $0x4] sm:$0xf]
        %v9725 = vld [vmem:[%s9722 + $0x8] sm:$0xf]
        %v9726 = vld [vmem:[%s9722 + $0xc] sm:$0xf]
        %v9731 = vunpack.c.l.b16 %v9723
        %v9732 = vunpack.c.l.b16 %v9724
        %v9733 = vunpack.c.l.b16 %v9725
        %v9734 = vunpack.c.l.b16 %v9726
        %v9735 = vpack.c.b16 %v9732, %v9731
        %v9736 = vpack.c.b16 %v9734, %v9733
        %v9740 = vsel %vm2496, %v9595, 0
        %9742 = vmatprep.subr.bf16.mxu0 0
        %9743 = vmatpush1.bf16.msra.mxu0 %v9735
        %9744 = vmatprep.subr.bf16.mxu0 0
        %9745 = vmatpush1.bf16.msra.mxu0 %v9736
        %9746 = vmatprep.subr.bf16.mxu0 0
        %9747 = vmatpush1.bf16.msra.mxu0 0
        %9748 = vmatprep.subr.bf16.mxu0 0
        %9749 = vmatpush1.bf16.msra.mxu0 0
        %9750 = vmatprep.subr.bf16.mxu0 0
        %9751 = vmatpush1.bf16.msra.mxu0 0
        %9752 = vmatprep.subr.bf16.mxu0 0
        %9753 = vmatpush1.bf16.msra.mxu0 0
        %9754 = vmatprep.subr.bf16.mxu0 0
        %9755 = vmatpush1.bf16.msra.mxu0 0
        %9756 = vmatprep.subr.bf16.mxu0 0
        %9757 = vmatpush1.bf16.msra.mxu0 0
        %9758 = vmatprep.subr.bf16.mxu0 0
        %9759 = vmatpush1.bf16.msra.mxu0 0
        %9760 = vmatprep.subr.bf16.mxu0 0
        %9761 = vmatpush1.bf16.msra.mxu0 0
        %9762 = vmatprep.subr.bf16.mxu0 0
        %9763 = vmatpush1.bf16.msra.mxu0 0
        %9764 = vmatprep.subr.bf16.mxu0 0
        %9765 = vmatpush1.bf16.msra.mxu0 0
        %9766 = vmatprep.subr.bf16.mxu0 0
        %9767 = vmatpush1.bf16.msra.mxu0 0
        %9768 = vmatprep.subr.bf16.mxu0 0
        %9769 = vmatpush1.bf16.msra.mxu0 0
        %9770 = vmatprep.subr.bf16.mxu0 0
        %9771 = vmatpush1.bf16.msra.mxu0 0
        %9772 = vmatprep.subr.bf16.mxu0 0
        %9773 = vmatpush1.bf16.msra.mxu0 0
        %9774 = vmatprep.mubr.bf16.mxu0 0
        %9775 = vmatmul.mubr.bf16.gmra.mrb[0].mxu0 %v9740
        %v9776 = vpop.f32.mrb[0].mxu0
        %v9777 = vadd.f32 0.0, %v9776
        %v9778 = vpop.f32.mrb[0].mxu0
        %v9779 = vpop.f32.mrb[0].mxu0
        %v9780 = vadd.f32 0.0, %v9779
        %v9781 = vpop.f32.mrb[0].mxu0
        %9782 = vdwg.mxu0
        %v9783 = vadd.f32 %v9716, %v9777
        %v9784 = vadd.f32 %v9719, %v9780
        %s9785 = scalar_lea.vmem %s79, 48
        %v9786 = vld [vmem:[%s9785] sm:$0xf]
        %v9787 = vld [vmem:[%s9785 + $0x4] sm:$0xf]
        %v9788 = vld [vmem:[%s9785 + $0x8] sm:$0xf]
        %v9789 = vld [vmem:[%s9785 + $0xc] sm:$0xf]
        %v9794 = vunpack.c.l.b16 %v9786
        %v9795 = vunpack.c.l.b16 %v9787
        %v9796 = vunpack.c.l.b16 %v9788
        %v9797 = vunpack.c.l.b16 %v9789
        %v9798 = vpack.c.b16 %v9795, %v9794
        %v9799 = vpack.c.b16 %v9797, %v9796
        %v9803 = vsel %vm2496, %v9596, 0
        %9805 = vmatprep.subr.bf16.mxu0 0
        %9806 = vmatpush1.bf16.msra.mxu0 %v9798
        %9807 = vmatprep.subr.bf16.mxu0 0
        %9808 = vmatpush1.bf16.msra.mxu0 %v9799
        %9809 = vmatprep.subr.bf16.mxu0 0
        %9810 = vmatpush1.bf16.msra.mxu0 0
        %9811 = vmatprep.subr.bf16.mxu0 0
        %9812 = vmatpush1.bf16.msra.mxu0 0
        %9813 = vmatprep.subr.bf16.mxu0 0
        %9814 = vmatpush1.bf16.msra.mxu0 0
        %9815 = vmatprep.subr.bf16.mxu0 0
        %9816 = vmatpush1.bf16.msra.mxu0 0
        %9817 = vmatprep.subr.bf16.mxu0 0
        %9818 = vmatpush1.bf16.msra.mxu0 0
        %9819 = vmatprep.subr.bf16.mxu0 0
        %9820 = vmatpush1.bf16.msra.mxu0 0
        %9821 = vmatprep.subr.bf16.mxu0 0
        %9822 = vmatpush1.bf16.msra.mxu0 0
        %9823 = vmatprep.subr.bf16.mxu0 0
        %9824 = vmatpush1.bf16.msra.mxu0 0
        %9825 = vmatprep.subr.bf16.mxu0 0
        %9826 = vmatpush1.bf16.msra.mxu0 0
        %9827 = vmatprep.subr.bf16.mxu0 0
        %9828 = vmatpush1.bf16.msra.mxu0 0
        %9829 = vmatprep.subr.bf16.mxu0 0
        %9830 = vmatpush1.bf16.msra.mxu0 0
        %9831 = vmatprep.subr.bf16.mxu0 0
        %9832 = vmatpush1.bf16.msra.mxu0 0
        %9833 = vmatprep.subr.bf16.mxu0 0
        %9834 = vmatpush1.bf16.msra.mxu0 0
        %9835 = vmatprep.subr.bf16.mxu0 0
        %9836 = vmatpush1.bf16.msra.mxu0 0
        %9837 = vmatprep.mubr.bf16.mxu0 0
        %9838 = vmatmul.mubr.bf16.gmra.mrb[0].mxu0 %v9803
        %v9839 = vpop.f32.mrb[0].mxu0
        %v9840 = vadd.f32 0.0, %v9839
        %v9841 = vpop.f32.mrb[0].mxu0
        %v9842 = vpop.f32.mrb[0].mxu0
        %v9843 = vadd.f32 0.0, %v9842
        %v9844 = vpop.f32.mrb[0].mxu0
        %9845 = vdwg.mxu0
        %v9846 = vadd.f32 %v9783, %v9840
        %v9847 = vadd.f32 %v9784, %v9843
        %s9848 = scalar_lea.vmem %s79, 64
        %v9849 = vld [vmem:[%s9848] sm:$0xf]
        %v9850 = vld [vmem:[%s9848 + $0x4] sm:$0xf]
        %v9851 = vld [vmem:[%s9848 + $0x8] sm:$0xf]
        %v9852 = vld [vmem:[%s9848 + $0xc] sm:$0xf]
        %v9857 = vunpack.c.l.b16 %v9849
        %v9858 = vunpack.c.l.b16 %v9850
        %v9859 = vunpack.c.l.b16 %v9851
        %v9860 = vunpack.c.l.b16 %v9852
        %v9861 = vpack.c.b16 %v9858, %v9857
        %v9862 = vpack.c.b16 %v9860, %v9859
        %v9866 = vsel %vm2496, %v9597, 0
        %9868 = vmatprep.subr.bf16.mxu0 0
        %9869 = vmatpush1.bf16.msra.mxu0 %v9861
        %9870 = vmatprep.subr.bf16.mxu0 0
        %9871 = vmatpush1.bf16.msra.mxu0 %v9862
        %9872 = vmatprep.subr.bf16.mxu0 0
        %9873 = vmatpush1.bf16.msra.mxu0 0
        %9874 = vmatprep.subr.bf16.mxu0 0
        %9875 = vmatpush1.bf16.msra.mxu0 0
        %9876 = vmatprep.subr.bf16.mxu0 0
        %9877 = vmatpush1.bf16.msra.mxu0 0
        %9878 = vmatprep.subr.bf16.mxu0 0
        %9879 = vmatpush1.bf16.msra.mxu0 0
        %9880 = vmatprep.subr.bf16.mxu0 0
        %9881 = vmatpush1.bf16.msra.mxu0 0
        %9882 = vmatprep.subr.bf16.mxu0 0
        %9883 = vmatpush1.bf16.msra.mxu0 0
        %9884 = vmatprep.subr.bf16.mxu0 0
        %9885 = vmatpush1.bf16.msra.mxu0 0
        %9886 = vmatprep.subr.bf16.mxu0 0
        %9887 = vmatpush1.bf16.msra.mxu0 0
        %9888 = vmatprep.subr.bf16.mxu0 0
        %9889 = vmatpush1.bf16.msra.mxu0 0
        %9890 = vmatprep.subr.bf16.mxu0 0
        %9891 = vmatpush1.bf16.msra.mxu0 0
        %9892 = vmatprep.subr.bf16.mxu0 0
        %9893 = vmatpush1.bf16.msra.mxu0 0
        %9894 = vmatprep.subr.bf16.mxu0 0
        %9895 = vmatpush1.bf16.msra.mxu0 0
        %9896 = vmatprep.subr.bf16.mxu0 0
        %9897 = vmatpush1.bf16.msra.mxu0 0
        %9898 = vmatprep.subr.bf16.mxu0 0
        %9899 = vmatpush1.bf16.msra.mxu0 0
        %9900 = vmatprep.mubr.bf16.mxu0 0
        %9901 = vmatmul.mubr.bf16.gmra.mrb[0].mxu0 %v9866
        %v9902 = vpop.f32.mrb[0].mxu0
        %v9903 = vadd.f32 0.0, %v9902
        %v9904 = vpop.f32.mrb[0].mxu0
        %v9905 = vpop.f32.mrb[0].mxu0
        %v9906 = vadd.f32 0.0, %v9905
        %v9907 = vpop.f32.mrb[0].mxu0
        %9908 = vdwg.mxu0
        %v9909 = vadd.f32 %v9846, %v9903
        %v9910 = vadd.f32 %v9847, %v9906
        %s9911 = scalar_lea.vmem %s79, 80
        %v9912 = vld [vmem:[%s9911] sm:$0xf]
        %v9913 = vld [vmem:[%s9911 + $0x4] sm:$0xf]
        %v9914 = vld [vmem:[%s9911 + $0x8] sm:$0xf]
        %v9915 = vld [vmem:[%s9911 + $0xc] sm:$0xf]
        %v9920 = vunpack.c.l.b16 %v9912
        %v9921 = vunpack.c.l.b16 %v9913
        %v9922 = vunpack.c.l.b16 %v9914
        %v9923 = vunpack.c.l.b16 %v9915
        %v9924 = vpack.c.b16 %v9921, %v9920
        %v9925 = vpack.c.b16 %v9923, %v9922
        %v9929 = vsel %vm2496, %v9598, 0
        %9931 = vmatprep.subr.bf16.mxu0 0
        %9932 = vmatpush1.bf16.msra.mxu0 %v9924
        %9933 = vmatprep.subr.bf16.mxu0 0
        %9934 = vmatpush1.bf16.msra.mxu0 %v9925
        %9935 = vmatprep.subr.bf16.mxu0 0
        %9936 = vmatpush1.bf16.msra.mxu0 0
        %9937 = vmatprep.subr.bf16.mxu0 0
        %9938 = vmatpush1.bf16.msra.mxu0 0
        %9939 = vmatprep.subr.bf16.mxu0 0
        %9940 = vmatpush1.bf16.msra.mxu0 0
        %9941 = vmatprep.subr.bf16.mxu0 0
        %9942 = vmatpush1.bf16.msra.mxu0 0
        %9943 = vmatprep.subr.bf16.mxu0 0
        %9944 = vmatpush1.bf16.msra.mxu0 0
        %9945 = vmatprep.subr.bf16.mxu0 0
        %9946 = vmatpush1.bf16.msra.mxu0 0
        %9947 = vmatprep.subr.bf16.mxu0 0
        %9948 = vmatpush1.bf16.msra.mxu0 0
        %9949 = vmatprep.subr.bf16.mxu0 0
        %9950 = vmatpush1.bf16.msra.mxu0 0
        %9951 = vmatprep.subr.bf16.mxu0 0
        %9952 = vmatpush1.bf16.msra.mxu0 0
        %9953 = vmatprep.subr.bf16.mxu0 0
        %9954 = vmatpush1.bf16.msra.mxu0 0
        %9955 = vmatprep.subr.bf16.mxu0 0
        %9956 = vmatpush1.bf16.msra.mxu0 0
        %9957 = vmatprep.subr.bf16.mxu0 0
        %9958 = vmatpush1.bf16.msra.mxu0 0
        %9959 = vmatprep.subr.bf16.mxu0 0
        %9960 = vmatpush1.bf16.msra.mxu0 0
        %9961 = vmatprep.subr.bf16.mxu0 0
        %9962 = vmatpush1.bf16.msra.mxu0 0
        %9963 = vmatprep.mubr.bf16.mxu0 0
        %9964 = vmatmul.mubr.bf16.gmra.mrb[0].mxu0 %v9929
        %v9965 = vpop.f32.mrb[0].mxu0
        %v9966 = vadd.f32 0.0, %v9965
        %v9967 = vpop.f32.mrb[0].mxu0
        %v9968 = vpop.f32.mrb[0].mxu0
        %v9969 = vadd.f32 0.0, %v9968
        %v9970 = vpop.f32.mrb[0].mxu0
        %9971 = vdwg.mxu0
        %v9972 = vadd.f32 %v9909, %v9966
        %v9973 = vadd.f32 %v9910, %v9969
        %s9974 = scalar_lea.vmem %s79, 96
        %v9975 = vld [vmem:[%s9974] sm:$0xf]
        %v9976 = vld [vmem:[%s9974 + $0x4] sm:$0xf]
        %v9977 = vld [vmem:[%s9974 + $0x8] sm:$0xf]
        %v9978 = vld [vmem:[%s9974 + $0xc] sm:$0xf]
        %v9983 = vunpack.c.l.b16 %v9975
        %v9984 = vunpack.c.l.b16 %v9976
        %v9985 = vunpack.c.l.b16 %v9977
        %v9986 = vunpack.c.l.b16 %v9978
        %v9987 = vpack.c.b16 %v9984, %v9983
        %v9988 = vpack.c.b16 %v9986, %v9985
        %v9992 = vsel %vm2496, %v9599, 0
        %9994 = vmatprep.subr.bf16.mxu0 0
        %9995 = vmatpush1.bf16.msra.mxu0 %v9987
        %9996 = vmatprep.subr.bf16.mxu0 0
        %9997 = vmatpush1.bf16.msra.mxu0 %v9988
        %9998 = vmatprep.subr.bf16.mxu0 0
        %9999 = vmatpush1.bf16.msra.mxu0 0
        %10000 = vmatprep.subr.bf16.mxu0 0
        %10001 = vmatpush1.bf16.msra.mxu0 0
        %10002 = vmatprep.subr.bf16.mxu0 0
        %10003 = vmatpush1.bf16.msra.mxu0 0
        %10004 = vmatprep.subr.bf16.mxu0 0
        %10005 = vmatpush1.bf16.msra.mxu0 0
        %10006 = vmatprep.subr.bf16.mxu0 0
        %10007 = vmatpush1.bf16.msra.mxu0 0
        %10008 = vmatprep.subr.bf16.mxu0 0
        %10009 = vmatpush1.bf16.msra.mxu0 0
        %10010 = vmatprep.subr.bf16.mxu0 0
        %10011 = vmatpush1.bf16.msra.mxu0 0
        %10012 = vmatprep.subr.bf16.mxu0 0
        %10013 = vmatpush1.bf16.msra.mxu0 0
        %10014 = vmatprep.subr.bf16.mxu0 0
        %10015 = vmatpush1.bf16.msra.mxu0 0
        %10016 = vmatprep.subr.bf16.mxu0 0
        %10017 = vmatpush1.bf16.msra.mxu0 0
        %10018 = vmatprep.subr.bf16.mxu0 0
        %10019 = vmatpush1.bf16.msra.mxu0 0
        %10020 = vmatprep.subr.bf16.mxu0 0
        %10021 = vmatpush1.bf16.msra.mxu0 0
        %10022 = vmatprep.subr.bf16.mxu0 0
        %10023 = vmatpush1.bf16.msra.mxu0 0
        %10024 = vmatprep.subr.bf16.mxu0 0
        %10025 = vmatpush1.bf16.msra.mxu0 0
        %10026 = vmatprep.mubr.bf16.mxu0 0
        %10027 = vmatmul.mubr.bf16.gmra.mrb[0].mxu0 %v9992
        %v10028 = vpop.f32.mrb[0].mxu0
        %v10029 = vadd.f32 0.0, %v10028
        %v10030 = vpop.f32.mrb[0].mxu0
        %v10031 = vpop.f32.mrb[0].mxu0
        %v10032 = vadd.f32 0.0, %v10031
        %v10033 = vpop.f32.mrb[0].mxu0
        %10034 = vdwg.mxu0
        %v10035 = vadd.f32 %v9972, %v10029
        %v10036 = vadd.f32 %v9973, %v10032
        %s10037 = scalar_lea.vmem %s79, 112
        %v10038 = vld [vmem:[%s10037] sm:$0xf]
        %v10039 = vld [vmem:[%s10037 + $0x4] sm:$0xf]
        %v10040 = vld [vmem:[%s10037 + $0x8] sm:$0xf]
        %v10041 = vld [vmem:[%s10037 + $0xc] sm:$0xf]
        %v10046 = vunpack.c.l.b16 %v10038
        %v10047 = vunpack.c.l.b16 %v10039
        %v10048 = vunpack.c.l.b16 %v10040
        %v10049 = vunpack.c.l.b16 %v10041
        %v10050 = vpack.c.b16 %v10047, %v10046
        %v10051 = vpack.c.b16 %v10049, %v10048
        %v10055 = vsel %vm2496, %v9600, 0
        %10057 = vmatprep.subr.bf16.mxu0 0
        %10058 = vmatpush1.bf16.msra.mxu0 %v10050
        %10059 = vmatprep.subr.bf16.mxu0 0
        %10060 = vmatpush1.bf16.msra.mxu0 %v10051
        %10061 = vmatprep.subr.bf16.mxu0 0
        %10062 = vmatpush1.bf16.msra.mxu0 0
        %10063 = vmatprep.subr.bf16.mxu0 0
        %10064 = vmatpush1.bf16.msra.mxu0 0
        %10065 = vmatprep.subr.bf16.mxu0 0
        %10066 = vmatpush1.bf16.msra.mxu0 0
        %10067 = vmatprep.subr.bf16.mxu0 0
        %10068 = vmatpush1.bf16.msra.mxu0 0
        %10069 = vmatprep.subr.bf16.mxu0 0
        %10070 = vmatpush1.bf16.msra.mxu0 0
        %10071 = vmatprep.subr.bf16.mxu0 0
        %10072 = vmatpush1.bf16.msra.mxu0 0
        %10073 = vmatprep.subr.bf16.mxu0 0
        %10074 = vmatpush1.bf16.msra.mxu0 0
        %10075 = vmatprep.subr.bf16.mxu0 0
        %10076 = vmatpush1.bf16.msra.mxu0 0
        %10077 = vmatprep.subr.bf16.mxu0 0
        %10078 = vmatpush1.bf16.msra.mxu0 0
        %10079 = vmatprep.subr.bf16.mxu0 0
        %10080 = vmatpush1.bf16.msra.mxu0 0
        %10081 = vmatprep.subr.bf16.mxu0 0
        %10082 = vmatpush1.bf16.msra.mxu0 0
        %10083 = vmatprep.subr.bf16.mxu0 0
        %10084 = vmatpush1.bf16.msra.mxu0 0
        %10085 = vmatprep.subr.bf16.mxu0 0
        %10086 = vmatpush1.bf16.msra.mxu0 0
        %10087 = vmatprep.subr.bf16.mxu0 0
        %10088 = vmatpush1.bf16.msra.mxu0 0
        %10089 = vmatprep.mubr.bf16.mxu0 0
        %10090 = vmatmul.mubr.bf16.gmra.mrb[0].mxu0 %v10055
        %v10091 = vpop.f32.mrb[0].mxu0
        %v10092 = vadd.f32 0.0, %v10091
        %v10093 = vpop.f32.mrb[0].mxu0
        %v10094 = vpop.f32.mrb[0].mxu0
        %v10095 = vadd.f32 0.0, %v10094
        %v10096 = vpop.f32.mrb[0].mxu0
        %10097 = vdwg.mxu0
        %v10098 = vadd.f32 %v10035, %v10092
        %v10099 = vadd.f32 %v10036, %v10095
        %v10100 = vld [vmem:[#allocation9] sm:$0x1]
        %v10102 = vlaneseq
        %v10103 = vshrl.u32 %v10102, 7
        %v10104 = vsub.s32 0, %v10103
        %v10105 = vrot.slane %v10100, %v10104
        %v10107 = vadd.f32 %v10098, %v10105
        %v10108 = vadd.f32 %v10099, %v10105
        %v10109 = vsel %vm2496, %v10107, 0.0
        %v10110 = vsel %vm2496, %v10108, 0.0
        %v10111 = vadd.f32 %v10109, %v10110
        %10112 = vadd.xlane.f32.xlu0 %v10111
        %v10113 = vpop.xlane.xlu0 %10112
        %v10114 = vrot.slane %v10113, 4
        %v10115 = vadd.f32 %v10113, %v10114
        %v10116 = vrot.slane %v10115, 2
        %v10117 = vadd.f32 %v10115, %v10116
        %v10118 = vrot.slane %v10117, 1
        %v10119 = vadd.f32 %v10117, %v10118
        %s10120 = vtos %v10119
        %v10121 = vstv %s10120
        %v10122 = vrcp.pop 512.0
        %v10123 = vmul.f32 %v10121, %v10122
        %v10124 = vsub.f32 %v10107, %v10123
        %v10125 = vsub.f32 %v10108, %v10123
        %v10126 = vmul.f32 %v10124, %v10124
        %v10127 = vmul.f32 %v10125, %v10125
        %v10128 = vsel %vm2496, %v10126, 0.0
        %v10129 = vsel %vm2496, %v10127, 0.0
        %v10130 = vadd.f32 %v10128, %v10129
        %10131 = vadd.xlane.f32.xlu0 %v10130
        %v10132 = vpop.xlane.xlu0 %10131
        %v10133 = vrot.slane %v10132, 4
        %v10134 = vadd.f32 %v10132, %v10133
        %v10135 = vrot.slane %v10134, 2
        %v10136 = vadd.f32 %v10134, %v10135
        %v10137 = vrot.slane %v10136, 1
        %v10138 = vadd.f32 %v10136, %v10137
        %s10139 = vtos %v10138
        %v10140 = vstv %s10139
        %v10141 = vmul.f32 %v10140, %v10122
        %v10142 = vadd.f32 %v10141, 1e-05
        %v10143 = vrsqrt.pop %v10142
        %v10144 = vmul.f32 %v10124, %v10143
        %v10145 = vmul.f32 %v10125, %v10143
        %v10146 = vld [vmem:[%s83] sm:$0xff]
        %v10147 = vld [vmem:[%s83 + $0x8] sm:$0xff]
        %v10148 = vmul.f32 %v10144, %v10146
        %v10149 = vmul.f32 %v10145, %v10147
        %v10150 = vld [vmem:[%s85] sm:$0xff]
        %v10151 = vld [vmem:[%s85 + $0x8] sm:$0xff]
        %v10152 = vadd.f32 %v10148, %v10150
        %v10153 = vadd.f32 %v10149, %v10151
        %v10154 = vld [vmem:[%s87] sm:$0xf]
        %v10155 = vld [vmem:[%s87 + $0x4] sm:$0xf]
        %v10156 = vld [vmem:[%s87 + $0x8] sm:$0xf]
        %v10157 = vld [vmem:[%s87 + $0xc] sm:$0xf]
        %v10158 = vpack.c.bf16 %v10153, %v10152
        %v10159 = vld [vmem:[#allocation11] sm:$0x1]
        %v10161 = vlaneseq
        %v10162 = vshrl.u32 %v10161, 7
        %v10163 = vsub.s32 0, %v10162
        %v10164 = vrot.slane %v10159, %v10163
        %v10170 = vunpack.c.l.b16 %v10154
        %v10171 = vunpack.c.l.b16 %v10155
        %v10172 = vunpack.c.l.b16 %v10156
        %v10173 = vunpack.c.l.b16 %v10157
        %v10174 = vpack.c.b16 %v10171, %v10170
        %v10175 = vpack.c.b16 %v10173, %v10172
        %v10179 = vsel %vm2496, %v10158, 0
        %10181 = vmatprep.subr.bf16.mxu0 0
        %10182 = vmatpush1.bf16.msra.mxu0 %v10174
        %10183 = vmatprep.subr.bf16.mxu0 0
        %10184 = vmatpush1.bf16.msra.mxu0 %v10175
        %10185 = vmatprep.subr.bf16.mxu0 0
        %10186 = vmatpush1.bf16.msra.mxu0 0
        %10187 = vmatprep.subr.bf16.mxu0 0
        %10188 = vmatpush1.bf16.msra.mxu0 0
        %10189 = vmatprep.subr.bf16.mxu0 0
        %10190 = vmatpush1.bf16.msra.mxu0 0
        %10191 = vmatprep.subr.bf16.mxu0 0
        %10192 = vmatpush1.bf16.msra.mxu0 0
        %10193 = vmatprep.subr.bf16.mxu0 0
        %10194 = vmatpush1.bf16.msra.mxu0 0
        %10195 = vmatprep.subr.bf16.mxu0 0
        %10196 = vmatpush1.bf16.msra.mxu0 0
        %10197 = vmatprep.subr.bf16.mxu0 0
        %10198 = vmatpush1.bf16.msra.mxu0 0
        %10199 = vmatprep.subr.bf16.mxu0 0
        %10200 = vmatpush1.bf16.msra.mxu0 0
        %10201 = vmatprep.subr.bf16.mxu0 0
        %10202 = vmatpush1.bf16.msra.mxu0 0
        %10203 = vmatprep.subr.bf16.mxu0 0
        %10204 = vmatpush1.bf16.msra.mxu0 0
        %10205 = vmatprep.subr.bf16.mxu0 0
        %10206 = vmatpush1.bf16.msra.mxu0 0
        %10207 = vmatprep.subr.bf16.mxu0 0
        %10208 = vmatpush1.bf16.msra.mxu0 0
        %10209 = vmatprep.subr.bf16.mxu0 0
        %10210 = vmatpush1.bf16.msra.mxu0 0
        %10211 = vmatprep.subr.bf16.mxu0 0
        %10212 = vmatpush1.bf16.msra.mxu0 0
        %10213 = vmatprep.mubr.bf16.mxu0 0
        %10214 = vmatmul.mubr.bf16.gmra.mrb[0].mxu0 %v10179
        %v10215 = vpop.f32.mrb[0].mxu0
        %v10216 = vadd.f32 %v10164, %v10215
        %v10217 = vpop.f32.mrb[0].mxu0
        %v10218 = vpop.f32.mrb[0].mxu0
        %v10219 = vadd.f32 %v10164, %v10218
        %v10220 = vpop.f32.mrb[0].mxu0
        %10221 = vdwg.mxu0
        %v10222 = vld [vmem:[%s91] sm:$0xf]
        %v10223 = vld [vmem:[%s91 + $0x4] sm:$0xf]
        %v10224 = vld [vmem:[%s91 + $0x8] sm:$0xf]
        %v10225 = vld [vmem:[%s91 + $0xc] sm:$0xf]
        %v10226 = vpack.c.bf16 %v10219, %v10216
        %v10227 = vld [vmem:[#allocation2] sm:$0x1]
        %v10229 = vlaneseq
        %v10230 = vshrl.u32 %v10229, 7
        %v10231 = vsub.s32 0, %v10230
        %v10232 = vrot.slane %v10227, %v10231
        %v10238 = vunpack.c.l.b16 %v10222
        %v10239 = vunpack.c.l.b16 %v10223
        %v10240 = vunpack.c.l.b16 %v10224
        %v10241 = vunpack.c.l.b16 %v10225
        %v10242 = vpack.c.b16 %v10239, %v10238
        %v10243 = vpack.c.b16 %v10241, %v10240
        %v10247 = vsel %vm2496, %v10226, 0
        %10249 = vmatprep.subr.bf16.mxu0 0
        %10250 = vmatpush1.bf16.msra.mxu0 %v10242
        %10251 = vmatprep.subr.bf16.mxu0 0
        %10252 = vmatpush1.bf16.msra.mxu0 %v10243
        %10253 = vmatprep.subr.bf16.mxu0 0
        %10254 = vmatpush1.bf16.msra.mxu0 0
        %10255 = vmatprep.subr.bf16.mxu0 0
        %10256 = vmatpush1.bf16.msra.mxu0 0
        %10257 = vmatprep.subr.bf16.mxu0 0
        %10258 = vmatpush1.bf16.msra.mxu0 0
        %10259 = vmatprep.subr.bf16.mxu0 0
        %10260 = vmatpush1.bf16.msra.mxu0 0
        %10261 = vmatprep.subr.bf16.mxu0 0
        %10262 = vmatpush1.bf16.msra.mxu0 0
        %10263 = vmatprep.subr.bf16.mxu0 0
        %10264 = vmatpush1.bf16.msra.mxu0 0
        %10265 = vmatprep.subr.bf16.mxu0 0
        %10266 = vmatpush1.bf16.msra.mxu0 0
        %10267 = vmatprep.subr.bf16.mxu0 0
        %10268 = vmatpush1.bf16.msra.mxu0 0
        %10269 = vmatprep.subr.bf16.mxu0 0
        %10270 = vmatpush1.bf16.msra.mxu0 0
        %10271 = vmatprep.subr.bf16.mxu0 0
        %10272 = vmatpush1.bf16.msra.mxu0 0
        %10273 = vmatprep.subr.bf16.mxu0 0
        %10274 = vmatpush1.bf16.msra.mxu0 0
        %10275 = vmatprep.subr.bf16.mxu0 0
        %10276 = vmatpush1.bf16.msra.mxu0 0
        %10277 = vmatprep.subr.bf16.mxu0 0
        %10278 = vmatpush1.bf16.msra.mxu0 0
        %10279 = vmatprep.subr.bf16.mxu0 0
        %10280 = vmatpush1.bf16.msra.mxu0 0
        %10281 = vmatprep.mubr.bf16.mxu0 0
        %10282 = vmatmul.mubr.bf16.gmra.mrb[0].mxu0 %v10247
        %v10283 = vpop.f32.mrb[0].mxu0
        %v10284 = vadd.f32 %v10232, %v10283
        %v10285 = vpop.f32.mrb[0].mxu0
        %v10286 = vpop.f32.mrb[0].mxu0
        %v10287 = vadd.f32 %v10232, %v10286
        %v10288 = vpop.f32.mrb[0].mxu0
        %10289 = vdwg.mxu0
        %v10290 = vld [vmem:[%s95] sm:$0xff]
        %v10291 = vld [vmem:[%s95 + $0x8] sm:$0xff]
        %10293 = vset.pattern.permute.xlu0 0
        %10294 = vperm.xlu0 %10293, %v10284
        %v10295 = vpop.permute.xlu0 %10294
        %10298 = vset.pattern.permute.xlu0 0
        %10299 = vperm.xlu0 %10298, %v10287
        %v10300 = vpop.permute.xlu0 %10299
        %v10302 = vmul.f32 %v10295, %v10290
        %v10303 = vmul.f32 %v10300, %v10291
        %vm10304 = vcmask 56320
        %v10305 = vsel %vm10304, %v10302, 0.0
        %v10306 = vsel %vm10304, %v10303, 0.0
        %v10307 = vadd.f32 %v10305, %v10306
        %v10308 = vrot.slane %v10307, 4
        %v10309 = vadd.f32 %v10307, %v10308
        %v10310 = vrot.slane %v10309, 2
        %v10311 = vadd.f32 %v10309, %v10310
        %v10312 = vrot.slane %v10311, 1
        %v10313 = vadd.f32 %v10311, %v10312
        %v10314 = vld [vmem:[#allocation12] sm:$0x1]
        %v10315 = vadd.f32 %v10313, %v10314
        %vm10316 = vcmask 49152
        %10317 = vst.msk [vmem:[%s1547] sm:$0x1] %vm10316, %v10315
        %s10318 = sand.u32 %s1166, 1
        %s10319 = scalar_lea.sflag [#allocation5], %s10318
        %s10320 = sand.u32 %s1166, 1
        %s10321 = scalar_lea.vmem [#allocation14], %s10320
        // Predicated region
        $region241: #{forward.1} parent=215 // pred_check
          %p10322 = pneg %p1176
        $region242: #{forward.1} parent=215 // pred_check_branch
          %10324 = sbr.rel (%p10322) target = $region244
        $region243: #{forward.1} parent=215 // pred_region
          %s10326 = ssub.s32 16, 16
          %10327 = vsyncadd %s10319, %s10326
          %s10328 = smul.addr %s119, 16
          %s10329 = scalar_lea.hbm %s99, %s10328
          %s10331 = sshll.u32 %s10321, 4
          %s10332 = int_to_ptr.vmem [resolvable:$true] %s10331
          %10334 = dma.vmem_to_hbm [thread:$0]  %s10332, 16, %s10329, %s10319
        $region244: #{forward.1} parent=215 // pred_fallthru
          _
      $region216: #{forward.1} parent=5 // pred_fallthru
        _
      %p10335 = scmp.le.s32.totalorder 2, %s114
      // Predicated region
      $region245: #{forward.1} parent=5 // pred_check
        %p10336 = pneg %p10335
      $region246: #{forward.1} parent=5 // pred_check_branch
        %10338 = sbr.rel (%p10336) target = $region248
      $region247: #{forward.1} parent=5 // pred_region
        %s10339 = ssub.s32 %s114, 2
        // Predicated region
        $region249: #{forward.1} parent=247 // pred_check
          %p10340 = pneg %p1182
        $region250: #{forward.1} parent=247 // pred_check_branch
          %10342 = sbr.rel (%p10340) target = $region252
        $region251: #{forward.1} parent=247 // pred_region
          %s10343 = sand.u32 %s1167, 1
          %s10344 = scalar_lea.sflag [#allocation5], %s10343
          %s10345 = sand.u32 %s1167, 1
          %s10346 = scalar_lea.vmem [#allocation14], %s10345
          %10347 = dma.done %s10344, 16
        $region252: #{forward.1} parent=247 // pred_fallthru
          _
      $region248: #{forward.1} parent=5 // pred_fallthru
        _
    $region6: #{forward.1} parent=1 // loop_footer
      %s118 = sadd.s32 1, %s114
    $region7: #{forward.1} parent=1 // loop_footer_branch
      %113 = sbr.rel target = $region3
    $region8: #{forward.1} parent=1 // loop_exit
      _
    %10348 = vsyncpa [#allocation4], 1
    %s10349 = scalar_lea.sflag [#allocation4], 1
    %10350 = vsyncpa %s10349, 1
    %10351 = vsyncpa [#allocation7], 1
    %10352 = vsyncpa [#allocation10], 1
    %10353 = vsyncpa [#allocation13], 1
    %10354 = vsyncpa [#allocation5], 1
    %s10355 = scalar_lea.sflag [#allocation5], 1
    %10356 = vsyncpa %s10355, 1

</llo_original>
